<compile_context>
chip_gen: v7x
topology: tpu7x:2x2x1
jax: 0.10.0
libtpu: 0.0.40
codegen_flags: <defaults>
</compile_context>

<pallas_src>
import math

import jax
import jax.numpy as jnp
from jax.experimental import pallas as pl
from jax.experimental.pallas import tpu as pltpu

EPS = 1e-5
C = 64  # out channels of every block


# ---------------------------------------------------------------------------
# In-kernel helpers.  All operate on 2-D VMEM refs whose rows are flattened
# (n, h, w) in NHWC order and whose columns are channels.  Only static 2-D
# slices / stride-2 pl.ds reads are used (no value reshapes, no >2-D values).
# ---------------------------------------------------------------------------
def _im2col_3x3_valid(src, dst, n_imgs, h_in, w_in, cin):
    """src: (n*h_in*w_in, cin) ref  ->  dst: (n*h_out*w_out, 9*cin) patch ref."""
    h_out, w_out = h_in - 2, w_in - 2
    for n in range(n_imgs):
        for i in range(h_out):
            d = (n * h_out + i) * w_out
            for ky in range(3):
                s = (n * h_in + i + ky) * w_in
                row = src[s:s + w_in, :]                      # (w_in, cin) single load
                for kx in range(3):
                    tap = ky * 3 + kx
                    dst[d:d + w_out, tap * cin:(tap + 1) * cin] = row[kx:kx + w_out, :]


def _maxpool_2x2(src, dst, n_imgs, h_in, w_in):
    """MaxPool2d(2), floor mode: (n*h_in*w_in, C) -> (n*(h_in//2)*(w_in//2), C)."""
    h_out, w_out = h_in // 2, w_in // 2
    for n in range(n_imgs):
        for ii in range(h_out):
            best = None
            for a in (0, 1):
                for b in (0, 1):
                    r = (n * h_in + 2 * ii + a) * w_in + b
                    v = src[pl.ds(r, w_out, stride=2), :]      # picks cols 2*jj + b
                    best = v if best is None else jnp.maximum(best, v)
            d = (n * h_out + ii) * w_out
            dst[d:d + w_out, :] = best


def _copy_interior_pad1(src, dst, n_imgs, h, w):
    """Copy (h, w) maps into the interior of PRE-ZEROED (h+2, w+2) maps.

    The zero halo of `dst` is written once by the caller; only interior rows are
    (fully) rewritten here, so repeated calls on the same scratch buffer are exact.
    """
    hp, wp = h + 2, w + 2
    for n in range(n_imgs):
        for i in range(h):
            d = (n * hp + i + 1) * wp + 1
            s = (n * h + i) * w
            dst[d:d + w, :] = src[s:s + w, :]


def _round_up(a, b):
    return -(-a // b) * b


def _padded_vmem_bytes(rows, cols, itemsize):
    """Conservative Mosaic footprint of a 2-D buffer ((8,128) tile padding)."""
    return _round_up(rows, 8) * _round_up(cols, 128) * itemsize


# ---------------------------------------------------------------------------
# Fused forward pass.
# ---------------------------------------------------------------------------
def convnet_nopool_forward(x_nchw, params):
    """Forward pass. x_nchw: (N, 3, H, W) -> (N, 64, H', W') (NCHW, like PyTorch)."""
    N, cin0, H, W = x_nchw.shape
    depth = len(params)
    assert cin0 == 3 and depth >= 3

    # Spatial trace: blocks 0,1 = valid conv + pool; blocks >=2 = pad-1 conv (size kept).
    h0, w0 = H - 2, W - 2              # block-0 conv output
    hp0, wp0 = h0 // 2, w0 // 2        # block-0 pooled
    h1, w1 = hp0 - 2, wp0 - 2          # block-1 conv output
    hp1, wp1 = h1 // 2, w1 // 2        # block-1 pooled == spatial size of deep blocks
    hpad, wpad = hp1 + 2, wp1 + 2      # deep blocks' zero-padded input

    m0 = N * h0 * w0
    mp0 = N * hp0 * wp0
    m1 = N * h1 * w1
    md = N * hp1 * wp1
    mpad = N * hpad * wpad

    def kernel(x_ref, w0_ref, wdeep_ref, gb_ref, o_ref,
               pat0, act0, pool0, pat1, act1, pool1, padbuf, patd, actd):

        def bn_relu(y, blk, m_rows):
            # Training-mode BatchNorm (batch stats, biased variance, eps=1e-5) folded
            # into one per-channel affine (scale/shift), fused with ReLU.
            gamma = gb_ref[2 * blk:2 * blk + 1, :]
            beta = gb_ref[2 * blk + 1:2 * blk + 2, :]
            inv_m = 1.0 / float(m_rows)
            s1 = jnp.sum(y, axis=0, keepdims=True)
            s2 = jnp.sum(y * y, axis=0, keepdims=True)
            mean = s1 * inv_m
            var = s2 * inv_m - mean * mean
            scale = gamma * jax.lax.rsqrt(var + EPS)           # rsqrt -> EUP slot
            shift = beta - mean * scale
            return jnp.maximum(y * scale + shift, 0.0)

        # ---- block 0: 3 -> 64, valid conv, BN, ReLU, pool ---------------------
        _im2col_3x3_valid(x_ref, pat0, N, H, W, 3)
        y = jnp.dot(pat0[...].astype(jnp.bfloat16), w0_ref[...],
                    preferred_element_type=jnp.float32)
        act0[...] = bn_relu(y, 0, m0)
        _maxpool_2x2(act0, pool0, N, h0, w0)

        # ---- block 1: 64 -> 64, valid conv, BN, ReLU, pool --------------------
        _im2col_3x3_valid(pool0, pat1, N, hp0, wp0, C)
        y = jnp.dot(pat1[...].astype(jnp.bfloat16), wdeep_ref[0],
                    preferred_element_type=jnp.float32)
        act1[...] = bn_relu(y, 1, m1)
        _maxpool_2x2(act1, pool1, N, h1, w1)

        # ---- blocks >= 2: 64 -> 64, pad-1 conv, BN, ReLU (no pool) ------------
        # Zero the padded scratch ONCE: only the interior rows change per block and
        # they are fully rewritten by _copy_interior_pad1; the halo stays zero.
        padbuf[...] = jnp.zeros_like(padbuf)
        cur = pool1
        for blk in range(2, depth):
            last = blk == depth - 1
            dst = o_ref if last else (actd if cur is pool1 else pool1)
            _copy_interior_pad1(cur, padbuf, N, hp1, wp1)
            _im2col_3x3_valid(padbuf, patd, N, hpad, wpad, C)
            y = jnp.dot(patd[...].astype(jnp.bfloat16), wdeep_ref[blk - 1],
                        preferred_element_type=jnp.float32)
            dst[...] = bn_relu(y, blk, md)
            cur = dst

    # Operands: input as NHWC rows, weights in bf16 matmul form, gamma/beta stacked.
    # The conv bias is intentionally NOT passed: under training-mode BatchNorm it is
    # exactly cancelled by the batch-mean subtraction.
    x_rows = jnp.transpose(x_nchw, (0, 2, 3, 1)).reshape(N * H * W, 3)
    w0_2d = params[0]["w"].reshape(9 * 3, C).astype(jnp.bfloat16)
    w_deep = jnp.stack([p["w"].reshape(9 * C, C) for p in params[1:]]).astype(jnp.bfloat16)
    gb = jnp.stack([v for p in params for v in (p["gamma"], p["beta"])])  # (2*depth, C)

    scratch_shapes = [
        pltpu.VMEM((m0, 9 * 3), jnp.float32),   # pat0  : block-0 im2col patches
        pltpu.VMEM((m0, C), jnp.float32),       # act0  : block-0 conv+BN+ReLU
        pltpu.VMEM((mp0, C), jnp.float32),      # pool0 : block-0 pooled
        pltpu.VMEM((m1, 9 * C), jnp.float32),   # pat1  : block-1 im2col patches
        pltpu.VMEM((m1, C), jnp.float32),       # act1  : block-1 conv+BN+ReLU
        pltpu.VMEM((md, C), jnp.float32),       # pool1 : block-1 pooled
        pltpu.VMEM((mpad, C), jnp.float32),     # padbuf: deep blocks' padded input
        pltpu.VMEM((md, 9 * C), jnp.float32),   # patd  : deep blocks' patches
        pltpu.VMEM((md, C), jnp.float32),       # actd  : deep blocks' ping-pong buf
    ]

    # Scoped-VMEM budget: tile-padded scratch + (double-buffered) I/O, with headroom,
    # clamped to [32 MiB, 64 MiB] (v7x has 64 MiB VMEM per TensorCore).
    scratch_bytes = sum(_padded_vmem_bytes(s.shape[-2] if len(s.shape) > 1 else 1,
                                           s.shape[-1], 4) *
                        (s.shape[0] if len(s.shape) > 2 else 1)
                        for s in scratch_shapes)
    io_bytes = (_padded_vmem_bytes(N * H * W, 3, 4) +
                _padded_vmem_bytes(9 * 3, C, 2) +
                (depth - 1) * _padded_vmem_bytes(9 * C, C, 2) +
                _padded_vmem_bytes(2 * depth, C, 4) +
                _padded_vmem_bytes(md, C, 4))
    vmem_limit = int(min(64 * 2 ** 20, max(32 * 2 ** 20, 2 * (scratch_bytes + 2 * io_bytes))))

    out_rows = pl.pallas_call(
        kernel,
        out_shape=jax.ShapeDtypeStruct((md, C), jnp.float32),
        grid=(1,),
        in_specs=[
            pl.BlockSpec((N * H * W, 3), lambda i: (0, 0)),
            pl.BlockSpec((9 * 3, C), lambda i: (0, 0)),
            pl.BlockSpec((depth - 1, 9 * C, C), lambda i: (0, 0, 0)),
            pl.BlockSpec((2 * depth, C), lambda i: (0, 0)),
        ],
        out_specs=pl.BlockSpec((md, C), lambda i: (0, 0)),
        scratch_shapes=scratch_shapes,
        compiler_params=pltpu.CompilerParams(
            dimension_semantics=("arbitrary",),
            vmem_limit_bytes=vmem_limit),
    )(x_rows, w0_2d, w_deep, gb)

    return jnp.transpose(out_rows.reshape(N, hp1, wp1, C), (0, 3, 1, 2))


# ---------------------------------------------------------------------------
# Parameters (mirrors the PyTorch init_layer / nn.Conv2d defaults).
# ---------------------------------------------------------------------------
def init_params(depth, key):
    params = []
    for i in range(depth):
        indim = 3 if i == 0 else 64
        outdim = 64
        key, k_w, k_b = jax.random.split(key, 3)
        n = 3 * 3 * outdim
        w = jax.random.normal(k_w, (3, 3, indim, outdim), jnp.float32) * math.sqrt(
            2.0 / float(n))
        fan_in = indim * 9
        bound = 1.0 / math.sqrt(fan_in)
        # Bias is kept in the params for module fidelity (and used by the f32 reference),
        # but the kernel does not consume it: training-mode BN cancels it exactly.
        b = jax.random.uniform(k_b, (outdim,), jnp.float32, -bound, bound)
        gamma = jnp.ones((outdim,), jnp.float32)
        beta = jnp.zeros((outdim,), jnp.float32)
        params.append({"w": w, "b": b, "gamma": gamma, "beta": beta})
    return params


# ---------------------------------------------------------------------------
# Pure-JAX (XLA) reference with the same bf16 matmul operands.  It KEEPS the
# conv bias, demonstrating that dropping it in the kernel is exact under
# training-mode BatchNorm.
# ---------------------------------------------------------------------------
def _reference_forward(x_nchw, params):
    x = jnp.transpose(x_nchw, (0, 2, 3, 1))
    for i, p in enumerate(params):
        padding = 0 if i in (0, 1) else 1
        pool = i in (0, 1)
        if padding:
            x = jnp.pad(x, ((0, 0), (1, 1), (1, 1), (0, 0)))
        n, hp, wp, cin = x.shape
        ho, wo = hp - 2, wp - 2
        cols = [x[:, ky:ky + ho, kx:kx + wo, :] for ky in range(3) for kx in range(3)]
        pat = jnp.concatenate(cols, axis=-1).reshape(n * ho * wo, 9 * cin)
        y = jnp.dot(pat.astype(jnp.bfloat16),
                    p["w"].reshape(9 * cin, C).astype(jnp.bfloat16),
                    preferred_element_type=jnp.float32)
        y = y + p["b"][None, :]
        mean = jnp.mean(y, axis=0, keepdims=True)
        var = jnp.mean(jnp.square(y - mean), axis=0, keepdims=True)
        y = (y - mean) * jax.lax.rsqrt(var + EPS) * p["gamma"] + p["beta"]
        y = jnp.maximum(y, 0.0).reshape(n, ho, wo, C)
        if pool:
            h2, w2 = ho // 2, wo // 2
            y = y[:, :2 * h2, :2 * w2, :].reshape(n, h2, 2, w2, 2, C).max(axis=(2, 4))
        x = y
    return jnp.transpose(x, (0, 3, 1, 2))


if __name__ == "__main__":
    depth = 4
    key = jax.random.PRNGKey(0)
    key, k_x = jax.random.split(key)

    # Small input consistent with the module: batch=2, channels=3, spatial=16.
    x = jax.random.normal(k_x, (2, 3, 16, 16), jnp.float32)
    params = init_params(depth, key)

    fwd = jax.jit(convnet_nopool_forward)
    out = fwd(x, params)
    jax.block_until_ready(out)

    # Shape trace: 16 ->conv(p0) 14 ->pool 7 ->conv(p0) 5 ->pool 2 ->conv(p1) 2 ->conv(p1) 2
    assert out.shape == (2, 64, 2, 2), out.shape
    assert bool(jnp.all(jnp.isfinite(out)))
    assert bool(jnp.all(out >= 0.0))  # ReLU output

    # Loose check against the f32-XLA reference (same bf16 MXU operands, bias kept).
    ref = _reference_forward(x, params)
    err = float(jnp.max(jnp.abs(out - ref)))
    assert err < 5e-2, err

    print("KERNEL_OK")
</pallas_src>

<mosaic_0001>
module attributes {stable_mosaic.version = 11 : i64} {
  func.func @kernel(%arg0: i32, %arg1: memref<512x3xf32, #tpu.memory_space<vmem>>, %arg2: memref<27x64xbf16, #tpu.memory_space<vmem>>, %arg3: memref<3x576x64xbf16, #tpu.memory_space<vmem>>, %arg4: memref<8x64xf32, #tpu.memory_space<vmem>>, %arg5: memref<8x64xf32, #tpu.memory_space<vmem>>, %arg6: memref<392x27xf32, #tpu.memory_space<vmem>>, %arg7: memref<392x64xf32, #tpu.memory_space<vmem>>, %arg8: memref<98x64xf32, #tpu.memory_space<vmem>>, %arg9: memref<50x576xf32, #tpu.memory_space<vmem>>, %arg10: memref<50x64xf32, #tpu.memory_space<vmem>>, %arg11: memref<8x64xf32, #tpu.memory_space<vmem>>, %arg12: memref<32x64xf32, #tpu.memory_space<vmem>>, %arg13: memref<8x576xf32, #tpu.memory_space<vmem>>, %arg14: memref<8x64xf32, #tpu.memory_space<vmem>>) attributes {dimension_semantics = [#tpu.dimension_semantics<arbitrary>], iteration_bounds = array<i64: 1>, scalar_prefetch = 0 : i64, scratch_operands = 9 : i64, tpu.core_type = #tpu.core_type<tc>, window_params = [{pipeline_mode = #tpu.pipeline_mode<synchronous>, transform_indices = @transform_0, window_bounds = array<i64: 512, 3>}, {pipeline_mode = #tpu.pipeline_mode<synchronous>, transform_indices = @transform_1, window_bounds = array<i64: 27, 64>}, {pipeline_mode = #tpu.pipeline_mode<synchronous>, transform_indices = @transform_2, window_bounds = array<i64: 3, 576, 64>}, {pipeline_mode = #tpu.pipeline_mode<synchronous>, transform_indices = @transform_3, window_bounds = array<i64: 8, 64>}, {pipeline_mode = #tpu.pipeline_mode<synchronous>, transform_indices = @transform_4, window_bounds = array<i64: 8, 64>}]} {
    %c0 = arith.constant 0 : index
    %c0_0 = arith.constant 0 : index
    %0 = vector.load %arg1[%c0, %c0_0] : memref<512x3xf32, #tpu.memory_space<vmem>>, vector<16x3xf32>
    %1 = vector.extract_strided_slice %0 {offsets = [0, 0], sizes = [14, 3], strides = [1, 1]} : vector<16x3xf32> to vector<14x3xf32>
    %c0_1 = arith.constant 0 : index
    %c0_2 = arith.constant 0 : index
    %2 = vector.load %arg6[%c0_1, %c0_2] : memref<392x27xf32, #tpu.memory_space<vmem>>, vector<14x3xf32>
    tpu.vector_store %arg6[%c0_1, %c0_2], %1 {strides = array<i32>} : memref<392x27xf32, #tpu.memory_space<vmem>>, vector<14x3xf32>,
    %3 = vector.extract_strided_slice %0 {offsets = [1, 0], sizes = [14, 3], strides = [1, 1]} : vector<16x3xf32> to vector<14x3xf32>
    %c0_3 = arith.constant 0 : index
    %c3 = arith.constant 3 : index
    %4 = vector.load %arg6[%c0_3, %c3] : memref<392x27xf32, #tpu.memory_space<vmem>>, vector<14x3xf32>
    tpu.vector_store %arg6[%c0_3, %c3], %3 {strides = array<i32>} : memref<392x27xf32, #tpu.memory_space<vmem>>, vector<14x3xf32>,
    %5 = vector.extract_strided_slice %0 {offsets = [2, 0], sizes = [14, 3], strides = [1, 1]} : vector<16x3xf32> to vector<14x3xf32>
    %c0_4 = arith.constant 0 : index
    %c6 = arith.constant 6 : index
    %6 = vector.load %arg6[%c0_4, %c6] : memref<392x27xf32, #tpu.memory_space<vmem>>, vector<14x3xf32>
    tpu.vector_store %arg6[%c0_4, %c6], %5 {strides = array<i32>} : memref<392x27xf32, #tpu.memory_space<vmem>>, vector<14x3xf32>,
    %c16 = arith.constant 16 : index
    %c0_5 = arith.constant 0 : index
    %7 = vector.load %arg1[%c16, %c0_5] : memref<512x3xf32, #tpu.memory_space<vmem>>, vector<16x3xf32>
    %8 = vector.extract_strided_slice %7 {offsets = [0, 0], sizes = [14, 3], strides = [1, 1]} : vector<16x3xf32> to vector<14x3xf32>
    %c0_6 = arith.constant 0 : index
    %c9 = arith.constant 9 : index
    %9 = vector.load %arg6[%c0_6, %c9] : memref<392x27xf32, #tpu.memory_space<vmem>>, vector<14x3xf32>
    tpu.vector_store %arg6[%c0_6, %c9], %8 {strides = array<i32>} : memref<392x27xf32, #tpu.memory_space<vmem>>, vector<14x3xf32>,
    %10 = vector.extract_strided_slice %7 {offsets = [1, 0], sizes = [14, 3], strides = [1, 1]} : vector<16x3xf32> to vector<14x3xf32>
    %c0_7 = arith.constant 0 : index
    %c12 = arith.constant 12 : index
    %11 = vector.load %arg6[%c0_7, %c12] : memref<392x27xf32, #tpu.memory_space<vmem>>, vector<14x3xf32>
    tpu.vector_store %arg6[%c0_7, %c12], %10 {strides = array<i32>} : memref<392x27xf32, #tpu.memory_space<vmem>>, vector<14x3xf32>,
    %12 = vector.extract_strided_slice %7 {offsets = [2, 0], sizes = [14, 3], strides = [1, 1]} : vector<16x3xf32> to vector<14x3xf32>
    %c0_8 = arith.constant 0 : index
    %c15 = arith.constant 15 : index
    %13 = vector.load %arg6[%c0_8, %c15] : memref<392x27xf32, #tpu.memory_space<vmem>>, vector<14x3xf32>
    tpu.vector_store %arg6[%c0_8, %c15], %12 {strides = array<i32>} : memref<392x27xf32, #tpu.memory_space<vmem>>, vector<14x3xf32>,
    %c32 = arith.constant 32 : index
    %c0_9 = arith.constant 0 : index
    %14 = vector.load %arg1[%c32, %c0_9] : memref<512x3xf32, #tpu.memory_space<vmem>>, vector<16x3xf32>
    %15 = vector.extract_strided_slice %14 {offsets = [0, 0], sizes = [14, 3], strides = [1, 1]} : vector<16x3xf32> to vector<14x3xf32>
    %c0_10 = arith.constant 0 : index
    %c18 = arith.constant 18 : index
    %16 = vector.load %arg6[%c0_10, %c18] : memref<392x27xf32, #tpu.memory_space<vmem>>, vector<14x3xf32>
    tpu.vector_store %arg6[%c0_10, %c18], %15 {strides = array<i32>} : memref<392x27xf32, #tpu.memory_space<vmem>>, vector<14x3xf32>,
    %17 = vector.extract_strided_slice %14 {offsets = [1, 0], sizes = [14, 3], strides = [1, 1]} : vector<16x3xf32> to vector<14x3xf32>
    %c0_11 = arith.constant 0 : index
    %c21 = arith.constant 21 : index
    %18 = vector.load %arg6[%c0_11, %c21] : memref<392x27xf32, #tpu.memory_space<vmem>>, vector<14x3xf32>
    tpu.vector_store %arg6[%c0_11, %c21], %17 {strides = array<i32>} : memref<392x27xf32, #tpu.memory_space<vmem>>, vector<14x3xf32>,
    %19 = vector.extract_strided_slice %14 {offsets = [2, 0], sizes = [14, 3], strides = [1, 1]} : vector<16x3xf32> to vector<14x3xf32>
    %c0_12 = arith.constant 0 : index
    %c24 = arith.constant 24 : index
    %20 = vector.load %arg6[%c0_12, %c24] : memref<392x27xf32, #tpu.memory_space<vmem>>, vector<14x3xf32>
    tpu.vector_store %arg6[%c0_12, %c24], %19 {strides = array<i32>} : memref<392x27xf32, #tpu.memory_space<vmem>>, vector<14x3xf32>,
    %c16_13 = arith.constant 16 : index
    %c0_14 = arith.constant 0 : index
    %21 = vector.load %arg1[%c16_13, %c0_14] : memref<512x3xf32, #tpu.memory_space<vmem>>, vector<16x3xf32>
    %22 = vector.extract_strided_slice %21 {offsets = [0, 0], sizes = [14, 3], strides = [1, 1]} : vector<16x3xf32> to vector<14x3xf32>
    %c14 = arith.constant 14 : index
    %c0_15 = arith.constant 0 : index
    %23 = vector.load %arg6[%c14, %c0_15] : memref<392x27xf32, #tpu.memory_space<vmem>>, vector<14x3xf32>
    tpu.vector_store %arg6[%c14, %c0_15], %22 {strides = array<i32>} : memref<392x27xf32, #tpu.memory_space<vmem>>, vector<14x3xf32>,
    %24 = vector.extract_strided_slice %21 {offsets = [1, 0], sizes = [14, 3], strides = [1, 1]} : vector<16x3xf32> to vector<14x3xf32>
    %c14_16 = arith.constant 14 : index
    %c3_17 = arith.constant 3 : index
    %25 = vector.load %arg6[%c14_16, %c3_17] : memref<392x27xf32, #tpu.memory_space<vmem>>, vector<14x3xf32>
    tpu.vector_store %arg6[%c14_16, %c3_17], %24 {strides = array<i32>} : memref<392x27xf32, #tpu.memory_space<vmem>>, vector<14x3xf32>,
    %26 = vector.extract_strided_slice %21 {offsets = [2, 0], sizes = [14, 3], strides = [1, 1]} : vector<16x3xf32> to vector<14x3xf32>
    %c14_18 = arith.constant 14 : index
    %c6_19 = arith.constant 6 : index
    %27 = vector.load %arg6[%c14_18, %c6_19] : memref<392x27xf32, #tpu.memory_space<vmem>>, vector<14x3xf32>
    tpu.vector_store %arg6[%c14_18, %c6_19], %26 {strides = array<i32>} : memref<392x27xf32, #tpu.memory_space<vmem>>, vector<14x3xf32>,
    %c32_20 = arith.constant 32 : index
    %c0_21 = arith.constant 0 : index
    %28 = vector.load %arg1[%c32_20, %c0_21] : memref<512x3xf32, #tpu.memory_space<vmem>>, vector<16x3xf32>
    %29 = vector.extract_strided_slice %28 {offsets = [0, 0], sizes = [14, 3], strides = [1, 1]} : vector<16x3xf32> to vector<14x3xf32>
    %c14_22 = arith.constant 14 : index
    %c9_23 = arith.constant 9 : index
    %30 = vector.load %arg6[%c14_22, %c9_23] : memref<392x27xf32, #tpu.memory_space<vmem>>, vector<14x3xf32>
    tpu.vector_store %arg6[%c14_22, %c9_23], %29 {strides = array<i32>} : memref<392x27xf32, #tpu.memory_space<vmem>>, vector<14x3xf32>,
    %31 = vector.extract_strided_slice %28 {offsets = [1, 0], sizes = [14, 3], strides = [1, 1]} : vector<16x3xf32> to vector<14x3xf32>
    %c14_24 = arith.constant 14 : index
    %c12_25 = arith.constant 12 : index
    %32 = vector.load %arg6[%c14_24, %c12_25] : memref<392x27xf32, #tpu.memory_space<vmem>>, vector<14x3xf32>
    tpu.vector_store %arg6[%c14_24, %c12_25], %31 {strides = array<i32>} : memref<392x27xf32, #tpu.memory_space<vmem>>, vector<14x3xf32>,
    %33 = vector.extract_strided_slice %28 {offsets = [2, 0], sizes = [14, 3], strides = [1, 1]} : vector<16x3xf32> to vector<14x3xf32>
    %c14_26 = arith.constant 14 : index
    %c15_27 = arith.constant 15 : index
    %34 = vector.load %arg6[%c14_26, %c15_27] : memref<392x27xf32, #tpu.memory_space<vmem>>, vector<14x3xf32>
    tpu.vector_store %arg6[%c14_26, %c15_27], %33 {strides = array<i32>} : memref<392x27xf32, #tpu.memory_space<vmem>>, vector<14x3xf32>,
    %c48 = arith.constant 48 : index
    %c0_28 = arith.constant 0 : index
    %35 = vector.load %arg1[%c48, %c0_28] : memref<512x3xf32, #tpu.memory_space<vmem>>, vector<16x3xf32>
    %36 = vector.extract_strided_slice %35 {offsets = [0, 0], sizes = [14, 3], strides = [1, 1]} : vector<16x3xf32> to vector<14x3xf32>
    %c14_29 = arith.constant 14 : index
    %c18_30 = arith.constant 18 : index
    %37 = vector.load %arg6[%c14_29, %c18_30] : memref<392x27xf32, #tpu.memory_space<vmem>>, vector<14x3xf32>
    tpu.vector_store %arg6[%c14_29, %c18_30], %36 {strides = array<i32>} : memref<392x27xf32, #tpu.memory_space<vmem>>, vector<14x3xf32>,
    %38 = vector.extract_strided_slice %35 {offsets = [1, 0], sizes = [14, 3], strides = [1, 1]} : vector<16x3xf32> to vector<14x3xf32>
    %c14_31 = arith.constant 14 : index
    %c21_32 = arith.constant 21 : index
    %39 = vector.load %arg6[%c14_31, %c21_32] : memref<392x27xf32, #tpu.memory_space<vmem>>, vector<14x3xf32>
    tpu.vector_store %arg6[%c14_31, %c21_32], %38 {strides = array<i32>} : memref<392x27xf32, #tpu.memory_space<vmem>>, vector<14x3xf32>,
    %40 = vector.extract_strided_slice %35 {offsets = [2, 0], sizes = [14, 3], strides = [1, 1]} : vector<16x3xf32> to vector<14x3xf32>
    %c14_33 = arith.constant 14 : index
    %c24_34 = arith.constant 24 : index
    %41 = vector.load %arg6[%c14_33, %c24_34] : memref<392x27xf32, #tpu.memory_space<vmem>>, vector<14x3xf32>
    tpu.vector_store %arg6[%c14_33, %c24_34], %40 {strides = array<i32>} : memref<392x27xf32, #tpu.memory_space<vmem>>, vector<14x3xf32>,
    %c32_35 = arith.constant 32 : index
    %c0_36 = arith.constant 0 : index
    %42 = vector.load %arg1[%c32_35, %c0_36] : memref<512x3xf32, #tpu.memory_space<vmem>>, vector<16x3xf32>
    %43 = vector.extract_strided_slice %42 {offsets = [0, 0], sizes = [14, 3], strides = [1, 1]} : vector<16x3xf32> to vector<14x3xf32>
    %c28 = arith.constant 28 : index
    %c0_37 = arith.constant 0 : index
    %44 = vector.load %arg6[%c28, %c0_37] : memref<392x27xf32, #tpu.memory_space<vmem>>, vector<14x3xf32>
    tpu.vector_store %arg6[%c28, %c0_37], %43 {strides = array<i32>} : memref<392x27xf32, #tpu.memory_space<vmem>>, vector<14x3xf32>,
    %45 = vector.extract_strided_slice %42 {offsets = [1, 0], sizes = [14, 3], strides = [1, 1]} : vector<16x3xf32> to vector<14x3xf32>
    %c28_38 = arith.constant 28 : index
    %c3_39 = arith.constant 3 : index
    %46 = vector.load %arg6[%c28_38, %c3_39] : memref<392x27xf32, #tpu.memory_space<vmem>>, vector<14x3xf32>
    tpu.vector_store %arg6[%c28_38, %c3_39], %45 {strides = array<i32>} : memref<392x27xf32, #tpu.memory_space<vmem>>, vector<14x3xf32>,
    %47 = vector.extract_strided_slice %42 {offsets = [2, 0], sizes = [14, 3], strides = [1, 1]} : vector<16x3xf32> to vector<14x3xf32>
    %c28_40 = arith.constant 28 : index
    %c6_41 = arith.constant 6 : index
    %48 = vector.load %arg6[%c28_40, %c6_41] : memref<392x27xf32, #tpu.memory_space<vmem>>, vector<14x3xf32>
    tpu.vector_store %arg6[%c28_40, %c6_41], %47 {strides = array<i32>} : memref<392x27xf32, #tpu.memory_space<vmem>>, vector<14x3xf32>,
    %c48_42 = arith.constant 48 : index
    %c0_43 = arith.constant 0 : index
    %49 = vector.load %arg1[%c48_42, %c0_43] : memref<512x3xf32, #tpu.memory_space<vmem>>, vector<16x3xf32>
    %50 = vector.extract_strided_slice %49 {offsets = [0, 0], sizes = [14, 3], strides = [1, 1]} : vector<16x3xf32> to vector<14x3xf32>
    %c28_44 = arith.constant 28 : index
    %c9_45 = arith.constant 9 : index
    %51 = vector.load %arg6[%c28_44, %c9_45] : memref<392x27xf32, #tpu.memory_space<vmem>>, vector<14x3xf32>
    tpu.vector_store %arg6[%c28_44, %c9_45], %50 {strides = array<i32>} : memref<392x27xf32, #tpu.memory_space<vmem>>, vector<14x3xf32>,
    %52 = vector.extract_strided_slice %49 {offsets = [1, 0], sizes = [14, 3], strides = [1, 1]} : vector<16x3xf32> to vector<14x3xf32>
    %c28_46 = arith.constant 28 : index
    %c12_47 = arith.constant 12 : index
    %53 = vector.load %arg6[%c28_46, %c12_47] : memref<392x27xf32, #tpu.memory_space<vmem>>, vector<14x3xf32>
    tpu.vector_store %arg6[%c28_46, %c12_47], %52 {strides = array<i32>} : memref<392x27xf32, #tpu.memory_space<vmem>>, vector<14x3xf32>,
    %54 = vector.extract_strided_slice %49 {offsets = [2, 0], sizes = [14, 3], strides = [1, 1]} : vector<16x3xf32> to vector<14x3xf32>
    %c28_48 = arith.constant 28 : index
    %c15_49 = arith.constant 15 : index
    %55 = vector.load %arg6[%c28_48, %c15_49] : memref<392x27xf32, #tpu.memory_space<vmem>>, vector<14x3xf32>
    tpu.vector_store %arg6[%c28_48, %c15_49], %54 {strides = array<i32>} : memref<392x27xf32, #tpu.memory_space<vmem>>, vector<14x3xf32>,
    %c64 = arith.constant 64 : index
    %c0_50 = arith.constant 0 : index
    %56 = vector.load %arg1[%c64, %c0_50] : memref<512x3xf32, #tpu.memory_space<vmem>>, vector<16x3xf32>
    %57 = vector.extract_strided_slice %56 {offsets = [0, 0], sizes = [14, 3], strides = [1, 1]} : vector<16x3xf32> to vector<14x3xf32>
    %c28_51 = arith.constant 28 : index
    %c18_52 = arith.constant 18 : index
    %58 = vector.load %arg6[%c28_51, %c18_52] : memref<392x27xf32, #tpu.memory_space<vmem>>, vector<14x3xf32>
    tpu.vector_store %arg6[%c28_51, %c18_52], %57 {strides = array<i32>} : memref<392x27xf32, #tpu.memory_space<vmem>>, vector<14x3xf32>,
    %59 = vector.extract_strided_slice %56 {offsets = [1, 0], sizes = [14, 3], strides = [1, 1]} : vector<16x3xf32> to vector<14x3xf32>
    %c28_53 = arith.constant 28 : index
    %c21_54 = arith.constant 21 : index
    %60 = vector.load %arg6[%c28_53, %c21_54] : memref<392x27xf32, #tpu.memory_space<vmem>>, vector<14x3xf32>
    tpu.vector_store %arg6[%c28_53, %c21_54], %59 {strides = array<i32>} : memref<392x27xf32, #tpu.memory_space<vmem>>, vector<14x3xf32>,
    %61 = vector.extract_strided_slice %56 {offsets = [2, 0], sizes = [14, 3], strides = [1, 1]} : vector<16x3xf32> to vector<14x3xf32>
    %c28_55 = arith.constant 28 : index
    %c24_56 = arith.constant 24 : index
    %62 = vector.load %arg6[%c28_55, %c24_56] : memref<392x27xf32, #tpu.memory_space<vmem>>, vector<14x3xf32>
    tpu.vector_store %arg6[%c28_55, %c24_56], %61 {strides = array<i32>} : memref<392x27xf32, #tpu.memory_space<vmem>>, vector<14x3xf32>,
    %c48_57 = arith.constant 48 : index
    %c0_58 = arith.constant 0 : index
    %63 = vector.load %arg1[%c48_57, %c0_58] : memref<512x3xf32, #tpu.memory_space<vmem>>, vector<16x3xf32>
    %64 = vector.extract_strided_slice %63 {offsets = [0, 0], sizes = [14, 3], strides = [1, 1]} : vector<16x3xf32> to vector<14x3xf32>
    %c42 = arith.constant 42 : index
    %c0_59 = arith.constant 0 : index
    %65 = vector.load %arg6[%c42, %c0_59] : memref<392x27xf32, #tpu.memory_space<vmem>>, vector<14x3xf32>
    tpu.vector_store %arg6[%c42, %c0_59], %64 {strides = array<i32>} : memref<392x27xf32, #tpu.memory_space<vmem>>, vector<14x3xf32>,
    %66 = vector.extract_strided_slice %63 {offsets = [1, 0], sizes = [14, 3], strides = [1, 1]} : vector<16x3xf32> to vector<14x3xf32>
    %c42_60 = arith.constant 42 : index
    %c3_61 = arith.constant 3 : index
    %67 = vector.load %arg6[%c42_60, %c3_61] : memref<392x27xf32, #tpu.memory_space<vmem>>, vector<14x3xf32>
    tpu.vector_store %arg6[%c42_60, %c3_61], %66 {strides = array<i32>} : memref<392x27xf32, #tpu.memory_space<vmem>>, vector<14x3xf32>,
    %68 = vector.extract_strided_slice %63 {offsets = [2, 0], sizes = [14, 3], strides = [1, 1]} : vector<16x3xf32> to vector<14x3xf32>
    %c42_62 = arith.constant 42 : index
    %c6_63 = arith.constant 6 : index
    %69 = vector.load %arg6[%c42_62, %c6_63] : memref<392x27xf32, #tpu.memory_space<vmem>>, vector<14x3xf32>
    tpu.vector_store %arg6[%c42_62, %c6_63], %68 {strides = array<i32>} : memref<392x27xf32, #tpu.memory_space<vmem>>, vector<14x3xf32>,
    %c64_64 = arith.constant 64 : index
    %c0_65 = arith.constant 0 : index
    %70 = vector.load %arg1[%c64_64, %c0_65] : memref<512x3xf32, #tpu.memory_space<vmem>>, vector<16x3xf32>
    %71 = vector.extract_strided_slice %70 {offsets = [0, 0], sizes = [14, 3], strides = [1, 1]} : vector<16x3xf32> to vector<14x3xf32>
    %c42_66 = arith.constant 42 : index
    %c9_67 = arith.constant 9 : index
    %72 = vector.load %arg6[%c42_66, %c9_67] : memref<392x27xf32, #tpu.memory_space<vmem>>, vector<14x3xf32>
    tpu.vector_store %arg6[%c42_66, %c9_67], %71 {strides = array<i32>} : memref<392x27xf32, #tpu.memory_space<vmem>>, vector<14x3xf32>,
    %73 = vector.extract_strided_slice %70 {offsets = [1, 0], sizes = [14, 3], strides = [1, 1]} : vector<16x3xf32> to vector<14x3xf32>
    %c42_68 = arith.constant 42 : index
    %c12_69 = arith.constant 12 : index
    %74 = vector.load %arg6[%c42_68, %c12_69] : memref<392x27xf32, #tpu.memory_space<vmem>>, vector<14x3xf32>
    tpu.vector_store %arg6[%c42_68, %c12_69], %73 {strides = array<i32>} : memref<392x27xf32, #tpu.memory_space<vmem>>, vector<14x3xf32>,
    %75 = vector.extract_strided_slice %70 {offsets = [2, 0], sizes = [14, 3], strides = [1, 1]} : vector<16x3xf32> to vector<14x3xf32>
    %c42_70 = arith.constant 42 : index
    %c15_71 = arith.constant 15 : index
    %76 = vector.load %arg6[%c42_70, %c15_71] : memref<392x27xf32, #tpu.memory_space<vmem>>, vector<14x3xf32>
    tpu.vector_store %arg6[%c42_70, %c15_71], %75 {strides = array<i32>} : memref<392x27xf32, #tpu.memory_space<vmem>>, vector<14x3xf32>,
    %c80 = arith.constant 80 : index
    %c0_72 = arith.constant 0 : index
    %77 = vector.load %arg1[%c80, %c0_72] : memref<512x3xf32, #tpu.memory_space<vmem>>, vector<16x3xf32>
    %78 = vector.extract_strided_slice %77 {offsets = [0, 0], sizes = [14, 3], strides = [1, 1]} : vector<16x3xf32> to vector<14x3xf32>
    %c42_73 = arith.constant 42 : index
    %c18_74 = arith.constant 18 : index
    %79 = vector.load %arg6[%c42_73, %c18_74] : memref<392x27xf32, #tpu.memory_space<vmem>>, vector<14x3xf32>
    tpu.vector_store %arg6[%c42_73, %c18_74], %78 {strides = array<i32>} : memref<392x27xf32, #tpu.memory_space<vmem>>, vector<14x3xf32>,
    %80 = vector.extract_strided_slice %77 {offsets = [1, 0], sizes = [14, 3], strides = [1, 1]} : vector<16x3xf32> to vector<14x3xf32>
    %c42_75 = arith.constant 42 : index
    %c21_76 = arith.constant 21 : index
    %81 = vector.load %arg6[%c42_75, %c21_76] : memref<392x27xf32, #tpu.memory_space<vmem>>, vector<14x3xf32>
    tpu.vector_store %arg6[%c42_75, %c21_76], %80 {strides = array<i32>} : memref<392x27xf32, #tpu.memory_space<vmem>>, vector<14x3xf32>,
    %82 = vector.extract_strided_slice %77 {offsets = [2, 0], sizes = [14, 3], strides = [1, 1]} : vector<16x3xf32> to vector<14x3xf32>
    %c42_77 = arith.constant 42 : index
    %c24_78 = arith.constant 24 : index
    %83 = vector.load %arg6[%c42_77, %c24_78] : memref<392x27xf32, #tpu.memory_space<vmem>>, vector<14x3xf32>
    tpu.vector_store %arg6[%c42_77, %c24_78], %82 {strides = array<i32>} : memref<392x27xf32, #tpu.memory_space<vmem>>, vector<14x3xf32>,
    %c64_79 = arith.constant 64 : index
    %c0_80 = arith.constant 0 : index
    %84 = vector.load %arg1[%c64_79, %c0_80] : memref<512x3xf32, #tpu.memory_space<vmem>>, vector<16x3xf32>
    %85 = vector.extract_strided_slice %84 {offsets = [0, 0], sizes = [14, 3], strides = [1, 1]} : vector<16x3xf32> to vector<14x3xf32>
    %c56 = arith.constant 56 : index
    %c0_81 = arith.constant 0 : index
    %86 = vector.load %arg6[%c56, %c0_81] : memref<392x27xf32, #tpu.memory_space<vmem>>, vector<14x3xf32>
    tpu.vector_store %arg6[%c56, %c0_81], %85 {strides = array<i32>} : memref<392x27xf32, #tpu.memory_space<vmem>>, vector<14x3xf32>,
    %87 = vector.extract_strided_slice %84 {offsets = [1, 0], sizes = [14, 3], strides = [1, 1]} : vector<16x3xf32> to vector<14x3xf32>
    %c56_82 = arith.constant 56 : index
    %c3_83 = arith.constant 3 : index
    %88 = vector.load %arg6[%c56_82, %c3_83] : memref<392x27xf32, #tpu.memory_space<vmem>>, vector<14x3xf32>
    tpu.vector_store %arg6[%c56_82, %c3_83], %87 {strides = array<i32>} : memref<392x27xf32, #tpu.memory_space<vmem>>, vector<14x3xf32>,
    %89 = vector.extract_strided_slice %84 {offsets = [2, 0], sizes = [14, 3], strides = [1, 1]} : vector<16x3xf32> to vector<14x3xf32>
    %c56_84 = arith.constant 56 : index
    %c6_85 = arith.constant 6 : index
    %90 = vector.load %arg6[%c56_84, %c6_85] : memref<392x27xf32, #tpu.memory_space<vmem>>, vector<14x3xf32>
    tpu.vector_store %arg6[%c56_84, %c6_85], %89 {strides = array<i32>} : memref<392x27xf32, #tpu.memory_space<vmem>>, vector<14x3xf32>,
    %c80_86 = arith.constant 80 : index
    %c0_87 = arith.constant 0 : index
    %91 = vector.load %arg1[%c80_86, %c0_87] : memref<512x3xf32, #tpu.memory_space<vmem>>, vector<16x3xf32>
    %92 = vector.extract_strided_slice %91 {offsets = [0, 0], sizes = [14, 3], strides = [1, 1]} : vector<16x3xf32> to vector<14x3xf32>
    %c56_88 = arith.constant 56 : index
    %c9_89 = arith.constant 9 : index
    %93 = vector.load %arg6[%c56_88, %c9_89] : memref<392x27xf32, #tpu.memory_space<vmem>>, vector<14x3xf32>
    tpu.vector_store %arg6[%c56_88, %c9_89], %92 {strides = array<i32>} : memref<392x27xf32, #tpu.memory_space<vmem>>, vector<14x3xf32>,
    %94 = vector.extract_strided_slice %91 {offsets = [1, 0], sizes = [14, 3], strides = [1, 1]} : vector<16x3xf32> to vector<14x3xf32>
    %c56_90 = arith.constant 56 : index
    %c12_91 = arith.constant 12 : index
    %95 = vector.load %arg6[%c56_90, %c12_91] : memref<392x27xf32, #tpu.memory_space<vmem>>, vector<14x3xf32>
    tpu.vector_store %arg6[%c56_90, %c12_91], %94 {strides = array<i32>} : memref<392x27xf32, #tpu.memory_space<vmem>>, vector<14x3xf32>,
    %96 = vector.extract_strided_slice %91 {offsets = [2, 0], sizes = [14, 3], strides = [1, 1]} : vector<16x3xf32> to vector<14x3xf32>
    %c56_92 = arith.constant 56 : index
    %c15_93 = arith.constant 15 : index
    %97 = vector.load %arg6[%c56_92, %c15_93] : memref<392x27xf32, #tpu.memory_space<vmem>>, vector<14x3xf32>
    tpu.vector_store %arg6[%c56_92, %c15_93], %96 {strides = array<i32>} : memref<392x27xf32, #tpu.memory_space<vmem>>, vector<14x3xf32>,
    %c96 = arith.constant 96 : index
    %c0_94 = arith.constant 0 : index
    %98 = vector.load %arg1[%c96, %c0_94] : memref<512x3xf32, #tpu.memory_space<vmem>>, vector<16x3xf32>
    %99 = vector.extract_strided_slice %98 {offsets = [0, 0], sizes = [14, 3], strides = [1, 1]} : vector<16x3xf32> to vector<14x3xf32>
    %c56_95 = arith.constant 56 : index
    %c18_96 = arith.constant 18 : index
    %100 = vector.load %arg6[%c56_95, %c18_96] : memref<392x27xf32, #tpu.memory_space<vmem>>, vector<14x3xf32>
    tpu.vector_store %arg6[%c56_95, %c18_96], %99 {strides = array<i32>} : memref<392x27xf32, #tpu.memory_space<vmem>>, vector<14x3xf32>,
    %101 = vector.extract_strided_slice %98 {offsets = [1, 0], sizes = [14, 3], strides = [1, 1]} : vector<16x3xf32> to vector<14x3xf32>
    %c56_97 = arith.constant 56 : index
    %c21_98 = arith.constant 21 : index
    %102 = vector.load %arg6[%c56_97, %c21_98] : memref<392x27xf32, #tpu.memory_space<vmem>>, vector<14x3xf32>
    tpu.vector_store %arg6[%c56_97, %c21_98], %101 {strides = array<i32>} : memref<392x27xf32, #tpu.memory_space<vmem>>, vector<14x3xf32>,
    %103 = vector.extract_strided_slice %98 {offsets = [2, 0], sizes = [14, 3], strides = [1, 1]} : vector<16x3xf32> to vector<14x3xf32>
    %c56_99 = arith.constant 56 : index
    %c24_100 = arith.constant 24 : index
    %104 = vector.load %arg6[%c56_99, %c24_100] : memref<392x27xf32, #tpu.memory_space<vmem>>, vector<14x3xf32>
    tpu.vector_store %arg6[%c56_99, %c24_100], %103 {strides = array<i32>} : memref<392x27xf32, #tpu.memory_space<vmem>>, vector<14x3xf32>,
    %c80_101 = arith.constant 80 : index
    %c0_102 = arith.constant 0 : index
    %105 = vector.load %arg1[%c80_101, %c0_102] : memref<512x3xf32, #tpu.memory_space<vmem>>, vector<16x3xf32>
    %106 = vector.extract_strided_slice %105 {offsets = [0, 0], sizes = [14, 3], strides = [1, 1]} : vector<16x3xf32> to vector<14x3xf32>
    %c70 = arith.constant 70 : index
    %c0_103 = arith.constant 0 : index
    %107 = vector.load %arg6[%c70, %c0_103] : memref<392x27xf32, #tpu.memory_space<vmem>>, vector<14x3xf32>
    tpu.vector_store %arg6[%c70, %c0_103], %106 {strides = array<i32>} : memref<392x27xf32, #tpu.memory_space<vmem>>, vector<14x3xf32>,
    %108 = vector.extract_strided_slice %105 {offsets = [1, 0], sizes = [14, 3], strides = [1, 1]} : vector<16x3xf32> to vector<14x3xf32>
    %c70_104 = arith.constant 70 : index
    %c3_105 = arith.constant 3 : index
    %109 = vector.load %arg6[%c70_104, %c3_105] : memref<392x27xf32, #tpu.memory_space<vmem>>, vector<14x3xf32>
    tpu.vector_store %arg6[%c70_104, %c3_105], %108 {strides = array<i32>} : memref<392x27xf32, #tpu.memory_space<vmem>>, vector<14x3xf32>,
    %110 = vector.extract_strided_slice %105 {offsets = [2, 0], sizes = [14, 3], strides = [1, 1]} : vector<16x3xf32> to vector<14x3xf32>
    %c70_106 = arith.constant 70 : index
    %c6_107 = arith.constant 6 : index
    %111 = vector.load %arg6[%c70_106, %c6_107] : memref<392x27xf32, #tpu.memory_space<vmem>>, vector<14x3xf32>
    tpu.vector_store %arg6[%c70_106, %c6_107], %110 {strides = array<i32>} : memref<392x27xf32, #tpu.memory_space<vmem>>, vector<14x3xf32>,
    %c96_108 = arith.constant 96 : index
    %c0_109 = arith.constant 0 : index
    %112 = vector.load %arg1[%c96_108, %c0_109] : memref<512x3xf32, #tpu.memory_space<vmem>>, vector<16x3xf32>
    %113 = vector.extract_strided_slice %112 {offsets = [0, 0], sizes = [14, 3], strides = [1, 1]} : vector<16x3xf32> to vector<14x3xf32>
    %c70_110 = arith.constant 70 : index
    %c9_111 = arith.constant 9 : index
    %114 = vector.load %arg6[%c70_110, %c9_111] : memref<392x27xf32, #tpu.memory_space<vmem>>, vector<14x3xf32>
    tpu.vector_store %arg6[%c70_110, %c9_111], %113 {strides = array<i32>} : memref<392x27xf32, #tpu.memory_space<vmem>>, vector<14x3xf32>,
    %115 = vector.extract_strided_slice %112 {offsets = [1, 0], sizes = [14, 3], strides = [1, 1]} : vector<16x3xf32> to vector<14x3xf32>
    %c70_112 = arith.constant 70 : index
    %c12_113 = arith.constant 12 : index
    %116 = vector.load %arg6[%c70_112, %c12_113] : memref<392x27xf32, #tpu.memory_space<vmem>>, vector<14x3xf32>
    tpu.vector_store %arg6[%c70_112, %c12_113], %115 {strides = array<i32>} : memref<392x27xf32, #tpu.memory_space<vmem>>, vector<14x3xf32>,
    %117 = vector.extract_strided_slice %112 {offsets = [2, 0], sizes = [14, 3], strides = [1, 1]} : vector<16x3xf32> to vector<14x3xf32>
    %c70_114 = arith.constant 70 : index
    %c15_115 = arith.constant 15 : index
    %118 = vector.load %arg6[%c70_114, %c15_115] : memref<392x27xf32, #tpu.memory_space<vmem>>, vector<14x3xf32>
    tpu.vector_store %arg6[%c70_114, %c15_115], %117 {strides = array<i32>} : memref<392x27xf32, #tpu.memory_space<vmem>>, vector<14x3xf32>,
    %c112 = arith.constant 112 : index
    %c0_116 = arith.constant 0 : index
    %119 = vector.load %arg1[%c112, %c0_116] : memref<512x3xf32, #tpu.memory_space<vmem>>, vector<16x3xf32>
    %120 = vector.extract_strided_slice %119 {offsets = [0, 0], sizes = [14, 3], strides = [1, 1]} : vector<16x3xf32> to vector<14x3xf32>
    %c70_117 = arith.constant 70 : index
    %c18_118 = arith.constant 18 : index
    %121 = vector.load %arg6[%c70_117, %c18_118] : memref<392x27xf32, #tpu.memory_space<vmem>>, vector<14x3xf32>
    tpu.vector_store %arg6[%c70_117, %c18_118], %120 {strides = array<i32>} : memref<392x27xf32, #tpu.memory_space<vmem>>, vector<14x3xf32>,
    %122 = vector.extract_strided_slice %119 {offsets = [1, 0], sizes = [14, 3], strides = [1, 1]} : vector<16x3xf32> to vector<14x3xf32>
    %c70_119 = arith.constant 70 : index
    %c21_120 = arith.constant 21 : index
    %123 = vector.load %arg6[%c70_119, %c21_120] : memref<392x27xf32, #tpu.memory_space<vmem>>, vector<14x3xf32>
    tpu.vector_store %arg6[%c70_119, %c21_120], %122 {strides = array<i32>} : memref<392x27xf32, #tpu.memory_space<vmem>>, vector<14x3xf32>,
    %124 = vector.extract_strided_slice %119 {offsets = [2, 0], sizes = [14, 3], strides = [1, 1]} : vector<16x3xf32> to vector<14x3xf32>
    %c70_121 = arith.constant 70 : index
    %c24_122 = arith.constant 24 : index
    %125 = vector.load %arg6[%c70_121, %c24_122] : memref<392x27xf32, #tpu.memory_space<vmem>>, vector<14x3xf32>
    tpu.vector_store %arg6[%c70_121, %c24_122], %124 {strides = array<i32>} : memref<392x27xf32, #tpu.memory_space<vmem>>, vector<14x3xf32>,
    %c96_123 = arith.constant 96 : index
    %c0_124 = arith.constant 0 : index
    %126 = vector.load %arg1[%c96_123, %c0_124] : memref<512x3xf32, #tpu.memory_space<vmem>>, vector<16x3xf32>
    %127 = vector.extract_strided_slice %126 {offsets = [0, 0], sizes = [14, 3], strides = [1, 1]} : vector<16x3xf32> to vector<14x3xf32>
    %c84 = arith.constant 84 : index
    %c0_125 = arith.constant 0 : index
    %128 = vector.load %arg6[%c84, %c0_125] : memref<392x27xf32, #tpu.memory_space<vmem>>, vector<14x3xf32>
    tpu.vector_store %arg6[%c84, %c0_125], %127 {strides = array<i32>} : memref<392x27xf32, #tpu.memory_space<vmem>>, vector<14x3xf32>,
    %129 = vector.extract_strided_slice %126 {offsets = [1, 0], sizes = [14, 3], strides = [1, 1]} : vector<16x3xf32> to vector<14x3xf32>
    %c84_126 = arith.constant 84 : index
    %c3_127 = arith.constant 3 : index
    %130 = vector.load %arg6[%c84_126, %c3_127] : memref<392x27xf32, #tpu.memory_space<vmem>>, vector<14x3xf32>
    tpu.vector_store %arg6[%c84_126, %c3_127], %129 {strides = array<i32>} : memref<392x27xf32, #tpu.memory_space<vmem>>, vector<14x3xf32>,
    %131 = vector.extract_strided_slice %126 {offsets = [2, 0], sizes = [14, 3], strides = [1, 1]} : vector<16x3xf32> to vector<14x3xf32>
    %c84_128 = arith.constant 84 : index
    %c6_129 = arith.constant 6 : index
    %132 = vector.load %arg6[%c84_128, %c6_129] : memref<392x27xf32, #tpu.memory_space<vmem>>, vector<14x3xf32>
    tpu.vector_store %arg6[%c84_128, %c6_129], %131 {strides = array<i32>} : memref<392x27xf32, #tpu.memory_space<vmem>>, vector<14x3xf32>,
    %c112_130 = arith.constant 112 : index
    %c0_131 = arith.constant 0 : index
    %133 = vector.load %arg1[%c112_130, %c0_131] : memref<512x3xf32, #tpu.memory_space<vmem>>, vector<16x3xf32>
    %134 = vector.extract_strided_slice %133 {offsets = [0, 0], sizes = [14, 3], strides = [1, 1]} : vector<16x3xf32> to vector<14x3xf32>
    %c84_132 = arith.constant 84 : index
    %c9_133 = arith.constant 9 : index
    %135 = vector.load %arg6[%c84_132, %c9_133] : memref<392x27xf32, #tpu.memory_space<vmem>>, vector<14x3xf32>
    tpu.vector_store %arg6[%c84_132, %c9_133], %134 {strides = array<i32>} : memref<392x27xf32, #tpu.memory_space<vmem>>, vector<14x3xf32>,
    %136 = vector.extract_strided_slice %133 {offsets = [1, 0], sizes = [14, 3], strides = [1, 1]} : vector<16x3xf32> to vector<14x3xf32>
    %c84_134 = arith.constant 84 : index
    %c12_135 = arith.constant 12 : index
    %137 = vector.load %arg6[%c84_134, %c12_135] : memref<392x27xf32, #tpu.memory_space<vmem>>, vector<14x3xf32>
    tpu.vector_store %arg6[%c84_134, %c12_135], %136 {strides = array<i32>} : memref<392x27xf32, #tpu.memory_space<vmem>>, vector<14x3xf32>,
    %138 = vector.extract_strided_slice %133 {offsets = [2, 0], sizes = [14, 3], strides = [1, 1]} : vector<16x3xf32> to vector<14x3xf32>
    %c84_136 = arith.constant 84 : index
    %c15_137 = arith.constant 15 : index
    %139 = vector.load %arg6[%c84_136, %c15_137] : memref<392x27xf32, #tpu.memory_space<vmem>>, vector<14x3xf32>
    tpu.vector_store %arg6[%c84_136, %c15_137], %138 {strides = array<i32>} : memref<392x27xf32, #tpu.memory_space<vmem>>, vector<14x3xf32>,
    %c128 = arith.constant 128 : index
    %c0_138 = arith.constant 0 : index
    %140 = vector.load %arg1[%c128, %c0_138] : memref<512x3xf32, #tpu.memory_space<vmem>>, vector<16x3xf32>
    %141 = vector.extract_strided_slice %140 {offsets = [0, 0], sizes = [14, 3], strides = [1, 1]} : vector<16x3xf32> to vector<14x3xf32>
    %c84_139 = arith.constant 84 : index
    %c18_140 = arith.constant 18 : index
    %142 = vector.load %arg6[%c84_139, %c18_140] : memref<392x27xf32, #tpu.memory_space<vmem>>, vector<14x3xf32>
    tpu.vector_store %arg6[%c84_139, %c18_140], %141 {strides = array<i32>} : memref<392x27xf32, #tpu.memory_space<vmem>>, vector<14x3xf32>,
    %143 = vector.extract_strided_slice %140 {offsets = [1, 0], sizes = [14, 3], strides = [1, 1]} : vector<16x3xf32> to vector<14x3xf32>
    %c84_141 = arith.constant 84 : index
    %c21_142 = arith.constant 21 : index
    %144 = vector.load %arg6[%c84_141, %c21_142] : memref<392x27xf32, #tpu.memory_space<vmem>>, vector<14x3xf32>
    tpu.vector_store %arg6[%c84_141, %c21_142], %143 {strides = array<i32>} : memref<392x27xf32, #tpu.memory_space<vmem>>, vector<14x3xf32>,
    %145 = vector.extract_strided_slice %140 {offsets = [2, 0], sizes = [14, 3], strides = [1, 1]} : vector<16x3xf32> to vector<14x3xf32>
    %c84_143 = arith.constant 84 : index
    %c24_144 = arith.constant 24 : index
    %146 = vector.load %arg6[%c84_143, %c24_144] : memref<392x27xf32, #tpu.memory_space<vmem>>, vector<14x3xf32>
    tpu.vector_store %arg6[%c84_143, %c24_144], %145 {strides = array<i32>} : memref<392x27xf32, #tpu.memory_space<vmem>>, vector<14x3xf32>,
    %c112_145 = arith.constant 112 : index
    %c0_146 = arith.constant 0 : index
    %147 = vector.load %arg1[%c112_145, %c0_146] : memref<512x3xf32, #tpu.memory_space<vmem>>, vector<16x3xf32>
    %148 = vector.extract_strided_slice %147 {offsets = [0, 0], sizes = [14, 3], strides = [1, 1]} : vector<16x3xf32> to vector<14x3xf32>
    %c98 = arith.constant 98 : index
    %c0_147 = arith.constant 0 : index
    %149 = vector.load %arg6[%c98, %c0_147] : memref<392x27xf32, #tpu.memory_space<vmem>>, vector<14x3xf32>
    tpu.vector_store %arg6[%c98, %c0_147], %148 {strides = array<i32>} : memref<392x27xf32, #tpu.memory_space<vmem>>, vector<14x3xf32>,
    %150 = vector.extract_strided_slice %147 {offsets = [1, 0], sizes = [14, 3], strides = [1, 1]} : vector<16x3xf32> to vector<14x3xf32>
    %c98_148 = arith.constant 98 : index
    %c3_149 = arith.constant 3 : index
    %151 = vector.load %arg6[%c98_148, %c3_149] : memref<392x27xf32, #tpu.memory_space<vmem>>, vector<14x3xf32>
    tpu.vector_store %arg6[%c98_148, %c3_149], %150 {strides = array<i32>} : memref<392x27xf32, #tpu.memory_space<vmem>>, vector<14x3xf32>,
    %152 = vector.extract_strided_slice %147 {offsets = [2, 0], sizes = [14, 3], strides = [1, 1]} : vector<16x3xf32> to vector<14x3xf32>
    %c98_150 = arith.constant 98 : index
    %c6_151 = arith.constant 6 : index
    %153 = vector.load %arg6[%c98_150, %c6_151] : memref<392x27xf32, #tpu.memory_space<vmem>>, vector<14x3xf32>
    tpu.vector_store %arg6[%c98_150, %c6_151], %152 {strides = array<i32>} : memref<392x27xf32, #tpu.memory_space<vmem>>, vector<14x3xf32>,
    %c128_152 = arith.constant 128 : index
    %c0_153 = arith.constant 0 : index
    %154 = vector.load %arg1[%c128_152, %c0_153] : memref<512x3xf32, #tpu.memory_space<vmem>>, vector<16x3xf32>
    %155 = vector.extract_strided_slice %154 {offsets = [0, 0], sizes = [14, 3], strides = [1, 1]} : vector<16x3xf32> to vector<14x3xf32>
    %c98_154 = arith.constant 98 : index
    %c9_155 = arith.constant 9 : index
    %156 = vector.load %arg6[%c98_154, %c9_155] : memref<392x27xf32, #tpu.memory_space<vmem>>, vector<14x3xf32>
    tpu.vector_store %arg6[%c98_154, %c9_155], %155 {strides = array<i32>} : memref<392x27xf32, #tpu.memory_space<vmem>>, vector<14x3xf32>,
    %157 = vector.extract_strided_slice %154 {offsets = [1, 0], sizes = [14, 3], strides = [1, 1]} : vector<16x3xf32> to vector<14x3xf32>
    %c98_156 = arith.constant 98 : index
    %c12_157 = arith.constant 12 : index
    %158 = vector.load %arg6[%c98_156, %c12_157] : memref<392x27xf32, #tpu.memory_space<vmem>>, vector<14x3xf32>
    tpu.vector_store %arg6[%c98_156, %c12_157], %157 {strides = array<i32>} : memref<392x27xf32, #tpu.memory_space<vmem>>, vector<14x3xf32>,
    %159 = vector.extract_strided_slice %154 {offsets = [2, 0], sizes = [14, 3], strides = [1, 1]} : vector<16x3xf32> to vector<14x3xf32>
    %c98_158 = arith.constant 98 : index
    %c15_159 = arith.constant 15 : index
    %160 = vector.load %arg6[%c98_158, %c15_159] : memref<392x27xf32, #tpu.memory_space<vmem>>, vector<14x3xf32>
    tpu.vector_store %arg6[%c98_158, %c15_159], %159 {strides = array<i32>} : memref<392x27xf32, #tpu.memory_space<vmem>>, vector<14x3xf32>,
    %c144 = arith.constant 144 : index
    %c0_160 = arith.constant 0 : index
    %161 = vector.load %arg1[%c144, %c0_160] : memref<512x3xf32, #tpu.memory_space<vmem>>, vector<16x3xf32>
    %162 = vector.extract_strided_slice %161 {offsets = [0, 0], sizes = [14, 3], strides = [1, 1]} : vector<16x3xf32> to vector<14x3xf32>
    %c98_161 = arith.constant 98 : index
    %c18_162 = arith.constant 18 : index
    %163 = vector.load %arg6[%c98_161, %c18_162] : memref<392x27xf32, #tpu.memory_space<vmem>>, vector<14x3xf32>
    tpu.vector_store %arg6[%c98_161, %c18_162], %162 {strides = array<i32>} : memref<392x27xf32, #tpu.memory_space<vmem>>, vector<14x3xf32>,
    %164 = vector.extract_strided_slice %161 {offsets = [1, 0], sizes = [14, 3], strides = [1, 1]} : vector<16x3xf32> to vector<14x3xf32>
    %c98_163 = arith.constant 98 : index
    %c21_164 = arith.constant 21 : index
    %165 = vector.load %arg6[%c98_163, %c21_164] : memref<392x27xf32, #tpu.memory_space<vmem>>, vector<14x3xf32>
    tpu.vector_store %arg6[%c98_163, %c21_164], %164 {strides = array<i32>} : memref<392x27xf32, #tpu.memory_space<vmem>>, vector<14x3xf32>,
    %166 = vector.extract_strided_slice %161 {offsets = [2, 0], sizes = [14, 3], strides = [1, 1]} : vector<16x3xf32> to vector<14x3xf32>
    %c98_165 = arith.constant 98 : index
    %c24_166 = arith.constant 24 : index
    %167 = vector.load %arg6[%c98_165, %c24_166] : memref<392x27xf32, #tpu.memory_space<vmem>>, vector<14x3xf32>
    tpu.vector_store %arg6[%c98_165, %c24_166], %166 {strides = array<i32>} : memref<392x27xf32, #tpu.memory_space<vmem>>, vector<14x3xf32>,
    %c128_167 = arith.constant 128 : index
    %c0_168 = arith.constant 0 : index
    %168 = vector.load %arg1[%c128_167, %c0_168] : memref<512x3xf32, #tpu.memory_space<vmem>>, vector<16x3xf32>
    %169 = vector.extract_strided_slice %168 {offsets = [0, 0], sizes = [14, 3], strides = [1, 1]} : vector<16x3xf32> to vector<14x3xf32>
    %c112_169 = arith.constant 112 : index
    %c0_170 = arith.constant 0 : index
    %170 = vector.load %arg6[%c112_169, %c0_170] : memref<392x27xf32, #tpu.memory_space<vmem>>, vector<14x3xf32>
    tpu.vector_store %arg6[%c112_169, %c0_170], %169 {strides = array<i32>} : memref<392x27xf32, #tpu.memory_space<vmem>>, vector<14x3xf32>,
    %171 = vector.extract_strided_slice %168 {offsets = [1, 0], sizes = [14, 3], strides = [1, 1]} : vector<16x3xf32> to vector<14x3xf32>
    %c112_171 = arith.constant 112 : index
    %c3_172 = arith.constant 3 : index
    %172 = vector.load %arg6[%c112_171, %c3_172] : memref<392x27xf32, #tpu.memory_space<vmem>>, vector<14x3xf32>
    tpu.vector_store %arg6[%c112_171, %c3_172], %171 {strides = array<i32>} : memref<392x27xf32, #tpu.memory_space<vmem>>, vector<14x3xf32>,
    %173 = vector.extract_strided_slice %168 {offsets = [2, 0], sizes = [14, 3], strides = [1, 1]} : vector<16x3xf32> to vector<14x3xf32>
    %c112_173 = arith.constant 112 : index
    %c6_174 = arith.constant 6 : index
    %174 = vector.load %arg6[%c112_173, %c6_174] : memref<392x27xf32, #tpu.memory_space<vmem>>, vector<14x3xf32>
    tpu.vector_store %arg6[%c112_173, %c6_174], %173 {strides = array<i32>} : memref<392x27xf32, #tpu.memory_space<vmem>>, vector<14x3xf32>,
    %c144_175 = arith.constant 144 : index
    %c0_176 = arith.constant 0 : index
    %175 = vector.load %arg1[%c144_175, %c0_176] : memref<512x3xf32, #tpu.memory_space<vmem>>, vector<16x3xf32>
    %176 = vector.extract_strided_slice %175 {offsets = [0, 0], sizes = [14, 3], strides = [1, 1]} : vector<16x3xf32> to vector<14x3xf32>
    %c112_177 = arith.constant 112 : index
    %c9_178 = arith.constant 9 : index
    %177 = vector.load %arg6[%c112_177, %c9_178] : memref<392x27xf32, #tpu.memory_space<vmem>>, vector<14x3xf32>
    tpu.vector_store %arg6[%c112_177, %c9_178], %176 {strides = array<i32>} : memref<392x27xf32, #tpu.memory_space<vmem>>, vector<14x3xf32>,
    %178 = vector.extract_strided_slice %175 {offsets = [1, 0], sizes = [14, 3], strides = [1, 1]} : vector<16x3xf32> to vector<14x3xf32>
    %c112_179 = arith.constant 112 : index
    %c12_180 = arith.constant 12 : index
    %179 = vector.load %arg6[%c112_179, %c12_180] : memref<392x27xf32, #tpu.memory_space<vmem>>, vector<14x3xf32>
    tpu.vector_store %arg6[%c112_179, %c12_180], %178 {strides = array<i32>} : memref<392x27xf32, #tpu.memory_space<vmem>>, vector<14x3xf32>,
    %180 = vector.extract_strided_slice %175 {offsets = [2, 0], sizes = [14, 3], strides = [1, 1]} : vector<16x3xf32> to vector<14x3xf32>
    %c112_181 = arith.constant 112 : index
    %c15_182 = arith.constant 15 : index
    %181 = vector.load %arg6[%c112_181, %c15_182] : memref<392x27xf32, #tpu.memory_space<vmem>>, vector<14x3xf32>
    tpu.vector_store %arg6[%c112_181, %c15_182], %180 {strides = array<i32>} : memref<392x27xf32, #tpu.memory_space<vmem>>, vector<14x3xf32>,
    %c160 = arith.constant 160 : index
    %c0_183 = arith.constant 0 : index
    %182 = vector.load %arg1[%c160, %c0_183] : memref<512x3xf32, #tpu.memory_space<vmem>>, vector<16x3xf32>
    %183 = vector.extract_strided_slice %182 {offsets = [0, 0], sizes = [14, 3], strides = [1, 1]} : vector<16x3xf32> to vector<14x3xf32>
    %c112_184 = arith.constant 112 : index
    %c18_185 = arith.constant 18 : index
    %184 = vector.load %arg6[%c112_184, %c18_185] : memref<392x27xf32, #tpu.memory_space<vmem>>, vector<14x3xf32>
    tpu.vector_store %arg6[%c112_184, %c18_185], %183 {strides = array<i32>} : memref<392x27xf32, #tpu.memory_space<vmem>>, vector<14x3xf32>,
    %185 = vector.extract_strided_slice %182 {offsets = [1, 0], sizes = [14, 3], strides = [1, 1]} : vector<16x3xf32> to vector<14x3xf32>
    %c112_186 = arith.constant 112 : index
    %c21_187 = arith.constant 21 : index
    %186 = vector.load %arg6[%c112_186, %c21_187] : memref<392x27xf32, #tpu.memory_space<vmem>>, vector<14x3xf32>
    tpu.vector_store %arg6[%c112_186, %c21_187], %185 {strides = array<i32>} : memref<392x27xf32, #tpu.memory_space<vmem>>, vector<14x3xf32>,
    %187 = vector.extract_strided_slice %182 {offsets = [2, 0], sizes = [14, 3], strides = [1, 1]} : vector<16x3xf32> to vector<14x3xf32>
    %c112_188 = arith.constant 112 : index
    %c24_189 = arith.constant 24 : index
    %188 = vector.load %arg6[%c112_188, %c24_189] : memref<392x27xf32, #tpu.memory_space<vmem>>, vector<14x3xf32>
    tpu.vector_store %arg6[%c112_188, %c24_189], %187 {strides = array<i32>} : memref<392x27xf32, #tpu.memory_space<vmem>>, vector<14x3xf32>,
    %c144_190 = arith.constant 144 : index
    %c0_191 = arith.constant 0 : index
    %189 = vector.load %arg1[%c144_190, %c0_191] : memref<512x3xf32, #tpu.memory_space<vmem>>, vector<16x3xf32>
    %190 = vector.extract_strided_slice %189 {offsets = [0, 0], sizes = [14, 3], strides = [1, 1]} : vector<16x3xf32> to vector<14x3xf32>
    %c126 = arith.constant 126 : index
    %c0_192 = arith.constant 0 : index
    %191 = vector.load %arg6[%c126, %c0_192] : memref<392x27xf32, #tpu.memory_space<vmem>>, vector<14x3xf32>
    tpu.vector_store %arg6[%c126, %c0_192], %190 {strides = array<i32>} : memref<392x27xf32, #tpu.memory_space<vmem>>, vector<14x3xf32>,
    %192 = vector.extract_strided_slice %189 {offsets = [1, 0], sizes = [14, 3], strides = [1, 1]} : vector<16x3xf32> to vector<14x3xf32>
    %c126_193 = arith.constant 126 : index
    %c3_194 = arith.constant 3 : index
    %193 = vector.load %arg6[%c126_193, %c3_194] : memref<392x27xf32, #tpu.memory_space<vmem>>, vector<14x3xf32>
    tpu.vector_store %arg6[%c126_193, %c3_194], %192 {strides = array<i32>} : memref<392x27xf32, #tpu.memory_space<vmem>>, vector<14x3xf32>,
    %194 = vector.extract_strided_slice %189 {offsets = [2, 0], sizes = [14, 3], strides = [1, 1]} : vector<16x3xf32> to vector<14x3xf32>
    %c126_195 = arith.constant 126 : index
    %c6_196 = arith.constant 6 : index
    %195 = vector.load %arg6[%c126_195, %c6_196] : memref<392x27xf32, #tpu.memory_space<vmem>>, vector<14x3xf32>
    tpu.vector_store %arg6[%c126_195, %c6_196], %194 {strides = array<i32>} : memref<392x27xf32, #tpu.memory_space<vmem>>, vector<14x3xf32>,
    %c160_197 = arith.constant 160 : index
    %c0_198 = arith.constant 0 : index
    %196 = vector.load %arg1[%c160_197, %c0_198] : memref<512x3xf32, #tpu.memory_space<vmem>>, vector<16x3xf32>
    %197 = vector.extract_strided_slice %196 {offsets = [0, 0], sizes = [14, 3], strides = [1, 1]} : vector<16x3xf32> to vector<14x3xf32>
    %c126_199 = arith.constant 126 : index
    %c9_200 = arith.constant 9 : index
    %198 = vector.load %arg6[%c126_199, %c9_200] : memref<392x27xf32, #tpu.memory_space<vmem>>, vector<14x3xf32>
    tpu.vector_store %arg6[%c126_199, %c9_200], %197 {strides = array<i32>} : memref<392x27xf32, #tpu.memory_space<vmem>>, vector<14x3xf32>,
    %199 = vector.extract_strided_slice %196 {offsets = [1, 0], sizes = [14, 3], strides = [1, 1]} : vector<16x3xf32> to vector<14x3xf32>
    %c126_201 = arith.constant 126 : index
    %c12_202 = arith.constant 12 : index
    %200 = vector.load %arg6[%c126_201, %c12_202] : memref<392x27xf32, #tpu.memory_space<vmem>>, vector<14x3xf32>
    tpu.vector_store %arg6[%c126_201, %c12_202], %199 {strides = array<i32>} : memref<392x27xf32, #tpu.memory_space<vmem>>, vector<14x3xf32>,
    %201 = vector.extract_strided_slice %196 {offsets = [2, 0], sizes = [14, 3], strides = [1, 1]} : vector<16x3xf32> to vector<14x3xf32>
    %c126_203 = arith.constant 126 : index
    %c15_204 = arith.constant 15 : index
    %202 = vector.load %arg6[%c126_203, %c15_204] : memref<392x27xf32, #tpu.memory_space<vmem>>, vector<14x3xf32>
    tpu.vector_store %arg6[%c126_203, %c15_204], %201 {strides = array<i32>} : memref<392x27xf32, #tpu.memory_space<vmem>>, vector<14x3xf32>,
    %c176 = arith.constant 176 : index
    %c0_205 = arith.constant 0 : index
    %203 = vector.load %arg1[%c176, %c0_205] : memref<512x3xf32, #tpu.memory_space<vmem>>, vector<16x3xf32>
    %204 = vector.extract_strided_slice %203 {offsets = [0, 0], sizes = [14, 3], strides = [1, 1]} : vector<16x3xf32> to vector<14x3xf32>
    %c126_206 = arith.constant 126 : index
    %c18_207 = arith.constant 18 : index
    %205 = vector.load %arg6[%c126_206, %c18_207] : memref<392x27xf32, #tpu.memory_space<vmem>>, vector<14x3xf32>
    tpu.vector_store %arg6[%c126_206, %c18_207], %204 {strides = array<i32>} : memref<392x27xf32, #tpu.memory_space<vmem>>, vector<14x3xf32>,
    %206 = vector.extract_strided_slice %203 {offsets = [1, 0], sizes = [14, 3], strides = [1, 1]} : vector<16x3xf32> to vector<14x3xf32>
    %c126_208 = arith.constant 126 : index
    %c21_209 = arith.constant 21 : index
    %207 = vector.load %arg6[%c126_208, %c21_209] : memref<392x27xf32, #tpu.memory_space<vmem>>, vector<14x3xf32>
    tpu.vector_store %arg6[%c126_208, %c21_209], %206 {strides = array<i32>} : memref<392x27xf32, #tpu.memory_space<vmem>>, vector<14x3xf32>,
    %208 = vector.extract_strided_slice %203 {offsets = [2, 0], sizes = [14, 3], strides = [1, 1]} : vector<16x3xf32> to vector<14x3xf32>
    %c126_210 = arith.constant 126 : index
    %c24_211 = arith.constant 24 : index
    %209 = vector.load %arg6[%c126_210, %c24_211] : memref<392x27xf32, #tpu.memory_space<vmem>>, vector<14x3xf32>
    tpu.vector_store %arg6[%c126_210, %c24_211], %208 {strides = array<i32>} : memref<392x27xf32, #tpu.memory_space<vmem>>, vector<14x3xf32>,
    %c160_212 = arith.constant 160 : index
    %c0_213 = arith.constant 0 : index
    %210 = vector.load %arg1[%c160_212, %c0_213] : memref<512x3xf32, #tpu.memory_space<vmem>>, vector<16x3xf32>
    %211 = vector.extract_strided_slice %210 {offsets = [0, 0], sizes = [14, 3], strides = [1, 1]} : vector<16x3xf32> to vector<14x3xf32>
    %c140 = arith.constant 140 : index
    %c0_214 = arith.constant 0 : index
    %212 = vector.load %arg6[%c140, %c0_214] : memref<392x27xf32, #tpu.memory_space<vmem>>, vector<14x3xf32>
    tpu.vector_store %arg6[%c140, %c0_214], %211 {strides = array<i32>} : memref<392x27xf32, #tpu.memory_space<vmem>>, vector<14x3xf32>,
    %213 = vector.extract_strided_slice %210 {offsets = [1, 0], sizes = [14, 3], strides = [1, 1]} : vector<16x3xf32> to vector<14x3xf32>
    %c140_215 = arith.constant 140 : index
    %c3_216 = arith.constant 3 : index
    %214 = vector.load %arg6[%c140_215, %c3_216] : memref<392x27xf32, #tpu.memory_space<vmem>>, vector<14x3xf32>
    tpu.vector_store %arg6[%c140_215, %c3_216], %213 {strides = array<i32>} : memref<392x27xf32, #tpu.memory_space<vmem>>, vector<14x3xf32>,
    %215 = vector.extract_strided_slice %210 {offsets = [2, 0], sizes = [14, 3], strides = [1, 1]} : vector<16x3xf32> to vector<14x3xf32>
    %c140_217 = arith.constant 140 : index
    %c6_218 = arith.constant 6 : index
    %216 = vector.load %arg6[%c140_217, %c6_218] : memref<392x27xf32, #tpu.memory_space<vmem>>, vector<14x3xf32>
    tpu.vector_store %arg6[%c140_217, %c6_218], %215 {strides = array<i32>} : memref<392x27xf32, #tpu.memory_space<vmem>>, vector<14x3xf32>,
    %c176_219 = arith.constant 176 : index
    %c0_220 = arith.constant 0 : index
    %217 = vector.load %arg1[%c176_219, %c0_220] : memref<512x3xf32, #tpu.memory_space<vmem>>, vector<16x3xf32>
    %218 = vector.extract_strided_slice %217 {offsets = [0, 0], sizes = [14, 3], strides = [1, 1]} : vector<16x3xf32> to vector<14x3xf32>
    %c140_221 = arith.constant 140 : index
    %c9_222 = arith.constant 9 : index
    %219 = vector.load %arg6[%c140_221, %c9_222] : memref<392x27xf32, #tpu.memory_space<vmem>>, vector<14x3xf32>
    tpu.vector_store %arg6[%c140_221, %c9_222], %218 {strides = array<i32>} : memref<392x27xf32, #tpu.memory_space<vmem>>, vector<14x3xf32>,
    %220 = vector.extract_strided_slice %217 {offsets = [1, 0], sizes = [14, 3], strides = [1, 1]} : vector<16x3xf32> to vector<14x3xf32>
    %c140_223 = arith.constant 140 : index
    %c12_224 = arith.constant 12 : index
    %221 = vector.load %arg6[%c140_223, %c12_224] : memref<392x27xf32, #tpu.memory_space<vmem>>, vector<14x3xf32>
    tpu.vector_store %arg6[%c140_223, %c12_224], %220 {strides = array<i32>} : memref<392x27xf32, #tpu.memory_space<vmem>>, vector<14x3xf32>,
    %222 = vector.extract_strided_slice %217 {offsets = [2, 0], sizes = [14, 3], strides = [1, 1]} : vector<16x3xf32> to vector<14x3xf32>
    %c140_225 = arith.constant 140 : index
    %c15_226 = arith.constant 15 : index
    %223 = vector.load %arg6[%c140_225, %c15_226] : memref<392x27xf32, #tpu.memory_space<vmem>>, vector<14x3xf32>
    tpu.vector_store %arg6[%c140_225, %c15_226], %222 {strides = array<i32>} : memref<392x27xf32, #tpu.memory_space<vmem>>, vector<14x3xf32>,
    %c192 = arith.constant 192 : index
    %c0_227 = arith.constant 0 : index
    %224 = vector.load %arg1[%c192, %c0_227] : memref<512x3xf32, #tpu.memory_space<vmem>>, vector<16x3xf32>
    %225 = vector.extract_strided_slice %224 {offsets = [0, 0], sizes = [14, 3], strides = [1, 1]} : vector<16x3xf32> to vector<14x3xf32>
    %c140_228 = arith.constant 140 : index
    %c18_229 = arith.constant 18 : index
    %226 = vector.load %arg6[%c140_228, %c18_229] : memref<392x27xf32, #tpu.memory_space<vmem>>, vector<14x3xf32>
    tpu.vector_store %arg6[%c140_228, %c18_229], %225 {strides = array<i32>} : memref<392x27xf32, #tpu.memory_space<vmem>>, vector<14x3xf32>,
    %227 = vector.extract_strided_slice %224 {offsets = [1, 0], sizes = [14, 3], strides = [1, 1]} : vector<16x3xf32> to vector<14x3xf32>
    %c140_230 = arith.constant 140 : index
    %c21_231 = arith.constant 21 : index
    %228 = vector.load %arg6[%c140_230, %c21_231] : memref<392x27xf32, #tpu.memory_space<vmem>>, vector<14x3xf32>
    tpu.vector_store %arg6[%c140_230, %c21_231], %227 {strides = array<i32>} : memref<392x27xf32, #tpu.memory_space<vmem>>, vector<14x3xf32>,
    %229 = vector.extract_strided_slice %224 {offsets = [2, 0], sizes = [14, 3], strides = [1, 1]} : vector<16x3xf32> to vector<14x3xf32>
    %c140_232 = arith.constant 140 : index
    %c24_233 = arith.constant 24 : index
    %230 = vector.load %arg6[%c140_232, %c24_233] : memref<392x27xf32, #tpu.memory_space<vmem>>, vector<14x3xf32>
    tpu.vector_store %arg6[%c140_232, %c24_233], %229 {strides = array<i32>} : memref<392x27xf32, #tpu.memory_space<vmem>>, vector<14x3xf32>,
    %c176_234 = arith.constant 176 : index
    %c0_235 = arith.constant 0 : index
    %231 = vector.load %arg1[%c176_234, %c0_235] : memref<512x3xf32, #tpu.memory_space<vmem>>, vector<16x3xf32>
    %232 = vector.extract_strided_slice %231 {offsets = [0, 0], sizes = [14, 3], strides = [1, 1]} : vector<16x3xf32> to vector<14x3xf32>
    %c154 = arith.constant 154 : index
    %c0_236 = arith.constant 0 : index
    %233 = vector.load %arg6[%c154, %c0_236] : memref<392x27xf32, #tpu.memory_space<vmem>>, vector<14x3xf32>
    tpu.vector_store %arg6[%c154, %c0_236], %232 {strides = array<i32>} : memref<392x27xf32, #tpu.memory_space<vmem>>, vector<14x3xf32>,
    %234 = vector.extract_strided_slice %231 {offsets = [1, 0], sizes = [14, 3], strides = [1, 1]} : vector<16x3xf32> to vector<14x3xf32>
    %c154_237 = arith.constant 154 : index
    %c3_238 = arith.constant 3 : index
    %235 = vector.load %arg6[%c154_237, %c3_238] : memref<392x27xf32, #tpu.memory_space<vmem>>, vector<14x3xf32>
    tpu.vector_store %arg6[%c154_237, %c3_238], %234 {strides = array<i32>} : memref<392x27xf32, #tpu.memory_space<vmem>>, vector<14x3xf32>,
    %236 = vector.extract_strided_slice %231 {offsets = [2, 0], sizes = [14, 3], strides = [1, 1]} : vector<16x3xf32> to vector<14x3xf32>
    %c154_239 = arith.constant 154 : index
    %c6_240 = arith.constant 6 : index
    %237 = vector.load %arg6[%c154_239, %c6_240] : memref<392x27xf32, #tpu.memory_space<vmem>>, vector<14x3xf32>
    tpu.vector_store %arg6[%c154_239, %c6_240], %236 {strides = array<i32>} : memref<392x27xf32, #tpu.memory_space<vmem>>, vector<14x3xf32>,
    %c192_241 = arith.constant 192 : index
    %c0_242 = arith.constant 0 : index
    %238 = vector.load %arg1[%c192_241, %c0_242] : memref<512x3xf32, #tpu.memory_space<vmem>>, vector<16x3xf32>
    %239 = vector.extract_strided_slice %238 {offsets = [0, 0], sizes = [14, 3], strides = [1, 1]} : vector<16x3xf32> to vector<14x3xf32>
    %c154_243 = arith.constant 154 : index
    %c9_244 = arith.constant 9 : index
    %240 = vector.load %arg6[%c154_243, %c9_244] : memref<392x27xf32, #tpu.memory_space<vmem>>, vector<14x3xf32>
    tpu.vector_store %arg6[%c154_243, %c9_244], %239 {strides = array<i32>} : memref<392x27xf32, #tpu.memory_space<vmem>>, vector<14x3xf32>,
    %241 = vector.extract_strided_slice %238 {offsets = [1, 0], sizes = [14, 3], strides = [1, 1]} : vector<16x3xf32> to vector<14x3xf32>
    %c154_245 = arith.constant 154 : index
    %c12_246 = arith.constant 12 : index
    %242 = vector.load %arg6[%c154_245, %c12_246] : memref<392x27xf32, #tpu.memory_space<vmem>>, vector<14x3xf32>
    tpu.vector_store %arg6[%c154_245, %c12_246], %241 {strides = array<i32>} : memref<392x27xf32, #tpu.memory_space<vmem>>, vector<14x3xf32>,
    %243 = vector.extract_strided_slice %238 {offsets = [2, 0], sizes = [14, 3], strides = [1, 1]} : vector<16x3xf32> to vector<14x3xf32>
    %c154_247 = arith.constant 154 : index
    %c15_248 = arith.constant 15 : index
    %244 = vector.load %arg6[%c154_247, %c15_248] : memref<392x27xf32, #tpu.memory_space<vmem>>, vector<14x3xf32>
    tpu.vector_store %arg6[%c154_247, %c15_248], %243 {strides = array<i32>} : memref<392x27xf32, #tpu.memory_space<vmem>>, vector<14x3xf32>,
    %c208 = arith.constant 208 : index
    %c0_249 = arith.constant 0 : index
    %245 = vector.load %arg1[%c208, %c0_249] : memref<512x3xf32, #tpu.memory_space<vmem>>, vector<16x3xf32>
    %246 = vector.extract_strided_slice %245 {offsets = [0, 0], sizes = [14, 3], strides = [1, 1]} : vector<16x3xf32> to vector<14x3xf32>
    %c154_250 = arith.constant 154 : index
    %c18_251 = arith.constant 18 : index
    %247 = vector.load %arg6[%c154_250, %c18_251] : memref<392x27xf32, #tpu.memory_space<vmem>>, vector<14x3xf32>
    tpu.vector_store %arg6[%c154_250, %c18_251], %246 {strides = array<i32>} : memref<392x27xf32, #tpu.memory_space<vmem>>, vector<14x3xf32>,
    %248 = vector.extract_strided_slice %245 {offsets = [1, 0], sizes = [14, 3], strides = [1, 1]} : vector<16x3xf32> to vector<14x3xf32>
    %c154_252 = arith.constant 154 : index
    %c21_253 = arith.constant 21 : index
    %249 = vector.load %arg6[%c154_252, %c21_253] : memref<392x27xf32, #tpu.memory_space<vmem>>, vector<14x3xf32>
    tpu.vector_store %arg6[%c154_252, %c21_253], %248 {strides = array<i32>} : memref<392x27xf32, #tpu.memory_space<vmem>>, vector<14x3xf32>,
    %250 = vector.extract_strided_slice %245 {offsets = [2, 0], sizes = [14, 3], strides = [1, 1]} : vector<16x3xf32> to vector<14x3xf32>
    %c154_254 = arith.constant 154 : index
    %c24_255 = arith.constant 24 : index
    %251 = vector.load %arg6[%c154_254, %c24_255] : memref<392x27xf32, #tpu.memory_space<vmem>>, vector<14x3xf32>
    tpu.vector_store %arg6[%c154_254, %c24_255], %250 {strides = array<i32>} : memref<392x27xf32, #tpu.memory_space<vmem>>, vector<14x3xf32>,
    %c192_256 = arith.constant 192 : index
    %c0_257 = arith.constant 0 : index
    %252 = vector.load %arg1[%c192_256, %c0_257] : memref<512x3xf32, #tpu.memory_space<vmem>>, vector<16x3xf32>
    %253 = vector.extract_strided_slice %252 {offsets = [0, 0], sizes = [14, 3], strides = [1, 1]} : vector<16x3xf32> to vector<14x3xf32>
    %c168 = arith.constant 168 : index
    %c0_258 = arith.constant 0 : index
    %254 = vector.load %arg6[%c168, %c0_258] : memref<392x27xf32, #tpu.memory_space<vmem>>, vector<14x3xf32>
    tpu.vector_store %arg6[%c168, %c0_258], %253 {strides = array<i32>} : memref<392x27xf32, #tpu.memory_space<vmem>>, vector<14x3xf32>,
    %255 = vector.extract_strided_slice %252 {offsets = [1, 0], sizes = [14, 3], strides = [1, 1]} : vector<16x3xf32> to vector<14x3xf32>
    %c168_259 = arith.constant 168 : index
    %c3_260 = arith.constant 3 : index
    %256 = vector.load %arg6[%c168_259, %c3_260] : memref<392x27xf32, #tpu.memory_space<vmem>>, vector<14x3xf32>
    tpu.vector_store %arg6[%c168_259, %c3_260], %255 {strides = array<i32>} : memref<392x27xf32, #tpu.memory_space<vmem>>, vector<14x3xf32>,
    %257 = vector.extract_strided_slice %252 {offsets = [2, 0], sizes = [14, 3], strides = [1, 1]} : vector<16x3xf32> to vector<14x3xf32>
    %c168_261 = arith.constant 168 : index
    %c6_262 = arith.constant 6 : index
    %258 = vector.load %arg6[%c168_261, %c6_262] : memref<392x27xf32, #tpu.memory_space<vmem>>, vector<14x3xf32>
    tpu.vector_store %arg6[%c168_261, %c6_262], %257 {strides = array<i32>} : memref<392x27xf32, #tpu.memory_space<vmem>>, vector<14x3xf32>,
    %c208_263 = arith.constant 208 : index
    %c0_264 = arith.constant 0 : index
    %259 = vector.load %arg1[%c208_263, %c0_264] : memref<512x3xf32, #tpu.memory_space<vmem>>, vector<16x3xf32>
    %260 = vector.extract_strided_slice %259 {offsets = [0, 0], sizes = [14, 3], strides = [1, 1]} : vector<16x3xf32> to vector<14x3xf32>
    %c168_265 = arith.constant 168 : index
    %c9_266 = arith.constant 9 : index
    %261 = vector.load %arg6[%c168_265, %c9_266] : memref<392x27xf32, #tpu.memory_space<vmem>>, vector<14x3xf32>
    tpu.vector_store %arg6[%c168_265, %c9_266], %260 {strides = array<i32>} : memref<392x27xf32, #tpu.memory_space<vmem>>, vector<14x3xf32>,
    %262 = vector.extract_strided_slice %259 {offsets = [1, 0], sizes = [14, 3], strides = [1, 1]} : vector<16x3xf32> to vector<14x3xf32>
    %c168_267 = arith.constant 168 : index
    %c12_268 = arith.constant 12 : index
    %263 = vector.load %arg6[%c168_267, %c12_268] : memref<392x27xf32, #tpu.memory_space<vmem>>, vector<14x3xf32>
    tpu.vector_store %arg6[%c168_267, %c12_268], %262 {strides = array<i32>} : memref<392x27xf32, #tpu.memory_space<vmem>>, vector<14x3xf32>,
    %264 = vector.extract_strided_slice %259 {offsets = [2, 0], sizes = [14, 3], strides = [1, 1]} : vector<16x3xf32> to vector<14x3xf32>
    %c168_269 = arith.constant 168 : index
    %c15_270 = arith.constant 15 : index
    %265 = vector.load %arg6[%c168_269, %c15_270] : memref<392x27xf32, #tpu.memory_space<vmem>>, vector<14x3xf32>
    tpu.vector_store %arg6[%c168_269, %c15_270], %264 {strides = array<i32>} : memref<392x27xf32, #tpu.memory_space<vmem>>, vector<14x3xf32>,
    %c224 = arith.constant 224 : index
    %c0_271 = arith.constant 0 : index
    %266 = vector.load %arg1[%c224, %c0_271] : memref<512x3xf32, #tpu.memory_space<vmem>>, vector<16x3xf32>
    %267 = vector.extract_strided_slice %266 {offsets = [0, 0], sizes = [14, 3], strides = [1, 1]} : vector<16x3xf32> to vector<14x3xf32>
    %c168_272 = arith.constant 168 : index
    %c18_273 = arith.constant 18 : index
    %268 = vector.load %arg6[%c168_272, %c18_273] : memref<392x27xf32, #tpu.memory_space<vmem>>, vector<14x3xf32>
    tpu.vector_store %arg6[%c168_272, %c18_273], %267 {strides = array<i32>} : memref<392x27xf32, #tpu.memory_space<vmem>>, vector<14x3xf32>,
    %269 = vector.extract_strided_slice %266 {offsets = [1, 0], sizes = [14, 3], strides = [1, 1]} : vector<16x3xf32> to vector<14x3xf32>
    %c168_274 = arith.constant 168 : index
    %c21_275 = arith.constant 21 : index
    %270 = vector.load %arg6[%c168_274, %c21_275] : memref<392x27xf32, #tpu.memory_space<vmem>>, vector<14x3xf32>
    tpu.vector_store %arg6[%c168_274, %c21_275], %269 {strides = array<i32>} : memref<392x27xf32, #tpu.memory_space<vmem>>, vector<14x3xf32>,
    %271 = vector.extract_strided_slice %266 {offsets = [2, 0], sizes = [14, 3], strides = [1, 1]} : vector<16x3xf32> to vector<14x3xf32>
    %c168_276 = arith.constant 168 : index
    %c24_277 = arith.constant 24 : index
    %272 = vector.load %arg6[%c168_276, %c24_277] : memref<392x27xf32, #tpu.memory_space<vmem>>, vector<14x3xf32>
    tpu.vector_store %arg6[%c168_276, %c24_277], %271 {strides = array<i32>} : memref<392x27xf32, #tpu.memory_space<vmem>>, vector<14x3xf32>,
    %c208_278 = arith.constant 208 : index
    %c0_279 = arith.constant 0 : index
    %273 = vector.load %arg1[%c208_278, %c0_279] : memref<512x3xf32, #tpu.memory_space<vmem>>, vector<16x3xf32>
    %274 = vector.extract_strided_slice %273 {offsets = [0, 0], sizes = [14, 3], strides = [1, 1]} : vector<16x3xf32> to vector<14x3xf32>
    %c182 = arith.constant 182 : index
    %c0_280 = arith.constant 0 : index
    %275 = vector.load %arg6[%c182, %c0_280] : memref<392x27xf32, #tpu.memory_space<vmem>>, vector<14x3xf32>
    tpu.vector_store %arg6[%c182, %c0_280], %274 {strides = array<i32>} : memref<392x27xf32, #tpu.memory_space<vmem>>, vector<14x3xf32>,
    %276 = vector.extract_strided_slice %273 {offsets = [1, 0], sizes = [14, 3], strides = [1, 1]} : vector<16x3xf32> to vector<14x3xf32>
    %c182_281 = arith.constant 182 : index
    %c3_282 = arith.constant 3 : index
    %277 = vector.load %arg6[%c182_281, %c3_282] : memref<392x27xf32, #tpu.memory_space<vmem>>, vector<14x3xf32>
    tpu.vector_store %arg6[%c182_281, %c3_282], %276 {strides = array<i32>} : memref<392x27xf32, #tpu.memory_space<vmem>>, vector<14x3xf32>,
    %278 = vector.extract_strided_slice %273 {offsets = [2, 0], sizes = [14, 3], strides = [1, 1]} : vector<16x3xf32> to vector<14x3xf32>
    %c182_283 = arith.constant 182 : index
    %c6_284 = arith.constant 6 : index
    %279 = vector.load %arg6[%c182_283, %c6_284] : memref<392x27xf32, #tpu.memory_space<vmem>>, vector<14x3xf32>
    tpu.vector_store %arg6[%c182_283, %c6_284], %278 {strides = array<i32>} : memref<392x27xf32, #tpu.memory_space<vmem>>, vector<14x3xf32>,
    %c224_285 = arith.constant 224 : index
    %c0_286 = arith.constant 0 : index
    %280 = vector.load %arg1[%c224_285, %c0_286] : memref<512x3xf32, #tpu.memory_space<vmem>>, vector<16x3xf32>
    %281 = vector.extract_strided_slice %280 {offsets = [0, 0], sizes = [14, 3], strides = [1, 1]} : vector<16x3xf32> to vector<14x3xf32>
    %c182_287 = arith.constant 182 : index
    %c9_288 = arith.constant 9 : index
    %282 = vector.load %arg6[%c182_287, %c9_288] : memref<392x27xf32, #tpu.memory_space<vmem>>, vector<14x3xf32>
    tpu.vector_store %arg6[%c182_287, %c9_288], %281 {strides = array<i32>} : memref<392x27xf32, #tpu.memory_space<vmem>>, vector<14x3xf32>,
    %283 = vector.extract_strided_slice %280 {offsets = [1, 0], sizes = [14, 3], strides = [1, 1]} : vector<16x3xf32> to vector<14x3xf32>
    %c182_289 = arith.constant 182 : index
    %c12_290 = arith.constant 12 : index
    %284 = vector.load %arg6[%c182_289, %c12_290] : memref<392x27xf32, #tpu.memory_space<vmem>>, vector<14x3xf32>
    tpu.vector_store %arg6[%c182_289, %c12_290], %283 {strides = array<i32>} : memref<392x27xf32, #tpu.memory_space<vmem>>, vector<14x3xf32>,
    %285 = vector.extract_strided_slice %280 {offsets = [2, 0], sizes = [14, 3], strides = [1, 1]} : vector<16x3xf32> to vector<14x3xf32>
    %c182_291 = arith.constant 182 : index
    %c15_292 = arith.constant 15 : index
    %286 = vector.load %arg6[%c182_291, %c15_292] : memref<392x27xf32, #tpu.memory_space<vmem>>, vector<14x3xf32>
    tpu.vector_store %arg6[%c182_291, %c15_292], %285 {strides = array<i32>} : memref<392x27xf32, #tpu.memory_space<vmem>>, vector<14x3xf32>,
    %c240 = arith.constant 240 : index
    %c0_293 = arith.constant 0 : index
    %287 = vector.load %arg1[%c240, %c0_293] : memref<512x3xf32, #tpu.memory_space<vmem>>, vector<16x3xf32>
    %288 = vector.extract_strided_slice %287 {offsets = [0, 0], sizes = [14, 3], strides = [1, 1]} : vector<16x3xf32> to vector<14x3xf32>
    %c182_294 = arith.constant 182 : index
    %c18_295 = arith.constant 18 : index
    %289 = vector.load %arg6[%c182_294, %c18_295] : memref<392x27xf32, #tpu.memory_space<vmem>>, vector<14x3xf32>
    tpu.vector_store %arg6[%c182_294, %c18_295], %288 {strides = array<i32>} : memref<392x27xf32, #tpu.memory_space<vmem>>, vector<14x3xf32>,
    %290 = vector.extract_strided_slice %287 {offsets = [1, 0], sizes = [14, 3], strides = [1, 1]} : vector<16x3xf32> to vector<14x3xf32>
    %c182_296 = arith.constant 182 : index
    %c21_297 = arith.constant 21 : index
    %291 = vector.load %arg6[%c182_296, %c21_297] : memref<392x27xf32, #tpu.memory_space<vmem>>, vector<14x3xf32>
    tpu.vector_store %arg6[%c182_296, %c21_297], %290 {strides = array<i32>} : memref<392x27xf32, #tpu.memory_space<vmem>>, vector<14x3xf32>,
    %292 = vector.extract_strided_slice %287 {offsets = [2, 0], sizes = [14, 3], strides = [1, 1]} : vector<16x3xf32> to vector<14x3xf32>
    %c182_298 = arith.constant 182 : index
    %c24_299 = arith.constant 24 : index
    %293 = vector.load %arg6[%c182_298, %c24_299] : memref<392x27xf32, #tpu.memory_space<vmem>>, vector<14x3xf32>
    tpu.vector_store %arg6[%c182_298, %c24_299], %292 {strides = array<i32>} : memref<392x27xf32, #tpu.memory_space<vmem>>, vector<14x3xf32>,
    %c256 = arith.constant 256 : index
    %c0_300 = arith.constant 0 : index
    %294 = vector.load %arg1[%c256, %c0_300] : memref<512x3xf32, #tpu.memory_space<vmem>>, vector<16x3xf32>
    %295 = vector.extract_strided_slice %294 {offsets = [0, 0], sizes = [14, 3], strides = [1, 1]} : vector<16x3xf32> to vector<14x3xf32>
    %c196 = arith.constant 196 : index
    %c0_301 = arith.constant 0 : index
    %296 = vector.load %arg6[%c196, %c0_301] : memref<392x27xf32, #tpu.memory_space<vmem>>, vector<14x3xf32>
    tpu.vector_store %arg6[%c196, %c0_301], %295 {strides = array<i32>} : memref<392x27xf32, #tpu.memory_space<vmem>>, vector<14x3xf32>,
    %297 = vector.extract_strided_slice %294 {offsets = [1, 0], sizes = [14, 3], strides = [1, 1]} : vector<16x3xf32> to vector<14x3xf32>
    %c196_302 = arith.constant 196 : index
    %c3_303 = arith.constant 3 : index
    %298 = vector.load %arg6[%c196_302, %c3_303] : memref<392x27xf32, #tpu.memory_space<vmem>>, vector<14x3xf32>
    tpu.vector_store %arg6[%c196_302, %c3_303], %297 {strides = array<i32>} : memref<392x27xf32, #tpu.memory_space<vmem>>, vector<14x3xf32>,
    %299 = vector.extract_strided_slice %294 {offsets = [2, 0], sizes = [14, 3], strides = [1, 1]} : vector<16x3xf32> to vector<14x3xf32>
    %c196_304 = arith.constant 196 : index
    %c6_305 = arith.constant 6 : index
    %300 = vector.load %arg6[%c196_304, %c6_305] : memref<392x27xf32, #tpu.memory_space<vmem>>, vector<14x3xf32>
    tpu.vector_store %arg6[%c196_304, %c6_305], %299 {strides = array<i32>} : memref<392x27xf32, #tpu.memory_space<vmem>>, vector<14x3xf32>,
    %c272 = arith.constant 272 : index
    %c0_306 = arith.constant 0 : index
    %301 = vector.load %arg1[%c272, %c0_306] : memref<512x3xf32, #tpu.memory_space<vmem>>, vector<16x3xf32>
    %302 = vector.extract_strided_slice %301 {offsets = [0, 0], sizes = [14, 3], strides = [1, 1]} : vector<16x3xf32> to vector<14x3xf32>
    %c196_307 = arith.constant 196 : index
    %c9_308 = arith.constant 9 : index
    %303 = vector.load %arg6[%c196_307, %c9_308] : memref<392x27xf32, #tpu.memory_space<vmem>>, vector<14x3xf32>
    tpu.vector_store %arg6[%c196_307, %c9_308], %302 {strides = array<i32>} : memref<392x27xf32, #tpu.memory_space<vmem>>, vector<14x3xf32>,
    %304 = vector.extract_strided_slice %301 {offsets = [1, 0], sizes = [14, 3], strides = [1, 1]} : vector<16x3xf32> to vector<14x3xf32>
    %c196_309 = arith.constant 196 : index
    %c12_310 = arith.constant 12 : index
    %305 = vector.load %arg6[%c196_309, %c12_310] : memref<392x27xf32, #tpu.memory_space<vmem>>, vector<14x3xf32>
    tpu.vector_store %arg6[%c196_309, %c12_310], %304 {strides = array<i32>} : memref<392x27xf32, #tpu.memory_space<vmem>>, vector<14x3xf32>,
    %306 = vector.extract_strided_slice %301 {offsets = [2, 0], sizes = [14, 3], strides = [1, 1]} : vector<16x3xf32> to vector<14x3xf32>
    %c196_311 = arith.constant 196 : index
    %c15_312 = arith.constant 15 : index
    %307 = vector.load %arg6[%c196_311, %c15_312] : memref<392x27xf32, #tpu.memory_space<vmem>>, vector<14x3xf32>
    tpu.vector_store %arg6[%c196_311, %c15_312], %306 {strides = array<i32>} : memref<392x27xf32, #tpu.memory_space<vmem>>, vector<14x3xf32>,
    %c288 = arith.constant 288 : index
    %c0_313 = arith.constant 0 : index
    %308 = vector.load %arg1[%c288, %c0_313] : memref<512x3xf32, #tpu.memory_space<vmem>>, vector<16x3xf32>
    %309 = vector.extract_strided_slice %308 {offsets = [0, 0], sizes = [14, 3], strides = [1, 1]} : vector<16x3xf32> to vector<14x3xf32>
    %c196_314 = arith.constant 196 : index
    %c18_315 = arith.constant 18 : index
    %310 = vector.load %arg6[%c196_314, %c18_315] : memref<392x27xf32, #tpu.memory_space<vmem>>, vector<14x3xf32>
    tpu.vector_store %arg6[%c196_314, %c18_315], %309 {strides = array<i32>} : memref<392x27xf32, #tpu.memory_space<vmem>>, vector<14x3xf32>,
    %311 = vector.extract_strided_slice %308 {offsets = [1, 0], sizes = [14, 3], strides = [1, 1]} : vector<16x3xf32> to vector<14x3xf32>
    %c196_316 = arith.constant 196 : index
    %c21_317 = arith.constant 21 : index
    %312 = vector.load %arg6[%c196_316, %c21_317] : memref<392x27xf32, #tpu.memory_space<vmem>>, vector<14x3xf32>
    tpu.vector_store %arg6[%c196_316, %c21_317], %311 {strides = array<i32>} : memref<392x27xf32, #tpu.memory_space<vmem>>, vector<14x3xf32>,
    %313 = vector.extract_strided_slice %308 {offsets = [2, 0], sizes = [14, 3], strides = [1, 1]} : vector<16x3xf32> to vector<14x3xf32>
    %c196_318 = arith.constant 196 : index
    %c24_319 = arith.constant 24 : index
    %314 = vector.load %arg6[%c196_318, %c24_319] : memref<392x27xf32, #tpu.memory_space<vmem>>, vector<14x3xf32>
    tpu.vector_store %arg6[%c196_318, %c24_319], %313 {strides = array<i32>} : memref<392x27xf32, #tpu.memory_space<vmem>>, vector<14x3xf32>,
    %c272_320 = arith.constant 272 : index
    %c0_321 = arith.constant 0 : index
    %315 = vector.load %arg1[%c272_320, %c0_321] : memref<512x3xf32, #tpu.memory_space<vmem>>, vector<16x3xf32>
    %316 = vector.extract_strided_slice %315 {offsets = [0, 0], sizes = [14, 3], strides = [1, 1]} : vector<16x3xf32> to vector<14x3xf32>
    %c210 = arith.constant 210 : index
    %c0_322 = arith.constant 0 : index
    %317 = vector.load %arg6[%c210, %c0_322] : memref<392x27xf32, #tpu.memory_space<vmem>>, vector<14x3xf32>
    tpu.vector_store %arg6[%c210, %c0_322], %316 {strides = array<i32>} : memref<392x27xf32, #tpu.memory_space<vmem>>, vector<14x3xf32>,
    %318 = vector.extract_strided_slice %315 {offsets = [1, 0], sizes = [14, 3], strides = [1, 1]} : vector<16x3xf32> to vector<14x3xf32>
    %c210_323 = arith.constant 210 : index
    %c3_324 = arith.constant 3 : index
    %319 = vector.load %arg6[%c210_323, %c3_324] : memref<392x27xf32, #tpu.memory_space<vmem>>, vector<14x3xf32>
    tpu.vector_store %arg6[%c210_323, %c3_324], %318 {strides = array<i32>} : memref<392x27xf32, #tpu.memory_space<vmem>>, vector<14x3xf32>,
    %320 = vector.extract_strided_slice %315 {offsets = [2, 0], sizes = [14, 3], strides = [1, 1]} : vector<16x3xf32> to vector<14x3xf32>
    %c210_325 = arith.constant 210 : index
    %c6_326 = arith.constant 6 : index
    %321 = vector.load %arg6[%c210_325, %c6_326] : memref<392x27xf32, #tpu.memory_space<vmem>>, vector<14x3xf32>
    tpu.vector_store %arg6[%c210_325, %c6_326], %320 {strides = array<i32>} : memref<392x27xf32, #tpu.memory_space<vmem>>, vector<14x3xf32>,
    %c288_327 = arith.constant 288 : index
    %c0_328 = arith.constant 0 : index
    %322 = vector.load %arg1[%c288_327, %c0_328] : memref<512x3xf32, #tpu.memory_space<vmem>>, vector<16x3xf32>
    %323 = vector.extract_strided_slice %322 {offsets = [0, 0], sizes = [14, 3], strides = [1, 1]} : vector<16x3xf32> to vector<14x3xf32>
    %c210_329 = arith.constant 210 : index
    %c9_330 = arith.constant 9 : index
    %324 = vector.load %arg6[%c210_329, %c9_330] : memref<392x27xf32, #tpu.memory_space<vmem>>, vector<14x3xf32>
    tpu.vector_store %arg6[%c210_329, %c9_330], %323 {strides = array<i32>} : memref<392x27xf32, #tpu.memory_space<vmem>>, vector<14x3xf32>,
    %325 = vector.extract_strided_slice %322 {offsets = [1, 0], sizes = [14, 3], strides = [1, 1]} : vector<16x3xf32> to vector<14x3xf32>
    %c210_331 = arith.constant 210 : index
    %c12_332 = arith.constant 12 : index
    %326 = vector.load %arg6[%c210_331, %c12_332] : memref<392x27xf32, #tpu.memory_space<vmem>>, vector<14x3xf32>
    tpu.vector_store %arg6[%c210_331, %c12_332], %325 {strides = array<i32>} : memref<392x27xf32, #tpu.memory_space<vmem>>, vector<14x3xf32>,
    %327 = vector.extract_strided_slice %322 {offsets = [2, 0], sizes = [14, 3], strides = [1, 1]} : vector<16x3xf32> to vector<14x3xf32>
    %c210_333 = arith.constant 210 : index
    %c15_334 = arith.constant 15 : index
    %328 = vector.load %arg6[%c210_333, %c15_334] : memref<392x27xf32, #tpu.memory_space<vmem>>, vector<14x3xf32>
    tpu.vector_store %arg6[%c210_333, %c15_334], %327 {strides = array<i32>} : memref<392x27xf32, #tpu.memory_space<vmem>>, vector<14x3xf32>,
    %c304 = arith.constant 304 : index
    %c0_335 = arith.constant 0 : index
    %329 = vector.load %arg1[%c304, %c0_335] : memref<512x3xf32, #tpu.memory_space<vmem>>, vector<16x3xf32>
    %330 = vector.extract_strided_slice %329 {offsets = [0, 0], sizes = [14, 3], strides = [1, 1]} : vector<16x3xf32> to vector<14x3xf32>
    %c210_336 = arith.constant 210 : index
    %c18_337 = arith.constant 18 : index
    %331 = vector.load %arg6[%c210_336, %c18_337] : memref<392x27xf32, #tpu.memory_space<vmem>>, vector<14x3xf32>
    tpu.vector_store %arg6[%c210_336, %c18_337], %330 {strides = array<i32>} : memref<392x27xf32, #tpu.memory_space<vmem>>, vector<14x3xf32>,
    %332 = vector.extract_strided_slice %329 {offsets = [1, 0], sizes = [14, 3], strides = [1, 1]} : vector<16x3xf32> to vector<14x3xf32>
    %c210_338 = arith.constant 210 : index
    %c21_339 = arith.constant 21 : index
    %333 = vector.load %arg6[%c210_338, %c21_339] : memref<392x27xf32, #tpu.memory_space<vmem>>, vector<14x3xf32>
    tpu.vector_store %arg6[%c210_338, %c21_339], %332 {strides = array<i32>} : memref<392x27xf32, #tpu.memory_space<vmem>>, vector<14x3xf32>,
    %334 = vector.extract_strided_slice %329 {offsets = [2, 0], sizes = [14, 3], strides = [1, 1]} : vector<16x3xf32> to vector<14x3xf32>
    %c210_340 = arith.constant 210 : index
    %c24_341 = arith.constant 24 : index
    %335 = vector.load %arg6[%c210_340, %c24_341] : memref<392x27xf32, #tpu.memory_space<vmem>>, vector<14x3xf32>
    tpu.vector_store %arg6[%c210_340, %c24_341], %334 {strides = array<i32>} : memref<392x27xf32, #tpu.memory_space<vmem>>, vector<14x3xf32>,
    %c288_342 = arith.constant 288 : index
    %c0_343 = arith.constant 0 : index
    %336 = vector.load %arg1[%c288_342, %c0_343] : memref<512x3xf32, #tpu.memory_space<vmem>>, vector<16x3xf32>
    %337 = vector.extract_strided_slice %336 {offsets = [0, 0], sizes = [14, 3], strides = [1, 1]} : vector<16x3xf32> to vector<14x3xf32>
    %c224_344 = arith.constant 224 : index
    %c0_345 = arith.constant 0 : index
    %338 = vector.load %arg6[%c224_344, %c0_345] : memref<392x27xf32, #tpu.memory_space<vmem>>, vector<14x3xf32>
    tpu.vector_store %arg6[%c224_344, %c0_345], %337 {strides = array<i32>} : memref<392x27xf32, #tpu.memory_space<vmem>>, vector<14x3xf32>,
    %339 = vector.extract_strided_slice %336 {offsets = [1, 0], sizes = [14, 3], strides = [1, 1]} : vector<16x3xf32> to vector<14x3xf32>
    %c224_346 = arith.constant 224 : index
    %c3_347 = arith.constant 3 : index
    %340 = vector.load %arg6[%c224_346, %c3_347] : memref<392x27xf32, #tpu.memory_space<vmem>>, vector<14x3xf32>
    tpu.vector_store %arg6[%c224_346, %c3_347], %339 {strides = array<i32>} : memref<392x27xf32, #tpu.memory_space<vmem>>, vector<14x3xf32>,
    %341 = vector.extract_strided_slice %336 {offsets = [2, 0], sizes = [14, 3], strides = [1, 1]} : vector<16x3xf32> to vector<14x3xf32>
    %c224_348 = arith.constant 224 : index
    %c6_349 = arith.constant 6 : index
    %342 = vector.load %arg6[%c224_348, %c6_349] : memref<392x27xf32, #tpu.memory_space<vmem>>, vector<14x3xf32>
    tpu.vector_store %arg6[%c224_348, %c6_349], %341 {strides = array<i32>} : memref<392x27xf32, #tpu.memory_space<vmem>>, vector<14x3xf32>,
    %c304_350 = arith.constant 304 : index
    %c0_351 = arith.constant 0 : index
    %343 = vector.load %arg1[%c304_350, %c0_351] : memref<512x3xf32, #tpu.memory_space<vmem>>, vector<16x3xf32>
    %344 = vector.extract_strided_slice %343 {offsets = [0, 0], sizes = [14, 3], strides = [1, 1]} : vector<16x3xf32> to vector<14x3xf32>
    %c224_352 = arith.constant 224 : index
    %c9_353 = arith.constant 9 : index
    %345 = vector.load %arg6[%c224_352, %c9_353] : memref<392x27xf32, #tpu.memory_space<vmem>>, vector<14x3xf32>
    tpu.vector_store %arg6[%c224_352, %c9_353], %344 {strides = array<i32>} : memref<392x27xf32, #tpu.memory_space<vmem>>, vector<14x3xf32>,
    %346 = vector.extract_strided_slice %343 {offsets = [1, 0], sizes = [14, 3], strides = [1, 1]} : vector<16x3xf32> to vector<14x3xf32>
    %c224_354 = arith.constant 224 : index
    %c12_355 = arith.constant 12 : index
    %347 = vector.load %arg6[%c224_354, %c12_355] : memref<392x27xf32, #tpu.memory_space<vmem>>, vector<14x3xf32>
    tpu.vector_store %arg6[%c224_354, %c12_355], %346 {strides = array<i32>} : memref<392x27xf32, #tpu.memory_space<vmem>>, vector<14x3xf32>,
    %348 = vector.extract_strided_slice %343 {offsets = [2, 0], sizes = [14, 3], strides = [1, 1]} : vector<16x3xf32> to vector<14x3xf32>
    %c224_356 = arith.constant 224 : index
    %c15_357 = arith.constant 15 : index
    %349 = vector.load %arg6[%c224_356, %c15_357] : memref<392x27xf32, #tpu.memory_space<vmem>>, vector<14x3xf32>
    tpu.vector_store %arg6[%c224_356, %c15_357], %348 {strides = array<i32>} : memref<392x27xf32, #tpu.memory_space<vmem>>, vector<14x3xf32>,
    %c320 = arith.constant 320 : index
    %c0_358 = arith.constant 0 : index
    %350 = vector.load %arg1[%c320, %c0_358] : memref<512x3xf32, #tpu.memory_space<vmem>>, vector<16x3xf32>
    %351 = vector.extract_strided_slice %350 {offsets = [0, 0], sizes = [14, 3], strides = [1, 1]} : vector<16x3xf32> to vector<14x3xf32>
    %c224_359 = arith.constant 224 : index
    %c18_360 = arith.constant 18 : index
    %352 = vector.load %arg6[%c224_359, %c18_360] : memref<392x27xf32, #tpu.memory_space<vmem>>, vector<14x3xf32>
    tpu.vector_store %arg6[%c224_359, %c18_360], %351 {strides = array<i32>} : memref<392x27xf32, #tpu.memory_space<vmem>>, vector<14x3xf32>,
    %353 = vector.extract_strided_slice %350 {offsets = [1, 0], sizes = [14, 3], strides = [1, 1]} : vector<16x3xf32> to vector<14x3xf32>
    %c224_361 = arith.constant 224 : index
    %c21_362 = arith.constant 21 : index
    %354 = vector.load %arg6[%c224_361, %c21_362] : memref<392x27xf32, #tpu.memory_space<vmem>>, vector<14x3xf32>
    tpu.vector_store %arg6[%c224_361, %c21_362], %353 {strides = array<i32>} : memref<392x27xf32, #tpu.memory_space<vmem>>, vector<14x3xf32>,
    %355 = vector.extract_strided_slice %350 {offsets = [2, 0], sizes = [14, 3], strides = [1, 1]} : vector<16x3xf32> to vector<14x3xf32>
    %c224_363 = arith.constant 224 : index
    %c24_364 = arith.constant 24 : index
    %356 = vector.load %arg6[%c224_363, %c24_364] : memref<392x27xf32, #tpu.memory_space<vmem>>, vector<14x3xf32>
    tpu.vector_store %arg6[%c224_363, %c24_364], %355 {strides = array<i32>} : memref<392x27xf32, #tpu.memory_space<vmem>>, vector<14x3xf32>,
    %c304_365 = arith.constant 304 : index
    %c0_366 = arith.constant 0 : index
    %357 = vector.load %arg1[%c304_365, %c0_366] : memref<512x3xf32, #tpu.memory_space<vmem>>, vector<16x3xf32>
    %358 = vector.extract_strided_slice %357 {offsets = [0, 0], sizes = [14, 3], strides = [1, 1]} : vector<16x3xf32> to vector<14x3xf32>
    %c238 = arith.constant 238 : index
    %c0_367 = arith.constant 0 : index
    %359 = vector.load %arg6[%c238, %c0_367] : memref<392x27xf32, #tpu.memory_space<vmem>>, vector<14x3xf32>
    tpu.vector_store %arg6[%c238, %c0_367], %358 {strides = array<i32>} : memref<392x27xf32, #tpu.memory_space<vmem>>, vector<14x3xf32>,
    %360 = vector.extract_strided_slice %357 {offsets = [1, 0], sizes = [14, 3], strides = [1, 1]} : vector<16x3xf32> to vector<14x3xf32>
    %c238_368 = arith.constant 238 : index
    %c3_369 = arith.constant 3 : index
    %361 = vector.load %arg6[%c238_368, %c3_369] : memref<392x27xf32, #tpu.memory_space<vmem>>, vector<14x3xf32>
    tpu.vector_store %arg6[%c238_368, %c3_369], %360 {strides = array<i32>} : memref<392x27xf32, #tpu.memory_space<vmem>>, vector<14x3xf32>,
    %362 = vector.extract_strided_slice %357 {offsets = [2, 0], sizes = [14, 3], strides = [1, 1]} : vector<16x3xf32> to vector<14x3xf32>
    %c238_370 = arith.constant 238 : index
    %c6_371 = arith.constant 6 : index
    %363 = vector.load %arg6[%c238_370, %c6_371] : memref<392x27xf32, #tpu.memory_space<vmem>>, vector<14x3xf32>
    tpu.vector_store %arg6[%c238_370, %c6_371], %362 {strides = array<i32>} : memref<392x27xf32, #tpu.memory_space<vmem>>, vector<14x3xf32>,
    %c320_372 = arith.constant 320 : index
    %c0_373 = arith.constant 0 : index
    %364 = vector.load %arg1[%c320_372, %c0_373] : memref<512x3xf32, #tpu.memory_space<vmem>>, vector<16x3xf32>
    %365 = vector.extract_strided_slice %364 {offsets = [0, 0], sizes = [14, 3], strides = [1, 1]} : vector<16x3xf32> to vector<14x3xf32>
    %c238_374 = arith.constant 238 : index
    %c9_375 = arith.constant 9 : index
    %366 = vector.load %arg6[%c238_374, %c9_375] : memref<392x27xf32, #tpu.memory_space<vmem>>, vector<14x3xf32>
    tpu.vector_store %arg6[%c238_374, %c9_375], %365 {strides = array<i32>} : memref<392x27xf32, #tpu.memory_space<vmem>>, vector<14x3xf32>,
    %367 = vector.extract_strided_slice %364 {offsets = [1, 0], sizes = [14, 3], strides = [1, 1]} : vector<16x3xf32> to vector<14x3xf32>
    %c238_376 = arith.constant 238 : index
    %c12_377 = arith.constant 12 : index
    %368 = vector.load %arg6[%c238_376, %c12_377] : memref<392x27xf32, #tpu.memory_space<vmem>>, vector<14x3xf32>
    tpu.vector_store %arg6[%c238_376, %c12_377], %367 {strides = array<i32>} : memref<392x27xf32, #tpu.memory_space<vmem>>, vector<14x3xf32>,
    %369 = vector.extract_strided_slice %364 {offsets = [2, 0], sizes = [14, 3], strides = [1, 1]} : vector<16x3xf32> to vector<14x3xf32>
    %c238_378 = arith.constant 238 : index
    %c15_379 = arith.constant 15 : index
    %370 = vector.load %arg6[%c238_378, %c15_379] : memref<392x27xf32, #tpu.memory_space<vmem>>, vector<14x3xf32>
    tpu.vector_store %arg6[%c238_378, %c15_379], %369 {strides = array<i32>} : memref<392x27xf32, #tpu.memory_space<vmem>>, vector<14x3xf32>,
    %c336 = arith.constant 336 : index
    %c0_380 = arith.constant 0 : index
    %371 = vector.load %arg1[%c336, %c0_380] : memref<512x3xf32, #tpu.memory_space<vmem>>, vector<16x3xf32>
    %372 = vector.extract_strided_slice %371 {offsets = [0, 0], sizes = [14, 3], strides = [1, 1]} : vector<16x3xf32> to vector<14x3xf32>
    %c238_381 = arith.constant 238 : index
    %c18_382 = arith.constant 18 : index
    %373 = vector.load %arg6[%c238_381, %c18_382] : memref<392x27xf32, #tpu.memory_space<vmem>>, vector<14x3xf32>
    tpu.vector_store %arg6[%c238_381, %c18_382], %372 {strides = array<i32>} : memref<392x27xf32, #tpu.memory_space<vmem>>, vector<14x3xf32>,
    %374 = vector.extract_strided_slice %371 {offsets = [1, 0], sizes = [14, 3], strides = [1, 1]} : vector<16x3xf32> to vector<14x3xf32>
    %c238_383 = arith.constant 238 : index
    %c21_384 = arith.constant 21 : index
    %375 = vector.load %arg6[%c238_383, %c21_384] : memref<392x27xf32, #tpu.memory_space<vmem>>, vector<14x3xf32>
    tpu.vector_store %arg6[%c238_383, %c21_384], %374 {strides = array<i32>} : memref<392x27xf32, #tpu.memory_space<vmem>>, vector<14x3xf32>,
    %376 = vector.extract_strided_slice %371 {offsets = [2, 0], sizes = [14, 3], strides = [1, 1]} : vector<16x3xf32> to vector<14x3xf32>
    %c238_385 = arith.constant 238 : index
    %c24_386 = arith.constant 24 : index
    %377 = vector.load %arg6[%c238_385, %c24_386] : memref<392x27xf32, #tpu.memory_space<vmem>>, vector<14x3xf32>
    tpu.vector_store %arg6[%c238_385, %c24_386], %376 {strides = array<i32>} : memref<392x27xf32, #tpu.memory_space<vmem>>, vector<14x3xf32>,
    %c320_387 = arith.constant 320 : index
    %c0_388 = arith.constant 0 : index
    %378 = vector.load %arg1[%c320_387, %c0_388] : memref<512x3xf32, #tpu.memory_space<vmem>>, vector<16x3xf32>
    %379 = vector.extract_strided_slice %378 {offsets = [0, 0], sizes = [14, 3], strides = [1, 1]} : vector<16x3xf32> to vector<14x3xf32>
    %c252 = arith.constant 252 : index
    %c0_389 = arith.constant 0 : index
    %380 = vector.load %arg6[%c252, %c0_389] : memref<392x27xf32, #tpu.memory_space<vmem>>, vector<14x3xf32>
    tpu.vector_store %arg6[%c252, %c0_389], %379 {strides = array<i32>} : memref<392x27xf32, #tpu.memory_space<vmem>>, vector<14x3xf32>,
    %381 = vector.extract_strided_slice %378 {offsets = [1, 0], sizes = [14, 3], strides = [1, 1]} : vector<16x3xf32> to vector<14x3xf32>
    %c252_390 = arith.constant 252 : index
    %c3_391 = arith.constant 3 : index
    %382 = vector.load %arg6[%c252_390, %c3_391] : memref<392x27xf32, #tpu.memory_space<vmem>>, vector<14x3xf32>
    tpu.vector_store %arg6[%c252_390, %c3_391], %381 {strides = array<i32>} : memref<392x27xf32, #tpu.memory_space<vmem>>, vector<14x3xf32>,
    %383 = vector.extract_strided_slice %378 {offsets = [2, 0], sizes = [14, 3], strides = [1, 1]} : vector<16x3xf32> to vector<14x3xf32>
    %c252_392 = arith.constant 252 : index
    %c6_393 = arith.constant 6 : index
    %384 = vector.load %arg6[%c252_392, %c6_393] : memref<392x27xf32, #tpu.memory_space<vmem>>, vector<14x3xf32>
    tpu.vector_store %arg6[%c252_392, %c6_393], %383 {strides = array<i32>} : memref<392x27xf32, #tpu.memory_space<vmem>>, vector<14x3xf32>,
    %c336_394 = arith.constant 336 : index
    %c0_395 = arith.constant 0 : index
    %385 = vector.load %arg1[%c336_394, %c0_395] : memref<512x3xf32, #tpu.memory_space<vmem>>, vector<16x3xf32>
    %386 = vector.extract_strided_slice %385 {offsets = [0, 0], sizes = [14, 3], strides = [1, 1]} : vector<16x3xf32> to vector<14x3xf32>
    %c252_396 = arith.constant 252 : index
    %c9_397 = arith.constant 9 : index
    %387 = vector.load %arg6[%c252_396, %c9_397] : memref<392x27xf32, #tpu.memory_space<vmem>>, vector<14x3xf32>
    tpu.vector_store %arg6[%c252_396, %c9_397], %386 {strides = array<i32>} : memref<392x27xf32, #tpu.memory_space<vmem>>, vector<14x3xf32>,
    %388 = vector.extract_strided_slice %385 {offsets = [1, 0], sizes = [14, 3], strides = [1, 1]} : vector<16x3xf32> to vector<14x3xf32>
    %c252_398 = arith.constant 252 : index
    %c12_399 = arith.constant 12 : index
    %389 = vector.load %arg6[%c252_398, %c12_399] : memref<392x27xf32, #tpu.memory_space<vmem>>, vector<14x3xf32>
    tpu.vector_store %arg6[%c252_398, %c12_399], %388 {strides = array<i32>} : memref<392x27xf32, #tpu.memory_space<vmem>>, vector<14x3xf32>,
    %390 = vector.extract_strided_slice %385 {offsets = [2, 0], sizes = [14, 3], strides = [1, 1]} : vector<16x3xf32> to vector<14x3xf32>
    %c252_400 = arith.constant 252 : index
    %c15_401 = arith.constant 15 : index
    %391 = vector.load %arg6[%c252_400, %c15_401] : memref<392x27xf32, #tpu.memory_space<vmem>>, vector<14x3xf32>
    tpu.vector_store %arg6[%c252_400, %c15_401], %390 {strides = array<i32>} : memref<392x27xf32, #tpu.memory_space<vmem>>, vector<14x3xf32>,
    %c352 = arith.constant 352 : index
    %c0_402 = arith.constant 0 : index
    %392 = vector.load %arg1[%c352, %c0_402] : memref<512x3xf32, #tpu.memory_space<vmem>>, vector<16x3xf32>
    %393 = vector.extract_strided_slice %392 {offsets = [0, 0], sizes = [14, 3], strides = [1, 1]} : vector<16x3xf32> to vector<14x3xf32>
    %c252_403 = arith.constant 252 : index
    %c18_404 = arith.constant 18 : index
    %394 = vector.load %arg6[%c252_403, %c18_404] : memref<392x27xf32, #tpu.memory_space<vmem>>, vector<14x3xf32>
    tpu.vector_store %arg6[%c252_403, %c18_404], %393 {strides = array<i32>} : memref<392x27xf32, #tpu.memory_space<vmem>>, vector<14x3xf32>,
    %395 = vector.extract_strided_slice %392 {offsets = [1, 0], sizes = [14, 3], strides = [1, 1]} : vector<16x3xf32> to vector<14x3xf32>
    %c252_405 = arith.constant 252 : index
    %c21_406 = arith.constant 21 : index
    %396 = vector.load %arg6[%c252_405, %c21_406] : memref<392x27xf32, #tpu.memory_space<vmem>>, vector<14x3xf32>
    tpu.vector_store %arg6[%c252_405, %c21_406], %395 {strides = array<i32>} : memref<392x27xf32, #tpu.memory_space<vmem>>, vector<14x3xf32>,
    %397 = vector.extract_strided_slice %392 {offsets = [2, 0], sizes = [14, 3], strides = [1, 1]} : vector<16x3xf32> to vector<14x3xf32>
    %c252_407 = arith.constant 252 : index
    %c24_408 = arith.constant 24 : index
    %398 = vector.load %arg6[%c252_407, %c24_408] : memref<392x27xf32, #tpu.memory_space<vmem>>, vector<14x3xf32>
    tpu.vector_store %arg6[%c252_407, %c24_408], %397 {strides = array<i32>} : memref<392x27xf32, #tpu.memory_space<vmem>>, vector<14x3xf32>,
    %c336_409 = arith.constant 336 : index
    %c0_410 = arith.constant 0 : index
    %399 = vector.load %arg1[%c336_409, %c0_410] : memref<512x3xf32, #tpu.memory_space<vmem>>, vector<16x3xf32>
    %400 = vector.extract_strided_slice %399 {offsets = [0, 0], sizes = [14, 3], strides = [1, 1]} : vector<16x3xf32> to vector<14x3xf32>
    %c266 = arith.constant 266 : index
    %c0_411 = arith.constant 0 : index
    %401 = vector.load %arg6[%c266, %c0_411] : memref<392x27xf32, #tpu.memory_space<vmem>>, vector<14x3xf32>
    tpu.vector_store %arg6[%c266, %c0_411], %400 {strides = array<i32>} : memref<392x27xf32, #tpu.memory_space<vmem>>, vector<14x3xf32>,
    %402 = vector.extract_strided_slice %399 {offsets = [1, 0], sizes = [14, 3], strides = [1, 1]} : vector<16x3xf32> to vector<14x3xf32>
    %c266_412 = arith.constant 266 : index
    %c3_413 = arith.constant 3 : index
    %403 = vector.load %arg6[%c266_412, %c3_413] : memref<392x27xf32, #tpu.memory_space<vmem>>, vector<14x3xf32>
    tpu.vector_store %arg6[%c266_412, %c3_413], %402 {strides = array<i32>} : memref<392x27xf32, #tpu.memory_space<vmem>>, vector<14x3xf32>,
    %404 = vector.extract_strided_slice %399 {offsets = [2, 0], sizes = [14, 3], strides = [1, 1]} : vector<16x3xf32> to vector<14x3xf32>
    %c266_414 = arith.constant 266 : index
    %c6_415 = arith.constant 6 : index
    %405 = vector.load %arg6[%c266_414, %c6_415] : memref<392x27xf32, #tpu.memory_space<vmem>>, vector<14x3xf32>
    tpu.vector_store %arg6[%c266_414, %c6_415], %404 {strides = array<i32>} : memref<392x27xf32, #tpu.memory_space<vmem>>, vector<14x3xf32>,
    %c352_416 = arith.constant 352 : index
    %c0_417 = arith.constant 0 : index
    %406 = vector.load %arg1[%c352_416, %c0_417] : memref<512x3xf32, #tpu.memory_space<vmem>>, vector<16x3xf32>
    %407 = vector.extract_strided_slice %406 {offsets = [0, 0], sizes = [14, 3], strides = [1, 1]} : vector<16x3xf32> to vector<14x3xf32>
    %c266_418 = arith.constant 266 : index
    %c9_419 = arith.constant 9 : index
    %408 = vector.load %arg6[%c266_418, %c9_419] : memref<392x27xf32, #tpu.memory_space<vmem>>, vector<14x3xf32>
    tpu.vector_store %arg6[%c266_418, %c9_419], %407 {strides = array<i32>} : memref<392x27xf32, #tpu.memory_space<vmem>>, vector<14x3xf32>,
    %409 = vector.extract_strided_slice %406 {offsets = [1, 0], sizes = [14, 3], strides = [1, 1]} : vector<16x3xf32> to vector<14x3xf32>
    %c266_420 = arith.constant 266 : index
    %c12_421 = arith.constant 12 : index
    %410 = vector.load %arg6[%c266_420, %c12_421] : memref<392x27xf32, #tpu.memory_space<vmem>>, vector<14x3xf32>
    tpu.vector_store %arg6[%c266_420, %c12_421], %409 {strides = array<i32>} : memref<392x27xf32, #tpu.memory_space<vmem>>, vector<14x3xf32>,
    %411 = vector.extract_strided_slice %406 {offsets = [2, 0], sizes = [14, 3], strides = [1, 1]} : vector<16x3xf32> to vector<14x3xf32>
    %c266_422 = arith.constant 266 : index
    %c15_423 = arith.constant 15 : index
    %412 = vector.load %arg6[%c266_422, %c15_423] : memref<392x27xf32, #tpu.memory_space<vmem>>, vector<14x3xf32>
    tpu.vector_store %arg6[%c266_422, %c15_423], %411 {strides = array<i32>} : memref<392x27xf32, #tpu.memory_space<vmem>>, vector<14x3xf32>,
    %c368 = arith.constant 368 : index
    %c0_424 = arith.constant 0 : index
    %413 = vector.load %arg1[%c368, %c0_424] : memref<512x3xf32, #tpu.memory_space<vmem>>, vector<16x3xf32>
    %414 = vector.extract_strided_slice %413 {offsets = [0, 0], sizes = [14, 3], strides = [1, 1]} : vector<16x3xf32> to vector<14x3xf32>
    %c266_425 = arith.constant 266 : index
    %c18_426 = arith.constant 18 : index
    %415 = vector.load %arg6[%c266_425, %c18_426] : memref<392x27xf32, #tpu.memory_space<vmem>>, vector<14x3xf32>
    tpu.vector_store %arg6[%c266_425, %c18_426], %414 {strides = array<i32>} : memref<392x27xf32, #tpu.memory_space<vmem>>, vector<14x3xf32>,
    %416 = vector.extract_strided_slice %413 {offsets = [1, 0], sizes = [14, 3], strides = [1, 1]} : vector<16x3xf32> to vector<14x3xf32>
    %c266_427 = arith.constant 266 : index
    %c21_428 = arith.constant 21 : index
    %417 = vector.load %arg6[%c266_427, %c21_428] : memref<392x27xf32, #tpu.memory_space<vmem>>, vector<14x3xf32>
    tpu.vector_store %arg6[%c266_427, %c21_428], %416 {strides = array<i32>} : memref<392x27xf32, #tpu.memory_space<vmem>>, vector<14x3xf32>,
    %418 = vector.extract_strided_slice %413 {offsets = [2, 0], sizes = [14, 3], strides = [1, 1]} : vector<16x3xf32> to vector<14x3xf32>
    %c266_429 = arith.constant 266 : index
    %c24_430 = arith.constant 24 : index
    %419 = vector.load %arg6[%c266_429, %c24_430] : memref<392x27xf32, #tpu.memory_space<vmem>>, vector<14x3xf32>
    tpu.vector_store %arg6[%c266_429, %c24_430], %418 {strides = array<i32>} : memref<392x27xf32, #tpu.memory_space<vmem>>, vector<14x3xf32>,
    %c352_431 = arith.constant 352 : index
    %c0_432 = arith.constant 0 : index
    %420 = vector.load %arg1[%c352_431, %c0_432] : memref<512x3xf32, #tpu.memory_space<vmem>>, vector<16x3xf32>
    %421 = vector.extract_strided_slice %420 {offsets = [0, 0], sizes = [14, 3], strides = [1, 1]} : vector<16x3xf32> to vector<14x3xf32>
    %c280 = arith.constant 280 : index
    %c0_433 = arith.constant 0 : index
    %422 = vector.load %arg6[%c280, %c0_433] : memref<392x27xf32, #tpu.memory_space<vmem>>, vector<14x3xf32>
    tpu.vector_store %arg6[%c280, %c0_433], %421 {strides = array<i32>} : memref<392x27xf32, #tpu.memory_space<vmem>>, vector<14x3xf32>,
    %423 = vector.extract_strided_slice %420 {offsets = [1, 0], sizes = [14, 3], strides = [1, 1]} : vector<16x3xf32> to vector<14x3xf32>
    %c280_434 = arith.constant 280 : index
    %c3_435 = arith.constant 3 : index
    %424 = vector.load %arg6[%c280_434, %c3_435] : memref<392x27xf32, #tpu.memory_space<vmem>>, vector<14x3xf32>
    tpu.vector_store %arg6[%c280_434, %c3_435], %423 {strides = array<i32>} : memref<392x27xf32, #tpu.memory_space<vmem>>, vector<14x3xf32>,
    %425 = vector.extract_strided_slice %420 {offsets = [2, 0], sizes = [14, 3], strides = [1, 1]} : vector<16x3xf32> to vector<14x3xf32>
    %c280_436 = arith.constant 280 : index
    %c6_437 = arith.constant 6 : index
    %426 = vector.load %arg6[%c280_436, %c6_437] : memref<392x27xf32, #tpu.memory_space<vmem>>, vector<14x3xf32>
    tpu.vector_store %arg6[%c280_436, %c6_437], %425 {strides = array<i32>} : memref<392x27xf32, #tpu.memory_space<vmem>>, vector<14x3xf32>,
    %c368_438 = arith.constant 368 : index
    %c0_439 = arith.constant 0 : index
    %427 = vector.load %arg1[%c368_438, %c0_439] : memref<512x3xf32, #tpu.memory_space<vmem>>, vector<16x3xf32>
    %428 = vector.extract_strided_slice %427 {offsets = [0, 0], sizes = [14, 3], strides = [1, 1]} : vector<16x3xf32> to vector<14x3xf32>
    %c280_440 = arith.constant 280 : index
    %c9_441 = arith.constant 9 : index
    %429 = vector.load %arg6[%c280_440, %c9_441] : memref<392x27xf32, #tpu.memory_space<vmem>>, vector<14x3xf32>
    tpu.vector_store %arg6[%c280_440, %c9_441], %428 {strides = array<i32>} : memref<392x27xf32, #tpu.memory_space<vmem>>, vector<14x3xf32>,
    %430 = vector.extract_strided_slice %427 {offsets = [1, 0], sizes = [14, 3], strides = [1, 1]} : vector<16x3xf32> to vector<14x3xf32>
    %c280_442 = arith.constant 280 : index
    %c12_443 = arith.constant 12 : index
    %431 = vector.load %arg6[%c280_442, %c12_443] : memref<392x27xf32, #tpu.memory_space<vmem>>, vector<14x3xf32>
    tpu.vector_store %arg6[%c280_442, %c12_443], %430 {strides = array<i32>} : memref<392x27xf32, #tpu.memory_space<vmem>>, vector<14x3xf32>,
    %432 = vector.extract_strided_slice %427 {offsets = [2, 0], sizes = [14, 3], strides = [1, 1]} : vector<16x3xf32> to vector<14x3xf32>
    %c280_444 = arith.constant 280 : index
    %c15_445 = arith.constant 15 : index
    %433 = vector.load %arg6[%c280_444, %c15_445] : memref<392x27xf32, #tpu.memory_space<vmem>>, vector<14x3xf32>
    tpu.vector_store %arg6[%c280_444, %c15_445], %432 {strides = array<i32>} : memref<392x27xf32, #tpu.memory_space<vmem>>, vector<14x3xf32>,
    %c384 = arith.constant 384 : index
    %c0_446 = arith.constant 0 : index
    %434 = vector.load %arg1[%c384, %c0_446] : memref<512x3xf32, #tpu.memory_space<vmem>>, vector<16x3xf32>
    %435 = vector.extract_strided_slice %434 {offsets = [0, 0], sizes = [14, 3], strides = [1, 1]} : vector<16x3xf32> to vector<14x3xf32>
    %c280_447 = arith.constant 280 : index
    %c18_448 = arith.constant 18 : index
    %436 = vector.load %arg6[%c280_447, %c18_448] : memref<392x27xf32, #tpu.memory_space<vmem>>, vector<14x3xf32>
    tpu.vector_store %arg6[%c280_447, %c18_448], %435 {strides = array<i32>} : memref<392x27xf32, #tpu.memory_space<vmem>>, vector<14x3xf32>,
    %437 = vector.extract_strided_slice %434 {offsets = [1, 0], sizes = [14, 3], strides = [1, 1]} : vector<16x3xf32> to vector<14x3xf32>
    %c280_449 = arith.constant 280 : index
    %c21_450 = arith.constant 21 : index
    %438 = vector.load %arg6[%c280_449, %c21_450] : memref<392x27xf32, #tpu.memory_space<vmem>>, vector<14x3xf32>
    tpu.vector_store %arg6[%c280_449, %c21_450], %437 {strides = array<i32>} : memref<392x27xf32, #tpu.memory_space<vmem>>, vector<14x3xf32>,
    %439 = vector.extract_strided_slice %434 {offsets = [2, 0], sizes = [14, 3], strides = [1, 1]} : vector<16x3xf32> to vector<14x3xf32>
    %c280_451 = arith.constant 280 : index
    %c24_452 = arith.constant 24 : index
    %440 = vector.load %arg6[%c280_451, %c24_452] : memref<392x27xf32, #tpu.memory_space<vmem>>, vector<14x3xf32>
    tpu.vector_store %arg6[%c280_451, %c24_452], %439 {strides = array<i32>} : memref<392x27xf32, #tpu.memory_space<vmem>>, vector<14x3xf32>,
    %c368_453 = arith.constant 368 : index
    %c0_454 = arith.constant 0 : index
    %441 = vector.load %arg1[%c368_453, %c0_454] : memref<512x3xf32, #tpu.memory_space<vmem>>, vector<16x3xf32>
    %442 = vector.extract_strided_slice %441 {offsets = [0, 0], sizes = [14, 3], strides = [1, 1]} : vector<16x3xf32> to vector<14x3xf32>
    %c294 = arith.constant 294 : index
    %c0_455 = arith.constant 0 : index
    %443 = vector.load %arg6[%c294, %c0_455] : memref<392x27xf32, #tpu.memory_space<vmem>>, vector<14x3xf32>
    tpu.vector_store %arg6[%c294, %c0_455], %442 {strides = array<i32>} : memref<392x27xf32, #tpu.memory_space<vmem>>, vector<14x3xf32>,
    %444 = vector.extract_strided_slice %441 {offsets = [1, 0], sizes = [14, 3], strides = [1, 1]} : vector<16x3xf32> to vector<14x3xf32>
    %c294_456 = arith.constant 294 : index
    %c3_457 = arith.constant 3 : index
    %445 = vector.load %arg6[%c294_456, %c3_457] : memref<392x27xf32, #tpu.memory_space<vmem>>, vector<14x3xf32>
    tpu.vector_store %arg6[%c294_456, %c3_457], %444 {strides = array<i32>} : memref<392x27xf32, #tpu.memory_space<vmem>>, vector<14x3xf32>,
    %446 = vector.extract_strided_slice %441 {offsets = [2, 0], sizes = [14, 3], strides = [1, 1]} : vector<16x3xf32> to vector<14x3xf32>
    %c294_458 = arith.constant 294 : index
    %c6_459 = arith.constant 6 : index
    %447 = vector.load %arg6[%c294_458, %c6_459] : memref<392x27xf32, #tpu.memory_space<vmem>>, vector<14x3xf32>
    tpu.vector_store %arg6[%c294_458, %c6_459], %446 {strides = array<i32>} : memref<392x27xf32, #tpu.memory_space<vmem>>, vector<14x3xf32>,
    %c384_460 = arith.constant 384 : index
    %c0_461 = arith.constant 0 : index
    %448 = vector.load %arg1[%c384_460, %c0_461] : memref<512x3xf32, #tpu.memory_space<vmem>>, vector<16x3xf32>
    %449 = vector.extract_strided_slice %448 {offsets = [0, 0], sizes = [14, 3], strides = [1, 1]} : vector<16x3xf32> to vector<14x3xf32>
    %c294_462 = arith.constant 294 : index
    %c9_463 = arith.constant 9 : index
    %450 = vector.load %arg6[%c294_462, %c9_463] : memref<392x27xf32, #tpu.memory_space<vmem>>, vector<14x3xf32>
    tpu.vector_store %arg6[%c294_462, %c9_463], %449 {strides = array<i32>} : memref<392x27xf32, #tpu.memory_space<vmem>>, vector<14x3xf32>,
    %451 = vector.extract_strided_slice %448 {offsets = [1, 0], sizes = [14, 3], strides = [1, 1]} : vector<16x3xf32> to vector<14x3xf32>
    %c294_464 = arith.constant 294 : index
    %c12_465 = arith.constant 12 : index
    %452 = vector.load %arg6[%c294_464, %c12_465] : memref<392x27xf32, #tpu.memory_space<vmem>>, vector<14x3xf32>
    tpu.vector_store %arg6[%c294_464, %c12_465], %451 {strides = array<i32>} : memref<392x27xf32, #tpu.memory_space<vmem>>, vector<14x3xf32>,
    %453 = vector.extract_strided_slice %448 {offsets = [2, 0], sizes = [14, 3], strides = [1, 1]} : vector<16x3xf32> to vector<14x3xf32>
    %c294_466 = arith.constant 294 : index
    %c15_467 = arith.constant 15 : index
    %454 = vector.load %arg6[%c294_466, %c15_467] : memref<392x27xf32, #tpu.memory_space<vmem>>, vector<14x3xf32>
    tpu.vector_store %arg6[%c294_466, %c15_467], %453 {strides = array<i32>} : memref<392x27xf32, #tpu.memory_space<vmem>>, vector<14x3xf32>,
    %c400 = arith.constant 400 : index
    %c0_468 = arith.constant 0 : index
    %455 = vector.load %arg1[%c400, %c0_468] : memref<512x3xf32, #tpu.memory_space<vmem>>, vector<16x3xf32>
    %456 = vector.extract_strided_slice %455 {offsets = [0, 0], sizes = [14, 3], strides = [1, 1]} : vector<16x3xf32> to vector<14x3xf32>
    %c294_469 = arith.constant 294 : index
    %c18_470 = arith.constant 18 : index
    %457 = vector.load %arg6[%c294_469, %c18_470] : memref<392x27xf32, #tpu.memory_space<vmem>>, vector<14x3xf32>
    tpu.vector_store %arg6[%c294_469, %c18_470], %456 {strides = array<i32>} : memref<392x27xf32, #tpu.memory_space<vmem>>, vector<14x3xf32>,
    %458 = vector.extract_strided_slice %455 {offsets = [1, 0], sizes = [14, 3], strides = [1, 1]} : vector<16x3xf32> to vector<14x3xf32>
    %c294_471 = arith.constant 294 : index
    %c21_472 = arith.constant 21 : index
    %459 = vector.load %arg6[%c294_471, %c21_472] : memref<392x27xf32, #tpu.memory_space<vmem>>, vector<14x3xf32>
    tpu.vector_store %arg6[%c294_471, %c21_472], %458 {strides = array<i32>} : memref<392x27xf32, #tpu.memory_space<vmem>>, vector<14x3xf32>,
    %460 = vector.extract_strided_slice %455 {offsets = [2, 0], sizes = [14, 3], strides = [1, 1]} : vector<16x3xf32> to vector<14x3xf32>
    %c294_473 = arith.constant 294 : index
    %c24_474 = arith.constant 24 : index
    %461 = vector.load %arg6[%c294_473, %c24_474] : memref<392x27xf32, #tpu.memory_space<vmem>>, vector<14x3xf32>
    tpu.vector_store %arg6[%c294_473, %c24_474], %460 {strides = array<i32>} : memref<392x27xf32, #tpu.memory_space<vmem>>, vector<14x3xf32>,
    %c384_475 = arith.constant 384 : index
    %c0_476 = arith.constant 0 : index
    %462 = vector.load %arg1[%c384_475, %c0_476] : memref<512x3xf32, #tpu.memory_space<vmem>>, vector<16x3xf32>
    %463 = vector.extract_strided_slice %462 {offsets = [0, 0], sizes = [14, 3], strides = [1, 1]} : vector<16x3xf32> to vector<14x3xf32>
    %c308 = arith.constant 308 : index
    %c0_477 = arith.constant 0 : index
    %464 = vector.load %arg6[%c308, %c0_477] : memref<392x27xf32, #tpu.memory_space<vmem>>, vector<14x3xf32>
    tpu.vector_store %arg6[%c308, %c0_477], %463 {strides = array<i32>} : memref<392x27xf32, #tpu.memory_space<vmem>>, vector<14x3xf32>,
    %465 = vector.extract_strided_slice %462 {offsets = [1, 0], sizes = [14, 3], strides = [1, 1]} : vector<16x3xf32> to vector<14x3xf32>
    %c308_478 = arith.constant 308 : index
    %c3_479 = arith.constant 3 : index
    %466 = vector.load %arg6[%c308_478, %c3_479] : memref<392x27xf32, #tpu.memory_space<vmem>>, vector<14x3xf32>
    tpu.vector_store %arg6[%c308_478, %c3_479], %465 {strides = array<i32>} : memref<392x27xf32, #tpu.memory_space<vmem>>, vector<14x3xf32>,
    %467 = vector.extract_strided_slice %462 {offsets = [2, 0], sizes = [14, 3], strides = [1, 1]} : vector<16x3xf32> to vector<14x3xf32>
    %c308_480 = arith.constant 308 : index
    %c6_481 = arith.constant 6 : index
    %468 = vector.load %arg6[%c308_480, %c6_481] : memref<392x27xf32, #tpu.memory_space<vmem>>, vector<14x3xf32>
    tpu.vector_store %arg6[%c308_480, %c6_481], %467 {strides = array<i32>} : memref<392x27xf32, #tpu.memory_space<vmem>>, vector<14x3xf32>,
    %c400_482 = arith.constant 400 : index
    %c0_483 = arith.constant 0 : index
    %469 = vector.load %arg1[%c400_482, %c0_483] : memref<512x3xf32, #tpu.memory_space<vmem>>, vector<16x3xf32>
    %470 = vector.extract_strided_slice %469 {offsets = [0, 0], sizes = [14, 3], strides = [1, 1]} : vector<16x3xf32> to vector<14x3xf32>
    %c308_484 = arith.constant 308 : index
    %c9_485 = arith.constant 9 : index
    %471 = vector.load %arg6[%c308_484, %c9_485] : memref<392x27xf32, #tpu.memory_space<vmem>>, vector<14x3xf32>
    tpu.vector_store %arg6[%c308_484, %c9_485], %470 {strides = array<i32>} : memref<392x27xf32, #tpu.memory_space<vmem>>, vector<14x3xf32>,
    %472 = vector.extract_strided_slice %469 {offsets = [1, 0], sizes = [14, 3], strides = [1, 1]} : vector<16x3xf32> to vector<14x3xf32>
    %c308_486 = arith.constant 308 : index
    %c12_487 = arith.constant 12 : index
    %473 = vector.load %arg6[%c308_486, %c12_487] : memref<392x27xf32, #tpu.memory_space<vmem>>, vector<14x3xf32>
    tpu.vector_store %arg6[%c308_486, %c12_487], %472 {strides = array<i32>} : memref<392x27xf32, #tpu.memory_space<vmem>>, vector<14x3xf32>,
    %474 = vector.extract_strided_slice %469 {offsets = [2, 0], sizes = [14, 3], strides = [1, 1]} : vector<16x3xf32> to vector<14x3xf32>
    %c308_488 = arith.constant 308 : index
    %c15_489 = arith.constant 15 : index
    %475 = vector.load %arg6[%c308_488, %c15_489] : memref<392x27xf32, #tpu.memory_space<vmem>>, vector<14x3xf32>
    tpu.vector_store %arg6[%c308_488, %c15_489], %474 {strides = array<i32>} : memref<392x27xf32, #tpu.memory_space<vmem>>, vector<14x3xf32>,
    %c416 = arith.constant 416 : index
    %c0_490 = arith.constant 0 : index
    %476 = vector.load %arg1[%c416, %c0_490] : memref<512x3xf32, #tpu.memory_space<vmem>>, vector<16x3xf32>
    %477 = vector.extract_strided_slice %476 {offsets = [0, 0], sizes = [14, 3], strides = [1, 1]} : vector<16x3xf32> to vector<14x3xf32>
    %c308_491 = arith.constant 308 : index
    %c18_492 = arith.constant 18 : index
    %478 = vector.load %arg6[%c308_491, %c18_492] : memref<392x27xf32, #tpu.memory_space<vmem>>, vector<14x3xf32>
    tpu.vector_store %arg6[%c308_491, %c18_492], %477 {strides = array<i32>} : memref<392x27xf32, #tpu.memory_space<vmem>>, vector<14x3xf32>,
    %479 = vector.extract_strided_slice %476 {offsets = [1, 0], sizes = [14, 3], strides = [1, 1]} : vector<16x3xf32> to vector<14x3xf32>
    %c308_493 = arith.constant 308 : index
    %c21_494 = arith.constant 21 : index
    %480 = vector.load %arg6[%c308_493, %c21_494] : memref<392x27xf32, #tpu.memory_space<vmem>>, vector<14x3xf32>
    tpu.vector_store %arg6[%c308_493, %c21_494], %479 {strides = array<i32>} : memref<392x27xf32, #tpu.memory_space<vmem>>, vector<14x3xf32>,
    %481 = vector.extract_strided_slice %476 {offsets = [2, 0], sizes = [14, 3], strides = [1, 1]} : vector<16x3xf32> to vector<14x3xf32>
    %c308_495 = arith.constant 308 : index
    %c24_496 = arith.constant 24 : index
    %482 = vector.load %arg6[%c308_495, %c24_496] : memref<392x27xf32, #tpu.memory_space<vmem>>, vector<14x3xf32>
    tpu.vector_store %arg6[%c308_495, %c24_496], %481 {strides = array<i32>} : memref<392x27xf32, #tpu.memory_space<vmem>>, vector<14x3xf32>,
    %c400_497 = arith.constant 400 : index
    %c0_498 = arith.constant 0 : index
    %483 = vector.load %arg1[%c400_497, %c0_498] : memref<512x3xf32, #tpu.memory_space<vmem>>, vector<16x3xf32>
    %484 = vector.extract_strided_slice %483 {offsets = [0, 0], sizes = [14, 3], strides = [1, 1]} : vector<16x3xf32> to vector<14x3xf32>
    %c322 = arith.constant 322 : index
    %c0_499 = arith.constant 0 : index
    %485 = vector.load %arg6[%c322, %c0_499] : memref<392x27xf32, #tpu.memory_space<vmem>>, vector<14x3xf32>
    tpu.vector_store %arg6[%c322, %c0_499], %484 {strides = array<i32>} : memref<392x27xf32, #tpu.memory_space<vmem>>, vector<14x3xf32>,
    %486 = vector.extract_strided_slice %483 {offsets = [1, 0], sizes = [14, 3], strides = [1, 1]} : vector<16x3xf32> to vector<14x3xf32>
    %c322_500 = arith.constant 322 : index
    %c3_501 = arith.constant 3 : index
    %487 = vector.load %arg6[%c322_500, %c3_501] : memref<392x27xf32, #tpu.memory_space<vmem>>, vector<14x3xf32>
    tpu.vector_store %arg6[%c322_500, %c3_501], %486 {strides = array<i32>} : memref<392x27xf32, #tpu.memory_space<vmem>>, vector<14x3xf32>,
    %488 = vector.extract_strided_slice %483 {offsets = [2, 0], sizes = [14, 3], strides = [1, 1]} : vector<16x3xf32> to vector<14x3xf32>
    %c322_502 = arith.constant 322 : index
    %c6_503 = arith.constant 6 : index
    %489 = vector.load %arg6[%c322_502, %c6_503] : memref<392x27xf32, #tpu.memory_space<vmem>>, vector<14x3xf32>
    tpu.vector_store %arg6[%c322_502, %c6_503], %488 {strides = array<i32>} : memref<392x27xf32, #tpu.memory_space<vmem>>, vector<14x3xf32>,
    %c416_504 = arith.constant 416 : index
    %c0_505 = arith.constant 0 : index
    %490 = vector.load %arg1[%c416_504, %c0_505] : memref<512x3xf32, #tpu.memory_space<vmem>>, vector<16x3xf32>
    %491 = vector.extract_strided_slice %490 {offsets = [0, 0], sizes = [14, 3], strides = [1, 1]} : vector<16x3xf32> to vector<14x3xf32>
    %c322_506 = arith.constant 322 : index
    %c9_507 = arith.constant 9 : index
    %492 = vector.load %arg6[%c322_506, %c9_507] : memref<392x27xf32, #tpu.memory_space<vmem>>, vector<14x3xf32>
    tpu.vector_store %arg6[%c322_506, %c9_507], %491 {strides = array<i32>} : memref<392x27xf32, #tpu.memory_space<vmem>>, vector<14x3xf32>,
    %493 = vector.extract_strided_slice %490 {offsets = [1, 0], sizes = [14, 3], strides = [1, 1]} : vector<16x3xf32> to vector<14x3xf32>
    %c322_508 = arith.constant 322 : index
    %c12_509 = arith.constant 12 : index
    %494 = vector.load %arg6[%c322_508, %c12_509] : memref<392x27xf32, #tpu.memory_space<vmem>>, vector<14x3xf32>
    tpu.vector_store %arg6[%c322_508, %c12_509], %493 {strides = array<i32>} : memref<392x27xf32, #tpu.memory_space<vmem>>, vector<14x3xf32>,
    %495 = vector.extract_strided_slice %490 {offsets = [2, 0], sizes = [14, 3], strides = [1, 1]} : vector<16x3xf32> to vector<14x3xf32>
    %c322_510 = arith.constant 322 : index
    %c15_511 = arith.constant 15 : index
    %496 = vector.load %arg6[%c322_510, %c15_511] : memref<392x27xf32, #tpu.memory_space<vmem>>, vector<14x3xf32>
    tpu.vector_store %arg6[%c322_510, %c15_511], %495 {strides = array<i32>} : memref<392x27xf32, #tpu.memory_space<vmem>>, vector<14x3xf32>,
    %c432 = arith.constant 432 : index
    %c0_512 = arith.constant 0 : index
    %497 = vector.load %arg1[%c432, %c0_512] : memref<512x3xf32, #tpu.memory_space<vmem>>, vector<16x3xf32>
    %498 = vector.extract_strided_slice %497 {offsets = [0, 0], sizes = [14, 3], strides = [1, 1]} : vector<16x3xf32> to vector<14x3xf32>
    %c322_513 = arith.constant 322 : index
    %c18_514 = arith.constant 18 : index
    %499 = vector.load %arg6[%c322_513, %c18_514] : memref<392x27xf32, #tpu.memory_space<vmem>>, vector<14x3xf32>
    tpu.vector_store %arg6[%c322_513, %c18_514], %498 {strides = array<i32>} : memref<392x27xf32, #tpu.memory_space<vmem>>, vector<14x3xf32>,
    %500 = vector.extract_strided_slice %497 {offsets = [1, 0], sizes = [14, 3], strides = [1, 1]} : vector<16x3xf32> to vector<14x3xf32>
    %c322_515 = arith.constant 322 : index
    %c21_516 = arith.constant 21 : index
    %501 = vector.load %arg6[%c322_515, %c21_516] : memref<392x27xf32, #tpu.memory_space<vmem>>, vector<14x3xf32>
    tpu.vector_store %arg6[%c322_515, %c21_516], %500 {strides = array<i32>} : memref<392x27xf32, #tpu.memory_space<vmem>>, vector<14x3xf32>,
    %502 = vector.extract_strided_slice %497 {offsets = [2, 0], sizes = [14, 3], strides = [1, 1]} : vector<16x3xf32> to vector<14x3xf32>
    %c322_517 = arith.constant 322 : index
    %c24_518 = arith.constant 24 : index
    %503 = vector.load %arg6[%c322_517, %c24_518] : memref<392x27xf32, #tpu.memory_space<vmem>>, vector<14x3xf32>
    tpu.vector_store %arg6[%c322_517, %c24_518], %502 {strides = array<i32>} : memref<392x27xf32, #tpu.memory_space<vmem>>, vector<14x3xf32>,
    %c416_519 = arith.constant 416 : index
    %c0_520 = arith.constant 0 : index
    %504 = vector.load %arg1[%c416_519, %c0_520] : memref<512x3xf32, #tpu.memory_space<vmem>>, vector<16x3xf32>
    %505 = vector.extract_strided_slice %504 {offsets = [0, 0], sizes = [14, 3], strides = [1, 1]} : vector<16x3xf32> to vector<14x3xf32>
    %c336_521 = arith.constant 336 : index
    %c0_522 = arith.constant 0 : index
    %506 = vector.load %arg6[%c336_521, %c0_522] : memref<392x27xf32, #tpu.memory_space<vmem>>, vector<14x3xf32>
    tpu.vector_store %arg6[%c336_521, %c0_522], %505 {strides = array<i32>} : memref<392x27xf32, #tpu.memory_space<vmem>>, vector<14x3xf32>,
    %507 = vector.extract_strided_slice %504 {offsets = [1, 0], sizes = [14, 3], strides = [1, 1]} : vector<16x3xf32> to vector<14x3xf32>
    %c336_523 = arith.constant 336 : index
    %c3_524 = arith.constant 3 : index
    %508 = vector.load %arg6[%c336_523, %c3_524] : memref<392x27xf32, #tpu.memory_space<vmem>>, vector<14x3xf32>
    tpu.vector_store %arg6[%c336_523, %c3_524], %507 {strides = array<i32>} : memref<392x27xf32, #tpu.memory_space<vmem>>, vector<14x3xf32>,
    %509 = vector.extract_strided_slice %504 {offsets = [2, 0], sizes = [14, 3], strides = [1, 1]} : vector<16x3xf32> to vector<14x3xf32>
    %c336_525 = arith.constant 336 : index
    %c6_526 = arith.constant 6 : index
    %510 = vector.load %arg6[%c336_525, %c6_526] : memref<392x27xf32, #tpu.memory_space<vmem>>, vector<14x3xf32>
    tpu.vector_store %arg6[%c336_525, %c6_526], %509 {strides = array<i32>} : memref<392x27xf32, #tpu.memory_space<vmem>>, vector<14x3xf32>,
    %c432_527 = arith.constant 432 : index
    %c0_528 = arith.constant 0 : index
    %511 = vector.load %arg1[%c432_527, %c0_528] : memref<512x3xf32, #tpu.memory_space<vmem>>, vector<16x3xf32>
    %512 = vector.extract_strided_slice %511 {offsets = [0, 0], sizes = [14, 3], strides = [1, 1]} : vector<16x3xf32> to vector<14x3xf32>
    %c336_529 = arith.constant 336 : index
    %c9_530 = arith.constant 9 : index
    %513 = vector.load %arg6[%c336_529, %c9_530] : memref<392x27xf32, #tpu.memory_space<vmem>>, vector<14x3xf32>
    tpu.vector_store %arg6[%c336_529, %c9_530], %512 {strides = array<i32>} : memref<392x27xf32, #tpu.memory_space<vmem>>, vector<14x3xf32>,
    %514 = vector.extract_strided_slice %511 {offsets = [1, 0], sizes = [14, 3], strides = [1, 1]} : vector<16x3xf32> to vector<14x3xf32>
    %c336_531 = arith.constant 336 : index
    %c12_532 = arith.constant 12 : index
    %515 = vector.load %arg6[%c336_531, %c12_532] : memref<392x27xf32, #tpu.memory_space<vmem>>, vector<14x3xf32>
    tpu.vector_store %arg6[%c336_531, %c12_532], %514 {strides = array<i32>} : memref<392x27xf32, #tpu.memory_space<vmem>>, vector<14x3xf32>,
    %516 = vector.extract_strided_slice %511 {offsets = [2, 0], sizes = [14, 3], strides = [1, 1]} : vector<16x3xf32> to vector<14x3xf32>
    %c336_533 = arith.constant 336 : index
    %c15_534 = arith.constant 15 : index
    %517 = vector.load %arg6[%c336_533, %c15_534] : memref<392x27xf32, #tpu.memory_space<vmem>>, vector<14x3xf32>
    tpu.vector_store %arg6[%c336_533, %c15_534], %516 {strides = array<i32>} : memref<392x27xf32, #tpu.memory_space<vmem>>, vector<14x3xf32>,
    %c448 = arith.constant 448 : index
    %c0_535 = arith.constant 0 : index
    %518 = vector.load %arg1[%c448, %c0_535] : memref<512x3xf32, #tpu.memory_space<vmem>>, vector<16x3xf32>
    %519 = vector.extract_strided_slice %518 {offsets = [0, 0], sizes = [14, 3], strides = [1, 1]} : vector<16x3xf32> to vector<14x3xf32>
    %c336_536 = arith.constant 336 : index
    %c18_537 = arith.constant 18 : index
    %520 = vector.load %arg6[%c336_536, %c18_537] : memref<392x27xf32, #tpu.memory_space<vmem>>, vector<14x3xf32>
    tpu.vector_store %arg6[%c336_536, %c18_537], %519 {strides = array<i32>} : memref<392x27xf32, #tpu.memory_space<vmem>>, vector<14x3xf32>,
    %521 = vector.extract_strided_slice %518 {offsets = [1, 0], sizes = [14, 3], strides = [1, 1]} : vector<16x3xf32> to vector<14x3xf32>
    %c336_538 = arith.constant 336 : index
    %c21_539 = arith.constant 21 : index
    %522 = vector.load %arg6[%c336_538, %c21_539] : memref<392x27xf32, #tpu.memory_space<vmem>>, vector<14x3xf32>
    tpu.vector_store %arg6[%c336_538, %c21_539], %521 {strides = array<i32>} : memref<392x27xf32, #tpu.memory_space<vmem>>, vector<14x3xf32>,
    %523 = vector.extract_strided_slice %518 {offsets = [2, 0], sizes = [14, 3], strides = [1, 1]} : vector<16x3xf32> to vector<14x3xf32>
    %c336_540 = arith.constant 336 : index
    %c24_541 = arith.constant 24 : index
    %524 = vector.load %arg6[%c336_540, %c24_541] : memref<392x27xf32, #tpu.memory_space<vmem>>, vector<14x3xf32>
    tpu.vector_store %arg6[%c336_540, %c24_541], %523 {strides = array<i32>} : memref<392x27xf32, #tpu.memory_space<vmem>>, vector<14x3xf32>,
    %c432_542 = arith.constant 432 : index
    %c0_543 = arith.constant 0 : index
    %525 = vector.load %arg1[%c432_542, %c0_543] : memref<512x3xf32, #tpu.memory_space<vmem>>, vector<16x3xf32>
    %526 = vector.extract_strided_slice %525 {offsets = [0, 0], sizes = [14, 3], strides = [1, 1]} : vector<16x3xf32> to vector<14x3xf32>
    %c350 = arith.constant 350 : index
    %c0_544 = arith.constant 0 : index
    %527 = vector.load %arg6[%c350, %c0_544] : memref<392x27xf32, #tpu.memory_space<vmem>>, vector<14x3xf32>
    tpu.vector_store %arg6[%c350, %c0_544], %526 {strides = array<i32>} : memref<392x27xf32, #tpu.memory_space<vmem>>, vector<14x3xf32>,
    %528 = vector.extract_strided_slice %525 {offsets = [1, 0], sizes = [14, 3], strides = [1, 1]} : vector<16x3xf32> to vector<14x3xf32>
    %c350_545 = arith.constant 350 : index
    %c3_546 = arith.constant 3 : index
    %529 = vector.load %arg6[%c350_545, %c3_546] : memref<392x27xf32, #tpu.memory_space<vmem>>, vector<14x3xf32>
    tpu.vector_store %arg6[%c350_545, %c3_546], %528 {strides = array<i32>} : memref<392x27xf32, #tpu.memory_space<vmem>>, vector<14x3xf32>,
    %530 = vector.extract_strided_slice %525 {offsets = [2, 0], sizes = [14, 3], strides = [1, 1]} : vector<16x3xf32> to vector<14x3xf32>
    %c350_547 = arith.constant 350 : index
    %c6_548 = arith.constant 6 : index
    %531 = vector.load %arg6[%c350_547, %c6_548] : memref<392x27xf32, #tpu.memory_space<vmem>>, vector<14x3xf32>
    tpu.vector_store %arg6[%c350_547, %c6_548], %530 {strides = array<i32>} : memref<392x27xf32, #tpu.memory_space<vmem>>, vector<14x3xf32>,
    %c448_549 = arith.constant 448 : index
    %c0_550 = arith.constant 0 : index
    %532 = vector.load %arg1[%c448_549, %c0_550] : memref<512x3xf32, #tpu.memory_space<vmem>>, vector<16x3xf32>
    %533 = vector.extract_strided_slice %532 {offsets = [0, 0], sizes = [14, 3], strides = [1, 1]} : vector<16x3xf32> to vector<14x3xf32>
    %c350_551 = arith.constant 350 : index
    %c9_552 = arith.constant 9 : index
    %534 = vector.load %arg6[%c350_551, %c9_552] : memref<392x27xf32, #tpu.memory_space<vmem>>, vector<14x3xf32>
    tpu.vector_store %arg6[%c350_551, %c9_552], %533 {strides = array<i32>} : memref<392x27xf32, #tpu.memory_space<vmem>>, vector<14x3xf32>,
    %535 = vector.extract_strided_slice %532 {offsets = [1, 0], sizes = [14, 3], strides = [1, 1]} : vector<16x3xf32> to vector<14x3xf32>
    %c350_553 = arith.constant 350 : index
    %c12_554 = arith.constant 12 : index
    %536 = vector.load %arg6[%c350_553, %c12_554] : memref<392x27xf32, #tpu.memory_space<vmem>>, vector<14x3xf32>
    tpu.vector_store %arg6[%c350_553, %c12_554], %535 {strides = array<i32>} : memref<392x27xf32, #tpu.memory_space<vmem>>, vector<14x3xf32>,
    %537 = vector.extract_strided_slice %532 {offsets = [2, 0], sizes = [14, 3], strides = [1, 1]} : vector<16x3xf32> to vector<14x3xf32>
    %c350_555 = arith.constant 350 : index
    %c15_556 = arith.constant 15 : index
    %538 = vector.load %arg6[%c350_555, %c15_556] : memref<392x27xf32, #tpu.memory_space<vmem>>, vector<14x3xf32>
    tpu.vector_store %arg6[%c350_555, %c15_556], %537 {strides = array<i32>} : memref<392x27xf32, #tpu.memory_space<vmem>>, vector<14x3xf32>,
    %c464 = arith.constant 464 : index
    %c0_557 = arith.constant 0 : index
    %539 = vector.load %arg1[%c464, %c0_557] : memref<512x3xf32, #tpu.memory_space<vmem>>, vector<16x3xf32>
    %540 = vector.extract_strided_slice %539 {offsets = [0, 0], sizes = [14, 3], strides = [1, 1]} : vector<16x3xf32> to vector<14x3xf32>
    %c350_558 = arith.constant 350 : index
    %c18_559 = arith.constant 18 : index
    %541 = vector.load %arg6[%c350_558, %c18_559] : memref<392x27xf32, #tpu.memory_space<vmem>>, vector<14x3xf32>
    tpu.vector_store %arg6[%c350_558, %c18_559], %540 {strides = array<i32>} : memref<392x27xf32, #tpu.memory_space<vmem>>, vector<14x3xf32>,
    %542 = vector.extract_strided_slice %539 {offsets = [1, 0], sizes = [14, 3], strides = [1, 1]} : vector<16x3xf32> to vector<14x3xf32>
    %c350_560 = arith.constant 350 : index
    %c21_561 = arith.constant 21 : index
    %543 = vector.load %arg6[%c350_560, %c21_561] : memref<392x27xf32, #tpu.memory_space<vmem>>, vector<14x3xf32>
    tpu.vector_store %arg6[%c350_560, %c21_561], %542 {strides = array<i32>} : memref<392x27xf32, #tpu.memory_space<vmem>>, vector<14x3xf32>,
    %544 = vector.extract_strided_slice %539 {offsets = [2, 0], sizes = [14, 3], strides = [1, 1]} : vector<16x3xf32> to vector<14x3xf32>
    %c350_562 = arith.constant 350 : index
    %c24_563 = arith.constant 24 : index
    %545 = vector.load %arg6[%c350_562, %c24_563] : memref<392x27xf32, #tpu.memory_space<vmem>>, vector<14x3xf32>
    tpu.vector_store %arg6[%c350_562, %c24_563], %544 {strides = array<i32>} : memref<392x27xf32, #tpu.memory_space<vmem>>, vector<14x3xf32>,
    %c448_564 = arith.constant 448 : index
    %c0_565 = arith.constant 0 : index
    %546 = vector.load %arg1[%c448_564, %c0_565] : memref<512x3xf32, #tpu.memory_space<vmem>>, vector<16x3xf32>
    %547 = vector.extract_strided_slice %546 {offsets = [0, 0], sizes = [14, 3], strides = [1, 1]} : vector<16x3xf32> to vector<14x3xf32>
    %c364 = arith.constant 364 : index
    %c0_566 = arith.constant 0 : index
    %548 = vector.load %arg6[%c364, %c0_566] : memref<392x27xf32, #tpu.memory_space<vmem>>, vector<14x3xf32>
    tpu.vector_store %arg6[%c364, %c0_566], %547 {strides = array<i32>} : memref<392x27xf32, #tpu.memory_space<vmem>>, vector<14x3xf32>,
    %549 = vector.extract_strided_slice %546 {offsets = [1, 0], sizes = [14, 3], strides = [1, 1]} : vector<16x3xf32> to vector<14x3xf32>
    %c364_567 = arith.constant 364 : index
    %c3_568 = arith.constant 3 : index
    %550 = vector.load %arg6[%c364_567, %c3_568] : memref<392x27xf32, #tpu.memory_space<vmem>>, vector<14x3xf32>
    tpu.vector_store %arg6[%c364_567, %c3_568], %549 {strides = array<i32>} : memref<392x27xf32, #tpu.memory_space<vmem>>, vector<14x3xf32>,
    %551 = vector.extract_strided_slice %546 {offsets = [2, 0], sizes = [14, 3], strides = [1, 1]} : vector<16x3xf32> to vector<14x3xf32>
    %c364_569 = arith.constant 364 : index
    %c6_570 = arith.constant 6 : index
    %552 = vector.load %arg6[%c364_569, %c6_570] : memref<392x27xf32, #tpu.memory_space<vmem>>, vector<14x3xf32>
    tpu.vector_store %arg6[%c364_569, %c6_570], %551 {strides = array<i32>} : memref<392x27xf32, #tpu.memory_space<vmem>>, vector<14x3xf32>,
    %c464_571 = arith.constant 464 : index
    %c0_572 = arith.constant 0 : index
    %553 = vector.load %arg1[%c464_571, %c0_572] : memref<512x3xf32, #tpu.memory_space<vmem>>, vector<16x3xf32>
    %554 = vector.extract_strided_slice %553 {offsets = [0, 0], sizes = [14, 3], strides = [1, 1]} : vector<16x3xf32> to vector<14x3xf32>
    %c364_573 = arith.constant 364 : index
    %c9_574 = arith.constant 9 : index
    %555 = vector.load %arg6[%c364_573, %c9_574] : memref<392x27xf32, #tpu.memory_space<vmem>>, vector<14x3xf32>
    tpu.vector_store %arg6[%c364_573, %c9_574], %554 {strides = array<i32>} : memref<392x27xf32, #tpu.memory_space<vmem>>, vector<14x3xf32>,
    %556 = vector.extract_strided_slice %553 {offsets = [1, 0], sizes = [14, 3], strides = [1, 1]} : vector<16x3xf32> to vector<14x3xf32>
    %c364_575 = arith.constant 364 : index
    %c12_576 = arith.constant 12 : index
    %557 = vector.load %arg6[%c364_575, %c12_576] : memref<392x27xf32, #tpu.memory_space<vmem>>, vector<14x3xf32>
    tpu.vector_store %arg6[%c364_575, %c12_576], %556 {strides = array<i32>} : memref<392x27xf32, #tpu.memory_space<vmem>>, vector<14x3xf32>,
    %558 = vector.extract_strided_slice %553 {offsets = [2, 0], sizes = [14, 3], strides = [1, 1]} : vector<16x3xf32> to vector<14x3xf32>
    %c364_577 = arith.constant 364 : index
    %c15_578 = arith.constant 15 : index
    %559 = vector.load %arg6[%c364_577, %c15_578] : memref<392x27xf32, #tpu.memory_space<vmem>>, vector<14x3xf32>
    tpu.vector_store %arg6[%c364_577, %c15_578], %558 {strides = array<i32>} : memref<392x27xf32, #tpu.memory_space<vmem>>, vector<14x3xf32>,
    %c480 = arith.constant 480 : index
    %c0_579 = arith.constant 0 : index
    %560 = vector.load %arg1[%c480, %c0_579] : memref<512x3xf32, #tpu.memory_space<vmem>>, vector<16x3xf32>
    %561 = vector.extract_strided_slice %560 {offsets = [0, 0], sizes = [14, 3], strides = [1, 1]} : vector<16x3xf32> to vector<14x3xf32>
    %c364_580 = arith.constant 364 : index
    %c18_581 = arith.constant 18 : index
    %562 = vector.load %arg6[%c364_580, %c18_581] : memref<392x27xf32, #tpu.memory_space<vmem>>, vector<14x3xf32>
    tpu.vector_store %arg6[%c364_580, %c18_581], %561 {strides = array<i32>} : memref<392x27xf32, #tpu.memory_space<vmem>>, vector<14x3xf32>,
    %563 = vector.extract_strided_slice %560 {offsets = [1, 0], sizes = [14, 3], strides = [1, 1]} : vector<16x3xf32> to vector<14x3xf32>
    %c364_582 = arith.constant 364 : index
    %c21_583 = arith.constant 21 : index
    %564 = vector.load %arg6[%c364_582, %c21_583] : memref<392x27xf32, #tpu.memory_space<vmem>>, vector<14x3xf32>
    tpu.vector_store %arg6[%c364_582, %c21_583], %563 {strides = array<i32>} : memref<392x27xf32, #tpu.memory_space<vmem>>, vector<14x3xf32>,
    %565 = vector.extract_strided_slice %560 {offsets = [2, 0], sizes = [14, 3], strides = [1, 1]} : vector<16x3xf32> to vector<14x3xf32>
    %c364_584 = arith.constant 364 : index
    %c24_585 = arith.constant 24 : index
    %566 = vector.load %arg6[%c364_584, %c24_585] : memref<392x27xf32, #tpu.memory_space<vmem>>, vector<14x3xf32>
    tpu.vector_store %arg6[%c364_584, %c24_585], %565 {strides = array<i32>} : memref<392x27xf32, #tpu.memory_space<vmem>>, vector<14x3xf32>,
    %c464_586 = arith.constant 464 : index
    %c0_587 = arith.constant 0 : index
    %567 = vector.load %arg1[%c464_586, %c0_587] : memref<512x3xf32, #tpu.memory_space<vmem>>, vector<16x3xf32>
    %568 = vector.extract_strided_slice %567 {offsets = [0, 0], sizes = [14, 3], strides = [1, 1]} : vector<16x3xf32> to vector<14x3xf32>
    %c378 = arith.constant 378 : index
    %c0_588 = arith.constant 0 : index
    %569 = vector.load %arg6[%c378, %c0_588] : memref<392x27xf32, #tpu.memory_space<vmem>>, vector<14x3xf32>
    tpu.vector_store %arg6[%c378, %c0_588], %568 {strides = array<i32>} : memref<392x27xf32, #tpu.memory_space<vmem>>, vector<14x3xf32>,
    %570 = vector.extract_strided_slice %567 {offsets = [1, 0], sizes = [14, 3], strides = [1, 1]} : vector<16x3xf32> to vector<14x3xf32>
    %c378_589 = arith.constant 378 : index
    %c3_590 = arith.constant 3 : index
    %571 = vector.load %arg6[%c378_589, %c3_590] : memref<392x27xf32, #tpu.memory_space<vmem>>, vector<14x3xf32>
    tpu.vector_store %arg6[%c378_589, %c3_590], %570 {strides = array<i32>} : memref<392x27xf32, #tpu.memory_space<vmem>>, vector<14x3xf32>,
    %572 = vector.extract_strided_slice %567 {offsets = [2, 0], sizes = [14, 3], strides = [1, 1]} : vector<16x3xf32> to vector<14x3xf32>
    %c378_591 = arith.constant 378 : index
    %c6_592 = arith.constant 6 : index
    %573 = vector.load %arg6[%c378_591, %c6_592] : memref<392x27xf32, #tpu.memory_space<vmem>>, vector<14x3xf32>
    tpu.vector_store %arg6[%c378_591, %c6_592], %572 {strides = array<i32>} : memref<392x27xf32, #tpu.memory_space<vmem>>, vector<14x3xf32>,
    %c480_593 = arith.constant 480 : index
    %c0_594 = arith.constant 0 : index
    %574 = vector.load %arg1[%c480_593, %c0_594] : memref<512x3xf32, #tpu.memory_space<vmem>>, vector<16x3xf32>
    %575 = vector.extract_strided_slice %574 {offsets = [0, 0], sizes = [14, 3], strides = [1, 1]} : vector<16x3xf32> to vector<14x3xf32>
    %c378_595 = arith.constant 378 : index
    %c9_596 = arith.constant 9 : index
    %576 = vector.load %arg6[%c378_595, %c9_596] : memref<392x27xf32, #tpu.memory_space<vmem>>, vector<14x3xf32>
    tpu.vector_store %arg6[%c378_595, %c9_596], %575 {strides = array<i32>} : memref<392x27xf32, #tpu.memory_space<vmem>>, vector<14x3xf32>,
    %577 = vector.extract_strided_slice %574 {offsets = [1, 0], sizes = [14, 3], strides = [1, 1]} : vector<16x3xf32> to vector<14x3xf32>
    %c378_597 = arith.constant 378 : index
    %c12_598 = arith.constant 12 : index
    %578 = vector.load %arg6[%c378_597, %c12_598] : memref<392x27xf32, #tpu.memory_space<vmem>>, vector<14x3xf32>
    tpu.vector_store %arg6[%c378_597, %c12_598], %577 {strides = array<i32>} : memref<392x27xf32, #tpu.memory_space<vmem>>, vector<14x3xf32>,
    %579 = vector.extract_strided_slice %574 {offsets = [2, 0], sizes = [14, 3], strides = [1, 1]} : vector<16x3xf32> to vector<14x3xf32>
    %c378_599 = arith.constant 378 : index
    %c15_600 = arith.constant 15 : index
    %580 = vector.load %arg6[%c378_599, %c15_600] : memref<392x27xf32, #tpu.memory_space<vmem>>, vector<14x3xf32>
    tpu.vector_store %arg6[%c378_599, %c15_600], %579 {strides = array<i32>} : memref<392x27xf32, #tpu.memory_space<vmem>>, vector<14x3xf32>,
    %c496 = arith.constant 496 : index
    %c0_601 = arith.constant 0 : index
    %581 = vector.load %arg1[%c496, %c0_601] : memref<512x3xf32, #tpu.memory_space<vmem>>, vector<16x3xf32>
    %582 = vector.extract_strided_slice %581 {offsets = [0, 0], sizes = [14, 3], strides = [1, 1]} : vector<16x3xf32> to vector<14x3xf32>
    %c378_602 = arith.constant 378 : index
    %c18_603 = arith.constant 18 : index
    %583 = vector.load %arg6[%c378_602, %c18_603] : memref<392x27xf32, #tpu.memory_space<vmem>>, vector<14x3xf32>
    tpu.vector_store %arg6[%c378_602, %c18_603], %582 {strides = array<i32>} : memref<392x27xf32, #tpu.memory_space<vmem>>, vector<14x3xf32>,
    %584 = vector.extract_strided_slice %581 {offsets = [1, 0], sizes = [14, 3], strides = [1, 1]} : vector<16x3xf32> to vector<14x3xf32>
    %c378_604 = arith.constant 378 : index
    %c21_605 = arith.constant 21 : index
    %585 = vector.load %arg6[%c378_604, %c21_605] : memref<392x27xf32, #tpu.memory_space<vmem>>, vector<14x3xf32>
    tpu.vector_store %arg6[%c378_604, %c21_605], %584 {strides = array<i32>} : memref<392x27xf32, #tpu.memory_space<vmem>>, vector<14x3xf32>,
    %586 = vector.extract_strided_slice %581 {offsets = [2, 0], sizes = [14, 3], strides = [1, 1]} : vector<16x3xf32> to vector<14x3xf32>
    %c378_606 = arith.constant 378 : index
    %c24_607 = arith.constant 24 : index
    %587 = vector.load %arg6[%c378_606, %c24_607] : memref<392x27xf32, #tpu.memory_space<vmem>>, vector<14x3xf32>
    tpu.vector_store %arg6[%c378_606, %c24_607], %586 {strides = array<i32>} : memref<392x27xf32, #tpu.memory_space<vmem>>, vector<14x3xf32>,
    %c0_608 = arith.constant 0 : index
    %c0_609 = arith.constant 0 : index
    %588 = vector.load %arg6[%c0_608, %c0_609] : memref<392x27xf32, #tpu.memory_space<vmem>>, vector<392x27xf32>
    %589 = arith.truncf %588 : vector<392x27xf32> to vector<392x27xbf16>
    %c0_610 = arith.constant 0 : index
    %c0_611 = arith.constant 0 : index
    %590 = vector.load %arg2[%c0_610, %c0_611] : memref<27x64xbf16, #tpu.memory_space<vmem>>, vector<27x64xbf16>
    %cst = arith.constant dense<0.000000e+00> : vector<392x64xf32>
    %591 = tpu.matmul %589, %590, %cst {dimension_numbers = #tpu.dot_dimension_numbers<[1], [0], [0], [1], [0, 0, 1, 1], [], []>} : vector<392x27xbf16>, vector<27x64xbf16>, vector<392x64xf32> -> vector<392x64xf32>
    %c0_612 = arith.constant 0 : index
    %c0_613 = arith.constant 0 : index
    %592 = vector.load %arg4[%c0_612, %c0_613] : memref<8x64xf32, #tpu.memory_space<vmem>>, vector<1x64xf32>
    %c1 = arith.constant 1 : index
    %c0_614 = arith.constant 0 : index
    %593 = vector.load %arg4[%c1, %c0_614] : memref<8x64xf32, #tpu.memory_space<vmem>>, vector<1x64xf32>
    %cst_615 = arith.constant dense<0.000000e+00> : vector<64xf32>
    %594 = vector.multi_reduction <add>, %591, %cst_615 [0] : vector<392x64xf32> to vector<64xf32>
    %595 = vector.shape_cast %594 : vector<64xf32> to vector<1x64xf32>
    %596 = arith.mulf %591, %591 : vector<392x64xf32>
    %cst_616 = arith.constant dense<0.000000e+00> : vector<64xf32>
    %597 = vector.multi_reduction <add>, %596, %cst_616 [0] : vector<392x64xf32> to vector<64xf32>
    %598 = vector.shape_cast %597 : vector<64xf32> to vector<1x64xf32>
    %cst_617 = arith.constant 0.00255102036 : f32
    %599 = vector.broadcast %cst_617 : f32 to vector<1x64xf32>
    %600 = arith.mulf %595, %599 : vector<1x64xf32>
    %cst_618 = arith.constant 0.00255102036 : f32
    %601 = vector.broadcast %cst_618 : f32 to vector<1x64xf32>
    %602 = arith.mulf %598, %601 : vector<1x64xf32>
    %603 = arith.mulf %600, %600 : vector<1x64xf32>
    %604 = arith.subf %602, %603 : vector<1x64xf32>
    %cst_619 = arith.constant 9.99999974E-6 : f32
    %605 = vector.broadcast %cst_619 : f32 to vector<1x64xf32>
    %606 = arith.addf %604, %605 : vector<1x64xf32>
    %607 = math.rsqrt %606 : vector<1x64xf32>
    %608 = arith.mulf %592, %607 : vector<1x64xf32>
    %609 = arith.mulf %600, %608 : vector<1x64xf32>
    %610 = arith.subf %593, %609 : vector<1x64xf32>
    %611 = vector.broadcast %608 : vector<1x64xf32> to vector<392x64xf32>
    %612 = arith.mulf %591, %611 : vector<392x64xf32>
    %613 = vector.broadcast %610 : vector<1x64xf32> to vector<392x64xf32>
    %614 = arith.addf %612, %613 : vector<392x64xf32>
    %cst_620 = arith.constant 0.000000e+00 : f32
    %615 = vector.broadcast %cst_620 : f32 to vector<392x64xf32>
    %616 = arith.maximumf %614, %615 : vector<392x64xf32>
    %c0_621 = arith.constant 0 : index
    %c0_622 = arith.constant 0 : index
    %617 = vector.load %arg7[%c0_621, %c0_622] : memref<392x64xf32, #tpu.memory_space<vmem>>, vector<392x64xf32>
    tpu.vector_store %arg7[%c0_621, %c0_622], %616 {strides = array<i32>} : memref<392x64xf32, #tpu.memory_space<vmem>>, vector<392x64xf32>,
    %c0_623 = arith.constant 0 : index
    %c0_624 = arith.constant 0 : index
    %618 = tpu.strided_load %arg7[%c0_623, %c0_624] {strides = array<i32: 2, 1>} : memref<392x64xf32, #tpu.memory_space<vmem>>, vector<7x64xf32>
    %c1_625 = arith.constant 1 : index
    %c0_626 = arith.constant 0 : index
    %619 = tpu.strided_load %arg7[%c1_625, %c0_626] {strides = array<i32: 2, 1>} : memref<392x64xf32, #tpu.memory_space<vmem>>, vector<7x64xf32>
    %620 = arith.maximumf %618, %619 : vector<7x64xf32>
    %c14_627 = arith.constant 14 : index
    %c0_628 = arith.constant 0 : index
    %621 = tpu.strided_load %arg7[%c14_627, %c0_628] {strides = array<i32: 2, 1>} : memref<392x64xf32, #tpu.memory_space<vmem>>, vector<7x64xf32>
    %622 = arith.maximumf %620, %621 : vector<7x64xf32>
    %c15_629 = arith.constant 15 : index
    %c0_630 = arith.constant 0 : index
    %623 = tpu.strided_load %arg7[%c15_629, %c0_630] {strides = array<i32: 2, 1>} : memref<392x64xf32, #tpu.memory_space<vmem>>, vector<7x64xf32>
    %624 = arith.maximumf %622, %623 : vector<7x64xf32>
    %c0_631 = arith.constant 0 : index
    %c0_632 = arith.constant 0 : index
    %625 = vector.load %arg8[%c0_631, %c0_632] : memref<98x64xf32, #tpu.memory_space<vmem>>, vector<7x64xf32>
    tpu.vector_store %arg8[%c0_631, %c0_632], %624 {strides = array<i32>} : memref<98x64xf32, #tpu.memory_space<vmem>>, vector<7x64xf32>,
    %c28_633 = arith.constant 28 : index
    %c0_634 = arith.constant 0 : index
    %626 = tpu.strided_load %arg7[%c28_633, %c0_634] {strides = array<i32: 2, 1>} : memref<392x64xf32, #tpu.memory_space<vmem>>, vector<7x64xf32>
    %c29 = arith.constant 29 : index
    %c0_635 = arith.constant 0 : index
    %627 = tpu.strided_load %arg7[%c29, %c0_635] {strides = array<i32: 2, 1>} : memref<392x64xf32, #tpu.memory_space<vmem>>, vector<7x64xf32>
    %628 = arith.maximumf %626, %627 : vector<7x64xf32>
    %c42_636 = arith.constant 42 : index
    %c0_637 = arith.constant 0 : index
    %629 = tpu.strided_load %arg7[%c42_636, %c0_637] {strides = array<i32: 2, 1>} : memref<392x64xf32, #tpu.memory_space<vmem>>, vector<7x64xf32>
    %630 = arith.maximumf %628, %629 : vector<7x64xf32>
    %c43 = arith.constant 43 : index
    %c0_638 = arith.constant 0 : index
    %631 = tpu.strided_load %arg7[%c43, %c0_638] {strides = array<i32: 2, 1>} : memref<392x64xf32, #tpu.memory_space<vmem>>, vector<7x64xf32>
    %632 = arith.maximumf %630, %631 : vector<7x64xf32>
    %c7 = arith.constant 7 : index
    %c0_639 = arith.constant 0 : index
    %633 = vector.load %arg8[%c7, %c0_639] : memref<98x64xf32, #tpu.memory_space<vmem>>, vector<7x64xf32>
    tpu.vector_store %arg8[%c7, %c0_639], %632 {strides = array<i32>} : memref<98x64xf32, #tpu.memory_space<vmem>>, vector<7x64xf32>,
    %c56_640 = arith.constant 56 : index
    %c0_641 = arith.constant 0 : index
    %634 = tpu.strided_load %arg7[%c56_640, %c0_641] {strides = array<i32: 2, 1>} : memref<392x64xf32, #tpu.memory_space<vmem>>, vector<7x64xf32>
    %c57 = arith.constant 57 : index
    %c0_642 = arith.constant 0 : index
    %635 = tpu.strided_load %arg7[%c57, %c0_642] {strides = array<i32: 2, 1>} : memref<392x64xf32, #tpu.memory_space<vmem>>, vector<7x64xf32>
    %636 = arith.maximumf %634, %635 : vector<7x64xf32>
    %c70_643 = arith.constant 70 : index
    %c0_644 = arith.constant 0 : index
    %637 = tpu.strided_load %arg7[%c70_643, %c0_644] {strides = array<i32: 2, 1>} : memref<392x64xf32, #tpu.memory_space<vmem>>, vector<7x64xf32>
    %638 = arith.maximumf %636, %637 : vector<7x64xf32>
    %c71 = arith.constant 71 : index
    %c0_645 = arith.constant 0 : index
    %639 = tpu.strided_load %arg7[%c71, %c0_645] {strides = array<i32: 2, 1>} : memref<392x64xf32, #tpu.memory_space<vmem>>, vector<7x64xf32>
    %640 = arith.maximumf %638, %639 : vector<7x64xf32>
    %c14_646 = arith.constant 14 : index
    %c0_647 = arith.constant 0 : index
    %641 = vector.load %arg8[%c14_646, %c0_647] : memref<98x64xf32, #tpu.memory_space<vmem>>, vector<7x64xf32>
    tpu.vector_store %arg8[%c14_646, %c0_647], %640 {strides = array<i32>} : memref<98x64xf32, #tpu.memory_space<vmem>>, vector<7x64xf32>,
    %c84_648 = arith.constant 84 : index
    %c0_649 = arith.constant 0 : index
    %642 = tpu.strided_load %arg7[%c84_648, %c0_649] {strides = array<i32: 2, 1>} : memref<392x64xf32, #tpu.memory_space<vmem>>, vector<7x64xf32>
    %c85 = arith.constant 85 : index
    %c0_650 = arith.constant 0 : index
    %643 = tpu.strided_load %arg7[%c85, %c0_650] {strides = array<i32: 2, 1>} : memref<392x64xf32, #tpu.memory_space<vmem>>, vector<7x64xf32>
    %644 = arith.maximumf %642, %643 : vector<7x64xf32>
    %c98_651 = arith.constant 98 : index
    %c0_652 = arith.constant 0 : index
    %645 = tpu.strided_load %arg7[%c98_651, %c0_652] {strides = array<i32: 2, 1>} : memref<392x64xf32, #tpu.memory_space<vmem>>, vector<7x64xf32>
    %646 = arith.maximumf %644, %645 : vector<7x64xf32>
    %c99 = arith.constant 99 : index
    %c0_653 = arith.constant 0 : index
    %647 = tpu.strided_load %arg7[%c99, %c0_653] {strides = array<i32: 2, 1>} : memref<392x64xf32, #tpu.memory_space<vmem>>, vector<7x64xf32>
    %648 = arith.maximumf %646, %647 : vector<7x64xf32>
    %c21_654 = arith.constant 21 : index
    %c0_655 = arith.constant 0 : index
    %649 = vector.load %arg8[%c21_654, %c0_655] : memref<98x64xf32, #tpu.memory_space<vmem>>, vector<7x64xf32>
    tpu.vector_store %arg8[%c21_654, %c0_655], %648 {strides = array<i32>} : memref<98x64xf32, #tpu.memory_space<vmem>>, vector<7x64xf32>,
    %c112_656 = arith.constant 112 : index
    %c0_657 = arith.constant 0 : index
    %650 = tpu.strided_load %arg7[%c112_656, %c0_657] {strides = array<i32: 2, 1>} : memref<392x64xf32, #tpu.memory_space<vmem>>, vector<7x64xf32>
    %c113 = arith.constant 113 : index
    %c0_658 = arith.constant 0 : index
    %651 = tpu.strided_load %arg7[%c113, %c0_658] {strides = array<i32: 2, 1>} : memref<392x64xf32, #tpu.memory_space<vmem>>, vector<7x64xf32>
    %652 = arith.maximumf %650, %651 : vector<7x64xf32>
    %c126_659 = arith.constant 126 : index
    %c0_660 = arith.constant 0 : index
    %653 = tpu.strided_load %arg7[%c126_659, %c0_660] {strides = array<i32: 2, 1>} : memref<392x64xf32, #tpu.memory_space<vmem>>, vector<7x64xf32>
    %654 = arith.maximumf %652, %653 : vector<7x64xf32>
    %c127 = arith.constant 127 : index
    %c0_661 = arith.constant 0 : index
    %655 = tpu.strided_load %arg7[%c127, %c0_661] {strides = array<i32: 2, 1>} : memref<392x64xf32, #tpu.memory_space<vmem>>, vector<7x64xf32>
    %656 = arith.maximumf %654, %655 : vector<7x64xf32>
    %c28_662 = arith.constant 28 : index
    %c0_663 = arith.constant 0 : index
    %657 = vector.load %arg8[%c28_662, %c0_663] : memref<98x64xf32, #tpu.memory_space<vmem>>, vector<7x64xf32>
    tpu.vector_store %arg8[%c28_662, %c0_663], %656 {strides = array<i32>} : memref<98x64xf32, #tpu.memory_space<vmem>>, vector<7x64xf32>,
    %c140_664 = arith.constant 140 : index
    %c0_665 = arith.constant 0 : index
    %658 = tpu.strided_load %arg7[%c140_664, %c0_665] {strides = array<i32: 2, 1>} : memref<392x64xf32, #tpu.memory_space<vmem>>, vector<7x64xf32>
    %c141 = arith.constant 141 : index
    %c0_666 = arith.constant 0 : index
    %659 = tpu.strided_load %arg7[%c141, %c0_666] {strides = array<i32: 2, 1>} : memref<392x64xf32, #tpu.memory_space<vmem>>, vector<7x64xf32>
    %660 = arith.maximumf %658, %659 : vector<7x64xf32>
    %c154_667 = arith.constant 154 : index
    %c0_668 = arith.constant 0 : index
    %661 = tpu.strided_load %arg7[%c154_667, %c0_668] {strides = array<i32: 2, 1>} : memref<392x64xf32, #tpu.memory_space<vmem>>, vector<7x64xf32>
    %662 = arith.maximumf %660, %661 : vector<7x64xf32>
    %c155 = arith.constant 155 : index
    %c0_669 = arith.constant 0 : index
    %663 = tpu.strided_load %arg7[%c155, %c0_669] {strides = array<i32: 2, 1>} : memref<392x64xf32, #tpu.memory_space<vmem>>, vector<7x64xf32>
    %664 = arith.maximumf %662, %663 : vector<7x64xf32>
    %c35 = arith.constant 35 : index
    %c0_670 = arith.constant 0 : index
    %665 = vector.load %arg8[%c35, %c0_670] : memref<98x64xf32, #tpu.memory_space<vmem>>, vector<7x64xf32>
    tpu.vector_store %arg8[%c35, %c0_670], %664 {strides = array<i32>} : memref<98x64xf32, #tpu.memory_space<vmem>>, vector<7x64xf32>,
    %c168_671 = arith.constant 168 : index
    %c0_672 = arith.constant 0 : index
    %666 = tpu.strided_load %arg7[%c168_671, %c0_672] {strides = array<i32: 2, 1>} : memref<392x64xf32, #tpu.memory_space<vmem>>, vector<7x64xf32>
    %c169 = arith.constant 169 : index
    %c0_673 = arith.constant 0 : index
    %667 = tpu.strided_load %arg7[%c169, %c0_673] {strides = array<i32: 2, 1>} : memref<392x64xf32, #tpu.memory_space<vmem>>, vector<7x64xf32>
    %668 = arith.maximumf %666, %667 : vector<7x64xf32>
    %c182_674 = arith.constant 182 : index
    %c0_675 = arith.constant 0 : index
    %669 = tpu.strided_load %arg7[%c182_674, %c0_675] {strides = array<i32: 2, 1>} : memref<392x64xf32, #tpu.memory_space<vmem>>, vector<7x64xf32>
    %670 = arith.maximumf %668, %669 : vector<7x64xf32>
    %c183 = arith.constant 183 : index
    %c0_676 = arith.constant 0 : index
    %671 = tpu.strided_load %arg7[%c183, %c0_676] {strides = array<i32: 2, 1>} : memref<392x64xf32, #tpu.memory_space<vmem>>, vector<7x64xf32>
    %672 = arith.maximumf %670, %671 : vector<7x64xf32>
    %c42_677 = arith.constant 42 : index
    %c0_678 = arith.constant 0 : index
    %673 = vector.load %arg8[%c42_677, %c0_678] : memref<98x64xf32, #tpu.memory_space<vmem>>, vector<7x64xf32>
    tpu.vector_store %arg8[%c42_677, %c0_678], %672 {strides = array<i32>} : memref<98x64xf32, #tpu.memory_space<vmem>>, vector<7x64xf32>,
    %c196_679 = arith.constant 196 : index
    %c0_680 = arith.constant 0 : index
    %674 = tpu.strided_load %arg7[%c196_679, %c0_680] {strides = array<i32: 2, 1>} : memref<392x64xf32, #tpu.memory_space<vmem>>, vector<7x64xf32>
    %c197 = arith.constant 197 : index
    %c0_681 = arith.constant 0 : index
    %675 = tpu.strided_load %arg7[%c197, %c0_681] {strides = array<i32: 2, 1>} : memref<392x64xf32, #tpu.memory_space<vmem>>, vector<7x64xf32>
    %676 = arith.maximumf %674, %675 : vector<7x64xf32>
    %c210_682 = arith.constant 210 : index
    %c0_683 = arith.constant 0 : index
    %677 = tpu.strided_load %arg7[%c210_682, %c0_683] {strides = array<i32: 2, 1>} : memref<392x64xf32, #tpu.memory_space<vmem>>, vector<7x64xf32>
    %678 = arith.maximumf %676, %677 : vector<7x64xf32>
    %c211 = arith.constant 211 : index
    %c0_684 = arith.constant 0 : index
    %679 = tpu.strided_load %arg7[%c211, %c0_684] {strides = array<i32: 2, 1>} : memref<392x64xf32, #tpu.memory_space<vmem>>, vector<7x64xf32>
    %680 = arith.maximumf %678, %679 : vector<7x64xf32>
    %c49 = arith.constant 49 : index
    %c0_685 = arith.constant 0 : index
    %681 = vector.load %arg8[%c49, %c0_685] : memref<98x64xf32, #tpu.memory_space<vmem>>, vector<7x64xf32>
    tpu.vector_store %arg8[%c49, %c0_685], %680 {strides = array<i32>} : memref<98x64xf32, #tpu.memory_space<vmem>>, vector<7x64xf32>,
    %c224_686 = arith.constant 224 : index
    %c0_687 = arith.constant 0 : index
    %682 = tpu.strided_load %arg7[%c224_686, %c0_687] {strides = array<i32: 2, 1>} : memref<392x64xf32, #tpu.memory_space<vmem>>, vector<7x64xf32>
    %c225 = arith.constant 225 : index
    %c0_688 = arith.constant 0 : index
    %683 = tpu.strided_load %arg7[%c225, %c0_688] {strides = array<i32: 2, 1>} : memref<392x64xf32, #tpu.memory_space<vmem>>, vector<7x64xf32>
    %684 = arith.maximumf %682, %683 : vector<7x64xf32>
    %c238_689 = arith.constant 238 : index
    %c0_690 = arith.constant 0 : index
    %685 = tpu.strided_load %arg7[%c238_689, %c0_690] {strides = array<i32: 2, 1>} : memref<392x64xf32, #tpu.memory_space<vmem>>, vector<7x64xf32>
    %686 = arith.maximumf %684, %685 : vector<7x64xf32>
    %c239 = arith.constant 239 : index
    %c0_691 = arith.constant 0 : index
    %687 = tpu.strided_load %arg7[%c239, %c0_691] {strides = array<i32: 2, 1>} : memref<392x64xf32, #tpu.memory_space<vmem>>, vector<7x64xf32>
    %688 = arith.maximumf %686, %687 : vector<7x64xf32>
    %c56_692 = arith.constant 56 : index
    %c0_693 = arith.constant 0 : index
    %689 = vector.load %arg8[%c56_692, %c0_693] : memref<98x64xf32, #tpu.memory_space<vmem>>, vector<7x64xf32>
    tpu.vector_store %arg8[%c56_692, %c0_693], %688 {strides = array<i32>} : memref<98x64xf32, #tpu.memory_space<vmem>>, vector<7x64xf32>,
    %c252_694 = arith.constant 252 : index
    %c0_695 = arith.constant 0 : index
    %690 = tpu.strided_load %arg7[%c252_694, %c0_695] {strides = array<i32: 2, 1>} : memref<392x64xf32, #tpu.memory_space<vmem>>, vector<7x64xf32>
    %c253 = arith.constant 253 : index
    %c0_696 = arith.constant 0 : index
    %691 = tpu.strided_load %arg7[%c253, %c0_696] {strides = array<i32: 2, 1>} : memref<392x64xf32, #tpu.memory_space<vmem>>, vector<7x64xf32>
    %692 = arith.maximumf %690, %691 : vector<7x64xf32>
    %c266_697 = arith.constant 266 : index
    %c0_698 = arith.constant 0 : index
    %693 = tpu.strided_load %arg7[%c266_697, %c0_698] {strides = array<i32: 2, 1>} : memref<392x64xf32, #tpu.memory_space<vmem>>, vector<7x64xf32>
    %694 = arith.maximumf %692, %693 : vector<7x64xf32>
    %c267 = arith.constant 267 : index
    %c0_699 = arith.constant 0 : index
    %695 = tpu.strided_load %arg7[%c267, %c0_699] {strides = array<i32: 2, 1>} : memref<392x64xf32, #tpu.memory_space<vmem>>, vector<7x64xf32>
    %696 = arith.maximumf %694, %695 : vector<7x64xf32>
    %c63 = arith.constant 63 : index
    %c0_700 = arith.constant 0 : index
    %697 = vector.load %arg8[%c63, %c0_700] : memref<98x64xf32, #tpu.memory_space<vmem>>, vector<7x64xf32>
    tpu.vector_store %arg8[%c63, %c0_700], %696 {strides = array<i32>} : memref<98x64xf32, #tpu.memory_space<vmem>>, vector<7x64xf32>,
    %c280_701 = arith.constant 280 : index
    %c0_702 = arith.constant 0 : index
    %698 = tpu.strided_load %arg7[%c280_701, %c0_702] {strides = array<i32: 2, 1>} : memref<392x64xf32, #tpu.memory_space<vmem>>, vector<7x64xf32>
    %c281 = arith.constant 281 : index
    %c0_703 = arith.constant 0 : index
    %699 = tpu.strided_load %arg7[%c281, %c0_703] {strides = array<i32: 2, 1>} : memref<392x64xf32, #tpu.memory_space<vmem>>, vector<7x64xf32>
    %700 = arith.maximumf %698, %699 : vector<7x64xf32>
    %c294_704 = arith.constant 294 : index
    %c0_705 = arith.constant 0 : index
    %701 = tpu.strided_load %arg7[%c294_704, %c0_705] {strides = array<i32: 2, 1>} : memref<392x64xf32, #tpu.memory_space<vmem>>, vector<7x64xf32>
    %702 = arith.maximumf %700, %701 : vector<7x64xf32>
    %c295 = arith.constant 295 : index
    %c0_706 = arith.constant 0 : index
    %703 = tpu.strided_load %arg7[%c295, %c0_706] {strides = array<i32: 2, 1>} : memref<392x64xf32, #tpu.memory_space<vmem>>, vector<7x64xf32>
    %704 = arith.maximumf %702, %703 : vector<7x64xf32>
    %c70_707 = arith.constant 70 : index
    %c0_708 = arith.constant 0 : index
    %705 = vector.load %arg8[%c70_707, %c0_708] : memref<98x64xf32, #tpu.memory_space<vmem>>, vector<7x64xf32>
    tpu.vector_store %arg8[%c70_707, %c0_708], %704 {strides = array<i32>} : memref<98x64xf32, #tpu.memory_space<vmem>>, vector<7x64xf32>,
    %c308_709 = arith.constant 308 : index
    %c0_710 = arith.constant 0 : index
    %706 = tpu.strided_load %arg7[%c308_709, %c0_710] {strides = array<i32: 2, 1>} : memref<392x64xf32, #tpu.memory_space<vmem>>, vector<7x64xf32>
    %c309 = arith.constant 309 : index
    %c0_711 = arith.constant 0 : index
    %707 = tpu.strided_load %arg7[%c309, %c0_711] {strides = array<i32: 2, 1>} : memref<392x64xf32, #tpu.memory_space<vmem>>, vector<7x64xf32>
    %708 = arith.maximumf %706, %707 : vector<7x64xf32>
    %c322_712 = arith.constant 322 : index
    %c0_713 = arith.constant 0 : index
    %709 = tpu.strided_load %arg7[%c322_712, %c0_713] {strides = array<i32: 2, 1>} : memref<392x64xf32, #tpu.memory_space<vmem>>, vector<7x64xf32>
    %710 = arith.maximumf %708, %709 : vector<7x64xf32>
    %c323 = arith.constant 323 : index
    %c0_714 = arith.constant 0 : index
    %711 = tpu.strided_load %arg7[%c323, %c0_714] {strides = array<i32: 2, 1>} : memref<392x64xf32, #tpu.memory_space<vmem>>, vector<7x64xf32>
    %712 = arith.maximumf %710, %711 : vector<7x64xf32>
    %c77 = arith.constant 77 : index
    %c0_715 = arith.constant 0 : index
    %713 = vector.load %arg8[%c77, %c0_715] : memref<98x64xf32, #tpu.memory_space<vmem>>, vector<7x64xf32>
    tpu.vector_store %arg8[%c77, %c0_715], %712 {strides = array<i32>} : memref<98x64xf32, #tpu.memory_space<vmem>>, vector<7x64xf32>,
    %c336_716 = arith.constant 336 : index
    %c0_717 = arith.constant 0 : index
    %714 = tpu.strided_load %arg7[%c336_716, %c0_717] {strides = array<i32: 2, 1>} : memref<392x64xf32, #tpu.memory_space<vmem>>, vector<7x64xf32>
    %c337 = arith.constant 337 : index
    %c0_718 = arith.constant 0 : index
    %715 = tpu.strided_load %arg7[%c337, %c0_718] {strides = array<i32: 2, 1>} : memref<392x64xf32, #tpu.memory_space<vmem>>, vector<7x64xf32>
    %716 = arith.maximumf %714, %715 : vector<7x64xf32>
    %c350_719 = arith.constant 350 : index
    %c0_720 = arith.constant 0 : index
    %717 = tpu.strided_load %arg7[%c350_719, %c0_720] {strides = array<i32: 2, 1>} : memref<392x64xf32, #tpu.memory_space<vmem>>, vector<7x64xf32>
    %718 = arith.maximumf %716, %717 : vector<7x64xf32>
    %c351 = arith.constant 351 : index
    %c0_721 = arith.constant 0 : index
    %719 = tpu.strided_load %arg7[%c351, %c0_721] {strides = array<i32: 2, 1>} : memref<392x64xf32, #tpu.memory_space<vmem>>, vector<7x64xf32>
    %720 = arith.maximumf %718, %719 : vector<7x64xf32>
    %c84_722 = arith.constant 84 : index
    %c0_723 = arith.constant 0 : index
    %721 = vector.load %arg8[%c84_722, %c0_723] : memref<98x64xf32, #tpu.memory_space<vmem>>, vector<7x64xf32>
    tpu.vector_store %arg8[%c84_722, %c0_723], %720 {strides = array<i32>} : memref<98x64xf32, #tpu.memory_space<vmem>>, vector<7x64xf32>,
    %c364_724 = arith.constant 364 : index
    %c0_725 = arith.constant 0 : index
    %722 = tpu.strided_load %arg7[%c364_724, %c0_725] {strides = array<i32: 2, 1>} : memref<392x64xf32, #tpu.memory_space<vmem>>, vector<7x64xf32>
    %c365 = arith.constant 365 : index
    %c0_726 = arith.constant 0 : index
    %723 = tpu.strided_load %arg7[%c365, %c0_726] {strides = array<i32: 2, 1>} : memref<392x64xf32, #tpu.memory_space<vmem>>, vector<7x64xf32>
    %724 = arith.maximumf %722, %723 : vector<7x64xf32>
    %c378_727 = arith.constant 378 : index
    %c0_728 = arith.constant 0 : index
    %725 = tpu.strided_load %arg7[%c378_727, %c0_728] {strides = array<i32: 2, 1>} : memref<392x64xf32, #tpu.memory_space<vmem>>, vector<7x64xf32>
    %726 = arith.maximumf %724, %725 : vector<7x64xf32>
    %c379 = arith.constant 379 : index
    %c0_729 = arith.constant 0 : index
    %727 = tpu.strided_load %arg7[%c379, %c0_729] {strides = array<i32: 2, 1>} : memref<392x64xf32, #tpu.memory_space<vmem>>, vector<7x64xf32>
    %728 = arith.maximumf %726, %727 : vector<7x64xf32>
    %c91 = arith.constant 91 : index
    %c0_730 = arith.constant 0 : index
    %729 = vector.load %arg8[%c91, %c0_730] : memref<98x64xf32, #tpu.memory_space<vmem>>, vector<7x64xf32>
    tpu.vector_store %arg8[%c91, %c0_730], %728 {strides = array<i32>} : memref<98x64xf32, #tpu.memory_space<vmem>>, vector<7x64xf32>,
    %c0_731 = arith.constant 0 : index
    %c0_732 = arith.constant 0 : index
    %730 = vector.load %arg8[%c0_731, %c0_732] : memref<98x64xf32, #tpu.memory_space<vmem>>, vector<7x64xf32>
    %731 = vector.extract_strided_slice %730 {offsets = [0, 0], sizes = [5, 64], strides = [1, 1]} : vector<7x64xf32> to vector<5x64xf32>
    %c0_733 = arith.constant 0 : index
    %c0_734 = arith.constant 0 : index
    %732 = vector.load %arg9[%c0_733, %c0_734] : memref<50x576xf32, #tpu.memory_space<vmem>>, vector<5x64xf32>
    tpu.vector_store %arg9[%c0_733, %c0_734], %731 {strides = array<i32>} : memref<50x576xf32, #tpu.memory_space<vmem>>, vector<5x64xf32>,
    %733 = vector.extract_strided_slice %730 {offsets = [1, 0], sizes = [5, 64], strides = [1, 1]} : vector<7x64xf32> to vector<5x64xf32>
    %c0_735 = arith.constant 0 : index
    %c64_736 = arith.constant 64 : index
    %734 = vector.load %arg9[%c0_735, %c64_736] : memref<50x576xf32, #tpu.memory_space<vmem>>, vector<5x64xf32>
    tpu.vector_store %arg9[%c0_735, %c64_736], %733 {strides = array<i32>} : memref<50x576xf32, #tpu.memory_space<vmem>>, vector<5x64xf32>,
    %735 = vector.extract_strided_slice %730 {offsets = [2, 0], sizes = [5, 64], strides = [1, 1]} : vector<7x64xf32> to vector<5x64xf32>
    %c0_737 = arith.constant 0 : index
    %c128_738 = arith.constant 128 : index
    %736 = vector.load %arg9[%c0_737, %c128_738] : memref<50x576xf32, #tpu.memory_space<vmem>>, vector<5x64xf32>
    tpu.vector_store %arg9[%c0_737, %c128_738], %735 {strides = array<i32>} : memref<50x576xf32, #tpu.memory_space<vmem>>, vector<5x64xf32>,
    %c7_739 = arith.constant 7 : index
    %c0_740 = arith.constant 0 : index
    %737 = vector.load %arg8[%c7_739, %c0_740] : memref<98x64xf32, #tpu.memory_space<vmem>>, vector<7x64xf32>
    %738 = vector.extract_strided_slice %737 {offsets = [0, 0], sizes = [5, 64], strides = [1, 1]} : vector<7x64xf32> to vector<5x64xf32>
    %c0_741 = arith.constant 0 : index
    %c192_742 = arith.constant 192 : index
    %739 = vector.load %arg9[%c0_741, %c192_742] : memref<50x576xf32, #tpu.memory_space<vmem>>, vector<5x64xf32>
    tpu.vector_store %arg9[%c0_741, %c192_742], %738 {strides = array<i32>} : memref<50x576xf32, #tpu.memory_space<vmem>>, vector<5x64xf32>,
    %740 = vector.extract_strided_slice %737 {offsets = [1, 0], sizes = [5, 64], strides = [1, 1]} : vector<7x64xf32> to vector<5x64xf32>
    %c0_743 = arith.constant 0 : index
    %c256_744 = arith.constant 256 : index
    %741 = vector.load %arg9[%c0_743, %c256_744] : memref<50x576xf32, #tpu.memory_space<vmem>>, vector<5x64xf32>
    tpu.vector_store %arg9[%c0_743, %c256_744], %740 {strides = array<i32>} : memref<50x576xf32, #tpu.memory_space<vmem>>, vector<5x64xf32>,
    %742 = vector.extract_strided_slice %737 {offsets = [2, 0], sizes = [5, 64], strides = [1, 1]} : vector<7x64xf32> to vector<5x64xf32>
    %c0_745 = arith.constant 0 : index
    %c320_746 = arith.constant 320 : index
    %743 = vector.load %arg9[%c0_745, %c320_746] : memref<50x576xf32, #tpu.memory_space<vmem>>, vector<5x64xf32>
    tpu.vector_store %arg9[%c0_745, %c320_746], %742 {strides = array<i32>} : memref<50x576xf32, #tpu.memory_space<vmem>>, vector<5x64xf32>,
    %c14_747 = arith.constant 14 : index
    %c0_748 = arith.constant 0 : index
    %744 = vector.load %arg8[%c14_747, %c0_748] : memref<98x64xf32, #tpu.memory_space<vmem>>, vector<7x64xf32>
    %745 = vector.extract_strided_slice %744 {offsets = [0, 0], sizes = [5, 64], strides = [1, 1]} : vector<7x64xf32> to vector<5x64xf32>
    %c0_749 = arith.constant 0 : index
    %c384_750 = arith.constant 384 : index
    %746 = vector.load %arg9[%c0_749, %c384_750] : memref<50x576xf32, #tpu.memory_space<vmem>>, vector<5x64xf32>
    tpu.vector_store %arg9[%c0_749, %c384_750], %745 {strides = array<i32>} : memref<50x576xf32, #tpu.memory_space<vmem>>, vector<5x64xf32>,
    %747 = vector.extract_strided_slice %744 {offsets = [1, 0], sizes = [5, 64], strides = [1, 1]} : vector<7x64xf32> to vector<5x64xf32>
    %c0_751 = arith.constant 0 : index
    %c448_752 = arith.constant 448 : index
    %748 = vector.load %arg9[%c0_751, %c448_752] : memref<50x576xf32, #tpu.memory_space<vmem>>, vector<5x64xf32>
    tpu.vector_store %arg9[%c0_751, %c448_752], %747 {strides = array<i32>} : memref<50x576xf32, #tpu.memory_space<vmem>>, vector<5x64xf32>,
    %749 = vector.extract_strided_slice %744 {offsets = [2, 0], sizes = [5, 64], strides = [1, 1]} : vector<7x64xf32> to vector<5x64xf32>
    %c0_753 = arith.constant 0 : index
    %c512 = arith.constant 512 : index
    %750 = vector.load %arg9[%c0_753, %c512] : memref<50x576xf32, #tpu.memory_space<vmem>>, vector<5x64xf32>
    tpu.vector_store %arg9[%c0_753, %c512], %749 {strides = array<i32>} : memref<50x576xf32, #tpu.memory_space<vmem>>, vector<5x64xf32>,
    %c7_754 = arith.constant 7 : index
    %c0_755 = arith.constant 0 : index
    %751 = vector.load %arg8[%c7_754, %c0_755] : memref<98x64xf32, #tpu.memory_space<vmem>>, vector<7x64xf32>
    %752 = vector.extract_strided_slice %751 {offsets = [0, 0], sizes = [5, 64], strides = [1, 1]} : vector<7x64xf32> to vector<5x64xf32>
    %c5 = arith.constant 5 : index
    %c0_756 = arith.constant 0 : index
    %753 = vector.load %arg9[%c5, %c0_756] : memref<50x576xf32, #tpu.memory_space<vmem>>, vector<5x64xf32>
    tpu.vector_store %arg9[%c5, %c0_756], %752 {strides = array<i32>} : memref<50x576xf32, #tpu.memory_space<vmem>>, vector<5x64xf32>,
    %754 = vector.extract_strided_slice %751 {offsets = [1, 0], sizes = [5, 64], strides = [1, 1]} : vector<7x64xf32> to vector<5x64xf32>
    %c5_757 = arith.constant 5 : index
    %c64_758 = arith.constant 64 : index
    %755 = vector.load %arg9[%c5_757, %c64_758] : memref<50x576xf32, #tpu.memory_space<vmem>>, vector<5x64xf32>
    tpu.vector_store %arg9[%c5_757, %c64_758], %754 {strides = array<i32>} : memref<50x576xf32, #tpu.memory_space<vmem>>, vector<5x64xf32>,
    %756 = vector.extract_strided_slice %751 {offsets = [2, 0], sizes = [5, 64], strides = [1, 1]} : vector<7x64xf32> to vector<5x64xf32>
    %c5_759 = arith.constant 5 : index
    %c128_760 = arith.constant 128 : index
    %757 = vector.load %arg9[%c5_759, %c128_760] : memref<50x576xf32, #tpu.memory_space<vmem>>, vector<5x64xf32>
    tpu.vector_store %arg9[%c5_759, %c128_760], %756 {strides = array<i32>} : memref<50x576xf32, #tpu.memory_space<vmem>>, vector<5x64xf32>,
    %c14_761 = arith.constant 14 : index
    %c0_762 = arith.constant 0 : index
    %758 = vector.load %arg8[%c14_761, %c0_762] : memref<98x64xf32, #tpu.memory_space<vmem>>, vector<7x64xf32>
    %759 = vector.extract_strided_slice %758 {offsets = [0, 0], sizes = [5, 64], strides = [1, 1]} : vector<7x64xf32> to vector<5x64xf32>
    %c5_763 = arith.constant 5 : index
    %c192_764 = arith.constant 192 : index
    %760 = vector.load %arg9[%c5_763, %c192_764] : memref<50x576xf32, #tpu.memory_space<vmem>>, vector<5x64xf32>
    tpu.vector_store %arg9[%c5_763, %c192_764], %759 {strides = array<i32>} : memref<50x576xf32, #tpu.memory_space<vmem>>, vector<5x64xf32>,
    %761 = vector.extract_strided_slice %758 {offsets = [1, 0], sizes = [5, 64], strides = [1, 1]} : vector<7x64xf32> to vector<5x64xf32>
    %c5_765 = arith.constant 5 : index
    %c256_766 = arith.constant 256 : index
    %762 = vector.load %arg9[%c5_765, %c256_766] : memref<50x576xf32, #tpu.memory_space<vmem>>, vector<5x64xf32>
    tpu.vector_store %arg9[%c5_765, %c256_766], %761 {strides = array<i32>} : memref<50x576xf32, #tpu.memory_space<vmem>>, vector<5x64xf32>,
    %763 = vector.extract_strided_slice %758 {offsets = [2, 0], sizes = [5, 64], strides = [1, 1]} : vector<7x64xf32> to vector<5x64xf32>
    %c5_767 = arith.constant 5 : index
    %c320_768 = arith.constant 320 : index
    %764 = vector.load %arg9[%c5_767, %c320_768] : memref<50x576xf32, #tpu.memory_space<vmem>>, vector<5x64xf32>
    tpu.vector_store %arg9[%c5_767, %c320_768], %763 {strides = array<i32>} : memref<50x576xf32, #tpu.memory_space<vmem>>, vector<5x64xf32>,
    %c21_769 = arith.constant 21 : index
    %c0_770 = arith.constant 0 : index
    %765 = vector.load %arg8[%c21_769, %c0_770] : memref<98x64xf32, #tpu.memory_space<vmem>>, vector<7x64xf32>
    %766 = vector.extract_strided_slice %765 {offsets = [0, 0], sizes = [5, 64], strides = [1, 1]} : vector<7x64xf32> to vector<5x64xf32>
    %c5_771 = arith.constant 5 : index
    %c384_772 = arith.constant 384 : index
    %767 = vector.load %arg9[%c5_771, %c384_772] : memref<50x576xf32, #tpu.memory_space<vmem>>, vector<5x64xf32>
    tpu.vector_store %arg9[%c5_771, %c384_772], %766 {strides = array<i32>} : memref<50x576xf32, #tpu.memory_space<vmem>>, vector<5x64xf32>,
    %768 = vector.extract_strided_slice %765 {offsets = [1, 0], sizes = [5, 64], strides = [1, 1]} : vector<7x64xf32> to vector<5x64xf32>
    %c5_773 = arith.constant 5 : index
    %c448_774 = arith.constant 448 : index
    %769 = vector.load %arg9[%c5_773, %c448_774] : memref<50x576xf32, #tpu.memory_space<vmem>>, vector<5x64xf32>
    tpu.vector_store %arg9[%c5_773, %c448_774], %768 {strides = array<i32>} : memref<50x576xf32, #tpu.memory_space<vmem>>, vector<5x64xf32>,
    %770 = vector.extract_strided_slice %765 {offsets = [2, 0], sizes = [5, 64], strides = [1, 1]} : vector<7x64xf32> to vector<5x64xf32>
    %c5_775 = arith.constant 5 : index
    %c512_776 = arith.constant 512 : index
    %771 = vector.load %arg9[%c5_775, %c512_776] : memref<50x576xf32, #tpu.memory_space<vmem>>, vector<5x64xf32>
    tpu.vector_store %arg9[%c5_775, %c512_776], %770 {strides = array<i32>} : memref<50x576xf32, #tpu.memory_space<vmem>>, vector<5x64xf32>,
    %c14_777 = arith.constant 14 : index
    %c0_778 = arith.constant 0 : index
    %772 = vector.load %arg8[%c14_777, %c0_778] : memref<98x64xf32, #tpu.memory_space<vmem>>, vector<7x64xf32>
    %773 = vector.extract_strided_slice %772 {offsets = [0, 0], sizes = [5, 64], strides = [1, 1]} : vector<7x64xf32> to vector<5x64xf32>
    %c10 = arith.constant 10 : index
    %c0_779 = arith.constant 0 : index
    %774 = vector.load %arg9[%c10, %c0_779] : memref<50x576xf32, #tpu.memory_space<vmem>>, vector<5x64xf32>
    tpu.vector_store %arg9[%c10, %c0_779], %773 {strides = array<i32>} : memref<50x576xf32, #tpu.memory_space<vmem>>, vector<5x64xf32>,
    %775 = vector.extract_strided_slice %772 {offsets = [1, 0], sizes = [5, 64], strides = [1, 1]} : vector<7x64xf32> to vector<5x64xf32>
    %c10_780 = arith.constant 10 : index
    %c64_781 = arith.constant 64 : index
    %776 = vector.load %arg9[%c10_780, %c64_781] : memref<50x576xf32, #tpu.memory_space<vmem>>, vector<5x64xf32>
    tpu.vector_store %arg9[%c10_780, %c64_781], %775 {strides = array<i32>} : memref<50x576xf32, #tpu.memory_space<vmem>>, vector<5x64xf32>,
    %777 = vector.extract_strided_slice %772 {offsets = [2, 0], sizes = [5, 64], strides = [1, 1]} : vector<7x64xf32> to vector<5x64xf32>
    %c10_782 = arith.constant 10 : index
    %c128_783 = arith.constant 128 : index
    %778 = vector.load %arg9[%c10_782, %c128_783] : memref<50x576xf32, #tpu.memory_space<vmem>>, vector<5x64xf32>
    tpu.vector_store %arg9[%c10_782, %c128_783], %777 {strides = array<i32>} : memref<50x576xf32, #tpu.memory_space<vmem>>, vector<5x64xf32>,
    %c21_784 = arith.constant 21 : index
    %c0_785 = arith.constant 0 : index
    %779 = vector.load %arg8[%c21_784, %c0_785] : memref<98x64xf32, #tpu.memory_space<vmem>>, vector<7x64xf32>
    %780 = vector.extract_strided_slice %779 {offsets = [0, 0], sizes = [5, 64], strides = [1, 1]} : vector<7x64xf32> to vector<5x64xf32>
    %c10_786 = arith.constant 10 : index
    %c192_787 = arith.constant 192 : index
    %781 = vector.load %arg9[%c10_786, %c192_787] : memref<50x576xf32, #tpu.memory_space<vmem>>, vector<5x64xf32>
    tpu.vector_store %arg9[%c10_786, %c192_787], %780 {strides = array<i32>} : memref<50x576xf32, #tpu.memory_space<vmem>>, vector<5x64xf32>,
    %782 = vector.extract_strided_slice %779 {offsets = [1, 0], sizes = [5, 64], strides = [1, 1]} : vector<7x64xf32> to vector<5x64xf32>
    %c10_788 = arith.constant 10 : index
    %c256_789 = arith.constant 256 : index
    %783 = vector.load %arg9[%c10_788, %c256_789] : memref<50x576xf32, #tpu.memory_space<vmem>>, vector<5x64xf32>
    tpu.vector_store %arg9[%c10_788, %c256_789], %782 {strides = array<i32>} : memref<50x576xf32, #tpu.memory_space<vmem>>, vector<5x64xf32>,
    %784 = vector.extract_strided_slice %779 {offsets = [2, 0], sizes = [5, 64], strides = [1, 1]} : vector<7x64xf32> to vector<5x64xf32>
    %c10_790 = arith.constant 10 : index
    %c320_791 = arith.constant 320 : index
    %785 = vector.load %arg9[%c10_790, %c320_791] : memref<50x576xf32, #tpu.memory_space<vmem>>, vector<5x64xf32>
    tpu.vector_store %arg9[%c10_790, %c320_791], %784 {strides = array<i32>} : memref<50x576xf32, #tpu.memory_space<vmem>>, vector<5x64xf32>,
    %c28_792 = arith.constant 28 : index
    %c0_793 = arith.constant 0 : index
    %786 = vector.load %arg8[%c28_792, %c0_793] : memref<98x64xf32, #tpu.memory_space<vmem>>, vector<7x64xf32>
    %787 = vector.extract_strided_slice %786 {offsets = [0, 0], sizes = [5, 64], strides = [1, 1]} : vector<7x64xf32> to vector<5x64xf32>
    %c10_794 = arith.constant 10 : index
    %c384_795 = arith.constant 384 : index
    %788 = vector.load %arg9[%c10_794, %c384_795] : memref<50x576xf32, #tpu.memory_space<vmem>>, vector<5x64xf32>
    tpu.vector_store %arg9[%c10_794, %c384_795], %787 {strides = array<i32>} : memref<50x576xf32, #tpu.memory_space<vmem>>, vector<5x64xf32>,
    %789 = vector.extract_strided_slice %786 {offsets = [1, 0], sizes = [5, 64], strides = [1, 1]} : vector<7x64xf32> to vector<5x64xf32>
    %c10_796 = arith.constant 10 : index
    %c448_797 = arith.constant 448 : index
    %790 = vector.load %arg9[%c10_796, %c448_797] : memref<50x576xf32, #tpu.memory_space<vmem>>, vector<5x64xf32>
    tpu.vector_store %arg9[%c10_796, %c448_797], %789 {strides = array<i32>} : memref<50x576xf32, #tpu.memory_space<vmem>>, vector<5x64xf32>,
    %791 = vector.extract_strided_slice %786 {offsets = [2, 0], sizes = [5, 64], strides = [1, 1]} : vector<7x64xf32> to vector<5x64xf32>
    %c10_798 = arith.constant 10 : index
    %c512_799 = arith.constant 512 : index
    %792 = vector.load %arg9[%c10_798, %c512_799] : memref<50x576xf32, #tpu.memory_space<vmem>>, vector<5x64xf32>
    tpu.vector_store %arg9[%c10_798, %c512_799], %791 {strides = array<i32>} : memref<50x576xf32, #tpu.memory_space<vmem>>, vector<5x64xf32>,
    %c21_800 = arith.constant 21 : index
    %c0_801 = arith.constant 0 : index
    %793 = vector.load %arg8[%c21_800, %c0_801] : memref<98x64xf32, #tpu.memory_space<vmem>>, vector<7x64xf32>
    %794 = vector.extract_strided_slice %793 {offsets = [0, 0], sizes = [5, 64], strides = [1, 1]} : vector<7x64xf32> to vector<5x64xf32>
    %c15_802 = arith.constant 15 : index
    %c0_803 = arith.constant 0 : index
    %795 = vector.load %arg9[%c15_802, %c0_803] : memref<50x576xf32, #tpu.memory_space<vmem>>, vector<5x64xf32>
    tpu.vector_store %arg9[%c15_802, %c0_803], %794 {strides = array<i32>} : memref<50x576xf32, #tpu.memory_space<vmem>>, vector<5x64xf32>,
    %796 = vector.extract_strided_slice %793 {offsets = [1, 0], sizes = [5, 64], strides = [1, 1]} : vector<7x64xf32> to vector<5x64xf32>
    %c15_804 = arith.constant 15 : index
    %c64_805 = arith.constant 64 : index
    %797 = vector.load %arg9[%c15_804, %c64_805] : memref<50x576xf32, #tpu.memory_space<vmem>>, vector<5x64xf32>
    tpu.vector_store %arg9[%c15_804, %c64_805], %796 {strides = array<i32>} : memref<50x576xf32, #tpu.memory_space<vmem>>, vector<5x64xf32>,
    %798 = vector.extract_strided_slice %793 {offsets = [2, 0], sizes = [5, 64], strides = [1, 1]} : vector<7x64xf32> to vector<5x64xf32>
    %c15_806 = arith.constant 15 : index
    %c128_807 = arith.constant 128 : index
    %799 = vector.load %arg9[%c15_806, %c128_807] : memref<50x576xf32, #tpu.memory_space<vmem>>, vector<5x64xf32>
    tpu.vector_store %arg9[%c15_806, %c128_807], %798 {strides = array<i32>} : memref<50x576xf32, #tpu.memory_space<vmem>>, vector<5x64xf32>,
    %c28_808 = arith.constant 28 : index
    %c0_809 = arith.constant 0 : index
    %800 = vector.load %arg8[%c28_808, %c0_809] : memref<98x64xf32, #tpu.memory_space<vmem>>, vector<7x64xf32>
    %801 = vector.extract_strided_slice %800 {offsets = [0, 0], sizes = [5, 64], strides = [1, 1]} : vector<7x64xf32> to vector<5x64xf32>
    %c15_810 = arith.constant 15 : index
    %c192_811 = arith.constant 192 : index
    %802 = vector.load %arg9[%c15_810, %c192_811] : memref<50x576xf32, #tpu.memory_space<vmem>>, vector<5x64xf32>
    tpu.vector_store %arg9[%c15_810, %c192_811], %801 {strides = array<i32>} : memref<50x576xf32, #tpu.memory_space<vmem>>, vector<5x64xf32>,
    %803 = vector.extract_strided_slice %800 {offsets = [1, 0], sizes = [5, 64], strides = [1, 1]} : vector<7x64xf32> to vector<5x64xf32>
    %c15_812 = arith.constant 15 : index
    %c256_813 = arith.constant 256 : index
    %804 = vector.load %arg9[%c15_812, %c256_813] : memref<50x576xf32, #tpu.memory_space<vmem>>, vector<5x64xf32>
    tpu.vector_store %arg9[%c15_812, %c256_813], %803 {strides = array<i32>} : memref<50x576xf32, #tpu.memory_space<vmem>>, vector<5x64xf32>,
    %805 = vector.extract_strided_slice %800 {offsets = [2, 0], sizes = [5, 64], strides = [1, 1]} : vector<7x64xf32> to vector<5x64xf32>
    %c15_814 = arith.constant 15 : index
    %c320_815 = arith.constant 320 : index
    %806 = vector.load %arg9[%c15_814, %c320_815] : memref<50x576xf32, #tpu.memory_space<vmem>>, vector<5x64xf32>
    tpu.vector_store %arg9[%c15_814, %c320_815], %805 {strides = array<i32>} : memref<50x576xf32, #tpu.memory_space<vmem>>, vector<5x64xf32>,
    %c35_816 = arith.constant 35 : index
    %c0_817 = arith.constant 0 : index
    %807 = vector.load %arg8[%c35_816, %c0_817] : memref<98x64xf32, #tpu.memory_space<vmem>>, vector<7x64xf32>
    %808 = vector.extract_strided_slice %807 {offsets = [0, 0], sizes = [5, 64], strides = [1, 1]} : vector<7x64xf32> to vector<5x64xf32>
    %c15_818 = arith.constant 15 : index
    %c384_819 = arith.constant 384 : index
    %809 = vector.load %arg9[%c15_818, %c384_819] : memref<50x576xf32, #tpu.memory_space<vmem>>, vector<5x64xf32>
    tpu.vector_store %arg9[%c15_818, %c384_819], %808 {strides = array<i32>} : memref<50x576xf32, #tpu.memory_space<vmem>>, vector<5x64xf32>,
    %810 = vector.extract_strided_slice %807 {offsets = [1, 0], sizes = [5, 64], strides = [1, 1]} : vector<7x64xf32> to vector<5x64xf32>
    %c15_820 = arith.constant 15 : index
    %c448_821 = arith.constant 448 : index
    %811 = vector.load %arg9[%c15_820, %c448_821] : memref<50x576xf32, #tpu.memory_space<vmem>>, vector<5x64xf32>
    tpu.vector_store %arg9[%c15_820, %c448_821], %810 {strides = array<i32>} : memref<50x576xf32, #tpu.memory_space<vmem>>, vector<5x64xf32>,
    %812 = vector.extract_strided_slice %807 {offsets = [2, 0], sizes = [5, 64], strides = [1, 1]} : vector<7x64xf32> to vector<5x64xf32>
    %c15_822 = arith.constant 15 : index
    %c512_823 = arith.constant 512 : index
    %813 = vector.load %arg9[%c15_822, %c512_823] : memref<50x576xf32, #tpu.memory_space<vmem>>, vector<5x64xf32>
    tpu.vector_store %arg9[%c15_822, %c512_823], %812 {strides = array<i32>} : memref<50x576xf32, #tpu.memory_space<vmem>>, vector<5x64xf32>,
    %c28_824 = arith.constant 28 : index
    %c0_825 = arith.constant 0 : index
    %814 = vector.load %arg8[%c28_824, %c0_825] : memref<98x64xf32, #tpu.memory_space<vmem>>, vector<7x64xf32>
    %815 = vector.extract_strided_slice %814 {offsets = [0, 0], sizes = [5, 64], strides = [1, 1]} : vector<7x64xf32> to vector<5x64xf32>
    %c20 = arith.constant 20 : index
    %c0_826 = arith.constant 0 : index
    %816 = vector.load %arg9[%c20, %c0_826] : memref<50x576xf32, #tpu.memory_space<vmem>>, vector<5x64xf32>
    tpu.vector_store %arg9[%c20, %c0_826], %815 {strides = array<i32>} : memref<50x576xf32, #tpu.memory_space<vmem>>, vector<5x64xf32>,
    %817 = vector.extract_strided_slice %814 {offsets = [1, 0], sizes = [5, 64], strides = [1, 1]} : vector<7x64xf32> to vector<5x64xf32>
    %c20_827 = arith.constant 20 : index
    %c64_828 = arith.constant 64 : index
    %818 = vector.load %arg9[%c20_827, %c64_828] : memref<50x576xf32, #tpu.memory_space<vmem>>, vector<5x64xf32>
    tpu.vector_store %arg9[%c20_827, %c64_828], %817 {strides = array<i32>} : memref<50x576xf32, #tpu.memory_space<vmem>>, vector<5x64xf32>,
    %819 = vector.extract_strided_slice %814 {offsets = [2, 0], sizes = [5, 64], strides = [1, 1]} : vector<7x64xf32> to vector<5x64xf32>
    %c20_829 = arith.constant 20 : index
    %c128_830 = arith.constant 128 : index
    %820 = vector.load %arg9[%c20_829, %c128_830] : memref<50x576xf32, #tpu.memory_space<vmem>>, vector<5x64xf32>
    tpu.vector_store %arg9[%c20_829, %c128_830], %819 {strides = array<i32>} : memref<50x576xf32, #tpu.memory_space<vmem>>, vector<5x64xf32>,
    %c35_831 = arith.constant 35 : index
    %c0_832 = arith.constant 0 : index
    %821 = vector.load %arg8[%c35_831, %c0_832] : memref<98x64xf32, #tpu.memory_space<vmem>>, vector<7x64xf32>
    %822 = vector.extract_strided_slice %821 {offsets = [0, 0], sizes = [5, 64], strides = [1, 1]} : vector<7x64xf32> to vector<5x64xf32>
    %c20_833 = arith.constant 20 : index
    %c192_834 = arith.constant 192 : index
    %823 = vector.load %arg9[%c20_833, %c192_834] : memref<50x576xf32, #tpu.memory_space<vmem>>, vector<5x64xf32>
    tpu.vector_store %arg9[%c20_833, %c192_834], %822 {strides = array<i32>} : memref<50x576xf32, #tpu.memory_space<vmem>>, vector<5x64xf32>,
    %824 = vector.extract_strided_slice %821 {offsets = [1, 0], sizes = [5, 64], strides = [1, 1]} : vector<7x64xf32> to vector<5x64xf32>
    %c20_835 = arith.constant 20 : index
    %c256_836 = arith.constant 256 : index
    %825 = vector.load %arg9[%c20_835, %c256_836] : memref<50x576xf32, #tpu.memory_space<vmem>>, vector<5x64xf32>
    tpu.vector_store %arg9[%c20_835, %c256_836], %824 {strides = array<i32>} : memref<50x576xf32, #tpu.memory_space<vmem>>, vector<5x64xf32>,
    %826 = vector.extract_strided_slice %821 {offsets = [2, 0], sizes = [5, 64], strides = [1, 1]} : vector<7x64xf32> to vector<5x64xf32>
    %c20_837 = arith.constant 20 : index
    %c320_838 = arith.constant 320 : index
    %827 = vector.load %arg9[%c20_837, %c320_838] : memref<50x576xf32, #tpu.memory_space<vmem>>, vector<5x64xf32>
    tpu.vector_store %arg9[%c20_837, %c320_838], %826 {strides = array<i32>} : memref<50x576xf32, #tpu.memory_space<vmem>>, vector<5x64xf32>,
    %c42_839 = arith.constant 42 : index
    %c0_840 = arith.constant 0 : index
    %828 = vector.load %arg8[%c42_839, %c0_840] : memref<98x64xf32, #tpu.memory_space<vmem>>, vector<7x64xf32>
    %829 = vector.extract_strided_slice %828 {offsets = [0, 0], sizes = [5, 64], strides = [1, 1]} : vector<7x64xf32> to vector<5x64xf32>
    %c20_841 = arith.constant 20 : index
    %c384_842 = arith.constant 384 : index
    %830 = vector.load %arg9[%c20_841, %c384_842] : memref<50x576xf32, #tpu.memory_space<vmem>>, vector<5x64xf32>
    tpu.vector_store %arg9[%c20_841, %c384_842], %829 {strides = array<i32>} : memref<50x576xf32, #tpu.memory_space<vmem>>, vector<5x64xf32>,
    %831 = vector.extract_strided_slice %828 {offsets = [1, 0], sizes = [5, 64], strides = [1, 1]} : vector<7x64xf32> to vector<5x64xf32>
    %c20_843 = arith.constant 20 : index
    %c448_844 = arith.constant 448 : index
    %832 = vector.load %arg9[%c20_843, %c448_844] : memref<50x576xf32, #tpu.memory_space<vmem>>, vector<5x64xf32>
    tpu.vector_store %arg9[%c20_843, %c448_844], %831 {strides = array<i32>} : memref<50x576xf32, #tpu.memory_space<vmem>>, vector<5x64xf32>,
    %833 = vector.extract_strided_slice %828 {offsets = [2, 0], sizes = [5, 64], strides = [1, 1]} : vector<7x64xf32> to vector<5x64xf32>
    %c20_845 = arith.constant 20 : index
    %c512_846 = arith.constant 512 : index
    %834 = vector.load %arg9[%c20_845, %c512_846] : memref<50x576xf32, #tpu.memory_space<vmem>>, vector<5x64xf32>
    tpu.vector_store %arg9[%c20_845, %c512_846], %833 {strides = array<i32>} : memref<50x576xf32, #tpu.memory_space<vmem>>, vector<5x64xf32>,
    %c49_847 = arith.constant 49 : index
    %c0_848 = arith.constant 0 : index
    %835 = vector.load %arg8[%c49_847, %c0_848] : memref<98x64xf32, #tpu.memory_space<vmem>>, vector<7x64xf32>
    %836 = vector.extract_strided_slice %835 {offsets = [0, 0], sizes = [5, 64], strides = [1, 1]} : vector<7x64xf32> to vector<5x64xf32>
    %c25 = arith.constant 25 : index
    %c0_849 = arith.constant 0 : index
    %837 = vector.load %arg9[%c25, %c0_849] : memref<50x576xf32, #tpu.memory_space<vmem>>, vector<5x64xf32>
    tpu.vector_store %arg9[%c25, %c0_849], %836 {strides = array<i32>} : memref<50x576xf32, #tpu.memory_space<vmem>>, vector<5x64xf32>,
    %838 = vector.extract_strided_slice %835 {offsets = [1, 0], sizes = [5, 64], strides = [1, 1]} : vector<7x64xf32> to vector<5x64xf32>
    %c25_850 = arith.constant 25 : index
    %c64_851 = arith.constant 64 : index
    %839 = vector.load %arg9[%c25_850, %c64_851] : memref<50x576xf32, #tpu.memory_space<vmem>>, vector<5x64xf32>
    tpu.vector_store %arg9[%c25_850, %c64_851], %838 {strides = array<i32>} : memref<50x576xf32, #tpu.memory_space<vmem>>, vector<5x64xf32>,
    %840 = vector.extract_strided_slice %835 {offsets = [2, 0], sizes = [5, 64], strides = [1, 1]} : vector<7x64xf32> to vector<5x64xf32>
    %c25_852 = arith.constant 25 : index
    %c128_853 = arith.constant 128 : index
    %841 = vector.load %arg9[%c25_852, %c128_853] : memref<50x576xf32, #tpu.memory_space<vmem>>, vector<5x64xf32>
    tpu.vector_store %arg9[%c25_852, %c128_853], %840 {strides = array<i32>} : memref<50x576xf32, #tpu.memory_space<vmem>>, vector<5x64xf32>,
    %c56_854 = arith.constant 56 : index
    %c0_855 = arith.constant 0 : index
    %842 = vector.load %arg8[%c56_854, %c0_855] : memref<98x64xf32, #tpu.memory_space<vmem>>, vector<7x64xf32>
    %843 = vector.extract_strided_slice %842 {offsets = [0, 0], sizes = [5, 64], strides = [1, 1]} : vector<7x64xf32> to vector<5x64xf32>
    %c25_856 = arith.constant 25 : index
    %c192_857 = arith.constant 192 : index
    %844 = vector.load %arg9[%c25_856, %c192_857] : memref<50x576xf32, #tpu.memory_space<vmem>>, vector<5x64xf32>
    tpu.vector_store %arg9[%c25_856, %c192_857], %843 {strides = array<i32>} : memref<50x576xf32, #tpu.memory_space<vmem>>, vector<5x64xf32>,
    %845 = vector.extract_strided_slice %842 {offsets = [1, 0], sizes = [5, 64], strides = [1, 1]} : vector<7x64xf32> to vector<5x64xf32>
    %c25_858 = arith.constant 25 : index
    %c256_859 = arith.constant 256 : index
    %846 = vector.load %arg9[%c25_858, %c256_859] : memref<50x576xf32, #tpu.memory_space<vmem>>, vector<5x64xf32>
    tpu.vector_store %arg9[%c25_858, %c256_859], %845 {strides = array<i32>} : memref<50x576xf32, #tpu.memory_space<vmem>>, vector<5x64xf32>,
    %847 = vector.extract_strided_slice %842 {offsets = [2, 0], sizes = [5, 64], strides = [1, 1]} : vector<7x64xf32> to vector<5x64xf32>
    %c25_860 = arith.constant 25 : index
    %c320_861 = arith.constant 320 : index
    %848 = vector.load %arg9[%c25_860, %c320_861] : memref<50x576xf32, #tpu.memory_space<vmem>>, vector<5x64xf32>
    tpu.vector_store %arg9[%c25_860, %c320_861], %847 {strides = array<i32>} : memref<50x576xf32, #tpu.memory_space<vmem>>, vector<5x64xf32>,
    %c63_862 = arith.constant 63 : index
    %c0_863 = arith.constant 0 : index
    %849 = vector.load %arg8[%c63_862, %c0_863] : memref<98x64xf32, #tpu.memory_space<vmem>>, vector<7x64xf32>
    %850 = vector.extract_strided_slice %849 {offsets = [0, 0], sizes = [5, 64], strides = [1, 1]} : vector<7x64xf32> to vector<5x64xf32>
    %c25_864 = arith.constant 25 : index
    %c384_865 = arith.constant 384 : index
    %851 = vector.load %arg9[%c25_864, %c384_865] : memref<50x576xf32, #tpu.memory_space<vmem>>, vector<5x64xf32>
    tpu.vector_store %arg9[%c25_864, %c384_865], %850 {strides = array<i32>} : memref<50x576xf32, #tpu.memory_space<vmem>>, vector<5x64xf32>,
    %852 = vector.extract_strided_slice %849 {offsets = [1, 0], sizes = [5, 64], strides = [1, 1]} : vector<7x64xf32> to vector<5x64xf32>
    %c25_866 = arith.constant 25 : index
    %c448_867 = arith.constant 448 : index
    %853 = vector.load %arg9[%c25_866, %c448_867] : memref<50x576xf32, #tpu.memory_space<vmem>>, vector<5x64xf32>
    tpu.vector_store %arg9[%c25_866, %c448_867], %852 {strides = array<i32>} : memref<50x576xf32, #tpu.memory_space<vmem>>, vector<5x64xf32>,
    %854 = vector.extract_strided_slice %849 {offsets = [2, 0], sizes = [5, 64], strides = [1, 1]} : vector<7x64xf32> to vector<5x64xf32>
    %c25_868 = arith.constant 25 : index
    %c512_869 = arith.constant 512 : index
    %855 = vector.load %arg9[%c25_868, %c512_869] : memref<50x576xf32, #tpu.memory_space<vmem>>, vector<5x64xf32>
    tpu.vector_store %arg9[%c25_868, %c512_869], %854 {strides = array<i32>} : memref<50x576xf32, #tpu.memory_space<vmem>>, vector<5x64xf32>,
    %c56_870 = arith.constant 56 : index
    %c0_871 = arith.constant 0 : index
    %856 = vector.load %arg8[%c56_870, %c0_871] : memref<98x64xf32, #tpu.memory_space<vmem>>, vector<7x64xf32>
    %857 = vector.extract_strided_slice %856 {offsets = [0, 0], sizes = [5, 64], strides = [1, 1]} : vector<7x64xf32> to vector<5x64xf32>
    %c30 = arith.constant 30 : index
    %c0_872 = arith.constant 0 : index
    %858 = vector.load %arg9[%c30, %c0_872] : memref<50x576xf32, #tpu.memory_space<vmem>>, vector<5x64xf32>
    tpu.vector_store %arg9[%c30, %c0_872], %857 {strides = array<i32>} : memref<50x576xf32, #tpu.memory_space<vmem>>, vector<5x64xf32>,
    %859 = vector.extract_strided_slice %856 {offsets = [1, 0], sizes = [5, 64], strides = [1, 1]} : vector<7x64xf32> to vector<5x64xf32>
    %c30_873 = arith.constant 30 : index
    %c64_874 = arith.constant 64 : index
    %860 = vector.load %arg9[%c30_873, %c64_874] : memref<50x576xf32, #tpu.memory_space<vmem>>, vector<5x64xf32>
    tpu.vector_store %arg9[%c30_873, %c64_874], %859 {strides = array<i32>} : memref<50x576xf32, #tpu.memory_space<vmem>>, vector<5x64xf32>,
    %861 = vector.extract_strided_slice %856 {offsets = [2, 0], sizes = [5, 64], strides = [1, 1]} : vector<7x64xf32> to vector<5x64xf32>
    %c30_875 = arith.constant 30 : index
    %c128_876 = arith.constant 128 : index
    %862 = vector.load %arg9[%c30_875, %c128_876] : memref<50x576xf32, #tpu.memory_space<vmem>>, vector<5x64xf32>
    tpu.vector_store %arg9[%c30_875, %c128_876], %861 {strides = array<i32>} : memref<50x576xf32, #tpu.memory_space<vmem>>, vector<5x64xf32>,
    %c63_877 = arith.constant 63 : index
    %c0_878 = arith.constant 0 : index
    %863 = vector.load %arg8[%c63_877, %c0_878] : memref<98x64xf32, #tpu.memory_space<vmem>>, vector<7x64xf32>
    %864 = vector.extract_strided_slice %863 {offsets = [0, 0], sizes = [5, 64], strides = [1, 1]} : vector<7x64xf32> to vector<5x64xf32>
    %c30_879 = arith.constant 30 : index
    %c192_880 = arith.constant 192 : index
    %865 = vector.load %arg9[%c30_879, %c192_880] : memref<50x576xf32, #tpu.memory_space<vmem>>, vector<5x64xf32>
    tpu.vector_store %arg9[%c30_879, %c192_880], %864 {strides = array<i32>} : memref<50x576xf32, #tpu.memory_space<vmem>>, vector<5x64xf32>,
    %866 = vector.extract_strided_slice %863 {offsets = [1, 0], sizes = [5, 64], strides = [1, 1]} : vector<7x64xf32> to vector<5x64xf32>
    %c30_881 = arith.constant 30 : index
    %c256_882 = arith.constant 256 : index
    %867 = vector.load %arg9[%c30_881, %c256_882] : memref<50x576xf32, #tpu.memory_space<vmem>>, vector<5x64xf32>
    tpu.vector_store %arg9[%c30_881, %c256_882], %866 {strides = array<i32>} : memref<50x576xf32, #tpu.memory_space<vmem>>, vector<5x64xf32>,
    %868 = vector.extract_strided_slice %863 {offsets = [2, 0], sizes = [5, 64], strides = [1, 1]} : vector<7x64xf32> to vector<5x64xf32>
    %c30_883 = arith.constant 30 : index
    %c320_884 = arith.constant 320 : index
    %869 = vector.load %arg9[%c30_883, %c320_884] : memref<50x576xf32, #tpu.memory_space<vmem>>, vector<5x64xf32>
    tpu.vector_store %arg9[%c30_883, %c320_884], %868 {strides = array<i32>} : memref<50x576xf32, #tpu.memory_space<vmem>>, vector<5x64xf32>,
    %c70_885 = arith.constant 70 : index
    %c0_886 = arith.constant 0 : index
    %870 = vector.load %arg8[%c70_885, %c0_886] : memref<98x64xf32, #tpu.memory_space<vmem>>, vector<7x64xf32>
    %871 = vector.extract_strided_slice %870 {offsets = [0, 0], sizes = [5, 64], strides = [1, 1]} : vector<7x64xf32> to vector<5x64xf32>
    %c30_887 = arith.constant 30 : index
    %c384_888 = arith.constant 384 : index
    %872 = vector.load %arg9[%c30_887, %c384_888] : memref<50x576xf32, #tpu.memory_space<vmem>>, vector<5x64xf32>
    tpu.vector_store %arg9[%c30_887, %c384_888], %871 {strides = array<i32>} : memref<50x576xf32, #tpu.memory_space<vmem>>, vector<5x64xf32>,
    %873 = vector.extract_strided_slice %870 {offsets = [1, 0], sizes = [5, 64], strides = [1, 1]} : vector<7x64xf32> to vector<5x64xf32>
    %c30_889 = arith.constant 30 : index
    %c448_890 = arith.constant 448 : index
    %874 = vector.load %arg9[%c30_889, %c448_890] : memref<50x576xf32, #tpu.memory_space<vmem>>, vector<5x64xf32>
    tpu.vector_store %arg9[%c30_889, %c448_890], %873 {strides = array<i32>} : memref<50x576xf32, #tpu.memory_space<vmem>>, vector<5x64xf32>,
    %875 = vector.extract_strided_slice %870 {offsets = [2, 0], sizes = [5, 64], strides = [1, 1]} : vector<7x64xf32> to vector<5x64xf32>
    %c30_891 = arith.constant 30 : index
    %c512_892 = arith.constant 512 : index
    %876 = vector.load %arg9[%c30_891, %c512_892] : memref<50x576xf32, #tpu.memory_space<vmem>>, vector<5x64xf32>
    tpu.vector_store %arg9[%c30_891, %c512_892], %875 {strides = array<i32>} : memref<50x576xf32, #tpu.memory_space<vmem>>, vector<5x64xf32>,
    %c63_893 = arith.constant 63 : index
    %c0_894 = arith.constant 0 : index
    %877 = vector.load %arg8[%c63_893, %c0_894] : memref<98x64xf32, #tpu.memory_space<vmem>>, vector<7x64xf32>
    %878 = vector.extract_strided_slice %877 {offsets = [0, 0], sizes = [5, 64], strides = [1, 1]} : vector<7x64xf32> to vector<5x64xf32>
    %c35_895 = arith.constant 35 : index
    %c0_896 = arith.constant 0 : index
    %879 = vector.load %arg9[%c35_895, %c0_896] : memref<50x576xf32, #tpu.memory_space<vmem>>, vector<5x64xf32>
    tpu.vector_store %arg9[%c35_895, %c0_896], %878 {strides = array<i32>} : memref<50x576xf32, #tpu.memory_space<vmem>>, vector<5x64xf32>,
    %880 = vector.extract_strided_slice %877 {offsets = [1, 0], sizes = [5, 64], strides = [1, 1]} : vector<7x64xf32> to vector<5x64xf32>
    %c35_897 = arith.constant 35 : index
    %c64_898 = arith.constant 64 : index
    %881 = vector.load %arg9[%c35_897, %c64_898] : memref<50x576xf32, #tpu.memory_space<vmem>>, vector<5x64xf32>
    tpu.vector_store %arg9[%c35_897, %c64_898], %880 {strides = array<i32>} : memref<50x576xf32, #tpu.memory_space<vmem>>, vector<5x64xf32>,
    %882 = vector.extract_strided_slice %877 {offsets = [2, 0], sizes = [5, 64], strides = [1, 1]} : vector<7x64xf32> to vector<5x64xf32>
    %c35_899 = arith.constant 35 : index
    %c128_900 = arith.constant 128 : index
    %883 = vector.load %arg9[%c35_899, %c128_900] : memref<50x576xf32, #tpu.memory_space<vmem>>, vector<5x64xf32>
    tpu.vector_store %arg9[%c35_899, %c128_900], %882 {strides = array<i32>} : memref<50x576xf32, #tpu.memory_space<vmem>>, vector<5x64xf32>,
    %c70_901 = arith.constant 70 : index
    %c0_902 = arith.constant 0 : index
    %884 = vector.load %arg8[%c70_901, %c0_902] : memref<98x64xf32, #tpu.memory_space<vmem>>, vector<7x64xf32>
    %885 = vector.extract_strided_slice %884 {offsets = [0, 0], sizes = [5, 64], strides = [1, 1]} : vector<7x64xf32> to vector<5x64xf32>
    %c35_903 = arith.constant 35 : index
    %c192_904 = arith.constant 192 : index
    %886 = vector.load %arg9[%c35_903, %c192_904] : memref<50x576xf32, #tpu.memory_space<vmem>>, vector<5x64xf32>
    tpu.vector_store %arg9[%c35_903, %c192_904], %885 {strides = array<i32>} : memref<50x576xf32, #tpu.memory_space<vmem>>, vector<5x64xf32>,
    %887 = vector.extract_strided_slice %884 {offsets = [1, 0], sizes = [5, 64], strides = [1, 1]} : vector<7x64xf32> to vector<5x64xf32>
    %c35_905 = arith.constant 35 : index
    %c256_906 = arith.constant 256 : index
    %888 = vector.load %arg9[%c35_905, %c256_906] : memref<50x576xf32, #tpu.memory_space<vmem>>, vector<5x64xf32>
    tpu.vector_store %arg9[%c35_905, %c256_906], %887 {strides = array<i32>} : memref<50x576xf32, #tpu.memory_space<vmem>>, vector<5x64xf32>,
    %889 = vector.extract_strided_slice %884 {offsets = [2, 0], sizes = [5, 64], strides = [1, 1]} : vector<7x64xf32> to vector<5x64xf32>
    %c35_907 = arith.constant 35 : index
    %c320_908 = arith.constant 320 : index
    %890 = vector.load %arg9[%c35_907, %c320_908] : memref<50x576xf32, #tpu.memory_space<vmem>>, vector<5x64xf32>
    tpu.vector_store %arg9[%c35_907, %c320_908], %889 {strides = array<i32>} : memref<50x576xf32, #tpu.memory_space<vmem>>, vector<5x64xf32>,
    %c77_909 = arith.constant 77 : index
    %c0_910 = arith.constant 0 : index
    %891 = vector.load %arg8[%c77_909, %c0_910] : memref<98x64xf32, #tpu.memory_space<vmem>>, vector<7x64xf32>
    %892 = vector.extract_strided_slice %891 {offsets = [0, 0], sizes = [5, 64], strides = [1, 1]} : vector<7x64xf32> to vector<5x64xf32>
    %c35_911 = arith.constant 35 : index
    %c384_912 = arith.constant 384 : index
    %893 = vector.load %arg9[%c35_911, %c384_912] : memref<50x576xf32, #tpu.memory_space<vmem>>, vector<5x64xf32>
    tpu.vector_store %arg9[%c35_911, %c384_912], %892 {strides = array<i32>} : memref<50x576xf32, #tpu.memory_space<vmem>>, vector<5x64xf32>,
    %894 = vector.extract_strided_slice %891 {offsets = [1, 0], sizes = [5, 64], strides = [1, 1]} : vector<7x64xf32> to vector<5x64xf32>
    %c35_913 = arith.constant 35 : index
    %c448_914 = arith.constant 448 : index
    %895 = vector.load %arg9[%c35_913, %c448_914] : memref<50x576xf32, #tpu.memory_space<vmem>>, vector<5x64xf32>
    tpu.vector_store %arg9[%c35_913, %c448_914], %894 {strides = array<i32>} : memref<50x576xf32, #tpu.memory_space<vmem>>, vector<5x64xf32>,
    %896 = vector.extract_strided_slice %891 {offsets = [2, 0], sizes = [5, 64], strides = [1, 1]} : vector<7x64xf32> to vector<5x64xf32>
    %c35_915 = arith.constant 35 : index
    %c512_916 = arith.constant 512 : index
    %897 = vector.load %arg9[%c35_915, %c512_916] : memref<50x576xf32, #tpu.memory_space<vmem>>, vector<5x64xf32>
    tpu.vector_store %arg9[%c35_915, %c512_916], %896 {strides = array<i32>} : memref<50x576xf32, #tpu.memory_space<vmem>>, vector<5x64xf32>,
    %c70_917 = arith.constant 70 : index
    %c0_918 = arith.constant 0 : index
    %898 = vector.load %arg8[%c70_917, %c0_918] : memref<98x64xf32, #tpu.memory_space<vmem>>, vector<7x64xf32>
    %899 = vector.extract_strided_slice %898 {offsets = [0, 0], sizes = [5, 64], strides = [1, 1]} : vector<7x64xf32> to vector<5x64xf32>
    %c40 = arith.constant 40 : index
    %c0_919 = arith.constant 0 : index
    %900 = vector.load %arg9[%c40, %c0_919] : memref<50x576xf32, #tpu.memory_space<vmem>>, vector<5x64xf32>
    tpu.vector_store %arg9[%c40, %c0_919], %899 {strides = array<i32>} : memref<50x576xf32, #tpu.memory_space<vmem>>, vector<5x64xf32>,
    %901 = vector.extract_strided_slice %898 {offsets = [1, 0], sizes = [5, 64], strides = [1, 1]} : vector<7x64xf32> to vector<5x64xf32>
    %c40_920 = arith.constant 40 : index
    %c64_921 = arith.constant 64 : index
    %902 = vector.load %arg9[%c40_920, %c64_921] : memref<50x576xf32, #tpu.memory_space<vmem>>, vector<5x64xf32>
    tpu.vector_store %arg9[%c40_920, %c64_921], %901 {strides = array<i32>} : memref<50x576xf32, #tpu.memory_space<vmem>>, vector<5x64xf32>,
    %903 = vector.extract_strided_slice %898 {offsets = [2, 0], sizes = [5, 64], strides = [1, 1]} : vector<7x64xf32> to vector<5x64xf32>
    %c40_922 = arith.constant 40 : index
    %c128_923 = arith.constant 128 : index
    %904 = vector.load %arg9[%c40_922, %c128_923] : memref<50x576xf32, #tpu.memory_space<vmem>>, vector<5x64xf32>
    tpu.vector_store %arg9[%c40_922, %c128_923], %903 {strides = array<i32>} : memref<50x576xf32, #tpu.memory_space<vmem>>, vector<5x64xf32>,
    %c77_924 = arith.constant 77 : index
    %c0_925 = arith.constant 0 : index
    %905 = vector.load %arg8[%c77_924, %c0_925] : memref<98x64xf32, #tpu.memory_space<vmem>>, vector<7x64xf32>
    %906 = vector.extract_strided_slice %905 {offsets = [0, 0], sizes = [5, 64], strides = [1, 1]} : vector<7x64xf32> to vector<5x64xf32>
    %c40_926 = arith.constant 40 : index
    %c192_927 = arith.constant 192 : index
    %907 = vector.load %arg9[%c40_926, %c192_927] : memref<50x576xf32, #tpu.memory_space<vmem>>, vector<5x64xf32>
    tpu.vector_store %arg9[%c40_926, %c192_927], %906 {strides = array<i32>} : memref<50x576xf32, #tpu.memory_space<vmem>>, vector<5x64xf32>,
    %908 = vector.extract_strided_slice %905 {offsets = [1, 0], sizes = [5, 64], strides = [1, 1]} : vector<7x64xf32> to vector<5x64xf32>
    %c40_928 = arith.constant 40 : index
    %c256_929 = arith.constant 256 : index
    %909 = vector.load %arg9[%c40_928, %c256_929] : memref<50x576xf32, #tpu.memory_space<vmem>>, vector<5x64xf32>
    tpu.vector_store %arg9[%c40_928, %c256_929], %908 {strides = array<i32>} : memref<50x576xf32, #tpu.memory_space<vmem>>, vector<5x64xf32>,
    %910 = vector.extract_strided_slice %905 {offsets = [2, 0], sizes = [5, 64], strides = [1, 1]} : vector<7x64xf32> to vector<5x64xf32>
    %c40_930 = arith.constant 40 : index
    %c320_931 = arith.constant 320 : index
    %911 = vector.load %arg9[%c40_930, %c320_931] : memref<50x576xf32, #tpu.memory_space<vmem>>, vector<5x64xf32>
    tpu.vector_store %arg9[%c40_930, %c320_931], %910 {strides = array<i32>} : memref<50x576xf32, #tpu.memory_space<vmem>>, vector<5x64xf32>,
    %c84_932 = arith.constant 84 : index
    %c0_933 = arith.constant 0 : index
    %912 = vector.load %arg8[%c84_932, %c0_933] : memref<98x64xf32, #tpu.memory_space<vmem>>, vector<7x64xf32>
    %913 = vector.extract_strided_slice %912 {offsets = [0, 0], sizes = [5, 64], strides = [1, 1]} : vector<7x64xf32> to vector<5x64xf32>
    %c40_934 = arith.constant 40 : index
    %c384_935 = arith.constant 384 : index
    %914 = vector.load %arg9[%c40_934, %c384_935] : memref<50x576xf32, #tpu.memory_space<vmem>>, vector<5x64xf32>
    tpu.vector_store %arg9[%c40_934, %c384_935], %913 {strides = array<i32>} : memref<50x576xf32, #tpu.memory_space<vmem>>, vector<5x64xf32>,
    %915 = vector.extract_strided_slice %912 {offsets = [1, 0], sizes = [5, 64], strides = [1, 1]} : vector<7x64xf32> to vector<5x64xf32>
    %c40_936 = arith.constant 40 : index
    %c448_937 = arith.constant 448 : index
    %916 = vector.load %arg9[%c40_936, %c448_937] : memref<50x576xf32, #tpu.memory_space<vmem>>, vector<5x64xf32>
    tpu.vector_store %arg9[%c40_936, %c448_937], %915 {strides = array<i32>} : memref<50x576xf32, #tpu.memory_space<vmem>>, vector<5x64xf32>,
    %917 = vector.extract_strided_slice %912 {offsets = [2, 0], sizes = [5, 64], strides = [1, 1]} : vector<7x64xf32> to vector<5x64xf32>
    %c40_938 = arith.constant 40 : index
    %c512_939 = arith.constant 512 : index
    %918 = vector.load %arg9[%c40_938, %c512_939] : memref<50x576xf32, #tpu.memory_space<vmem>>, vector<5x64xf32>
    tpu.vector_store %arg9[%c40_938, %c512_939], %917 {strides = array<i32>} : memref<50x576xf32, #tpu.memory_space<vmem>>, vector<5x64xf32>,
    %c77_940 = arith.constant 77 : index
    %c0_941 = arith.constant 0 : index
    %919 = vector.load %arg8[%c77_940, %c0_941] : memref<98x64xf32, #tpu.memory_space<vmem>>, vector<7x64xf32>
    %920 = vector.extract_strided_slice %919 {offsets = [0, 0], sizes = [5, 64], strides = [1, 1]} : vector<7x64xf32> to vector<5x64xf32>
    %c45 = arith.constant 45 : index
    %c0_942 = arith.constant 0 : index
    %921 = vector.load %arg9[%c45, %c0_942] : memref<50x576xf32, #tpu.memory_space<vmem>>, vector<5x64xf32>
    tpu.vector_store %arg9[%c45, %c0_942], %920 {strides = array<i32>} : memref<50x576xf32, #tpu.memory_space<vmem>>, vector<5x64xf32>,
    %922 = vector.extract_strided_slice %919 {offsets = [1, 0], sizes = [5, 64], strides = [1, 1]} : vector<7x64xf32> to vector<5x64xf32>
    %c45_943 = arith.constant 45 : index
    %c64_944 = arith.constant 64 : index
    %923 = vector.load %arg9[%c45_943, %c64_944] : memref<50x576xf32, #tpu.memory_space<vmem>>, vector<5x64xf32>
    tpu.vector_store %arg9[%c45_943, %c64_944], %922 {strides = array<i32>} : memref<50x576xf32, #tpu.memory_space<vmem>>, vector<5x64xf32>,
    %924 = vector.extract_strided_slice %919 {offsets = [2, 0], sizes = [5, 64], strides = [1, 1]} : vector<7x64xf32> to vector<5x64xf32>
    %c45_945 = arith.constant 45 : index
    %c128_946 = arith.constant 128 : index
    %925 = vector.load %arg9[%c45_945, %c128_946] : memref<50x576xf32, #tpu.memory_space<vmem>>, vector<5x64xf32>
    tpu.vector_store %arg9[%c45_945, %c128_946], %924 {strides = array<i32>} : memref<50x576xf32, #tpu.memory_space<vmem>>, vector<5x64xf32>,
    %c84_947 = arith.constant 84 : index
    %c0_948 = arith.constant 0 : index
    %926 = vector.load %arg8[%c84_947, %c0_948] : memref<98x64xf32, #tpu.memory_space<vmem>>, vector<7x64xf32>
    %927 = vector.extract_strided_slice %926 {offsets = [0, 0], sizes = [5, 64], strides = [1, 1]} : vector<7x64xf32> to vector<5x64xf32>
    %c45_949 = arith.constant 45 : index
    %c192_950 = arith.constant 192 : index
    %928 = vector.load %arg9[%c45_949, %c192_950] : memref<50x576xf32, #tpu.memory_space<vmem>>, vector<5x64xf32>
    tpu.vector_store %arg9[%c45_949, %c192_950], %927 {strides = array<i32>} : memref<50x576xf32, #tpu.memory_space<vmem>>, vector<5x64xf32>,
    %929 = vector.extract_strided_slice %926 {offsets = [1, 0], sizes = [5, 64], strides = [1, 1]} : vector<7x64xf32> to vector<5x64xf32>
    %c45_951 = arith.constant 45 : index
    %c256_952 = arith.constant 256 : index
    %930 = vector.load %arg9[%c45_951, %c256_952] : memref<50x576xf32, #tpu.memory_space<vmem>>, vector<5x64xf32>
    tpu.vector_store %arg9[%c45_951, %c256_952], %929 {strides = array<i32>} : memref<50x576xf32, #tpu.memory_space<vmem>>, vector<5x64xf32>,
    %931 = vector.extract_strided_slice %926 {offsets = [2, 0], sizes = [5, 64], strides = [1, 1]} : vector<7x64xf32> to vector<5x64xf32>
    %c45_953 = arith.constant 45 : index
    %c320_954 = arith.constant 320 : index
    %932 = vector.load %arg9[%c45_953, %c320_954] : memref<50x576xf32, #tpu.memory_space<vmem>>, vector<5x64xf32>
    tpu.vector_store %arg9[%c45_953, %c320_954], %931 {strides = array<i32>} : memref<50x576xf32, #tpu.memory_space<vmem>>, vector<5x64xf32>,
    %c91_955 = arith.constant 91 : index
    %c0_956 = arith.constant 0 : index
    %933 = vector.load %arg8[%c91_955, %c0_956] : memref<98x64xf32, #tpu.memory_space<vmem>>, vector<7x64xf32>
    %934 = vector.extract_strided_slice %933 {offsets = [0, 0], sizes = [5, 64], strides = [1, 1]} : vector<7x64xf32> to vector<5x64xf32>
    %c45_957 = arith.constant 45 : index
    %c384_958 = arith.constant 384 : index
    %935 = vector.load %arg9[%c45_957, %c384_958] : memref<50x576xf32, #tpu.memory_space<vmem>>, vector<5x64xf32>
    tpu.vector_store %arg9[%c45_957, %c384_958], %934 {strides = array<i32>} : memref<50x576xf32, #tpu.memory_space<vmem>>, vector<5x64xf32>,
    %936 = vector.extract_strided_slice %933 {offsets = [1, 0], sizes = [5, 64], strides = [1, 1]} : vector<7x64xf32> to vector<5x64xf32>
    %c45_959 = arith.constant 45 : index
    %c448_960 = arith.constant 448 : index
    %937 = vector.load %arg9[%c45_959, %c448_960] : memref<50x576xf32, #tpu.memory_space<vmem>>, vector<5x64xf32>
    tpu.vector_store %arg9[%c45_959, %c448_960], %936 {strides = array<i32>} : memref<50x576xf32, #tpu.memory_space<vmem>>, vector<5x64xf32>,
    %938 = vector.extract_strided_slice %933 {offsets = [2, 0], sizes = [5, 64], strides = [1, 1]} : vector<7x64xf32> to vector<5x64xf32>
    %c45_961 = arith.constant 45 : index
    %c512_962 = arith.constant 512 : index
    %939 = vector.load %arg9[%c45_961, %c512_962] : memref<50x576xf32, #tpu.memory_space<vmem>>, vector<5x64xf32>
    tpu.vector_store %arg9[%c45_961, %c512_962], %938 {strides = array<i32>} : memref<50x576xf32, #tpu.memory_space<vmem>>, vector<5x64xf32>,
    %c0_963 = arith.constant 0 : index
    %c0_964 = arith.constant 0 : index
    %940 = vector.load %arg9[%c0_963, %c0_964] : memref<50x576xf32, #tpu.memory_space<vmem>>, vector<50x576xf32>
    %941 = arith.truncf %940 : vector<50x576xf32> to vector<50x576xbf16>
    %c0_965 = arith.constant 0 : index
    %c0_966 = arith.constant 0 : index
    %c0_967 = arith.constant 0 : index
    %942 = vector.load %arg3[%c0_965, %c0_966, %c0_967] : memref<3x576x64xbf16, #tpu.memory_space<vmem>>, vector<1x576x64xbf16>
    %943 = vector.shape_cast %942 : vector<1x576x64xbf16> to vector<576x64xbf16>
    %cst_968 = arith.constant dense<0.000000e+00> : vector<50x64xf32>
    %944 = tpu.matmul %941, %943, %cst_968 {dimension_numbers = #tpu.dot_dimension_numbers<[1], [0], [0], [1], [0, 0, 1, 1], [], []>} : vector<50x576xbf16>, vector<576x64xbf16>, vector<50x64xf32> -> vector<50x64xf32>
    %c2 = arith.constant 2 : index
    %c0_969 = arith.constant 0 : index
    %945 = vector.load %arg4[%c2, %c0_969] : memref<8x64xf32, #tpu.memory_space<vmem>>, vector<1x64xf32>
    %c3_970 = arith.constant 3 : index
    %c0_971 = arith.constant 0 : index
    %946 = vector.load %arg4[%c3_970, %c0_971] : memref<8x64xf32, #tpu.memory_space<vmem>>, vector<1x64xf32>
    %cst_972 = arith.constant dense<0.000000e+00> : vector<64xf32>
    %947 = vector.multi_reduction <add>, %944, %cst_972 [0] : vector<50x64xf32> to vector<64xf32>
    %948 = vector.shape_cast %947 : vector<64xf32> to vector<1x64xf32>
    %949 = arith.mulf %944, %944 : vector<50x64xf32>
    %cst_973 = arith.constant dense<0.000000e+00> : vector<64xf32>
    %950 = vector.multi_reduction <add>, %949, %cst_973 [0] : vector<50x64xf32> to vector<64xf32>
    %951 = vector.shape_cast %950 : vector<64xf32> to vector<1x64xf32>
    %cst_974 = arith.constant 2.000000e-02 : f32
    %952 = vector.broadcast %cst_974 : f32 to vector<1x64xf32>
    %953 = arith.mulf %948, %952 : vector<1x64xf32>
    %cst_975 = arith.constant 2.000000e-02 : f32
    %954 = vector.broadcast %cst_975 : f32 to vector<1x64xf32>
    %955 = arith.mulf %951, %954 : vector<1x64xf32>
    %956 = arith.mulf %953, %953 : vector<1x64xf32>
    %957 = arith.subf %955, %956 : vector<1x64xf32>
    %cst_976 = arith.constant 9.99999974E-6 : f32
    %958 = vector.broadcast %cst_976 : f32 to vector<1x64xf32>
    %959 = arith.addf %957, %958 : vector<1x64xf32>
    %960 = math.rsqrt %959 : vector<1x64xf32>
    %961 = arith.mulf %945, %960 : vector<1x64xf32>
    %962 = arith.mulf %953, %961 : vector<1x64xf32>
    %963 = arith.subf %946, %962 : vector<1x64xf32>
    %964 = vector.broadcast %961 : vector<1x64xf32> to vector<50x64xf32>
    %965 = arith.mulf %944, %964 : vector<50x64xf32>
    %966 = vector.broadcast %963 : vector<1x64xf32> to vector<50x64xf32>
    %967 = arith.addf %965, %966 : vector<50x64xf32>
    %cst_977 = arith.constant 0.000000e+00 : f32
    %968 = vector.broadcast %cst_977 : f32 to vector<50x64xf32>
    %969 = arith.maximumf %967, %968 : vector<50x64xf32>
    %c0_978 = arith.constant 0 : index
    %c0_979 = arith.constant 0 : index
    %970 = vector.load %arg10[%c0_978, %c0_979] : memref<50x64xf32, #tpu.memory_space<vmem>>, vector<50x64xf32>
    tpu.vector_store %arg10[%c0_978, %c0_979], %969 {strides = array<i32>} : memref<50x64xf32, #tpu.memory_space<vmem>>, vector<50x64xf32>,
    %c0_980 = arith.constant 0 : index
    %c0_981 = arith.constant 0 : index
    %971 = tpu.strided_load %arg10[%c0_980, %c0_981] {strides = array<i32: 2, 1>} : memref<50x64xf32, #tpu.memory_space<vmem>>, vector<2x64xf32>
    %c1_982 = arith.constant 1 : index
    %c0_983 = arith.constant 0 : index
    %972 = tpu.strided_load %arg10[%c1_982, %c0_983] {strides = array<i32: 2, 1>} : memref<50x64xf32, #tpu.memory_space<vmem>>, vector<2x64xf32>
    %973 = arith.maximumf %971, %972 : vector<2x64xf32>
    %c5_984 = arith.constant 5 : index
    %c0_985 = arith.constant 0 : index
    %974 = tpu.strided_load %arg10[%c5_984, %c0_985] {strides = array<i32: 2, 1>} : memref<50x64xf32, #tpu.memory_space<vmem>>, vector<2x64xf32>
    %975 = arith.maximumf %973, %974 : vector<2x64xf32>
    %c6_986 = arith.constant 6 : index
    %c0_987 = arith.constant 0 : index
    %976 = tpu.strided_load %arg10[%c6_986, %c0_987] {strides = array<i32: 2, 1>} : memref<50x64xf32, #tpu.memory_space<vmem>>, vector<2x64xf32>
    %977 = arith.maximumf %975, %976 : vector<2x64xf32>
    %c0_988 = arith.constant 0 : index
    %c0_989 = arith.constant 0 : index
    %978 = vector.load %arg11[%c0_988, %c0_989] : memref<8x64xf32, #tpu.memory_space<vmem>>, vector<2x64xf32>
    tpu.vector_store %arg11[%c0_988, %c0_989], %977 {strides = array<i32>} : memref<8x64xf32, #tpu.memory_space<vmem>>, vector<2x64xf32>,
    %c10_990 = arith.constant 10 : index
    %c0_991 = arith.constant 0 : index
    %979 = tpu.strided_load %arg10[%c10_990, %c0_991] {strides = array<i32: 2, 1>} : memref<50x64xf32, #tpu.memory_space<vmem>>, vector<2x64xf32>
    %c11 = arith.constant 11 : index
    %c0_992 = arith.constant 0 : index
    %980 = tpu.strided_load %arg10[%c11, %c0_992] {strides = array<i32: 2, 1>} : memref<50x64xf32, #tpu.memory_space<vmem>>, vector<2x64xf32>
    %981 = arith.maximumf %979, %980 : vector<2x64xf32>
    %c15_993 = arith.constant 15 : index
    %c0_994 = arith.constant 0 : index
    %982 = tpu.strided_load %arg10[%c15_993, %c0_994] {strides = array<i32: 2, 1>} : memref<50x64xf32, #tpu.memory_space<vmem>>, vector<2x64xf32>
    %983 = arith.maximumf %981, %982 : vector<2x64xf32>
    %c16_995 = arith.constant 16 : index
    %c0_996 = arith.constant 0 : index
    %984 = tpu.strided_load %arg10[%c16_995, %c0_996] {strides = array<i32: 2, 1>} : memref<50x64xf32, #tpu.memory_space<vmem>>, vector<2x64xf32>
    %985 = arith.maximumf %983, %984 : vector<2x64xf32>
    %c2_997 = arith.constant 2 : index
    %c0_998 = arith.constant 0 : index
    %986 = vector.load %arg11[%c2_997, %c0_998] : memref<8x64xf32, #tpu.memory_space<vmem>>, vector<2x64xf32>
    tpu.vector_store %arg11[%c2_997, %c0_998], %985 {strides = array<i32>} : memref<8x64xf32, #tpu.memory_space<vmem>>, vector<2x64xf32>,
    %c25_999 = arith.constant 25 : index
    %c0_1000 = arith.constant 0 : index
    %987 = tpu.strided_load %arg10[%c25_999, %c0_1000] {strides = array<i32: 2, 1>} : memref<50x64xf32, #tpu.memory_space<vmem>>, vector<2x64xf32>
    %c26 = arith.constant 26 : index
    %c0_1001 = arith.constant 0 : index
    %988 = tpu.strided_load %arg10[%c26, %c0_1001] {strides = array<i32: 2, 1>} : memref<50x64xf32, #tpu.memory_space<vmem>>, vector<2x64xf32>
    %989 = arith.maximumf %987, %988 : vector<2x64xf32>
    %c30_1002 = arith.constant 30 : index
    %c0_1003 = arith.constant 0 : index
    %990 = tpu.strided_load %arg10[%c30_1002, %c0_1003] {strides = array<i32: 2, 1>} : memref<50x64xf32, #tpu.memory_space<vmem>>, vector<2x64xf32>
    %991 = arith.maximumf %989, %990 : vector<2x64xf32>
    %c31 = arith.constant 31 : index
    %c0_1004 = arith.constant 0 : index
    %992 = tpu.strided_load %arg10[%c31, %c0_1004] {strides = array<i32: 2, 1>} : memref<50x64xf32, #tpu.memory_space<vmem>>, vector<2x64xf32>
    %993 = arith.maximumf %991, %992 : vector<2x64xf32>
    %c4 = arith.constant 4 : index
    %c0_1005 = arith.constant 0 : index
    %994 = vector.load %arg11[%c4, %c0_1005] : memref<8x64xf32, #tpu.memory_space<vmem>>, vector<2x64xf32>
    tpu.vector_store %arg11[%c4, %c0_1005], %993 {strides = array<i32>} : memref<8x64xf32, #tpu.memory_space<vmem>>, vector<2x64xf32>,
    %c35_1006 = arith.constant 35 : index
    %c0_1007 = arith.constant 0 : index
    %995 = tpu.strided_load %arg10[%c35_1006, %c0_1007] {strides = array<i32: 2, 1>} : memref<50x64xf32, #tpu.memory_space<vmem>>, vector<2x64xf32>
    %c36 = arith.constant 36 : index
    %c0_1008 = arith.constant 0 : index
    %996 = tpu.strided_load %arg10[%c36, %c0_1008] {strides = array<i32: 2, 1>} : memref<50x64xf32, #tpu.memory_space<vmem>>, vector<2x64xf32>
    %997 = arith.maximumf %995, %996 : vector<2x64xf32>
    %c40_1009 = arith.constant 40 : index
    %c0_1010 = arith.constant 0 : index
    %998 = tpu.strided_load %arg10[%c40_1009, %c0_1010] {strides = array<i32: 2, 1>} : memref<50x64xf32, #tpu.memory_space<vmem>>, vector<2x64xf32>
    %999 = arith.maximumf %997, %998 : vector<2x64xf32>
    %c41 = arith.constant 41 : index
    %c0_1011 = arith.constant 0 : index
    %1000 = tpu.strided_load %arg10[%c41, %c0_1011] {strides = array<i32: 2, 1>} : memref<50x64xf32, #tpu.memory_space<vmem>>, vector<2x64xf32>
    %1001 = arith.maximumf %999, %1000 : vector<2x64xf32>
    %c6_1012 = arith.constant 6 : index
    %c0_1013 = arith.constant 0 : index
    %1002 = vector.load %arg11[%c6_1012, %c0_1013] : memref<8x64xf32, #tpu.memory_space<vmem>>, vector<2x64xf32>
    tpu.vector_store %arg11[%c6_1012, %c0_1013], %1001 {strides = array<i32>} : memref<8x64xf32, #tpu.memory_space<vmem>>, vector<2x64xf32>,
    %cst_1014 = arith.constant 0.000000e+00 : f32
    %1003 = vector.broadcast %cst_1014 : f32 to vector<32x64xf32>
    %c0_1015 = arith.constant 0 : index
    %c0_1016 = arith.constant 0 : index
    %1004 = vector.load %arg12[%c0_1015, %c0_1016] : memref<32x64xf32, #tpu.memory_space<vmem>>, vector<32x64xf32>
    tpu.vector_store %arg12[%c0_1015, %c0_1016], %1003 {strides = array<i32>} : memref<32x64xf32, #tpu.memory_space<vmem>>, vector<32x64xf32>,
    %c0_1017 = arith.constant 0 : index
    %c0_1018 = arith.constant 0 : index
    %1005 = vector.load %arg11[%c0_1017, %c0_1018] : memref<8x64xf32, #tpu.memory_space<vmem>>, vector<2x64xf32>
    %c5_1019 = arith.constant 5 : index
    %c0_1020 = arith.constant 0 : index
    %1006 = vector.load %arg12[%c5_1019, %c0_1020] : memref<32x64xf32, #tpu.memory_space<vmem>>, vector<2x64xf32>
    tpu.vector_store %arg12[%c5_1019, %c0_1020], %1005 {strides = array<i32>} : memref<32x64xf32, #tpu.memory_space<vmem>>, vector<2x64xf32>,
    %c2_1021 = arith.constant 2 : index
    %c0_1022 = arith.constant 0 : index
    %1007 = vector.load %arg11[%c2_1021, %c0_1022] : memref<8x64xf32, #tpu.memory_space<vmem>>, vector<2x64xf32>
    %c9_1023 = arith.constant 9 : index
    %c0_1024 = arith.constant 0 : index
    %1008 = vector.load %arg12[%c9_1023, %c0_1024] : memref<32x64xf32, #tpu.memory_space<vmem>>, vector<2x64xf32>
    tpu.vector_store %arg12[%c9_1023, %c0_1024], %1007 {strides = array<i32>} : memref<32x64xf32, #tpu.memory_space<vmem>>, vector<2x64xf32>,
    %c4_1025 = arith.constant 4 : index
    %c0_1026 = arith.constant 0 : index
    %1009 = vector.load %arg11[%c4_1025, %c0_1026] : memref<8x64xf32, #tpu.memory_space<vmem>>, vector<2x64xf32>
    %c21_1027 = arith.constant 21 : index
    %c0_1028 = arith.constant 0 : index
    %1010 = vector.load %arg12[%c21_1027, %c0_1028] : memref<32x64xf32, #tpu.memory_space<vmem>>, vector<2x64xf32>
    tpu.vector_store %arg12[%c21_1027, %c0_1028], %1009 {strides = array<i32>} : memref<32x64xf32, #tpu.memory_space<vmem>>, vector<2x64xf32>,
    %c6_1029 = arith.constant 6 : index
    %c0_1030 = arith.constant 0 : index
    %1011 = vector.load %arg11[%c6_1029, %c0_1030] : memref<8x64xf32, #tpu.memory_space<vmem>>, vector<2x64xf32>
    %c25_1031 = arith.constant 25 : index
    %c0_1032 = arith.constant 0 : index
    %1012 = vector.load %arg12[%c25_1031, %c0_1032] : memref<32x64xf32, #tpu.memory_space<vmem>>, vector<2x64xf32>
    tpu.vector_store %arg12[%c25_1031, %c0_1032], %1011 {strides = array<i32>} : memref<32x64xf32, #tpu.memory_space<vmem>>, vector<2x64xf32>,
    %c0_1033 = arith.constant 0 : index
    %c0_1034 = arith.constant 0 : index
    %1013 = vector.load %arg12[%c0_1033, %c0_1034] : memref<32x64xf32, #tpu.memory_space<vmem>>, vector<4x64xf32>
    %1014 = vector.extract_strided_slice %1013 {offsets = [0, 0], sizes = [2, 64], strides = [1, 1]} : vector<4x64xf32> to vector<2x64xf32>
    %c0_1035 = arith.constant 0 : index
    %c0_1036 = arith.constant 0 : index
    %1015 = vector.load %arg13[%c0_1035, %c0_1036] : memref<8x576xf32, #tpu.memory_space<vmem>>, vector<2x64xf32>
    tpu.vector_store %arg13[%c0_1035, %c0_1036], %1014 {strides = array<i32>} : memref<8x576xf32, #tpu.memory_space<vmem>>, vector<2x64xf32>,
    %1016 = vector.extract_strided_slice %1013 {offsets = [1, 0], sizes = [2, 64], strides = [1, 1]} : vector<4x64xf32> to vector<2x64xf32>
    %c0_1037 = arith.constant 0 : index
    %c64_1038 = arith.constant 64 : index
    %1017 = vector.load %arg13[%c0_1037, %c64_1038] : memref<8x576xf32, #tpu.memory_space<vmem>>, vector<2x64xf32>
    tpu.vector_store %arg13[%c0_1037, %c64_1038], %1016 {strides = array<i32>} : memref<8x576xf32, #tpu.memory_space<vmem>>, vector<2x64xf32>,
    %1018 = vector.extract_strided_slice %1013 {offsets = [2, 0], sizes = [2, 64], strides = [1, 1]} : vector<4x64xf32> to vector<2x64xf32>
    %c0_1039 = arith.constant 0 : index
    %c128_1040 = arith.constant 128 : index
    %1019 = vector.load %arg13[%c0_1039, %c128_1040] : memref<8x576xf32, #tpu.memory_space<vmem>>, vector<2x64xf32>
    tpu.vector_store %arg13[%c0_1039, %c128_1040], %1018 {strides = array<i32>} : memref<8x576xf32, #tpu.memory_space<vmem>>, vector<2x64xf32>,
    %c4_1041 = arith.constant 4 : index
    %c0_1042 = arith.constant 0 : index
    %1020 = vector.load %arg12[%c4_1041, %c0_1042] : memref<32x64xf32, #tpu.memory_space<vmem>>, vector<4x64xf32>
    %1021 = vector.extract_strided_slice %1020 {offsets = [0, 0], sizes = [2, 64], strides = [1, 1]} : vector<4x64xf32> to vector<2x64xf32>
    %c0_1043 = arith.constant 0 : index
    %c192_1044 = arith.constant 192 : index
    %1022 = vector.load %arg13[%c0_1043, %c192_1044] : memref<8x576xf32, #tpu.memory_space<vmem>>, vector<2x64xf32>
    tpu.vector_store %arg13[%c0_1043, %c192_1044], %1021 {strides = array<i32>} : memref<8x576xf32, #tpu.memory_space<vmem>>, vector<2x64xf32>,
    %1023 = vector.extract_strided_slice %1020 {offsets = [1, 0], sizes = [2, 64], strides = [1, 1]} : vector<4x64xf32> to vector<2x64xf32>
    %c0_1045 = arith.constant 0 : index
    %c256_1046 = arith.constant 256 : index
    %1024 = vector.load %arg13[%c0_1045, %c256_1046] : memref<8x576xf32, #tpu.memory_space<vmem>>, vector<2x64xf32>
    tpu.vector_store %arg13[%c0_1045, %c256_1046], %1023 {strides = array<i32>} : memref<8x576xf32, #tpu.memory_space<vmem>>, vector<2x64xf32>,
    %1025 = vector.extract_strided_slice %1020 {offsets = [2, 0], sizes = [2, 64], strides = [1, 1]} : vector<4x64xf32> to vector<2x64xf32>
    %c0_1047 = arith.constant 0 : index
    %c320_1048 = arith.constant 320 : index
    %1026 = vector.load %arg13[%c0_1047, %c320_1048] : memref<8x576xf32, #tpu.memory_space<vmem>>, vector<2x64xf32>
    tpu.vector_store %arg13[%c0_1047, %c320_1048], %1025 {strides = array<i32>} : memref<8x576xf32, #tpu.memory_space<vmem>>, vector<2x64xf32>,
    %c8 = arith.constant 8 : index
    %c0_1049 = arith.constant 0 : index
    %1027 = vector.load %arg12[%c8, %c0_1049] : memref<32x64xf32, #tpu.memory_space<vmem>>, vector<4x64xf32>
    %1028 = vector.extract_strided_slice %1027 {offsets = [0, 0], sizes = [2, 64], strides = [1, 1]} : vector<4x64xf32> to vector<2x64xf32>
    %c0_1050 = arith.constant 0 : index
    %c384_1051 = arith.constant 384 : index
    %1029 = vector.load %arg13[%c0_1050, %c384_1051] : memref<8x576xf32, #tpu.memory_space<vmem>>, vector<2x64xf32>
    tpu.vector_store %arg13[%c0_1050, %c384_1051], %1028 {strides = array<i32>} : memref<8x576xf32, #tpu.memory_space<vmem>>, vector<2x64xf32>,
    %1030 = vector.extract_strided_slice %1027 {offsets = [1, 0], sizes = [2, 64], strides = [1, 1]} : vector<4x64xf32> to vector<2x64xf32>
    %c0_1052 = arith.constant 0 : index
    %c448_1053 = arith.constant 448 : index
    %1031 = vector.load %arg13[%c0_1052, %c448_1053] : memref<8x576xf32, #tpu.memory_space<vmem>>, vector<2x64xf32>
    tpu.vector_store %arg13[%c0_1052, %c448_1053], %1030 {strides = array<i32>} : memref<8x576xf32, #tpu.memory_space<vmem>>, vector<2x64xf32>,
    %1032 = vector.extract_strided_slice %1027 {offsets = [2, 0], sizes = [2, 64], strides = [1, 1]} : vector<4x64xf32> to vector<2x64xf32>
    %c0_1054 = arith.constant 0 : index
    %c512_1055 = arith.constant 512 : index
    %1033 = vector.load %arg13[%c0_1054, %c512_1055] : memref<8x576xf32, #tpu.memory_space<vmem>>, vector<2x64xf32>
    tpu.vector_store %arg13[%c0_1054, %c512_1055], %1032 {strides = array<i32>} : memref<8x576xf32, #tpu.memory_space<vmem>>, vector<2x64xf32>,
    %c4_1056 = arith.constant 4 : index
    %c0_1057 = arith.constant 0 : index
    %1034 = vector.load %arg12[%c4_1056, %c0_1057] : memref<32x64xf32, #tpu.memory_space<vmem>>, vector<4x64xf32>
    %1035 = vector.extract_strided_slice %1034 {offsets = [0, 0], sizes = [2, 64], strides = [1, 1]} : vector<4x64xf32> to vector<2x64xf32>
    %c2_1058 = arith.constant 2 : index
    %c0_1059 = arith.constant 0 : index
    %1036 = vector.load %arg13[%c2_1058, %c0_1059] : memref<8x576xf32, #tpu.memory_space<vmem>>, vector<2x64xf32>
    tpu.vector_store %arg13[%c2_1058, %c0_1059], %1035 {strides = array<i32>} : memref<8x576xf32, #tpu.memory_space<vmem>>, vector<2x64xf32>,
    %1037 = vector.extract_strided_slice %1034 {offsets = [1, 0], sizes = [2, 64], strides = [1, 1]} : vector<4x64xf32> to vector<2x64xf32>
    %c2_1060 = arith.constant 2 : index
    %c64_1061 = arith.constant 64 : index
    %1038 = vector.load %arg13[%c2_1060, %c64_1061] : memref<8x576xf32, #tpu.memory_space<vmem>>, vector<2x64xf32>
    tpu.vector_store %arg13[%c2_1060, %c64_1061], %1037 {strides = array<i32>} : memref<8x576xf32, #tpu.memory_space<vmem>>, vector<2x64xf32>,
    %1039 = vector.extract_strided_slice %1034 {offsets = [2, 0], sizes = [2, 64], strides = [1, 1]} : vector<4x64xf32> to vector<2x64xf32>
    %c2_1062 = arith.constant 2 : index
    %c128_1063 = arith.constant 128 : index
    %1040 = vector.load %arg13[%c2_1062, %c128_1063] : memref<8x576xf32, #tpu.memory_space<vmem>>, vector<2x64xf32>
    tpu.vector_store %arg13[%c2_1062, %c128_1063], %1039 {strides = array<i32>} : memref<8x576xf32, #tpu.memory_space<vmem>>, vector<2x64xf32>,
    %c8_1064 = arith.constant 8 : index
    %c0_1065 = arith.constant 0 : index
    %1041 = vector.load %arg12[%c8_1064, %c0_1065] : memref<32x64xf32, #tpu.memory_space<vmem>>, vector<4x64xf32>
    %1042 = vector.extract_strided_slice %1041 {offsets = [0, 0], sizes = [2, 64], strides = [1, 1]} : vector<4x64xf32> to vector<2x64xf32>
    %c2_1066 = arith.constant 2 : index
    %c192_1067 = arith.constant 192 : index
    %1043 = vector.load %arg13[%c2_1066, %c192_1067] : memref<8x576xf32, #tpu.memory_space<vmem>>, vector<2x64xf32>
    tpu.vector_store %arg13[%c2_1066, %c192_1067], %1042 {strides = array<i32>} : memref<8x576xf32, #tpu.memory_space<vmem>>, vector<2x64xf32>,
    %1044 = vector.extract_strided_slice %1041 {offsets = [1, 0], sizes = [2, 64], strides = [1, 1]} : vector<4x64xf32> to vector<2x64xf32>
    %c2_1068 = arith.constant 2 : index
    %c256_1069 = arith.constant 256 : index
    %1045 = vector.load %arg13[%c2_1068, %c256_1069] : memref<8x576xf32, #tpu.memory_space<vmem>>, vector<2x64xf32>
    tpu.vector_store %arg13[%c2_1068, %c256_1069], %1044 {strides = array<i32>} : memref<8x576xf32, #tpu.memory_space<vmem>>, vector<2x64xf32>,
    %1046 = vector.extract_strided_slice %1041 {offsets = [2, 0], sizes = [2, 64], strides = [1, 1]} : vector<4x64xf32> to vector<2x64xf32>
    %c2_1070 = arith.constant 2 : index
    %c320_1071 = arith.constant 320 : index
    %1047 = vector.load %arg13[%c2_1070, %c320_1071] : memref<8x576xf32, #tpu.memory_space<vmem>>, vector<2x64xf32>
    tpu.vector_store %arg13[%c2_1070, %c320_1071], %1046 {strides = array<i32>} : memref<8x576xf32, #tpu.memory_space<vmem>>, vector<2x64xf32>,
    %c12_1072 = arith.constant 12 : index
    %c0_1073 = arith.constant 0 : index
    %1048 = vector.load %arg12[%c12_1072, %c0_1073] : memref<32x64xf32, #tpu.memory_space<vmem>>, vector<4x64xf32>
    %1049 = vector.extract_strided_slice %1048 {offsets = [0, 0], sizes = [2, 64], strides = [1, 1]} : vector<4x64xf32> to vector<2x64xf32>
    %c2_1074 = arith.constant 2 : index
    %c384_1075 = arith.constant 384 : index
    %1050 = vector.load %arg13[%c2_1074, %c384_1075] : memref<8x576xf32, #tpu.memory_space<vmem>>, vector<2x64xf32>
    tpu.vector_store %arg13[%c2_1074, %c384_1075], %1049 {strides = array<i32>} : memref<8x576xf32, #tpu.memory_space<vmem>>, vector<2x64xf32>,
    %1051 = vector.extract_strided_slice %1048 {offsets = [1, 0], sizes = [2, 64], strides = [1, 1]} : vector<4x64xf32> to vector<2x64xf32>
    %c2_1076 = arith.constant 2 : index
    %c448_1077 = arith.constant 448 : index
    %1052 = vector.load %arg13[%c2_1076, %c448_1077] : memref<8x576xf32, #tpu.memory_space<vmem>>, vector<2x64xf32>
    tpu.vector_store %arg13[%c2_1076, %c448_1077], %1051 {strides = array<i32>} : memref<8x576xf32, #tpu.memory_space<vmem>>, vector<2x64xf32>,
    %1053 = vector.extract_strided_slice %1048 {offsets = [2, 0], sizes = [2, 64], strides = [1, 1]} : vector<4x64xf32> to vector<2x64xf32>
    %c2_1078 = arith.constant 2 : index
    %c512_1079 = arith.constant 512 : index
    %1054 = vector.load %arg13[%c2_1078, %c512_1079] : memref<8x576xf32, #tpu.memory_space<vmem>>, vector<2x64xf32>
    tpu.vector_store %arg13[%c2_1078, %c512_1079], %1053 {strides = array<i32>} : memref<8x576xf32, #tpu.memory_space<vmem>>, vector<2x64xf32>,
    %c16_1080 = arith.constant 16 : index
    %c0_1081 = arith.constant 0 : index
    %1055 = vector.load %arg12[%c16_1080, %c0_1081] : memref<32x64xf32, #tpu.memory_space<vmem>>, vector<4x64xf32>
    %1056 = vector.extract_strided_slice %1055 {offsets = [0, 0], sizes = [2, 64], strides = [1, 1]} : vector<4x64xf32> to vector<2x64xf32>
    %c4_1082 = arith.constant 4 : index
    %c0_1083 = arith.constant 0 : index
    %1057 = vector.load %arg13[%c4_1082, %c0_1083] : memref<8x576xf32, #tpu.memory_space<vmem>>, vector<2x64xf32>
    tpu.vector_store %arg13[%c4_1082, %c0_1083], %1056 {strides = array<i32>} : memref<8x576xf32, #tpu.memory_space<vmem>>, vector<2x64xf32>,
    %1058 = vector.extract_strided_slice %1055 {offsets = [1, 0], sizes = [2, 64], strides = [1, 1]} : vector<4x64xf32> to vector<2x64xf32>
    %c4_1084 = arith.constant 4 : index
    %c64_1085 = arith.constant 64 : index
    %1059 = vector.load %arg13[%c4_1084, %c64_1085] : memref<8x576xf32, #tpu.memory_space<vmem>>, vector<2x64xf32>
    tpu.vector_store %arg13[%c4_1084, %c64_1085], %1058 {strides = array<i32>} : memref<8x576xf32, #tpu.memory_space<vmem>>, vector<2x64xf32>,
    %1060 = vector.extract_strided_slice %1055 {offsets = [2, 0], sizes = [2, 64], strides = [1, 1]} : vector<4x64xf32> to vector<2x64xf32>
    %c4_1086 = arith.constant 4 : index
    %c128_1087 = arith.constant 128 : index
    %1061 = vector.load %arg13[%c4_1086, %c128_1087] : memref<8x576xf32, #tpu.memory_space<vmem>>, vector<2x64xf32>
    tpu.vector_store %arg13[%c4_1086, %c128_1087], %1060 {strides = array<i32>} : memref<8x576xf32, #tpu.memory_space<vmem>>, vector<2x64xf32>,
    %c20_1088 = arith.constant 20 : index
    %c0_1089 = arith.constant 0 : index
    %1062 = vector.load %arg12[%c20_1088, %c0_1089] : memref<32x64xf32, #tpu.memory_space<vmem>>, vector<4x64xf32>
    %1063 = vector.extract_strided_slice %1062 {offsets = [0, 0], sizes = [2, 64], strides = [1, 1]} : vector<4x64xf32> to vector<2x64xf32>
    %c4_1090 = arith.constant 4 : index
    %c192_1091 = arith.constant 192 : index
    %1064 = vector.load %arg13[%c4_1090, %c192_1091] : memref<8x576xf32, #tpu.memory_space<vmem>>, vector<2x64xf32>
    tpu.vector_store %arg13[%c4_1090, %c192_1091], %1063 {strides = array<i32>} : memref<8x576xf32, #tpu.memory_space<vmem>>, vector<2x64xf32>,
    %1065 = vector.extract_strided_slice %1062 {offsets = [1, 0], sizes = [2, 64], strides = [1, 1]} : vector<4x64xf32> to vector<2x64xf32>
    %c4_1092 = arith.constant 4 : index
    %c256_1093 = arith.constant 256 : index
    %1066 = vector.load %arg13[%c4_1092, %c256_1093] : memref<8x576xf32, #tpu.memory_space<vmem>>, vector<2x64xf32>
    tpu.vector_store %arg13[%c4_1092, %c256_1093], %1065 {strides = array<i32>} : memref<8x576xf32, #tpu.memory_space<vmem>>, vector<2x64xf32>,
    %1067 = vector.extract_strided_slice %1062 {offsets = [2, 0], sizes = [2, 64], strides = [1, 1]} : vector<4x64xf32> to vector<2x64xf32>
    %c4_1094 = arith.constant 4 : index
    %c320_1095 = arith.constant 320 : index
    %1068 = vector.load %arg13[%c4_1094, %c320_1095] : memref<8x576xf32, #tpu.memory_space<vmem>>, vector<2x64xf32>
    tpu.vector_store %arg13[%c4_1094, %c320_1095], %1067 {strides = array<i32>} : memref<8x576xf32, #tpu.memory_space<vmem>>, vector<2x64xf32>,
    %c24_1096 = arith.constant 24 : index
    %c0_1097 = arith.constant 0 : index
    %1069 = vector.load %arg12[%c24_1096, %c0_1097] : memref<32x64xf32, #tpu.memory_space<vmem>>, vector<4x64xf32>
    %1070 = vector.extract_strided_slice %1069 {offsets = [0, 0], sizes = [2, 64], strides = [1, 1]} : vector<4x64xf32> to vector<2x64xf32>
    %c4_1098 = arith.constant 4 : index
    %c384_1099 = arith.constant 384 : index
    %1071 = vector.load %arg13[%c4_1098, %c384_1099] : memref<8x576xf32, #tpu.memory_space<vmem>>, vector<2x64xf32>
    tpu.vector_store %arg13[%c4_1098, %c384_1099], %1070 {strides = array<i32>} : memref<8x576xf32, #tpu.memory_space<vmem>>, vector<2x64xf32>,
    %1072 = vector.extract_strided_slice %1069 {offsets = [1, 0], sizes = [2, 64], strides = [1, 1]} : vector<4x64xf32> to vector<2x64xf32>
    %c4_1100 = arith.constant 4 : index
    %c448_1101 = arith.constant 448 : index
    %1073 = vector.load %arg13[%c4_1100, %c448_1101] : memref<8x576xf32, #tpu.memory_space<vmem>>, vector<2x64xf32>
    tpu.vector_store %arg13[%c4_1100, %c448_1101], %1072 {strides = array<i32>} : memref<8x576xf32, #tpu.memory_space<vmem>>, vector<2x64xf32>,
    %1074 = vector.extract_strided_slice %1069 {offsets = [2, 0], sizes = [2, 64], strides = [1, 1]} : vector<4x64xf32> to vector<2x64xf32>
    %c4_1102 = arith.constant 4 : index
    %c512_1103 = arith.constant 512 : index
    %1075 = vector.load %arg13[%c4_1102, %c512_1103] : memref<8x576xf32, #tpu.memory_space<vmem>>, vector<2x64xf32>
    tpu.vector_store %arg13[%c4_1102, %c512_1103], %1074 {strides = array<i32>} : memref<8x576xf32, #tpu.memory_space<vmem>>, vector<2x64xf32>,
    %c20_1104 = arith.constant 20 : index
    %c0_1105 = arith.constant 0 : index
    %1076 = vector.load %arg12[%c20_1104, %c0_1105] : memref<32x64xf32, #tpu.memory_space<vmem>>, vector<4x64xf32>
    %1077 = vector.extract_strided_slice %1076 {offsets = [0, 0], sizes = [2, 64], strides = [1, 1]} : vector<4x64xf32> to vector<2x64xf32>
    %c6_1106 = arith.constant 6 : index
    %c0_1107 = arith.constant 0 : index
    %1078 = vector.load %arg13[%c6_1106, %c0_1107] : memref<8x576xf32, #tpu.memory_space<vmem>>, vector<2x64xf32>
    tpu.vector_store %arg13[%c6_1106, %c0_1107], %1077 {strides = array<i32>} : memref<8x576xf32, #tpu.memory_space<vmem>>, vector<2x64xf32>,
    %1079 = vector.extract_strided_slice %1076 {offsets = [1, 0], sizes = [2, 64], strides = [1, 1]} : vector<4x64xf32> to vector<2x64xf32>
    %c6_1108 = arith.constant 6 : index
    %c64_1109 = arith.constant 64 : index
    %1080 = vector.load %arg13[%c6_1108, %c64_1109] : memref<8x576xf32, #tpu.memory_space<vmem>>, vector<2x64xf32>
    tpu.vector_store %arg13[%c6_1108, %c64_1109], %1079 {strides = array<i32>} : memref<8x576xf32, #tpu.memory_space<vmem>>, vector<2x64xf32>,
    %1081 = vector.extract_strided_slice %1076 {offsets = [2, 0], sizes = [2, 64], strides = [1, 1]} : vector<4x64xf32> to vector<2x64xf32>
    %c6_1110 = arith.constant 6 : index
    %c128_1111 = arith.constant 128 : index
    %1082 = vector.load %arg13[%c6_1110, %c128_1111] : memref<8x576xf32, #tpu.memory_space<vmem>>, vector<2x64xf32>
    tpu.vector_store %arg13[%c6_1110, %c128_1111], %1081 {strides = array<i32>} : memref<8x576xf32, #tpu.memory_space<vmem>>, vector<2x64xf32>,
    %c24_1112 = arith.constant 24 : index
    %c0_1113 = arith.constant 0 : index
    %1083 = vector.load %arg12[%c24_1112, %c0_1113] : memref<32x64xf32, #tpu.memory_space<vmem>>, vector<4x64xf32>
    %1084 = vector.extract_strided_slice %1083 {offsets = [0, 0], sizes = [2, 64], strides = [1, 1]} : vector<4x64xf32> to vector<2x64xf32>
    %c6_1114 = arith.constant 6 : index
    %c192_1115 = arith.constant 192 : index
    %1085 = vector.load %arg13[%c6_1114, %c192_1115] : memref<8x576xf32, #tpu.memory_space<vmem>>, vector<2x64xf32>
    tpu.vector_store %arg13[%c6_1114, %c192_1115], %1084 {strides = array<i32>} : memref<8x576xf32, #tpu.memory_space<vmem>>, vector<2x64xf32>,
    %1086 = vector.extract_strided_slice %1083 {offsets = [1, 0], sizes = [2, 64], strides = [1, 1]} : vector<4x64xf32> to vector<2x64xf32>
    %c6_1116 = arith.constant 6 : index
    %c256_1117 = arith.constant 256 : index
    %1087 = vector.load %arg13[%c6_1116, %c256_1117] : memref<8x576xf32, #tpu.memory_space<vmem>>, vector<2x64xf32>
    tpu.vector_store %arg13[%c6_1116, %c256_1117], %1086 {strides = array<i32>} : memref<8x576xf32, #tpu.memory_space<vmem>>, vector<2x64xf32>,
    %1088 = vector.extract_strided_slice %1083 {offsets = [2, 0], sizes = [2, 64], strides = [1, 1]} : vector<4x64xf32> to vector<2x64xf32>
    %c6_1118 = arith.constant 6 : index
    %c320_1119 = arith.constant 320 : index
    %1089 = vector.load %arg13[%c6_1118, %c320_1119] : memref<8x576xf32, #tpu.memory_space<vmem>>, vector<2x64xf32>
    tpu.vector_store %arg13[%c6_1118, %c320_1119], %1088 {strides = array<i32>} : memref<8x576xf32, #tpu.memory_space<vmem>>, vector<2x64xf32>,
    %c28_1120 = arith.constant 28 : index
    %c0_1121 = arith.constant 0 : index
    %1090 = vector.load %arg12[%c28_1120, %c0_1121] : memref<32x64xf32, #tpu.memory_space<vmem>>, vector<4x64xf32>
    %1091 = vector.extract_strided_slice %1090 {offsets = [0, 0], sizes = [2, 64], strides = [1, 1]} : vector<4x64xf32> to vector<2x64xf32>
    %c6_1122 = arith.constant 6 : index
    %c384_1123 = arith.constant 384 : index
    %1092 = vector.load %arg13[%c6_1122, %c384_1123] : memref<8x576xf32, #tpu.memory_space<vmem>>, vector<2x64xf32>
    tpu.vector_store %arg13[%c6_1122, %c384_1123], %1091 {strides = array<i32>} : memref<8x576xf32, #tpu.memory_space<vmem>>, vector<2x64xf32>,
    %1093 = vector.extract_strided_slice %1090 {offsets = [1, 0], sizes = [2, 64], strides = [1, 1]} : vector<4x64xf32> to vector<2x64xf32>
    %c6_1124 = arith.constant 6 : index
    %c448_1125 = arith.constant 448 : index
    %1094 = vector.load %arg13[%c6_1124, %c448_1125] : memref<8x576xf32, #tpu.memory_space<vmem>>, vector<2x64xf32>
    tpu.vector_store %arg13[%c6_1124, %c448_1125], %1093 {strides = array<i32>} : memref<8x576xf32, #tpu.memory_space<vmem>>, vector<2x64xf32>,
    %1095 = vector.extract_strided_slice %1090 {offsets = [2, 0], sizes = [2, 64], strides = [1, 1]} : vector<4x64xf32> to vector<2x64xf32>
    %c6_1126 = arith.constant 6 : index
    %c512_1127 = arith.constant 512 : index
    %1096 = vector.load %arg13[%c6_1126, %c512_1127] : memref<8x576xf32, #tpu.memory_space<vmem>>, vector<2x64xf32>
    tpu.vector_store %arg13[%c6_1126, %c512_1127], %1095 {strides = array<i32>} : memref<8x576xf32, #tpu.memory_space<vmem>>, vector<2x64xf32>,
    %c0_1128 = arith.constant 0 : index
    %c0_1129 = arith.constant 0 : index
    %1097 = vector.load %arg13[%c0_1128, %c0_1129] : memref<8x576xf32, #tpu.memory_space<vmem>>, vector<8x576xf32>
    %1098 = arith.truncf %1097 : vector<8x576xf32> to vector<8x576xbf16>
    %c1_1130 = arith.constant 1 : index
    %c0_1131 = arith.constant 0 : index
    %c0_1132 = arith.constant 0 : index
    %1099 = vector.load %arg3[%c1_1130, %c0_1131, %c0_1132] : memref<3x576x64xbf16, #tpu.memory_space<vmem>>, vector<1x576x64xbf16>
    %1100 = vector.shape_cast %1099 : vector<1x576x64xbf16> to vector<576x64xbf16>
    %cst_1133 = arith.constant dense<0.000000e+00> : vector<8x64xf32>
    %1101 = tpu.matmul %1098, %1100, %cst_1133 {dimension_numbers = #tpu.dot_dimension_numbers<[1], [0], [0], [1], [0, 0, 1, 1], [], []>} : vector<8x576xbf16>, vector<576x64xbf16>, vector<8x64xf32> -> vector<8x64xf32>
    %c4_1134 = arith.constant 4 : index
    %c0_1135 = arith.constant 0 : index
    %1102 = vector.load %arg4[%c4_1134, %c0_1135] : memref<8x64xf32, #tpu.memory_space<vmem>>, vector<1x64xf32>
    %c5_1136 = arith.constant 5 : index
    %c0_1137 = arith.constant 0 : index
    %1103 = vector.load %arg4[%c5_1136, %c0_1137] : memref<8x64xf32, #tpu.memory_space<vmem>>, vector<1x64xf32>
    %cst_1138 = arith.constant dense<0.000000e+00> : vector<64xf32>
    %1104 = vector.multi_reduction <add>, %1101, %cst_1138 [0] : vector<8x64xf32> to vector<64xf32>
    %1105 = vector.shape_cast %1104 : vector<64xf32> to vector<1x64xf32>
    %1106 = arith.mulf %1101, %1101 : vector<8x64xf32>
    %cst_1139 = arith.constant dense<0.000000e+00> : vector<64xf32>
    %1107 = vector.multi_reduction <add>, %1106, %cst_1139 [0] : vector<8x64xf32> to vector<64xf32>
    %1108 = vector.shape_cast %1107 : vector<64xf32> to vector<1x64xf32>
    %cst_1140 = arith.constant 1.250000e-01 : f32
    %1109 = vector.broadcast %cst_1140 : f32 to vector<1x64xf32>
    %1110 = arith.mulf %1105, %1109 : vector<1x64xf32>
    %cst_1141 = arith.constant 1.250000e-01 : f32
    %1111 = vector.broadcast %cst_1141 : f32 to vector<1x64xf32>
    %1112 = arith.mulf %1108, %1111 : vector<1x64xf32>
    %1113 = arith.mulf %1110, %1110 : vector<1x64xf32>
    %1114 = arith.subf %1112, %1113 : vector<1x64xf32>
    %cst_1142 = arith.constant 9.99999974E-6 : f32
    %1115 = vector.broadcast %cst_1142 : f32 to vector<1x64xf32>
    %1116 = arith.addf %1114, %1115 : vector<1x64xf32>
    %1117 = math.rsqrt %1116 : vector<1x64xf32>
    %1118 = arith.mulf %1102, %1117 : vector<1x64xf32>
    %1119 = arith.mulf %1110, %1118 : vector<1x64xf32>
    %1120 = arith.subf %1103, %1119 : vector<1x64xf32>
    %1121 = vector.broadcast %1118 : vector<1x64xf32> to vector<8x64xf32>
    %1122 = arith.mulf %1101, %1121 : vector<8x64xf32>
    %1123 = vector.broadcast %1120 : vector<1x64xf32> to vector<8x64xf32>
    %1124 = arith.addf %1122, %1123 : vector<8x64xf32>
    %cst_1143 = arith.constant 0.000000e+00 : f32
    %1125 = vector.broadcast %cst_1143 : f32 to vector<8x64xf32>
    %1126 = arith.maximumf %1124, %1125 : vector<8x64xf32>
    %c0_1144 = arith.constant 0 : index
    %c0_1145 = arith.constant 0 : index
    %1127 = vector.load %arg14[%c0_1144, %c0_1145] : memref<8x64xf32, #tpu.memory_space<vmem>>, vector<8x64xf32>
    tpu.vector_store %arg14[%c0_1144, %c0_1145], %1126 {strides = array<i32>} : memref<8x64xf32, #tpu.memory_space<vmem>>, vector<8x64xf32>,
    %c0_1146 = arith.constant 0 : index
    %c0_1147 = arith.constant 0 : index
    %1128 = vector.load %arg14[%c0_1146, %c0_1147] : memref<8x64xf32, #tpu.memory_space<vmem>>, vector<2x64xf32>
    %c5_1148 = arith.constant 5 : index
    %c0_1149 = arith.constant 0 : index
    %1129 = vector.load %arg12[%c5_1148, %c0_1149] : memref<32x64xf32, #tpu.memory_space<vmem>>, vector<2x64xf32>
    tpu.vector_store %arg12[%c5_1148, %c0_1149], %1128 {strides = array<i32>} : memref<32x64xf32, #tpu.memory_space<vmem>>, vector<2x64xf32>,
    %c2_1150 = arith.constant 2 : index
    %c0_1151 = arith.constant 0 : index
    %1130 = vector.load %arg14[%c2_1150, %c0_1151] : memref<8x64xf32, #tpu.memory_space<vmem>>, vector<2x64xf32>
    %c9_1152 = arith.constant 9 : index
    %c0_1153 = arith.constant 0 : index
    %1131 = vector.load %arg12[%c9_1152, %c0_1153] : memref<32x64xf32, #tpu.memory_space<vmem>>, vector<2x64xf32>
    tpu.vector_store %arg12[%c9_1152, %c0_1153], %1130 {strides = array<i32>} : memref<32x64xf32, #tpu.memory_space<vmem>>, vector<2x64xf32>,
    %c4_1154 = arith.constant 4 : index
    %c0_1155 = arith.constant 0 : index
    %1132 = vector.load %arg14[%c4_1154, %c0_1155] : memref<8x64xf32, #tpu.memory_space<vmem>>, vector<2x64xf32>
    %c21_1156 = arith.constant 21 : index
    %c0_1157 = arith.constant 0 : index
    %1133 = vector.load %arg12[%c21_1156, %c0_1157] : memref<32x64xf32, #tpu.memory_space<vmem>>, vector<2x64xf32>
    tpu.vector_store %arg12[%c21_1156, %c0_1157], %1132 {strides = array<i32>} : memref<32x64xf32, #tpu.memory_space<vmem>>, vector<2x64xf32>,
    %c6_1158 = arith.constant 6 : index
    %c0_1159 = arith.constant 0 : index
    %1134 = vector.load %arg14[%c6_1158, %c0_1159] : memref<8x64xf32, #tpu.memory_space<vmem>>, vector<2x64xf32>
    %c25_1160 = arith.constant 25 : index
    %c0_1161 = arith.constant 0 : index
    %1135 = vector.load %arg12[%c25_1160, %c0_1161] : memref<32x64xf32, #tpu.memory_space<vmem>>, vector<2x64xf32>
    tpu.vector_store %arg12[%c25_1160, %c0_1161], %1134 {strides = array<i32>} : memref<32x64xf32, #tpu.memory_space<vmem>>, vector<2x64xf32>,
    %c0_1162 = arith.constant 0 : index
    %c0_1163 = arith.constant 0 : index
    %1136 = vector.load %arg12[%c0_1162, %c0_1163] : memref<32x64xf32, #tpu.memory_space<vmem>>, vector<4x64xf32>
    %1137 = vector.extract_strided_slice %1136 {offsets = [0, 0], sizes = [2, 64], strides = [1, 1]} : vector<4x64xf32> to vector<2x64xf32>
    %c0_1164 = arith.constant 0 : index
    %c0_1165 = arith.constant 0 : index
    %1138 = vector.load %arg13[%c0_1164, %c0_1165] : memref<8x576xf32, #tpu.memory_space<vmem>>, vector<2x64xf32>
    tpu.vector_store %arg13[%c0_1164, %c0_1165], %1137 {strides = array<i32>} : memref<8x576xf32, #tpu.memory_space<vmem>>, vector<2x64xf32>,
    %1139 = vector.extract_strided_slice %1136 {offsets = [1, 0], sizes = [2, 64], strides = [1, 1]} : vector<4x64xf32> to vector<2x64xf32>
    %c0_1166 = arith.constant 0 : index
    %c64_1167 = arith.constant 64 : index
    %1140 = vector.load %arg13[%c0_1166, %c64_1167] : memref<8x576xf32, #tpu.memory_space<vmem>>, vector<2x64xf32>
    tpu.vector_store %arg13[%c0_1166, %c64_1167], %1139 {strides = array<i32>} : memref<8x576xf32, #tpu.memory_space<vmem>>, vector<2x64xf32>,
    %1141 = vector.extract_strided_slice %1136 {offsets = [2, 0], sizes = [2, 64], strides = [1, 1]} : vector<4x64xf32> to vector<2x64xf32>
    %c0_1168 = arith.constant 0 : index
    %c128_1169 = arith.constant 128 : index
    %1142 = vector.load %arg13[%c0_1168, %c128_1169] : memref<8x576xf32, #tpu.memory_space<vmem>>, vector<2x64xf32>
    tpu.vector_store %arg13[%c0_1168, %c128_1169], %1141 {strides = array<i32>} : memref<8x576xf32, #tpu.memory_space<vmem>>, vector<2x64xf32>,
    %c4_1170 = arith.constant 4 : index
    %c0_1171 = arith.constant 0 : index
    %1143 = vector.load %arg12[%c4_1170, %c0_1171] : memref<32x64xf32, #tpu.memory_space<vmem>>, vector<4x64xf32>
    %1144 = vector.extract_strided_slice %1143 {offsets = [0, 0], sizes = [2, 64], strides = [1, 1]} : vector<4x64xf32> to vector<2x64xf32>
    %c0_1172 = arith.constant 0 : index
    %c192_1173 = arith.constant 192 : index
    %1145 = vector.load %arg13[%c0_1172, %c192_1173] : memref<8x576xf32, #tpu.memory_space<vmem>>, vector<2x64xf32>
    tpu.vector_store %arg13[%c0_1172, %c192_1173], %1144 {strides = array<i32>} : memref<8x576xf32, #tpu.memory_space<vmem>>, vector<2x64xf32>,
    %1146 = vector.extract_strided_slice %1143 {offsets = [1, 0], sizes = [2, 64], strides = [1, 1]} : vector<4x64xf32> to vector<2x64xf32>
    %c0_1174 = arith.constant 0 : index
    %c256_1175 = arith.constant 256 : index
    %1147 = vector.load %arg13[%c0_1174, %c256_1175] : memref<8x576xf32, #tpu.memory_space<vmem>>, vector<2x64xf32>
    tpu.vector_store %arg13[%c0_1174, %c256_1175], %1146 {strides = array<i32>} : memref<8x576xf32, #tpu.memory_space<vmem>>, vector<2x64xf32>,
    %1148 = vector.extract_strided_slice %1143 {offsets = [2, 0], sizes = [2, 64], strides = [1, 1]} : vector<4x64xf32> to vector<2x64xf32>
    %c0_1176 = arith.constant 0 : index
    %c320_1177 = arith.constant 320 : index
    %1149 = vector.load %arg13[%c0_1176, %c320_1177] : memref<8x576xf32, #tpu.memory_space<vmem>>, vector<2x64xf32>
    tpu.vector_store %arg13[%c0_1176, %c320_1177], %1148 {strides = array<i32>} : memref<8x576xf32, #tpu.memory_space<vmem>>, vector<2x64xf32>,
    %c8_1178 = arith.constant 8 : index
    %c0_1179 = arith.constant 0 : index
    %1150 = vector.load %arg12[%c8_1178, %c0_1179] : memref<32x64xf32, #tpu.memory_space<vmem>>, vector<4x64xf32>
    %1151 = vector.extract_strided_slice %1150 {offsets = [0, 0], sizes = [2, 64], strides = [1, 1]} : vector<4x64xf32> to vector<2x64xf32>
    %c0_1180 = arith.constant 0 : index
    %c384_1181 = arith.constant 384 : index
    %1152 = vector.load %arg13[%c0_1180, %c384_1181] : memref<8x576xf32, #tpu.memory_space<vmem>>, vector<2x64xf32>
    tpu.vector_store %arg13[%c0_1180, %c384_1181], %1151 {strides = array<i32>} : memref<8x576xf32, #tpu.memory_space<vmem>>, vector<2x64xf32>,
    %1153 = vector.extract_strided_slice %1150 {offsets = [1, 0], sizes = [2, 64], strides = [1, 1]} : vector<4x64xf32> to vector<2x64xf32>
    %c0_1182 = arith.constant 0 : index
    %c448_1183 = arith.constant 448 : index
    %1154 = vector.load %arg13[%c0_1182, %c448_1183] : memref<8x576xf32, #tpu.memory_space<vmem>>, vector<2x64xf32>
    tpu.vector_store %arg13[%c0_1182, %c448_1183], %1153 {strides = array<i32>} : memref<8x576xf32, #tpu.memory_space<vmem>>, vector<2x64xf32>,
    %1155 = vector.extract_strided_slice %1150 {offsets = [2, 0], sizes = [2, 64], strides = [1, 1]} : vector<4x64xf32> to vector<2x64xf32>
    %c0_1184 = arith.constant 0 : index
    %c512_1185 = arith.constant 512 : index
    %1156 = vector.load %arg13[%c0_1184, %c512_1185] : memref<8x576xf32, #tpu.memory_space<vmem>>, vector<2x64xf32>
    tpu.vector_store %arg13[%c0_1184, %c512_1185], %1155 {strides = array<i32>} : memref<8x576xf32, #tpu.memory_space<vmem>>, vector<2x64xf32>,
    %c4_1186 = arith.constant 4 : index
    %c0_1187 = arith.constant 0 : index
    %1157 = vector.load %arg12[%c4_1186, %c0_1187] : memref<32x64xf32, #tpu.memory_space<vmem>>, vector<4x64xf32>
    %1158 = vector.extract_strided_slice %1157 {offsets = [0, 0], sizes = [2, 64], strides = [1, 1]} : vector<4x64xf32> to vector<2x64xf32>
    %c2_1188 = arith.constant 2 : index
    %c0_1189 = arith.constant 0 : index
    %1159 = vector.load %arg13[%c2_1188, %c0_1189] : memref<8x576xf32, #tpu.memory_space<vmem>>, vector<2x64xf32>
    tpu.vector_store %arg13[%c2_1188, %c0_1189], %1158 {strides = array<i32>} : memref<8x576xf32, #tpu.memory_space<vmem>>, vector<2x64xf32>,
    %1160 = vector.extract_strided_slice %1157 {offsets = [1, 0], sizes = [2, 64], strides = [1, 1]} : vector<4x64xf32> to vector<2x64xf32>
    %c2_1190 = arith.constant 2 : index
    %c64_1191 = arith.constant 64 : index
    %1161 = vector.load %arg13[%c2_1190, %c64_1191] : memref<8x576xf32, #tpu.memory_space<vmem>>, vector<2x64xf32>
    tpu.vector_store %arg13[%c2_1190, %c64_1191], %1160 {strides = array<i32>} : memref<8x576xf32, #tpu.memory_space<vmem>>, vector<2x64xf32>,
    %1162 = vector.extract_strided_slice %1157 {offsets = [2, 0], sizes = [2, 64], strides = [1, 1]} : vector<4x64xf32> to vector<2x64xf32>
    %c2_1192 = arith.constant 2 : index
    %c128_1193 = arith.constant 128 : index
    %1163 = vector.load %arg13[%c2_1192, %c128_1193] : memref<8x576xf32, #tpu.memory_space<vmem>>, vector<2x64xf32>
    tpu.vector_store %arg13[%c2_1192, %c128_1193], %1162 {strides = array<i32>} : memref<8x576xf32, #tpu.memory_space<vmem>>, vector<2x64xf32>,
    %c8_1194 = arith.constant 8 : index
    %c0_1195 = arith.constant 0 : index
    %1164 = vector.load %arg12[%c8_1194, %c0_1195] : memref<32x64xf32, #tpu.memory_space<vmem>>, vector<4x64xf32>
    %1165 = vector.extract_strided_slice %1164 {offsets = [0, 0], sizes = [2, 64], strides = [1, 1]} : vector<4x64xf32> to vector<2x64xf32>
    %c2_1196 = arith.constant 2 : index
    %c192_1197 = arith.constant 192 : index
    %1166 = vector.load %arg13[%c2_1196, %c192_1197] : memref<8x576xf32, #tpu.memory_space<vmem>>, vector<2x64xf32>
    tpu.vector_store %arg13[%c2_1196, %c192_1197], %1165 {strides = array<i32>} : memref<8x576xf32, #tpu.memory_space<vmem>>, vector<2x64xf32>,
    %1167 = vector.extract_strided_slice %1164 {offsets = [1, 0], sizes = [2, 64], strides = [1, 1]} : vector<4x64xf32> to vector<2x64xf32>
    %c2_1198 = arith.constant 2 : index
    %c256_1199 = arith.constant 256 : index
    %1168 = vector.load %arg13[%c2_1198, %c256_1199] : memref<8x576xf32, #tpu.memory_space<vmem>>, vector<2x64xf32>
    tpu.vector_store %arg13[%c2_1198, %c256_1199], %1167 {strides = array<i32>} : memref<8x576xf32, #tpu.memory_space<vmem>>, vector<2x64xf32>,
    %1169 = vector.extract_strided_slice %1164 {offsets = [2, 0], sizes = [2, 64], strides = [1, 1]} : vector<4x64xf32> to vector<2x64xf32>
    %c2_1200 = arith.constant 2 : index
    %c320_1201 = arith.constant 320 : index
    %1170 = vector.load %arg13[%c2_1200, %c320_1201] : memref<8x576xf32, #tpu.memory_space<vmem>>, vector<2x64xf32>
    tpu.vector_store %arg13[%c2_1200, %c320_1201], %1169 {strides = array<i32>} : memref<8x576xf32, #tpu.memory_space<vmem>>, vector<2x64xf32>,
    %c12_1202 = arith.constant 12 : index
    %c0_1203 = arith.constant 0 : index
    %1171 = vector.load %arg12[%c12_1202, %c0_1203] : memref<32x64xf32, #tpu.memory_space<vmem>>, vector<4x64xf32>
    %1172 = vector.extract_strided_slice %1171 {offsets = [0, 0], sizes = [2, 64], strides = [1, 1]} : vector<4x64xf32> to vector<2x64xf32>
    %c2_1204 = arith.constant 2 : index
    %c384_1205 = arith.constant 384 : index
    %1173 = vector.load %arg13[%c2_1204, %c384_1205] : memref<8x576xf32, #tpu.memory_space<vmem>>, vector<2x64xf32>
    tpu.vector_store %arg13[%c2_1204, %c384_1205], %1172 {strides = array<i32>} : memref<8x576xf32, #tpu.memory_space<vmem>>, vector<2x64xf32>,
    %1174 = vector.extract_strided_slice %1171 {offsets = [1, 0], sizes = [2, 64], strides = [1, 1]} : vector<4x64xf32> to vector<2x64xf32>
    %c2_1206 = arith.constant 2 : index
    %c448_1207 = arith.constant 448 : index
    %1175 = vector.load %arg13[%c2_1206, %c448_1207] : memref<8x576xf32, #tpu.memory_space<vmem>>, vector<2x64xf32>
    tpu.vector_store %arg13[%c2_1206, %c448_1207], %1174 {strides = array<i32>} : memref<8x576xf32, #tpu.memory_space<vmem>>, vector<2x64xf32>,
    %1176 = vector.extract_strided_slice %1171 {offsets = [2, 0], sizes = [2, 64], strides = [1, 1]} : vector<4x64xf32> to vector<2x64xf32>
    %c2_1208 = arith.constant 2 : index
    %c512_1209 = arith.constant 512 : index
    %1177 = vector.load %arg13[%c2_1208, %c512_1209] : memref<8x576xf32, #tpu.memory_space<vmem>>, vector<2x64xf32>
    tpu.vector_store %arg13[%c2_1208, %c512_1209], %1176 {strides = array<i32>} : memref<8x576xf32, #tpu.memory_space<vmem>>, vector<2x64xf32>,
    %c16_1210 = arith.constant 16 : index
    %c0_1211 = arith.constant 0 : index
    %1178 = vector.load %arg12[%c16_1210, %c0_1211] : memref<32x64xf32, #tpu.memory_space<vmem>>, vector<4x64xf32>
    %1179 = vector.extract_strided_slice %1178 {offsets = [0, 0], sizes = [2, 64], strides = [1, 1]} : vector<4x64xf32> to vector<2x64xf32>
    %c4_1212 = arith.constant 4 : index
    %c0_1213 = arith.constant 0 : index
    %1180 = vector.load %arg13[%c4_1212, %c0_1213] : memref<8x576xf32, #tpu.memory_space<vmem>>, vector<2x64xf32>
    tpu.vector_store %arg13[%c4_1212, %c0_1213], %1179 {strides = array<i32>} : memref<8x576xf32, #tpu.memory_space<vmem>>, vector<2x64xf32>,
    %1181 = vector.extract_strided_slice %1178 {offsets = [1, 0], sizes = [2, 64], strides = [1, 1]} : vector<4x64xf32> to vector<2x64xf32>
    %c4_1214 = arith.constant 4 : index
    %c64_1215 = arith.constant 64 : index
    %1182 = vector.load %arg13[%c4_1214, %c64_1215] : memref<8x576xf32, #tpu.memory_space<vmem>>, vector<2x64xf32>
    tpu.vector_store %arg13[%c4_1214, %c64_1215], %1181 {strides = array<i32>} : memref<8x576xf32, #tpu.memory_space<vmem>>, vector<2x64xf32>,
    %1183 = vector.extract_strided_slice %1178 {offsets = [2, 0], sizes = [2, 64], strides = [1, 1]} : vector<4x64xf32> to vector<2x64xf32>
    %c4_1216 = arith.constant 4 : index
    %c128_1217 = arith.constant 128 : index
    %1184 = vector.load %arg13[%c4_1216, %c128_1217] : memref<8x576xf32, #tpu.memory_space<vmem>>, vector<2x64xf32>
    tpu.vector_store %arg13[%c4_1216, %c128_1217], %1183 {strides = array<i32>} : memref<8x576xf32, #tpu.memory_space<vmem>>, vector<2x64xf32>,
    %c20_1218 = arith.constant 20 : index
    %c0_1219 = arith.constant 0 : index
    %1185 = vector.load %arg12[%c20_1218, %c0_1219] : memref<32x64xf32, #tpu.memory_space<vmem>>, vector<4x64xf32>
    %1186 = vector.extract_strided_slice %1185 {offsets = [0, 0], sizes = [2, 64], strides = [1, 1]} : vector<4x64xf32> to vector<2x64xf32>
    %c4_1220 = arith.constant 4 : index
    %c192_1221 = arith.constant 192 : index
    %1187 = vector.load %arg13[%c4_1220, %c192_1221] : memref<8x576xf32, #tpu.memory_space<vmem>>, vector<2x64xf32>
    tpu.vector_store %arg13[%c4_1220, %c192_1221], %1186 {strides = array<i32>} : memref<8x576xf32, #tpu.memory_space<vmem>>, vector<2x64xf32>,
    %1188 = vector.extract_strided_slice %1185 {offsets = [1, 0], sizes = [2, 64], strides = [1, 1]} : vector<4x64xf32> to vector<2x64xf32>
    %c4_1222 = arith.constant 4 : index
    %c256_1223 = arith.constant 256 : index
    %1189 = vector.load %arg13[%c4_1222, %c256_1223] : memref<8x576xf32, #tpu.memory_space<vmem>>, vector<2x64xf32>
    tpu.vector_store %arg13[%c4_1222, %c256_1223], %1188 {strides = array<i32>} : memref<8x576xf32, #tpu.memory_space<vmem>>, vector<2x64xf32>,
    %1190 = vector.extract_strided_slice %1185 {offsets = [2, 0], sizes = [2, 64], strides = [1, 1]} : vector<4x64xf32> to vector<2x64xf32>
    %c4_1224 = arith.constant 4 : index
    %c320_1225 = arith.constant 320 : index
    %1191 = vector.load %arg13[%c4_1224, %c320_1225] : memref<8x576xf32, #tpu.memory_space<vmem>>, vector<2x64xf32>
    tpu.vector_store %arg13[%c4_1224, %c320_1225], %1190 {strides = array<i32>} : memref<8x576xf32, #tpu.memory_space<vmem>>, vector<2x64xf32>,
    %c24_1226 = arith.constant 24 : index
    %c0_1227 = arith.constant 0 : index
    %1192 = vector.load %arg12[%c24_1226, %c0_1227] : memref<32x64xf32, #tpu.memory_space<vmem>>, vector<4x64xf32>
    %1193 = vector.extract_strided_slice %1192 {offsets = [0, 0], sizes = [2, 64], strides = [1, 1]} : vector<4x64xf32> to vector<2x64xf32>
    %c4_1228 = arith.constant 4 : index
    %c384_1229 = arith.constant 384 : index
    %1194 = vector.load %arg13[%c4_1228, %c384_1229] : memref<8x576xf32, #tpu.memory_space<vmem>>, vector<2x64xf32>
    tpu.vector_store %arg13[%c4_1228, %c384_1229], %1193 {strides = array<i32>} : memref<8x576xf32, #tpu.memory_space<vmem>>, vector<2x64xf32>,
    %1195 = vector.extract_strided_slice %1192 {offsets = [1, 0], sizes = [2, 64], strides = [1, 1]} : vector<4x64xf32> to vector<2x64xf32>
    %c4_1230 = arith.constant 4 : index
    %c448_1231 = arith.constant 448 : index
    %1196 = vector.load %arg13[%c4_1230, %c448_1231] : memref<8x576xf32, #tpu.memory_space<vmem>>, vector<2x64xf32>
    tpu.vector_store %arg13[%c4_1230, %c448_1231], %1195 {strides = array<i32>} : memref<8x576xf32, #tpu.memory_space<vmem>>, vector<2x64xf32>,
    %1197 = vector.extract_strided_slice %1192 {offsets = [2, 0], sizes = [2, 64], strides = [1, 1]} : vector<4x64xf32> to vector<2x64xf32>
    %c4_1232 = arith.constant 4 : index
    %c512_1233 = arith.constant 512 : index
    %1198 = vector.load %arg13[%c4_1232, %c512_1233] : memref<8x576xf32, #tpu.memory_space<vmem>>, vector<2x64xf32>
    tpu.vector_store %arg13[%c4_1232, %c512_1233], %1197 {strides = array<i32>} : memref<8x576xf32, #tpu.memory_space<vmem>>, vector<2x64xf32>,
    %c20_1234 = arith.constant 20 : index
    %c0_1235 = arith.constant 0 : index
    %1199 = vector.load %arg12[%c20_1234, %c0_1235] : memref<32x64xf32, #tpu.memory_space<vmem>>, vector<4x64xf32>
    %1200 = vector.extract_strided_slice %1199 {offsets = [0, 0], sizes = [2, 64], strides = [1, 1]} : vector<4x64xf32> to vector<2x64xf32>
    %c6_1236 = arith.constant 6 : index
    %c0_1237 = arith.constant 0 : index
    %1201 = vector.load %arg13[%c6_1236, %c0_1237] : memref<8x576xf32, #tpu.memory_space<vmem>>, vector<2x64xf32>
    tpu.vector_store %arg13[%c6_1236, %c0_1237], %1200 {strides = array<i32>} : memref<8x576xf32, #tpu.memory_space<vmem>>, vector<2x64xf32>,
    %1202 = vector.extract_strided_slice %1199 {offsets = [1, 0], sizes = [2, 64], strides = [1, 1]} : vector<4x64xf32> to vector<2x64xf32>
    %c6_1238 = arith.constant 6 : index
    %c64_1239 = arith.constant 64 : index
    %1203 = vector.load %arg13[%c6_1238, %c64_1239] : memref<8x576xf32, #tpu.memory_space<vmem>>, vector<2x64xf32>
    tpu.vector_store %arg13[%c6_1238, %c64_1239], %1202 {strides = array<i32>} : memref<8x576xf32, #tpu.memory_space<vmem>>, vector<2x64xf32>,
    %1204 = vector.extract_strided_slice %1199 {offsets = [2, 0], sizes = [2, 64], strides = [1, 1]} : vector<4x64xf32> to vector<2x64xf32>
    %c6_1240 = arith.constant 6 : index
    %c128_1241 = arith.constant 128 : index
    %1205 = vector.load %arg13[%c6_1240, %c128_1241] : memref<8x576xf32, #tpu.memory_space<vmem>>, vector<2x64xf32>
    tpu.vector_store %arg13[%c6_1240, %c128_1241], %1204 {strides = array<i32>} : memref<8x576xf32, #tpu.memory_space<vmem>>, vector<2x64xf32>,
    %c24_1242 = arith.constant 24 : index
    %c0_1243 = arith.constant 0 : index
    %1206 = vector.load %arg12[%c24_1242, %c0_1243] : memref<32x64xf32, #tpu.memory_space<vmem>>, vector<4x64xf32>
    %1207 = vector.extract_strided_slice %1206 {offsets = [0, 0], sizes = [2, 64], strides = [1, 1]} : vector<4x64xf32> to vector<2x64xf32>
    %c6_1244 = arith.constant 6 : index
    %c192_1245 = arith.constant 192 : index
    %1208 = vector.load %arg13[%c6_1244, %c192_1245] : memref<8x576xf32, #tpu.memory_space<vmem>>, vector<2x64xf32>
    tpu.vector_store %arg13[%c6_1244, %c192_1245], %1207 {strides = array<i32>} : memref<8x576xf32, #tpu.memory_space<vmem>>, vector<2x64xf32>,
    %1209 = vector.extract_strided_slice %1206 {offsets = [1, 0], sizes = [2, 64], strides = [1, 1]} : vector<4x64xf32> to vector<2x64xf32>
    %c6_1246 = arith.constant 6 : index
    %c256_1247 = arith.constant 256 : index
    %1210 = vector.load %arg13[%c6_1246, %c256_1247] : memref<8x576xf32, #tpu.memory_space<vmem>>, vector<2x64xf32>
    tpu.vector_store %arg13[%c6_1246, %c256_1247], %1209 {strides = array<i32>} : memref<8x576xf32, #tpu.memory_space<vmem>>, vector<2x64xf32>,
    %1211 = vector.extract_strided_slice %1206 {offsets = [2, 0], sizes = [2, 64], strides = [1, 1]} : vector<4x64xf32> to vector<2x64xf32>
    %c6_1248 = arith.constant 6 : index
    %c320_1249 = arith.constant 320 : index
    %1212 = vector.load %arg13[%c6_1248, %c320_1249] : memref<8x576xf32, #tpu.memory_space<vmem>>, vector<2x64xf32>
    tpu.vector_store %arg13[%c6_1248, %c320_1249], %1211 {strides = array<i32>} : memref<8x576xf32, #tpu.memory_space<vmem>>, vector<2x64xf32>,
    %c28_1250 = arith.constant 28 : index
    %c0_1251 = arith.constant 0 : index
    %1213 = vector.load %arg12[%c28_1250, %c0_1251] : memref<32x64xf32, #tpu.memory_space<vmem>>, vector<4x64xf32>
    %1214 = vector.extract_strided_slice %1213 {offsets = [0, 0], sizes = [2, 64], strides = [1, 1]} : vector<4x64xf32> to vector<2x64xf32>
    %c6_1252 = arith.constant 6 : index
    %c384_1253 = arith.constant 384 : index
    %1215 = vector.load %arg13[%c6_1252, %c384_1253] : memref<8x576xf32, #tpu.memory_space<vmem>>, vector<2x64xf32>
    tpu.vector_store %arg13[%c6_1252, %c384_1253], %1214 {strides = array<i32>} : memref<8x576xf32, #tpu.memory_space<vmem>>, vector<2x64xf32>,
    %1216 = vector.extract_strided_slice %1213 {offsets = [1, 0], sizes = [2, 64], strides = [1, 1]} : vector<4x64xf32> to vector<2x64xf32>
    %c6_1254 = arith.constant 6 : index
    %c448_1255 = arith.constant 448 : index
    %1217 = vector.load %arg13[%c6_1254, %c448_1255] : memref<8x576xf32, #tpu.memory_space<vmem>>, vector<2x64xf32>
    tpu.vector_store %arg13[%c6_1254, %c448_1255], %1216 {strides = array<i32>} : memref<8x576xf32, #tpu.memory_space<vmem>>, vector<2x64xf32>,
    %1218 = vector.extract_strided_slice %1213 {offsets = [2, 0], sizes = [2, 64], strides = [1, 1]} : vector<4x64xf32> to vector<2x64xf32>
    %c6_1256 = arith.constant 6 : index
    %c512_1257 = arith.constant 512 : index
    %1219 = vector.load %arg13[%c6_1256, %c512_1257] : memref<8x576xf32, #tpu.memory_space<vmem>>, vector<2x64xf32>
    tpu.vector_store %arg13[%c6_1256, %c512_1257], %1218 {strides = array<i32>} : memref<8x576xf32, #tpu.memory_space<vmem>>, vector<2x64xf32>,
    %c0_1258 = arith.constant 0 : index
    %c0_1259 = arith.constant 0 : index
    %1220 = vector.load %arg13[%c0_1258, %c0_1259] : memref<8x576xf32, #tpu.memory_space<vmem>>, vector<8x576xf32>
    %1221 = arith.truncf %1220 : vector<8x576xf32> to vector<8x576xbf16>
    %c2_1260 = arith.constant 2 : index
    %c0_1261 = arith.constant 0 : index
    %c0_1262 = arith.constant 0 : index
    %1222 = vector.load %arg3[%c2_1260, %c0_1261, %c0_1262] : memref<3x576x64xbf16, #tpu.memory_space<vmem>>, vector<1x576x64xbf16>
    %1223 = vector.shape_cast %1222 : vector<1x576x64xbf16> to vector<576x64xbf16>
    %cst_1263 = arith.constant dense<0.000000e+00> : vector<8x64xf32>
    %1224 = tpu.matmul %1221, %1223, %cst_1263 {dimension_numbers = #tpu.dot_dimension_numbers<[1], [0], [0], [1], [0, 0, 1, 1], [], []>} : vector<8x576xbf16>, vector<576x64xbf16>, vector<8x64xf32> -> vector<8x64xf32>
    %c6_1264 = arith.constant 6 : index
    %c0_1265 = arith.constant 0 : index
    %1225 = vector.load %arg4[%c6_1264, %c0_1265] : memref<8x64xf32, #tpu.memory_space<vmem>>, vector<1x64xf32>
    %c7_1266 = arith.constant 7 : index
    %c0_1267 = arith.constant 0 : index
    %1226 = vector.load %arg4[%c7_1266, %c0_1267] : memref<8x64xf32, #tpu.memory_space<vmem>>, vector<1x64xf32>
    %cst_1268 = arith.constant dense<0.000000e+00> : vector<64xf32>
    %1227 = vector.multi_reduction <add>, %1224, %cst_1268 [0] : vector<8x64xf32> to vector<64xf32>
    %1228 = vector.shape_cast %1227 : vector<64xf32> to vector<1x64xf32>
    %1229 = arith.mulf %1224, %1224 : vector<8x64xf32>
    %cst_1269 = arith.constant dense<0.000000e+00> : vector<64xf32>
    %1230 = vector.multi_reduction <add>, %1229, %cst_1269 [0] : vector<8x64xf32> to vector<64xf32>
    %1231 = vector.shape_cast %1230 : vector<64xf32> to vector<1x64xf32>
    %cst_1270 = arith.constant 1.250000e-01 : f32
    %1232 = vector.broadcast %cst_1270 : f32 to vector<1x64xf32>
    %1233 = arith.mulf %1228, %1232 : vector<1x64xf32>
    %cst_1271 = arith.constant 1.250000e-01 : f32
    %1234 = vector.broadcast %cst_1271 : f32 to vector<1x64xf32>
    %1235 = arith.mulf %1231, %1234 : vector<1x64xf32>
    %1236 = arith.mulf %1233, %1233 : vector<1x64xf32>
    %1237 = arith.subf %1235, %1236 : vector<1x64xf32>
    %cst_1272 = arith.constant 9.99999974E-6 : f32
    %1238 = vector.broadcast %cst_1272 : f32 to vector<1x64xf32>
    %1239 = arith.addf %1237, %1238 : vector<1x64xf32>
    %1240 = math.rsqrt %1239 : vector<1x64xf32>
    %1241 = arith.mulf %1225, %1240 : vector<1x64xf32>
    %1242 = arith.mulf %1233, %1241 : vector<1x64xf32>
    %1243 = arith.subf %1226, %1242 : vector<1x64xf32>
    %1244 = vector.broadcast %1241 : vector<1x64xf32> to vector<8x64xf32>
    %1245 = arith.mulf %1224, %1244 : vector<8x64xf32>
    %1246 = vector.broadcast %1243 : vector<1x64xf32> to vector<8x64xf32>
    %1247 = arith.addf %1245, %1246 : vector<8x64xf32>
    %cst_1273 = arith.constant 0.000000e+00 : f32
    %1248 = vector.broadcast %cst_1273 : f32 to vector<8x64xf32>
    %1249 = arith.maximumf %1247, %1248 : vector<8x64xf32>
    %c0_1274 = arith.constant 0 : index
    %c0_1275 = arith.constant 0 : index
    %1250 = vector.load %arg5[%c0_1274, %c0_1275] : memref<8x64xf32, #tpu.memory_space<vmem>>, vector<8x64xf32>
    tpu.vector_store %arg5[%c0_1274, %c0_1275], %1249 {strides = array<i32>} : memref<8x64xf32, #tpu.memory_space<vmem>>, vector<8x64xf32>,
    return
  }
  func.func @transform_0(%arg0: i32) -> (i32, i32) {
    %c0_i32 = arith.constant 0 : i32
    %c0_i32_0 = arith.constant 0 : i32
    %c0_i32_1 = arith.constant 0 : i32
    return %c0_i32, %c0_i32_0 : i32, i32
  }
  func.func @transform_1(%arg0: i32) -> (i32, i32) {
    %c0_i32 = arith.constant 0 : i32
    %c0_i32_0 = arith.constant 0 : i32
    %c0_i32_1 = arith.constant 0 : i32
    return %c0_i32, %c0_i32_0 : i32, i32
  }
  func.func @transform_2(%arg0: i32) -> (i32, i32, i32) {
    %c0_i32 = arith.constant 0 : i32
    %c0_i32_0 = arith.constant 0 : i32
    %c0_i32_1 = arith.constant 0 : i32
    %c0_i32_2 = arith.constant 0 : i32
    return %c0_i32, %c0_i32_0, %c0_i32_1 : i32, i32, i32
  }
  func.func @transform_3(%arg0: i32) -> (i32, i32) {
    %c0_i32 = arith.constant 0 : i32
    %c0_i32_0 = arith.constant 0 : i32
    %c0_i32_1 = arith.constant 0 : i32
    return %c0_i32, %c0_i32_0 : i32, i32
  }
  func.func @transform_4(%arg0: i32) -> (i32, i32) {
    %c0_i32 = arith.constant 0 : i32
    %c0_i32_0 = arith.constant 0 : i32
    %c0_i32_1 = arith.constant 0 : i32
    return %c0_i32, %c0_i32_0 : i32, i32
  }
}

</mosaic_0001>

<llo_original>
// kernel: convnet_nopool_forward.1
$region0: #{convnet_nopool_forward.1}
  #allocation0 [shape = 'u32[]', space=smem, size = 0x4, offset = 0x4, fixed_abs, tag = 'smem constant byte address 0x4 - core index']
  #allocation1 [shape = 'u32[144,128]{1,0:T(1,128)}', space=vmem, size = 0x12000, scoped, tag = 'internal scratch']
  #allocation2 [shape = 'f32[392,27]{1,0:T(8,128)}', space=vmem, size = 0x31000, scoped, tag = 'scratch operand']
  #allocation3 [shape = 'f32[392,64]{1,0:T(8,128)}', space=vmem, size = 0x31000, scoped, tag = 'scratch operand']
  #allocation4 [shape = 'f32[98,64]{1,0:T(8,128)}', space=vmem, size = 0xd000, scoped, tag = 'scratch operand']
  #allocation5 [shape = 'f32[50,576]{1,0:T(8,128)}', space=vmem, size = 0x23000, scoped, tag = 'scratch operand']
  #allocation6 [shape = 'f32[50,64]{1,0:T(8,128)}', space=vmem, size = 0x7000, scoped, tag = 'scratch operand']
  #allocation7 [shape = 'f32[8,64]{1,0:T(8,128)}', space=vmem, size = 0x1000, scoped, tag = 'scratch operand']
  #allocation8 [shape = 'f32[32,64]{1,0:T(8,128)}', space=vmem, size = 0x4000, scoped, tag = 'scratch operand']
  #allocation9 [shape = 'f32[8,576]{1,0:T(8,128)}', space=vmem, size = 0x5000, scoped, tag = 'scratch operand']
  #allocation10 [shape = 'f32[8,64]{1,0:T(8,128)}', space=vmem, size = 0x1000, scoped, tag = 'scratch operand']
  %s0 = inlined_call_operand.vmem [shape: f32[512,3], index: 0, kind: input, shape index: {}]
  %s1 = inlined_call_operand.vmem [shape: bf16[27,64], index: 1, kind: input, shape index: {}]
  %s2 = inlined_call_operand.vmem [shape: bf16[3,576,64], index: 2, kind: input, shape index: {}]
  %s3 = inlined_call_operand.vmem [shape: f32[8,64], index: 3, kind: input, shape index: {}]
  %s4 = inlined_call_operand.hbm [shape: f32[8,64], index: 4, kind: output, shape index: {}]
  %s5 = sld [smem:[#allocation0]]
  $region26: #{convnet_nopool_forward.1} parent=0
    _
  %s7 = ssub.s32 1, %s5
  %s8 = scalar_select 0, %s7, %s5
  $region1: #{convnet_nopool_forward.1} parent=0
    #allocation11 [shape = 'u8[4096]{0}', space=vmem, size = 0x1000, scoped, tag = 'output window, operand 0, single buffered']
    #allocation12 [shape = 's32[1]{0}', space=sflag, size = 0x4, scoped, tag = 'scoped memory for convnet_nopool_forward.1']
    %9 = vsyncpa [#allocation12], 0
    // Predicated region
    $region2: #{convnet_nopool_forward.1} parent=1 // pred_check
      _
    $region3: #{convnet_nopool_forward.1} parent=1 // pred_check_branch
      %11 = sbr.rel (0) target = $region5
    $region4: #{convnet_nopool_forward.1} parent=1 // pred_region
      _
    $region5: #{convnet_nopool_forward.1} parent=1 // pred_fallthru
      _
    // Predicated region
    $region6: #{convnet_nopool_forward.1} parent=1 // pred_check
      _
    $region7: #{convnet_nopool_forward.1} parent=1 // pred_check_branch
      %13 = sbr.rel (0) target = $region9
    $region8: #{convnet_nopool_forward.1} parent=1 // pred_region
      _
    $region9: #{convnet_nopool_forward.1} parent=1 // pred_fallthru
      _
    // Predicated region
    $region10: #{convnet_nopool_forward.1} parent=1 // pred_check
      _
    $region11: #{convnet_nopool_forward.1} parent=1 // pred_check_branch
      %15 = sbr.rel (0) target = $region13
    $region12: #{convnet_nopool_forward.1} parent=1 // pred_region
      _
    $region13: #{convnet_nopool_forward.1} parent=1 // pred_fallthru
      _
    // Predicated region
    $region14: #{convnet_nopool_forward.1} parent=1 // pred_check
      _
    $region15: #{convnet_nopool_forward.1} parent=1 // pred_check_branch
      %17 = sbr.rel (0) target = $region17
    $region16: #{convnet_nopool_forward.1} parent=1 // pred_region
      _
    $region17: #{convnet_nopool_forward.1} parent=1 // pred_fallthru
      _
    %v19 = vld [vmem:[%s0] sm:$0xff]
    %v20 = vld [vmem:[%s0 + $0x8] sm:$0xff]
    %vm21 = vcmask 23552
    %22 = vst.msk [vmem:[#allocation2] sm:$0xff] %vm21, %v19
    %vm23 = vcmask 21504
    %24 = vst.msk [vmem:[#allocation2 + $0x8] sm:$0x3f] %vm23, %v20
    %27 = vrot.lane.b32.xlu0 %v19, 3
    %v28 = vpop.permute.xlu0 %27
    %29 = vrot.lane.b32.xlu0 %v20, 3
    %v30 = vpop.permute.xlu0 %29
    %vm33 = vcmask 48153
    %34 = vst.msk [vmem:[#allocation2 - $0x1] sm:$0xfe] %vm33, %v28
    %vm35 = vcmask 47128
    %36 = vst.msk [vmem:[#allocation2 + $0x7] sm:$0x7f] %vm35, %v30
    %37 = vrot.lane.b32.xlu0 %v19, 6
    %v38 = vpop.permute.xlu0 %37
    %39 = vrot.lane.b32.xlu0 %v20, 6
    %v40 = vpop.permute.xlu0 %39
    %vm43 = vcmask 72754
    %44 = vst.msk [vmem:[#allocation2 - $0x2] sm:$0xfc] %vm43, %v38
    %vm45 = vcmask 72752
    %46 = vst.msk [vmem:[#allocation2 + $0x6] sm:$0xff] %vm45, %v40
    %v47 = vld [vmem:[%s0 + $0x10] sm:$0xff]
    %v48 = vld [vmem:[%s0 + $0x18] sm:$0xff]
    %51 = vrot.lane.b32.xlu0 %v47, 9
    %v52 = vpop.permute.xlu0 %51
    %53 = vrot.lane.b32.xlu0 %v48, 9
    %v54 = vpop.permute.xlu0 %53
    %vm57 = vcmask 97352
    %58 = vst.msk [vmem:[#allocation2] sm:$0xff] %vm57, %v52
    %vm59 = vcmask 95304
    %60 = vst.msk [vmem:[#allocation2 + $0x8] sm:$0x3f] %vm59, %v54
    %61 = vrot.lane.b32.xlu0 %v47, 12
    %v62 = vpop.permute.xlu0 %61
    %63 = vrot.lane.b32.xlu0 %v48, 12
    %v64 = vpop.permute.xlu0 %63
    %vm67 = vcmask 121953
    %68 = vst.msk [vmem:[#allocation2 - $0x1] sm:$0xfe] %vm67, %v62
    %vm69 = vcmask 120928
    %70 = vst.msk [vmem:[#allocation2 + $0x7] sm:$0x7f] %vm69, %v64
    %71 = vrot.lane.b32.xlu0 %v47, 15
    %v72 = vpop.permute.xlu0 %71
    %73 = vrot.lane.b32.xlu0 %v48, 15
    %v74 = vpop.permute.xlu0 %73
    %vm77 = vcmask 146554
    %78 = vst.msk [vmem:[#allocation2 - $0x2] sm:$0xfc] %vm77, %v72
    %vm79 = vcmask 146552
    %80 = vst.msk [vmem:[#allocation2 + $0x6] sm:$0xff] %vm79, %v74
    %v81 = vld [vmem:[%s0 + $0x20] sm:$0xff]
    %v82 = vld [vmem:[%s0 + $0x28] sm:$0xff]
    %85 = vrot.lane.b32.xlu0 %v81, 18
    %v86 = vpop.permute.xlu0 %85
    %87 = vrot.lane.b32.xlu0 %v82, 18
    %v88 = vpop.permute.xlu0 %87
    %vm91 = vcmask 171152
    %92 = vst.msk [vmem:[#allocation2] sm:$0xff] %vm91, %v86
    %vm93 = vcmask 169104
    %94 = vst.msk [vmem:[#allocation2 + $0x8] sm:$0x3f] %vm93, %v88
    %95 = vrot.lane.b32.xlu0 %v81, 21
    %v96 = vpop.permute.xlu0 %95
    %97 = vrot.lane.b32.xlu0 %v82, 21
    %v98 = vpop.permute.xlu0 %97
    %vm101 = vcmask 195753
    %102 = vst.msk [vmem:[#allocation2 - $0x1] sm:$0xfe] %vm101, %v96
    %vm103 = vcmask 194728
    %104 = vst.msk [vmem:[#allocation2 + $0x7] sm:$0x7f] %vm103, %v98
    %105 = vrot.lane.b32.xlu0 %v81, 24
    %v106 = vpop.permute.xlu0 %105
    %107 = vrot.lane.b32.xlu0 %v82, 24
    %v108 = vpop.permute.xlu0 %107
    %vm111 = vcmask 220354
    %112 = vst.msk [vmem:[#allocation2 - $0x2] sm:$0xfc] %vm111, %v106
    %vm113 = vcmask 220352
    %114 = vst.msk [vmem:[#allocation2 + $0x6] sm:$0xff] %vm113, %v108
    %v115 = vld [vmem:[%s0 + $0x10] sm:$0xff]
    %v116 = vld [vmem:[%s0 + $0x18] sm:$0xff]
    %117 = vst.msk [vmem:[#allocation2 + $0xe] sm:$0xff] %vm21, %v115
    %118 = vst.msk [vmem:[#allocation2 + $0x16] sm:$0x3f] %vm23, %v116
    %121 = vrot.lane.b32.xlu0 %v115, 3
    %v122 = vpop.permute.xlu0 %121
    %123 = vrot.lane.b32.xlu0 %v116, 3
    %v124 = vpop.permute.xlu0 %123
    %127 = vst.msk [vmem:[#allocation2 + $0xd] sm:$0xfe] %vm33, %v122
    %128 = vst.msk [vmem:[#allocation2 + $0x15] sm:$0x7f] %vm35, %v124
    %129 = vrot.lane.b32.xlu0 %v115, 6
    %v130 = vpop.permute.xlu0 %129
    %131 = vrot.lane.b32.xlu0 %v116, 6
    %v132 = vpop.permute.xlu0 %131
    %135 = vst.msk [vmem:[#allocation2 + $0xc] sm:$0xfc] %vm43, %v130
    %136 = vst.msk [vmem:[#allocation2 + $0x14] sm:$0xff] %vm45, %v132
    %v137 = vld [vmem:[%s0 + $0x20] sm:$0xff]
    %v138 = vld [vmem:[%s0 + $0x28] sm:$0xff]
    %141 = vrot.lane.b32.xlu0 %v137, 9
    %v142 = vpop.permute.xlu0 %141
    %143 = vrot.lane.b32.xlu0 %v138, 9
    %v144 = vpop.permute.xlu0 %143
    %147 = vst.msk [vmem:[#allocation2 + $0xe] sm:$0xff] %vm57, %v142
    %148 = vst.msk [vmem:[#allocation2 + $0x16] sm:$0x3f] %vm59, %v144
    %149 = vrot.lane.b32.xlu0 %v137, 12
    %v150 = vpop.permute.xlu0 %149
    %151 = vrot.lane.b32.xlu0 %v138, 12
    %v152 = vpop.permute.xlu0 %151
    %155 = vst.msk [vmem:[#allocation2 + $0xd] sm:$0xfe] %vm67, %v150
    %156 = vst.msk [vmem:[#allocation2 + $0x15] sm:$0x7f] %vm69, %v152
    %157 = vrot.lane.b32.xlu0 %v137, 15
    %v158 = vpop.permute.xlu0 %157
    %159 = vrot.lane.b32.xlu0 %v138, 15
    %v160 = vpop.permute.xlu0 %159
    %163 = vst.msk [vmem:[#allocation2 + $0xc] sm:$0xfc] %vm77, %v158
    %164 = vst.msk [vmem:[#allocation2 + $0x14] sm:$0xff] %vm79, %v160
    %v165 = vld [vmem:[%s0 + $0x30] sm:$0xff]
    %v166 = vld [vmem:[%s0 + $0x38] sm:$0xff]
    %169 = vrot.lane.b32.xlu0 %v165, 18
    %v170 = vpop.permute.xlu0 %169
    %171 = vrot.lane.b32.xlu0 %v166, 18
    %v172 = vpop.permute.xlu0 %171
    %175 = vst.msk [vmem:[#allocation2 + $0xe] sm:$0xff] %vm91, %v170
    %176 = vst.msk [vmem:[#allocation2 + $0x16] sm:$0x3f] %vm93, %v172
    %177 = vrot.lane.b32.xlu0 %v165, 21
    %v178 = vpop.permute.xlu0 %177
    %179 = vrot.lane.b32.xlu0 %v166, 21
    %v180 = vpop.permute.xlu0 %179
    %183 = vst.msk [vmem:[#allocation2 + $0xd] sm:$0xfe] %vm101, %v178
    %184 = vst.msk [vmem:[#allocation2 + $0x15] sm:$0x7f] %vm103, %v180
    %185 = vrot.lane.b32.xlu0 %v165, 24
    %v186 = vpop.permute.xlu0 %185
    %187 = vrot.lane.b32.xlu0 %v166, 24
    %v188 = vpop.permute.xlu0 %187
    %191 = vst.msk [vmem:[#allocation2 + $0xc] sm:$0xfc] %vm111, %v186
    %192 = vst.msk [vmem:[#allocation2 + $0x14] sm:$0xff] %vm113, %v188
    %v193 = vld [vmem:[%s0 + $0x20] sm:$0xff]
    %v194 = vld [vmem:[%s0 + $0x28] sm:$0xff]
    %195 = vst.msk [vmem:[#allocation2 + $0x1c] sm:$0xff] %vm21, %v193
    %196 = vst.msk [vmem:[#allocation2 + $0x24] sm:$0x3f] %vm23, %v194
    %199 = vrot.lane.b32.xlu0 %v193, 3
    %v200 = vpop.permute.xlu0 %199
    %201 = vrot.lane.b32.xlu0 %v194, 3
    %v202 = vpop.permute.xlu0 %201
    %205 = vst.msk [vmem:[#allocation2 + $0x1b] sm:$0xfe] %vm33, %v200
    %206 = vst.msk [vmem:[#allocation2 + $0x23] sm:$0x7f] %vm35, %v202
    %207 = vrot.lane.b32.xlu0 %v193, 6
    %v208 = vpop.permute.xlu0 %207
    %209 = vrot.lane.b32.xlu0 %v194, 6
    %v210 = vpop.permute.xlu0 %209
    %213 = vst.msk [vmem:[#allocation2 + $0x1a] sm:$0xfc] %vm43, %v208
    %214 = vst.msk [vmem:[#allocation2 + $0x22] sm:$0xff] %vm45, %v210
    %v215 = vld [vmem:[%s0 + $0x30] sm:$0xff]
    %v216 = vld [vmem:[%s0 + $0x38] sm:$0xff]
    %219 = vrot.lane.b32.xlu0 %v215, 9
    %v220 = vpop.permute.xlu0 %219
    %221 = vrot.lane.b32.xlu0 %v216, 9
    %v222 = vpop.permute.xlu0 %221
    %225 = vst.msk [vmem:[#allocation2 + $0x1c] sm:$0xff] %vm57, %v220
    %226 = vst.msk [vmem:[#allocation2 + $0x24] sm:$0x3f] %vm59, %v222
    %227 = vrot.lane.b32.xlu0 %v215, 12
    %v228 = vpop.permute.xlu0 %227
    %229 = vrot.lane.b32.xlu0 %v216, 12
    %v230 = vpop.permute.xlu0 %229
    %233 = vst.msk [vmem:[#allocation2 + $0x1b] sm:$0xfe] %vm67, %v228
    %234 = vst.msk [vmem:[#allocation2 + $0x23] sm:$0x7f] %vm69, %v230
    %235 = vrot.lane.b32.xlu0 %v215, 15
    %v236 = vpop.permute.xlu0 %235
    %237 = vrot.lane.b32.xlu0 %v216, 15
    %v238 = vpop.permute.xlu0 %237
    %241 = vst.msk [vmem:[#allocation2 + $0x1a] sm:$0xfc] %vm77, %v236
    %242 = vst.msk [vmem:[#allocation2 + $0x22] sm:$0xff] %vm79, %v238
    %v243 = vld [vmem:[%s0 + $0x40] sm:$0xff]
    %v244 = vld [vmem:[%s0 + $0x48] sm:$0xff]
    %247 = vrot.lane.b32.xlu0 %v243, 18
    %v248 = vpop.permute.xlu0 %247
    %249 = vrot.lane.b32.xlu0 %v244, 18
    %v250 = vpop.permute.xlu0 %249
    %253 = vst.msk [vmem:[#allocation2 + $0x1c] sm:$0xff] %vm91, %v248
    %254 = vst.msk [vmem:[#allocation2 + $0x24] sm:$0x3f] %vm93, %v250
    %255 = vrot.lane.b32.xlu0 %v243, 21
    %v256 = vpop.permute.xlu0 %255
    %257 = vrot.lane.b32.xlu0 %v244, 21
    %v258 = vpop.permute.xlu0 %257
    %261 = vst.msk [vmem:[#allocation2 + $0x1b] sm:$0xfe] %vm101, %v256
    %262 = vst.msk [vmem:[#allocation2 + $0x23] sm:$0x7f] %vm103, %v258
    %263 = vrot.lane.b32.xlu0 %v243, 24
    %v264 = vpop.permute.xlu0 %263
    %265 = vrot.lane.b32.xlu0 %v244, 24
    %v266 = vpop.permute.xlu0 %265
    %269 = vst.msk [vmem:[#allocation2 + $0x1a] sm:$0xfc] %vm111, %v264
    %270 = vst.msk [vmem:[#allocation2 + $0x22] sm:$0xff] %vm113, %v266
    %v271 = vld [vmem:[%s0 + $0x30] sm:$0xff]
    %v272 = vld [vmem:[%s0 + $0x38] sm:$0xff]
    %273 = vst.msk [vmem:[#allocation2 + $0x2a] sm:$0xff] %vm21, %v271
    %274 = vst.msk [vmem:[#allocation2 + $0x32] sm:$0x3f] %vm23, %v272
    %277 = vrot.lane.b32.xlu0 %v271, 3
    %v278 = vpop.permute.xlu0 %277
    %279 = vrot.lane.b32.xlu0 %v272, 3
    %v280 = vpop.permute.xlu0 %279
    %283 = vst.msk [vmem:[#allocation2 + $0x29] sm:$0xfe] %vm33, %v278
    %284 = vst.msk [vmem:[#allocation2 + $0x31] sm:$0x7f] %vm35, %v280
    %285 = vrot.lane.b32.xlu0 %v271, 6
    %v286 = vpop.permute.xlu0 %285
    %287 = vrot.lane.b32.xlu0 %v272, 6
    %v288 = vpop.permute.xlu0 %287
    %291 = vst.msk [vmem:[#allocation2 + $0x28] sm:$0xfc] %vm43, %v286
    %292 = vst.msk [vmem:[#allocation2 + $0x30] sm:$0xff] %vm45, %v288
    %v293 = vld [vmem:[%s0 + $0x40] sm:$0xff]
    %v294 = vld [vmem:[%s0 + $0x48] sm:$0xff]
    %297 = vrot.lane.b32.xlu0 %v293, 9
    %v298 = vpop.permute.xlu0 %297
    %299 = vrot.lane.b32.xlu0 %v294, 9
    %v300 = vpop.permute.xlu0 %299
    %303 = vst.msk [vmem:[#allocation2 + $0x2a] sm:$0xff] %vm57, %v298
    %304 = vst.msk [vmem:[#allocation2 + $0x32] sm:$0x3f] %vm59, %v300
    %305 = vrot.lane.b32.xlu0 %v293, 12
    %v306 = vpop.permute.xlu0 %305
    %307 = vrot.lane.b32.xlu0 %v294, 12
    %v308 = vpop.permute.xlu0 %307
    %311 = vst.msk [vmem:[#allocation2 + $0x29] sm:$0xfe] %vm67, %v306
    %312 = vst.msk [vmem:[#allocation2 + $0x31] sm:$0x7f] %vm69, %v308
    %313 = vrot.lane.b32.xlu0 %v293, 15
    %v314 = vpop.permute.xlu0 %313
    %315 = vrot.lane.b32.xlu0 %v294, 15
    %v316 = vpop.permute.xlu0 %315
    %319 = vst.msk [vmem:[#allocation2 + $0x28] sm:$0xfc] %vm77, %v314
    %320 = vst.msk [vmem:[#allocation2 + $0x30] sm:$0xff] %vm79, %v316
    %v321 = vld [vmem:[%s0 + $0x50] sm:$0xff]
    %v322 = vld [vmem:[%s0 + $0x58] sm:$0xff]
    %325 = vrot.lane.b32.xlu0 %v321, 18
    %v326 = vpop.permute.xlu0 %325
    %327 = vrot.lane.b32.xlu0 %v322, 18
    %v328 = vpop.permute.xlu0 %327
    %331 = vst.msk [vmem:[#allocation2 + $0x2a] sm:$0xff] %vm91, %v326
    %332 = vst.msk [vmem:[#allocation2 + $0x32] sm:$0x3f] %vm93, %v328
    %333 = vrot.lane.b32.xlu0 %v321, 21
    %v334 = vpop.permute.xlu0 %333
    %335 = vrot.lane.b32.xlu0 %v322, 21
    %v336 = vpop.permute.xlu0 %335
    %339 = vst.msk [vmem:[#allocation2 + $0x29] sm:$0xfe] %vm101, %v334
    %340 = vst.msk [vmem:[#allocation2 + $0x31] sm:$0x7f] %vm103, %v336
    %341 = vrot.lane.b32.xlu0 %v321, 24
    %v342 = vpop.permute.xlu0 %341
    %343 = vrot.lane.b32.xlu0 %v322, 24
    %v344 = vpop.permute.xlu0 %343
    %347 = vst.msk [vmem:[#allocation2 + $0x28] sm:$0xfc] %vm111, %v342
    %348 = vst.msk [vmem:[#allocation2 + $0x30] sm:$0xff] %vm113, %v344
    %v349 = vld [vmem:[%s0 + $0x40] sm:$0xff]
    %v350 = vld [vmem:[%s0 + $0x48] sm:$0xff]
    %351 = vst.msk [vmem:[#allocation2 + $0x38] sm:$0xff] %vm21, %v349
    %352 = vst.msk [vmem:[#allocation2 + $0x40] sm:$0x3f] %vm23, %v350
    %355 = vrot.lane.b32.xlu0 %v349, 3
    %v356 = vpop.permute.xlu0 %355
    %357 = vrot.lane.b32.xlu0 %v350, 3
    %v358 = vpop.permute.xlu0 %357
    %361 = vst.msk [vmem:[#allocation2 + $0x37] sm:$0xfe] %vm33, %v356
    %362 = vst.msk [vmem:[#allocation2 + $0x3f] sm:$0x7f] %vm35, %v358
    %363 = vrot.lane.b32.xlu0 %v349, 6
    %v364 = vpop.permute.xlu0 %363
    %365 = vrot.lane.b32.xlu0 %v350, 6
    %v366 = vpop.permute.xlu0 %365
    %369 = vst.msk [vmem:[#allocation2 + $0x36] sm:$0xfc] %vm43, %v364
    %370 = vst.msk [vmem:[#allocation2 + $0x3e] sm:$0xff] %vm45, %v366
    %v371 = vld [vmem:[%s0 + $0x50] sm:$0xff]
    %v372 = vld [vmem:[%s0 + $0x58] sm:$0xff]
    %375 = vrot.lane.b32.xlu0 %v371, 9
    %v376 = vpop.permute.xlu0 %375
    %377 = vrot.lane.b32.xlu0 %v372, 9
    %v378 = vpop.permute.xlu0 %377
    %381 = vst.msk [vmem:[#allocation2 + $0x38] sm:$0xff] %vm57, %v376
    %382 = vst.msk [vmem:[#allocation2 + $0x40] sm:$0x3f] %vm59, %v378
    %383 = vrot.lane.b32.xlu0 %v371, 12
    %v384 = vpop.permute.xlu0 %383
    %385 = vrot.lane.b32.xlu0 %v372, 12
    %v386 = vpop.permute.xlu0 %385
    %389 = vst.msk [vmem:[#allocation2 + $0x37] sm:$0xfe] %vm67, %v384
    %390 = vst.msk [vmem:[#allocation2 + $0x3f] sm:$0x7f] %vm69, %v386
    %391 = vrot.lane.b32.xlu0 %v371, 15
    %v392 = vpop.permute.xlu0 %391
    %393 = vrot.lane.b32.xlu0 %v372, 15
    %v394 = vpop.permute.xlu0 %393
    %397 = vst.msk [vmem:[#allocation2 + $0x36] sm:$0xfc] %vm77, %v392
    %398 = vst.msk [vmem:[#allocation2 + $0x3e] sm:$0xff] %vm79, %v394
    %v399 = vld [vmem:[%s0 + $0x60] sm:$0xff]
    %v400 = vld [vmem:[%s0 + $0x68] sm:$0xff]
    %403 = vrot.lane.b32.xlu0 %v399, 18
    %v404 = vpop.permute.xlu0 %403
    %405 = vrot.lane.b32.xlu0 %v400, 18
    %v406 = vpop.permute.xlu0 %405
    %409 = vst.msk [vmem:[#allocation2 + $0x38] sm:$0xff] %vm91, %v404
    %410 = vst.msk [vmem:[#allocation2 + $0x40] sm:$0x3f] %vm93, %v406
    %411 = vrot.lane.b32.xlu0 %v399, 21
    %v412 = vpop.permute.xlu0 %411
    %413 = vrot.lane.b32.xlu0 %v400, 21
    %v414 = vpop.permute.xlu0 %413
    %417 = vst.msk [vmem:[#allocation2 + $0x37] sm:$0xfe] %vm101, %v412
    %418 = vst.msk [vmem:[#allocation2 + $0x3f] sm:$0x7f] %vm103, %v414
    %419 = vrot.lane.b32.xlu0 %v399, 24
    %v420 = vpop.permute.xlu0 %419
    %421 = vrot.lane.b32.xlu0 %v400, 24
    %v422 = vpop.permute.xlu0 %421
    %425 = vst.msk [vmem:[#allocation2 + $0x36] sm:$0xfc] %vm111, %v420
    %426 = vst.msk [vmem:[#allocation2 + $0x3e] sm:$0xff] %vm113, %v422
    %v427 = vld [vmem:[%s0 + $0x50] sm:$0xff]
    %v428 = vld [vmem:[%s0 + $0x58] sm:$0xff]
    %429 = vst.msk [vmem:[#allocation2 + $0x46] sm:$0xff] %vm21, %v427
    %430 = vst.msk [vmem:[#allocation2 + $0x4e] sm:$0x3f] %vm23, %v428
    %433 = vrot.lane.b32.xlu0 %v427, 3
    %v434 = vpop.permute.xlu0 %433
    %435 = vrot.lane.b32.xlu0 %v428, 3
    %v436 = vpop.permute.xlu0 %435
    %439 = vst.msk [vmem:[#allocation2 + $0x45] sm:$0xfe] %vm33, %v434
    %440 = vst.msk [vmem:[#allocation2 + $0x4d] sm:$0x7f] %vm35, %v436
    %441 = vrot.lane.b32.xlu0 %v427, 6
    %v442 = vpop.permute.xlu0 %441
    %443 = vrot.lane.b32.xlu0 %v428, 6
    %v444 = vpop.permute.xlu0 %443
    %447 = vst.msk [vmem:[#allocation2 + $0x44] sm:$0xfc] %vm43, %v442
    %448 = vst.msk [vmem:[#allocation2 + $0x4c] sm:$0xff] %vm45, %v444
    %v449 = vld [vmem:[%s0 + $0x60] sm:$0xff]
    %v450 = vld [vmem:[%s0 + $0x68] sm:$0xff]
    %453 = vrot.lane.b32.xlu0 %v449, 9
    %v454 = vpop.permute.xlu0 %453
    %455 = vrot.lane.b32.xlu0 %v450, 9
    %v456 = vpop.permute.xlu0 %455
    %459 = vst.msk [vmem:[#allocation2 + $0x46] sm:$0xff] %vm57, %v454
    %460 = vst.msk [vmem:[#allocation2 + $0x4e] sm:$0x3f] %vm59, %v456
    %461 = vrot.lane.b32.xlu0 %v449, 12
    %v462 = vpop.permute.xlu0 %461
    %463 = vrot.lane.b32.xlu0 %v450, 12
    %v464 = vpop.permute.xlu0 %463
    %467 = vst.msk [vmem:[#allocation2 + $0x45] sm:$0xfe] %vm67, %v462
    %468 = vst.msk [vmem:[#allocation2 + $0x4d] sm:$0x7f] %vm69, %v464
    %469 = vrot.lane.b32.xlu0 %v449, 15
    %v470 = vpop.permute.xlu0 %469
    %471 = vrot.lane.b32.xlu0 %v450, 15
    %v472 = vpop.permute.xlu0 %471
    %475 = vst.msk [vmem:[#allocation2 + $0x44] sm:$0xfc] %vm77, %v470
    %476 = vst.msk [vmem:[#allocation2 + $0x4c] sm:$0xff] %vm79, %v472
    %v477 = vld [vmem:[%s0 + $0x70] sm:$0xff]
    %v478 = vld [vmem:[%s0 + $0x78] sm:$0xff]
    %481 = vrot.lane.b32.xlu0 %v477, 18
    %v482 = vpop.permute.xlu0 %481
    %483 = vrot.lane.b32.xlu0 %v478, 18
    %v484 = vpop.permute.xlu0 %483
    %487 = vst.msk [vmem:[#allocation2 + $0x46] sm:$0xff] %vm91, %v482
    %488 = vst.msk [vmem:[#allocation2 + $0x4e] sm:$0x3f] %vm93, %v484
    %489 = vrot.lane.b32.xlu0 %v477, 21
    %v490 = vpop.permute.xlu0 %489
    %491 = vrot.lane.b32.xlu0 %v478, 21
    %v492 = vpop.permute.xlu0 %491
    %495 = vst.msk [vmem:[#allocation2 + $0x45] sm:$0xfe] %vm101, %v490
    %496 = vst.msk [vmem:[#allocation2 + $0x4d] sm:$0x7f] %vm103, %v492
    %497 = vrot.lane.b32.xlu0 %v477, 24
    %v498 = vpop.permute.xlu0 %497
    %499 = vrot.lane.b32.xlu0 %v478, 24
    %v500 = vpop.permute.xlu0 %499
    %503 = vst.msk [vmem:[#allocation2 + $0x44] sm:$0xfc] %vm111, %v498
    %504 = vst.msk [vmem:[#allocation2 + $0x4c] sm:$0xff] %vm113, %v500
    %v505 = vld [vmem:[%s0 + $0x60] sm:$0xff]
    %v506 = vld [vmem:[%s0 + $0x68] sm:$0xff]
    %507 = vst.msk [vmem:[#allocation2 + $0x54] sm:$0xff] %vm21, %v505
    %508 = vst.msk [vmem:[#allocation2 + $0x5c] sm:$0x3f] %vm23, %v506
    %511 = vrot.lane.b32.xlu0 %v505, 3
    %v512 = vpop.permute.xlu0 %511
    %513 = vrot.lane.b32.xlu0 %v506, 3
    %v514 = vpop.permute.xlu0 %513
    %517 = vst.msk [vmem:[#allocation2 + $0x53] sm:$0xfe] %vm33, %v512
    %518 = vst.msk [vmem:[#allocation2 + $0x5b] sm:$0x7f] %vm35, %v514
    %519 = vrot.lane.b32.xlu0 %v505, 6
    %v520 = vpop.permute.xlu0 %519
    %521 = vrot.lane.b32.xlu0 %v506, 6
    %v522 = vpop.permute.xlu0 %521
    %525 = vst.msk [vmem:[#allocation2 + $0x52] sm:$0xfc] %vm43, %v520
    %526 = vst.msk [vmem:[#allocation2 + $0x5a] sm:$0xff] %vm45, %v522
    %v527 = vld [vmem:[%s0 + $0x70] sm:$0xff]
    %v528 = vld [vmem:[%s0 + $0x78] sm:$0xff]
    %531 = vrot.lane.b32.xlu0 %v527, 9
    %v532 = vpop.permute.xlu0 %531
    %533 = vrot.lane.b32.xlu0 %v528, 9
    %v534 = vpop.permute.xlu0 %533
    %537 = vst.msk [vmem:[#allocation2 + $0x54] sm:$0xff] %vm57, %v532
    %538 = vst.msk [vmem:[#allocation2 + $0x5c] sm:$0x3f] %vm59, %v534
    %539 = vrot.lane.b32.xlu0 %v527, 12
    %v540 = vpop.permute.xlu0 %539
    %541 = vrot.lane.b32.xlu0 %v528, 12
    %v542 = vpop.permute.xlu0 %541
    %545 = vst.msk [vmem:[#allocation2 + $0x53] sm:$0xfe] %vm67, %v540
    %546 = vst.msk [vmem:[#allocation2 + $0x5b] sm:$0x7f] %vm69, %v542
    %547 = vrot.lane.b32.xlu0 %v527, 15
    %v548 = vpop.permute.xlu0 %547
    %549 = vrot.lane.b32.xlu0 %v528, 15
    %v550 = vpop.permute.xlu0 %549
    %553 = vst.msk [vmem:[#allocation2 + $0x52] sm:$0xfc] %vm77, %v548
    %554 = vst.msk [vmem:[#allocation2 + $0x5a] sm:$0xff] %vm79, %v550
    %v555 = vld [vmem:[%s0 + $0x80] sm:$0xff]
    %v556 = vld [vmem:[%s0 + $0x88] sm:$0xff]
    %559 = vrot.lane.b32.xlu0 %v555, 18
    %v560 = vpop.permute.xlu0 %559
    %561 = vrot.lane.b32.xlu0 %v556, 18
    %v562 = vpop.permute.xlu0 %561
    %565 = vst.msk [vmem:[#allocation2 + $0x54] sm:$0xff] %vm91, %v560
    %566 = vst.msk [vmem:[#allocation2 + $0x5c] sm:$0x3f] %vm93, %v562
    %567 = vrot.lane.b32.xlu0 %v555, 21
    %v568 = vpop.permute.xlu0 %567
    %569 = vrot.lane.b32.xlu0 %v556, 21
    %v570 = vpop.permute.xlu0 %569
    %573 = vst.msk [vmem:[#allocation2 + $0x53] sm:$0xfe] %vm101, %v568
    %574 = vst.msk [vmem:[#allocation2 + $0x5b] sm:$0x7f] %vm103, %v570
    %575 = vrot.lane.b32.xlu0 %v555, 24
    %v576 = vpop.permute.xlu0 %575
    %577 = vrot.lane.b32.xlu0 %v556, 24
    %v578 = vpop.permute.xlu0 %577
    %581 = vst.msk [vmem:[#allocation2 + $0x52] sm:$0xfc] %vm111, %v576
    %582 = vst.msk [vmem:[#allocation2 + $0x5a] sm:$0xff] %vm113, %v578
    %v583 = vld [vmem:[%s0 + $0x70] sm:$0xff]
    %v584 = vld [vmem:[%s0 + $0x78] sm:$0xff]
    %585 = vst.msk [vmem:[#allocation2 + $0x62] sm:$0xff] %vm21, %v583
    %586 = vst.msk [vmem:[#allocation2 + $0x6a] sm:$0x3f] %vm23, %v584
    %589 = vrot.lane.b32.xlu0 %v583, 3
    %v590 = vpop.permute.xlu0 %589
    %591 = vrot.lane.b32.xlu0 %v584, 3
    %v592 = vpop.permute.xlu0 %591
    %595 = vst.msk [vmem:[#allocation2 + $0x61] sm:$0xfe] %vm33, %v590
    %596 = vst.msk [vmem:[#allocation2 + $0x69] sm:$0x7f] %vm35, %v592
    %597 = vrot.lane.b32.xlu0 %v583, 6
    %v598 = vpop.permute.xlu0 %597
    %599 = vrot.lane.b32.xlu0 %v584, 6
    %v600 = vpop.permute.xlu0 %599
    %603 = vst.msk [vmem:[#allocation2 + $0x60] sm:$0xfc] %vm43, %v598
    %604 = vst.msk [vmem:[#allocation2 + $0x68] sm:$0xff] %vm45, %v600
    %v605 = vld [vmem:[%s0 + $0x80] sm:$0xff]
    %v606 = vld [vmem:[%s0 + $0x88] sm:$0xff]
    %609 = vrot.lane.b32.xlu0 %v605, 9
    %v610 = vpop.permute.xlu0 %609
    %611 = vrot.lane.b32.xlu0 %v606, 9
    %v612 = vpop.permute.xlu0 %611
    %615 = vst.msk [vmem:[#allocation2 + $0x62] sm:$0xff] %vm57, %v610
    %616 = vst.msk [vmem:[#allocation2 + $0x6a] sm:$0x3f] %vm59, %v612
    %617 = vrot.lane.b32.xlu0 %v605, 12
    %v618 = vpop.permute.xlu0 %617
    %619 = vrot.lane.b32.xlu0 %v606, 12
    %v620 = vpop.permute.xlu0 %619
    %623 = vst.msk [vmem:[#allocation2 + $0x61] sm:$0xfe] %vm67, %v618
    %624 = vst.msk [vmem:[#allocation2 + $0x69] sm:$0x7f] %vm69, %v620
    %625 = vrot.lane.b32.xlu0 %v605, 15
    %v626 = vpop.permute.xlu0 %625
    %627 = vrot.lane.b32.xlu0 %v606, 15
    %v628 = vpop.permute.xlu0 %627
    %631 = vst.msk [vmem:[#allocation2 + $0x60] sm:$0xfc] %vm77, %v626
    %632 = vst.msk [vmem:[#allocation2 + $0x68] sm:$0xff] %vm79, %v628
    %v633 = vld [vmem:[%s0 + $0x90] sm:$0xff]
    %v634 = vld [vmem:[%s0 + $0x98] sm:$0xff]
    %637 = vrot.lane.b32.xlu0 %v633, 18
    %v638 = vpop.permute.xlu0 %637
    %639 = vrot.lane.b32.xlu0 %v634, 18
    %v640 = vpop.permute.xlu0 %639
    %643 = vst.msk [vmem:[#allocation2 + $0x62] sm:$0xff] %vm91, %v638
    %644 = vst.msk [vmem:[#allocation2 + $0x6a] sm:$0x3f] %vm93, %v640
    %645 = vrot.lane.b32.xlu0 %v633, 21
    %v646 = vpop.permute.xlu0 %645
    %647 = vrot.lane.b32.xlu0 %v634, 21
    %v648 = vpop.permute.xlu0 %647
    %651 = vst.msk [vmem:[#allocation2 + $0x61] sm:$0xfe] %vm101, %v646
    %652 = vst.msk [vmem:[#allocation2 + $0x69] sm:$0x7f] %vm103, %v648
    %653 = vrot.lane.b32.xlu0 %v633, 24
    %v654 = vpop.permute.xlu0 %653
    %655 = vrot.lane.b32.xlu0 %v634, 24
    %v656 = vpop.permute.xlu0 %655
    %659 = vst.msk [vmem:[#allocation2 + $0x60] sm:$0xfc] %vm111, %v654
    %660 = vst.msk [vmem:[#allocation2 + $0x68] sm:$0xff] %vm113, %v656
    %v661 = vld [vmem:[%s0 + $0x80] sm:$0xff]
    %v662 = vld [vmem:[%s0 + $0x88] sm:$0xff]
    %663 = vst.msk [vmem:[#allocation2 + $0x70] sm:$0xff] %vm21, %v661
    %664 = vst.msk [vmem:[#allocation2 + $0x78] sm:$0x3f] %vm23, %v662
    %667 = vrot.lane.b32.xlu0 %v661, 3
    %v668 = vpop.permute.xlu0 %667
    %669 = vrot.lane.b32.xlu0 %v662, 3
    %v670 = vpop.permute.xlu0 %669
    %673 = vst.msk [vmem:[#allocation2 + $0x6f] sm:$0xfe] %vm33, %v668
    %674 = vst.msk [vmem:[#allocation2 + $0x77] sm:$0x7f] %vm35, %v670
    %675 = vrot.lane.b32.xlu0 %v661, 6
    %v676 = vpop.permute.xlu0 %675
    %677 = vrot.lane.b32.xlu0 %v662, 6
    %v678 = vpop.permute.xlu0 %677
    %681 = vst.msk [vmem:[#allocation2 + $0x6e] sm:$0xfc] %vm43, %v676
    %682 = vst.msk [vmem:[#allocation2 + $0x76] sm:$0xff] %vm45, %v678
    %v683 = vld [vmem:[%s0 + $0x90] sm:$0xff]
    %v684 = vld [vmem:[%s0 + $0x98] sm:$0xff]
    %687 = vrot.lane.b32.xlu0 %v683, 9
    %v688 = vpop.permute.xlu0 %687
    %689 = vrot.lane.b32.xlu0 %v684, 9
    %v690 = vpop.permute.xlu0 %689
    %693 = vst.msk [vmem:[#allocation2 + $0x70] sm:$0xff] %vm57, %v688
    %694 = vst.msk [vmem:[#allocation2 + $0x78] sm:$0x3f] %vm59, %v690
    %695 = vrot.lane.b32.xlu0 %v683, 12
    %v696 = vpop.permute.xlu0 %695
    %697 = vrot.lane.b32.xlu0 %v684, 12
    %v698 = vpop.permute.xlu0 %697
    %701 = vst.msk [vmem:[#allocation2 + $0x6f] sm:$0xfe] %vm67, %v696
    %702 = vst.msk [vmem:[#allocation2 + $0x77] sm:$0x7f] %vm69, %v698
    %703 = vrot.lane.b32.xlu0 %v683, 15
    %v704 = vpop.permute.xlu0 %703
    %705 = vrot.lane.b32.xlu0 %v684, 15
    %v706 = vpop.permute.xlu0 %705
    %709 = vst.msk [vmem:[#allocation2 + $0x6e] sm:$0xfc] %vm77, %v704
    %710 = vst.msk [vmem:[#allocation2 + $0x76] sm:$0xff] %vm79, %v706
    %v711 = vld [vmem:[%s0 + $0xa0] sm:$0xff]
    %v712 = vld [vmem:[%s0 + $0xa8] sm:$0xff]
    %715 = vrot.lane.b32.xlu0 %v711, 18
    %v716 = vpop.permute.xlu0 %715
    %717 = vrot.lane.b32.xlu0 %v712, 18
    %v718 = vpop.permute.xlu0 %717
    %721 = vst.msk [vmem:[#allocation2 + $0x70] sm:$0xff] %vm91, %v716
    %722 = vst.msk [vmem:[#allocation2 + $0x78] sm:$0x3f] %vm93, %v718
    %723 = vrot.lane.b32.xlu0 %v711, 21
    %v724 = vpop.permute.xlu0 %723
    %725 = vrot.lane.b32.xlu0 %v712, 21
    %v726 = vpop.permute.xlu0 %725
    %729 = vst.msk [vmem:[#allocation2 + $0x6f] sm:$0xfe] %vm101, %v724
    %730 = vst.msk [vmem:[#allocation2 + $0x77] sm:$0x7f] %vm103, %v726
    %731 = vrot.lane.b32.xlu0 %v711, 24
    %v732 = vpop.permute.xlu0 %731
    %733 = vrot.lane.b32.xlu0 %v712, 24
    %v734 = vpop.permute.xlu0 %733
    %737 = vst.msk [vmem:[#allocation2 + $0x6e] sm:$0xfc] %vm111, %v732
    %738 = vst.msk [vmem:[#allocation2 + $0x76] sm:$0xff] %vm113, %v734
    %v739 = vld [vmem:[%s0 + $0x90] sm:$0xff]
    %v740 = vld [vmem:[%s0 + $0x98] sm:$0xff]
    %741 = vst.msk [vmem:[#allocation2 + $0x7e] sm:$0xff] %vm21, %v739
    %742 = vst.msk [vmem:[#allocation2 + $0x86] sm:$0x3f] %vm23, %v740
    %745 = vrot.lane.b32.xlu0 %v739, 3
    %v746 = vpop.permute.xlu0 %745
    %747 = vrot.lane.b32.xlu0 %v740, 3
    %v748 = vpop.permute.xlu0 %747
    %751 = vst.msk [vmem:[#allocation2 + $0x7d] sm:$0xfe] %vm33, %v746
    %752 = vst.msk [vmem:[#allocation2 + $0x85] sm:$0x7f] %vm35, %v748
    %753 = vrot.lane.b32.xlu0 %v739, 6
    %v754 = vpop.permute.xlu0 %753
    %755 = vrot.lane.b32.xlu0 %v740, 6
    %v756 = vpop.permute.xlu0 %755
    %759 = vst.msk [vmem:[#allocation2 + $0x7c] sm:$0xfc] %vm43, %v754
    %760 = vst.msk [vmem:[#allocation2 + $0x84] sm:$0xff] %vm45, %v756
    %v761 = vld [vmem:[%s0 + $0xa0] sm:$0xff]
    %v762 = vld [vmem:[%s0 + $0xa8] sm:$0xff]
    %765 = vrot.lane.b32.xlu0 %v761, 9
    %v766 = vpop.permute.xlu0 %765
    %767 = vrot.lane.b32.xlu0 %v762, 9
    %v768 = vpop.permute.xlu0 %767
    %771 = vst.msk [vmem:[#allocation2 + $0x7e] sm:$0xff] %vm57, %v766
    %772 = vst.msk [vmem:[#allocation2 + $0x86] sm:$0x3f] %vm59, %v768
    %773 = vrot.lane.b32.xlu0 %v761, 12
    %v774 = vpop.permute.xlu0 %773
    %775 = vrot.lane.b32.xlu0 %v762, 12
    %v776 = vpop.permute.xlu0 %775
    %779 = vst.msk [vmem:[#allocation2 + $0x7d] sm:$0xfe] %vm67, %v774
    %780 = vst.msk [vmem:[#allocation2 + $0x85] sm:$0x7f] %vm69, %v776
    %781 = vrot.lane.b32.xlu0 %v761, 15
    %v782 = vpop.permute.xlu0 %781
    %783 = vrot.lane.b32.xlu0 %v762, 15
    %v784 = vpop.permute.xlu0 %783
    %787 = vst.msk [vmem:[#allocation2 + $0x7c] sm:$0xfc] %vm77, %v782
    %788 = vst.msk [vmem:[#allocation2 + $0x84] sm:$0xff] %vm79, %v784
    %v789 = vld [vmem:[%s0 + $0xb0] sm:$0xff]
    %v790 = vld [vmem:[%s0 + $0xb8] sm:$0xff]
    %793 = vrot.lane.b32.xlu0 %v789, 18
    %v794 = vpop.permute.xlu0 %793
    %795 = vrot.lane.b32.xlu0 %v790, 18
    %v796 = vpop.permute.xlu0 %795
    %799 = vst.msk [vmem:[#allocation2 + $0x7e] sm:$0xff] %vm91, %v794
    %800 = vst.msk [vmem:[#allocation2 + $0x86] sm:$0x3f] %vm93, %v796
    %801 = vrot.lane.b32.xlu0 %v789, 21
    %v802 = vpop.permute.xlu0 %801
    %803 = vrot.lane.b32.xlu0 %v790, 21
    %v804 = vpop.permute.xlu0 %803
    %807 = vst.msk [vmem:[#allocation2 + $0x7d] sm:$0xfe] %vm101, %v802
    %808 = vst.msk [vmem:[#allocation2 + $0x85] sm:$0x7f] %vm103, %v804
    %809 = vrot.lane.b32.xlu0 %v789, 24
    %v810 = vpop.permute.xlu0 %809
    %811 = vrot.lane.b32.xlu0 %v790, 24
    %v812 = vpop.permute.xlu0 %811
    %815 = vst.msk [vmem:[#allocation2 + $0x7c] sm:$0xfc] %vm111, %v810
    %816 = vst.msk [vmem:[#allocation2 + $0x84] sm:$0xff] %vm113, %v812
    %v817 = vld [vmem:[%s0 + $0xa0] sm:$0xff]
    %v818 = vld [vmem:[%s0 + $0xa8] sm:$0xff]
    %819 = vst.msk [vmem:[#allocation2 + $0x8c] sm:$0xff] %vm21, %v817
    %820 = vst.msk [vmem:[#allocation2 + $0x94] sm:$0x3f] %vm23, %v818
    %823 = vrot.lane.b32.xlu0 %v817, 3
    %v824 = vpop.permute.xlu0 %823
    %825 = vrot.lane.b32.xlu0 %v818, 3
    %v826 = vpop.permute.xlu0 %825
    %829 = vst.msk [vmem:[#allocation2 + $0x8b] sm:$0xfe] %vm33, %v824
    %830 = vst.msk [vmem:[#allocation2 + $0x93] sm:$0x7f] %vm35, %v826
    %831 = vrot.lane.b32.xlu0 %v817, 6
    %v832 = vpop.permute.xlu0 %831
    %833 = vrot.lane.b32.xlu0 %v818, 6
    %v834 = vpop.permute.xlu0 %833
    %837 = vst.msk [vmem:[#allocation2 + $0x8a] sm:$0xfc] %vm43, %v832
    %838 = vst.msk [vmem:[#allocation2 + $0x92] sm:$0xff] %vm45, %v834
    %v839 = vld [vmem:[%s0 + $0xb0] sm:$0xff]
    %v840 = vld [vmem:[%s0 + $0xb8] sm:$0xff]
    %843 = vrot.lane.b32.xlu0 %v839, 9
    %v844 = vpop.permute.xlu0 %843
    %845 = vrot.lane.b32.xlu0 %v840, 9
    %v846 = vpop.permute.xlu0 %845
    %849 = vst.msk [vmem:[#allocation2 + $0x8c] sm:$0xff] %vm57, %v844
    %850 = vst.msk [vmem:[#allocation2 + $0x94] sm:$0x3f] %vm59, %v846
    %851 = vrot.lane.b32.xlu0 %v839, 12
    %v852 = vpop.permute.xlu0 %851
    %853 = vrot.lane.b32.xlu0 %v840, 12
    %v854 = vpop.permute.xlu0 %853
    %857 = vst.msk [vmem:[#allocation2 + $0x8b] sm:$0xfe] %vm67, %v852
    %858 = vst.msk [vmem:[#allocation2 + $0x93] sm:$0x7f] %vm69, %v854
    %859 = vrot.lane.b32.xlu0 %v839, 15
    %v860 = vpop.permute.xlu0 %859
    %861 = vrot.lane.b32.xlu0 %v840, 15
    %v862 = vpop.permute.xlu0 %861
    %865 = vst.msk [vmem:[#allocation2 + $0x8a] sm:$0xfc] %vm77, %v860
    %866 = vst.msk [vmem:[#allocation2 + $0x92] sm:$0xff] %vm79, %v862
    %v867 = vld [vmem:[%s0 + $0xc0] sm:$0xff]
    %v868 = vld [vmem:[%s0 + $0xc8] sm:$0xff]
    %871 = vrot.lane.b32.xlu0 %v867, 18
    %v872 = vpop.permute.xlu0 %871
    %873 = vrot.lane.b32.xlu0 %v868, 18
    %v874 = vpop.permute.xlu0 %873
    %877 = vst.msk [vmem:[#allocation2 + $0x8c] sm:$0xff] %vm91, %v872
    %878 = vst.msk [vmem:[#allocation2 + $0x94] sm:$0x3f] %vm93, %v874
    %879 = vrot.lane.b32.xlu0 %v867, 21
    %v880 = vpop.permute.xlu0 %879
    %881 = vrot.lane.b32.xlu0 %v868, 21
    %v882 = vpop.permute.xlu0 %881
    %885 = vst.msk [vmem:[#allocation2 + $0x8b] sm:$0xfe] %vm101, %v880
    %886 = vst.msk [vmem:[#allocation2 + $0x93] sm:$0x7f] %vm103, %v882
    %887 = vrot.lane.b32.xlu0 %v867, 24
    %v888 = vpop.permute.xlu0 %887
    %889 = vrot.lane.b32.xlu0 %v868, 24
    %v890 = vpop.permute.xlu0 %889
    %893 = vst.msk [vmem:[#allocation2 + $0x8a] sm:$0xfc] %vm111, %v888
    %894 = vst.msk [vmem:[#allocation2 + $0x92] sm:$0xff] %vm113, %v890
    %v895 = vld [vmem:[%s0 + $0xb0] sm:$0xff]
    %v896 = vld [vmem:[%s0 + $0xb8] sm:$0xff]
    %897 = vst.msk [vmem:[#allocation2 + $0x9a] sm:$0xff] %vm21, %v895
    %898 = vst.msk [vmem:[#allocation2 + $0xa2] sm:$0x3f] %vm23, %v896
    %901 = vrot.lane.b32.xlu0 %v895, 3
    %v902 = vpop.permute.xlu0 %901
    %903 = vrot.lane.b32.xlu0 %v896, 3
    %v904 = vpop.permute.xlu0 %903
    %907 = vst.msk [vmem:[#allocation2 + $0x99] sm:$0xfe] %vm33, %v902
    %908 = vst.msk [vmem:[#allocation2 + $0xa1] sm:$0x7f] %vm35, %v904
    %909 = vrot.lane.b32.xlu0 %v895, 6
    %v910 = vpop.permute.xlu0 %909
    %911 = vrot.lane.b32.xlu0 %v896, 6
    %v912 = vpop.permute.xlu0 %911
    %915 = vst.msk [vmem:[#allocation2 + $0x98] sm:$0xfc] %vm43, %v910
    %916 = vst.msk [vmem:[#allocation2 + $0xa0] sm:$0xff] %vm45, %v912
    %v917 = vld [vmem:[%s0 + $0xc0] sm:$0xff]
    %v918 = vld [vmem:[%s0 + $0xc8] sm:$0xff]
    %921 = vrot.lane.b32.xlu0 %v917, 9
    %v922 = vpop.permute.xlu0 %921
    %923 = vrot.lane.b32.xlu0 %v918, 9
    %v924 = vpop.permute.xlu0 %923
    %927 = vst.msk [vmem:[#allocation2 + $0x9a] sm:$0xff] %vm57, %v922
    %928 = vst.msk [vmem:[#allocation2 + $0xa2] sm:$0x3f] %vm59, %v924
    %929 = vrot.lane.b32.xlu0 %v917, 12
    %v930 = vpop.permute.xlu0 %929
    %931 = vrot.lane.b32.xlu0 %v918, 12
    %v932 = vpop.permute.xlu0 %931
    %935 = vst.msk [vmem:[#allocation2 + $0x99] sm:$0xfe] %vm67, %v930
    %936 = vst.msk [vmem:[#allocation2 + $0xa1] sm:$0x7f] %vm69, %v932
    %937 = vrot.lane.b32.xlu0 %v917, 15
    %v938 = vpop.permute.xlu0 %937
    %939 = vrot.lane.b32.xlu0 %v918, 15
    %v940 = vpop.permute.xlu0 %939
    %943 = vst.msk [vmem:[#allocation2 + $0x98] sm:$0xfc] %vm77, %v938
    %944 = vst.msk [vmem:[#allocation2 + $0xa0] sm:$0xff] %vm79, %v940
    %v945 = vld [vmem:[%s0 + $0xd0] sm:$0xff]
    %v946 = vld [vmem:[%s0 + $0xd8] sm:$0xff]
    %949 = vrot.lane.b32.xlu0 %v945, 18
    %v950 = vpop.permute.xlu0 %949
    %951 = vrot.lane.b32.xlu0 %v946, 18
    %v952 = vpop.permute.xlu0 %951
    %955 = vst.msk [vmem:[#allocation2 + $0x9a] sm:$0xff] %vm91, %v950
    %956 = vst.msk [vmem:[#allocation2 + $0xa2] sm:$0x3f] %vm93, %v952
    %957 = vrot.lane.b32.xlu0 %v945, 21
    %v958 = vpop.permute.xlu0 %957
    %959 = vrot.lane.b32.xlu0 %v946, 21
    %v960 = vpop.permute.xlu0 %959
    %963 = vst.msk [vmem:[#allocation2 + $0x99] sm:$0xfe] %vm101, %v958
    %964 = vst.msk [vmem:[#allocation2 + $0xa1] sm:$0x7f] %vm103, %v960
    %965 = vrot.lane.b32.xlu0 %v945, 24
    %v966 = vpop.permute.xlu0 %965
    %967 = vrot.lane.b32.xlu0 %v946, 24
    %v968 = vpop.permute.xlu0 %967
    %971 = vst.msk [vmem:[#allocation2 + $0x98] sm:$0xfc] %vm111, %v966
    %972 = vst.msk [vmem:[#allocation2 + $0xa0] sm:$0xff] %vm113, %v968
    %v973 = vld [vmem:[%s0 + $0xc0] sm:$0xff]
    %v974 = vld [vmem:[%s0 + $0xc8] sm:$0xff]
    %975 = vst.msk [vmem:[#allocation2 + $0xa8] sm:$0xff] %vm21, %v973
    %976 = vst.msk [vmem:[#allocation2 + $0xb0] sm:$0x3f] %vm23, %v974
    %979 = vrot.lane.b32.xlu0 %v973, 3
    %v980 = vpop.permute.xlu0 %979
    %981 = vrot.lane.b32.xlu0 %v974, 3
    %v982 = vpop.permute.xlu0 %981
    %985 = vst.msk [vmem:[#allocation2 + $0xa7] sm:$0xfe] %vm33, %v980
    %986 = vst.msk [vmem:[#allocation2 + $0xaf] sm:$0x7f] %vm35, %v982
    %987 = vrot.lane.b32.xlu0 %v973, 6
    %v988 = vpop.permute.xlu0 %987
    %989 = vrot.lane.b32.xlu0 %v974, 6
    %v990 = vpop.permute.xlu0 %989
    %993 = vst.msk [vmem:[#allocation2 + $0xa6] sm:$0xfc] %vm43, %v988
    %994 = vst.msk [vmem:[#allocation2 + $0xae] sm:$0xff] %vm45, %v990
    %v995 = vld [vmem:[%s0 + $0xd0] sm:$0xff]
    %v996 = vld [vmem:[%s0 + $0xd8] sm:$0xff]
    %999 = vrot.lane.b32.xlu0 %v995, 9
    %v1000 = vpop.permute.xlu0 %999
    %1001 = vrot.lane.b32.xlu0 %v996, 9
    %v1002 = vpop.permute.xlu0 %1001
    %1005 = vst.msk [vmem:[#allocation2 + $0xa8] sm:$0xff] %vm57, %v1000
    %1006 = vst.msk [vmem:[#allocation2 + $0xb0] sm:$0x3f] %vm59, %v1002
    %1007 = vrot.lane.b32.xlu0 %v995, 12
    %v1008 = vpop.permute.xlu0 %1007
    %1009 = vrot.lane.b32.xlu0 %v996, 12
    %v1010 = vpop.permute.xlu0 %1009
    %1013 = vst.msk [vmem:[#allocation2 + $0xa7] sm:$0xfe] %vm67, %v1008
    %1014 = vst.msk [vmem:[#allocation2 + $0xaf] sm:$0x7f] %vm69, %v1010
    %1015 = vrot.lane.b32.xlu0 %v995, 15
    %v1016 = vpop.permute.xlu0 %1015
    %1017 = vrot.lane.b32.xlu0 %v996, 15
    %v1018 = vpop.permute.xlu0 %1017
    %1021 = vst.msk [vmem:[#allocation2 + $0xa6] sm:$0xfc] %vm77, %v1016
    %1022 = vst.msk [vmem:[#allocation2 + $0xae] sm:$0xff] %vm79, %v1018
    %v1023 = vld [vmem:[%s0 + $0xe0] sm:$0xff]
    %v1024 = vld [vmem:[%s0 + $0xe8] sm:$0xff]
    %1027 = vrot.lane.b32.xlu0 %v1023, 18
    %v1028 = vpop.permute.xlu0 %1027
    %1029 = vrot.lane.b32.xlu0 %v1024, 18
    %v1030 = vpop.permute.xlu0 %1029
    %1033 = vst.msk [vmem:[#allocation2 + $0xa8] sm:$0xff] %vm91, %v1028
    %1034 = vst.msk [vmem:[#allocation2 + $0xb0] sm:$0x3f] %vm93, %v1030
    %1035 = vrot.lane.b32.xlu0 %v1023, 21
    %v1036 = vpop.permute.xlu0 %1035
    %1037 = vrot.lane.b32.xlu0 %v1024, 21
    %v1038 = vpop.permute.xlu0 %1037
    %1041 = vst.msk [vmem:[#allocation2 + $0xa7] sm:$0xfe] %vm101, %v1036
    %1042 = vst.msk [vmem:[#allocation2 + $0xaf] sm:$0x7f] %vm103, %v1038
    %1043 = vrot.lane.b32.xlu0 %v1023, 24
    %v1044 = vpop.permute.xlu0 %1043
    %1045 = vrot.lane.b32.xlu0 %v1024, 24
    %v1046 = vpop.permute.xlu0 %1045
    %1049 = vst.msk [vmem:[#allocation2 + $0xa6] sm:$0xfc] %vm111, %v1044
    %1050 = vst.msk [vmem:[#allocation2 + $0xae] sm:$0xff] %vm113, %v1046
    %v1051 = vld [vmem:[%s0 + $0xd0] sm:$0xff]
    %v1052 = vld [vmem:[%s0 + $0xd8] sm:$0xff]
    %1053 = vst.msk [vmem:[#allocation2 + $0xb6] sm:$0xff] %vm21, %v1051
    %1054 = vst.msk [vmem:[#allocation2 + $0xbe] sm:$0x3f] %vm23, %v1052
    %1057 = vrot.lane.b32.xlu0 %v1051, 3
    %v1058 = vpop.permute.xlu0 %1057
    %1059 = vrot.lane.b32.xlu0 %v1052, 3
    %v1060 = vpop.permute.xlu0 %1059
    %1063 = vst.msk [vmem:[#allocation2 + $0xb5] sm:$0xfe] %vm33, %v1058
    %1064 = vst.msk [vmem:[#allocation2 + $0xbd] sm:$0x7f] %vm35, %v1060
    %1065 = vrot.lane.b32.xlu0 %v1051, 6
    %v1066 = vpop.permute.xlu0 %1065
    %1067 = vrot.lane.b32.xlu0 %v1052, 6
    %v1068 = vpop.permute.xlu0 %1067
    %1071 = vst.msk [vmem:[#allocation2 + $0xb4] sm:$0xfc] %vm43, %v1066
    %1072 = vst.msk [vmem:[#allocation2 + $0xbc] sm:$0xff] %vm45, %v1068
    %v1073 = vld [vmem:[%s0 + $0xe0] sm:$0xff]
    %v1074 = vld [vmem:[%s0 + $0xe8] sm:$0xff]
    %1077 = vrot.lane.b32.xlu0 %v1073, 9
    %v1078 = vpop.permute.xlu0 %1077
    %1079 = vrot.lane.b32.xlu0 %v1074, 9
    %v1080 = vpop.permute.xlu0 %1079
    %1083 = vst.msk [vmem:[#allocation2 + $0xb6] sm:$0xff] %vm57, %v1078
    %1084 = vst.msk [vmem:[#allocation2 + $0xbe] sm:$0x3f] %vm59, %v1080
    %1085 = vrot.lane.b32.xlu0 %v1073, 12
    %v1086 = vpop.permute.xlu0 %1085
    %1087 = vrot.lane.b32.xlu0 %v1074, 12
    %v1088 = vpop.permute.xlu0 %1087
    %1091 = vst.msk [vmem:[#allocation2 + $0xb5] sm:$0xfe] %vm67, %v1086
    %1092 = vst.msk [vmem:[#allocation2 + $0xbd] sm:$0x7f] %vm69, %v1088
    %1093 = vrot.lane.b32.xlu0 %v1073, 15
    %v1094 = vpop.permute.xlu0 %1093
    %1095 = vrot.lane.b32.xlu0 %v1074, 15
    %v1096 = vpop.permute.xlu0 %1095
    %1099 = vst.msk [vmem:[#allocation2 + $0xb4] sm:$0xfc] %vm77, %v1094
    %1100 = vst.msk [vmem:[#allocation2 + $0xbc] sm:$0xff] %vm79, %v1096
    %v1101 = vld [vmem:[%s0 + $0xf0] sm:$0xff]
    %v1102 = vld [vmem:[%s0 + $0xf8] sm:$0xff]
    %1105 = vrot.lane.b32.xlu0 %v1101, 18
    %v1106 = vpop.permute.xlu0 %1105
    %1107 = vrot.lane.b32.xlu0 %v1102, 18
    %v1108 = vpop.permute.xlu0 %1107
    %1111 = vst.msk [vmem:[#allocation2 + $0xb6] sm:$0xff] %vm91, %v1106
    %1112 = vst.msk [vmem:[#allocation2 + $0xbe] sm:$0x3f] %vm93, %v1108
    %1113 = vrot.lane.b32.xlu0 %v1101, 21
    %v1114 = vpop.permute.xlu0 %1113
    %1115 = vrot.lane.b32.xlu0 %v1102, 21
    %v1116 = vpop.permute.xlu0 %1115
    %1119 = vst.msk [vmem:[#allocation2 + $0xb5] sm:$0xfe] %vm101, %v1114
    %1120 = vst.msk [vmem:[#allocation2 + $0xbd] sm:$0x7f] %vm103, %v1116
    %1121 = vrot.lane.b32.xlu0 %v1101, 24
    %v1122 = vpop.permute.xlu0 %1121
    %1123 = vrot.lane.b32.xlu0 %v1102, 24
    %v1124 = vpop.permute.xlu0 %1123
    %1127 = vst.msk [vmem:[#allocation2 + $0xb4] sm:$0xfc] %vm111, %v1122
    %1128 = vst.msk [vmem:[#allocation2 + $0xbc] sm:$0xff] %vm113, %v1124
    %v1129 = vld [vmem:[%s0 + $0x100] sm:$0xff]
    %v1130 = vld [vmem:[%s0 + $0x108] sm:$0xff]
    %1131 = vst.msk [vmem:[#allocation2 + $0xc4] sm:$0xff] %vm21, %v1129
    %1132 = vst.msk [vmem:[#allocation2 + $0xcc] sm:$0x3f] %vm23, %v1130
    %1135 = vrot.lane.b32.xlu0 %v1129, 3
    %v1136 = vpop.permute.xlu0 %1135
    %1137 = vrot.lane.b32.xlu0 %v1130, 3
    %v1138 = vpop.permute.xlu0 %1137
    %1141 = vst.msk [vmem:[#allocation2 + $0xc3] sm:$0xfe] %vm33, %v1136
    %1142 = vst.msk [vmem:[#allocation2 + $0xcb] sm:$0x7f] %vm35, %v1138
    %1143 = vrot.lane.b32.xlu0 %v1129, 6
    %v1144 = vpop.permute.xlu0 %1143
    %1145 = vrot.lane.b32.xlu0 %v1130, 6
    %v1146 = vpop.permute.xlu0 %1145
    %1149 = vst.msk [vmem:[#allocation2 + $0xc2] sm:$0xfc] %vm43, %v1144
    %1150 = vst.msk [vmem:[#allocation2 + $0xca] sm:$0xff] %vm45, %v1146
    %v1151 = vld [vmem:[%s0 + $0x110] sm:$0xff]
    %v1152 = vld [vmem:[%s0 + $0x118] sm:$0xff]
    %1155 = vrot.lane.b32.xlu0 %v1151, 9
    %v1156 = vpop.permute.xlu0 %1155
    %1157 = vrot.lane.b32.xlu0 %v1152, 9
    %v1158 = vpop.permute.xlu0 %1157
    %1161 = vst.msk [vmem:[#allocation2 + $0xc4] sm:$0xff] %vm57, %v1156
    %1162 = vst.msk [vmem:[#allocation2 + $0xcc] sm:$0x3f] %vm59, %v1158
    %1163 = vrot.lane.b32.xlu0 %v1151, 12
    %v1164 = vpop.permute.xlu0 %1163
    %1165 = vrot.lane.b32.xlu0 %v1152, 12
    %v1166 = vpop.permute.xlu0 %1165
    %1169 = vst.msk [vmem:[#allocation2 + $0xc3] sm:$0xfe] %vm67, %v1164
    %1170 = vst.msk [vmem:[#allocation2 + $0xcb] sm:$0x7f] %vm69, %v1166
    %1171 = vrot.lane.b32.xlu0 %v1151, 15
    %v1172 = vpop.permute.xlu0 %1171
    %1173 = vrot.lane.b32.xlu0 %v1152, 15
    %v1174 = vpop.permute.xlu0 %1173
    %1177 = vst.msk [vmem:[#allocation2 + $0xc2] sm:$0xfc] %vm77, %v1172
    %1178 = vst.msk [vmem:[#allocation2 + $0xca] sm:$0xff] %vm79, %v1174
    %v1179 = vld [vmem:[%s0 + $0x120] sm:$0xff]
    %v1180 = vld [vmem:[%s0 + $0x128] sm:$0xff]
    %1183 = vrot.lane.b32.xlu0 %v1179, 18
    %v1184 = vpop.permute.xlu0 %1183
    %1185 = vrot.lane.b32.xlu0 %v1180, 18
    %v1186 = vpop.permute.xlu0 %1185
    %1189 = vst.msk [vmem:[#allocation2 + $0xc4] sm:$0xff] %vm91, %v1184
    %1190 = vst.msk [vmem:[#allocation2 + $0xcc] sm:$0x3f] %vm93, %v1186
    %1191 = vrot.lane.b32.xlu0 %v1179, 21
    %v1192 = vpop.permute.xlu0 %1191
    %1193 = vrot.lane.b32.xlu0 %v1180, 21
    %v1194 = vpop.permute.xlu0 %1193
    %1197 = vst.msk [vmem:[#allocation2 + $0xc3] sm:$0xfe] %vm101, %v1192
    %1198 = vst.msk [vmem:[#allocation2 + $0xcb] sm:$0x7f] %vm103, %v1194
    %1199 = vrot.lane.b32.xlu0 %v1179, 24
    %v1200 = vpop.permute.xlu0 %1199
    %1201 = vrot.lane.b32.xlu0 %v1180, 24
    %v1202 = vpop.permute.xlu0 %1201
    %1205 = vst.msk [vmem:[#allocation2 + $0xc2] sm:$0xfc] %vm111, %v1200
    %1206 = vst.msk [vmem:[#allocation2 + $0xca] sm:$0xff] %vm113, %v1202
    %v1207 = vld [vmem:[%s0 + $0x110] sm:$0xff]
    %v1208 = vld [vmem:[%s0 + $0x118] sm:$0xff]
    %1209 = vst.msk [vmem:[#allocation2 + $0xd2] sm:$0xff] %vm21, %v1207
    %1210 = vst.msk [vmem:[#allocation2 + $0xda] sm:$0x3f] %vm23, %v1208
    %1213 = vrot.lane.b32.xlu0 %v1207, 3
    %v1214 = vpop.permute.xlu0 %1213
    %1215 = vrot.lane.b32.xlu0 %v1208, 3
    %v1216 = vpop.permute.xlu0 %1215
    %1219 = vst.msk [vmem:[#allocation2 + $0xd1] sm:$0xfe] %vm33, %v1214
    %1220 = vst.msk [vmem:[#allocation2 + $0xd9] sm:$0x7f] %vm35, %v1216
    %1221 = vrot.lane.b32.xlu0 %v1207, 6
    %v1222 = vpop.permute.xlu0 %1221
    %1223 = vrot.lane.b32.xlu0 %v1208, 6
    %v1224 = vpop.permute.xlu0 %1223
    %1227 = vst.msk [vmem:[#allocation2 + $0xd0] sm:$0xfc] %vm43, %v1222
    %1228 = vst.msk [vmem:[#allocation2 + $0xd8] sm:$0xff] %vm45, %v1224
    %v1229 = vld [vmem:[%s0 + $0x120] sm:$0xff]
    %v1230 = vld [vmem:[%s0 + $0x128] sm:$0xff]
    %1233 = vrot.lane.b32.xlu0 %v1229, 9
    %v1234 = vpop.permute.xlu0 %1233
    %1235 = vrot.lane.b32.xlu0 %v1230, 9
    %v1236 = vpop.permute.xlu0 %1235
    %1239 = vst.msk [vmem:[#allocation2 + $0xd2] sm:$0xff] %vm57, %v1234
    %1240 = vst.msk [vmem:[#allocation2 + $0xda] sm:$0x3f] %vm59, %v1236
    %1241 = vrot.lane.b32.xlu0 %v1229, 12
    %v1242 = vpop.permute.xlu0 %1241
    %1243 = vrot.lane.b32.xlu0 %v1230, 12
    %v1244 = vpop.permute.xlu0 %1243
    %1247 = vst.msk [vmem:[#allocation2 + $0xd1] sm:$0xfe] %vm67, %v1242
    %1248 = vst.msk [vmem:[#allocation2 + $0xd9] sm:$0x7f] %vm69, %v1244
    %1249 = vrot.lane.b32.xlu0 %v1229, 15
    %v1250 = vpop.permute.xlu0 %1249
    %1251 = vrot.lane.b32.xlu0 %v1230, 15
    %v1252 = vpop.permute.xlu0 %1251
    %1255 = vst.msk [vmem:[#allocation2 + $0xd0] sm:$0xfc] %vm77, %v1250
    %1256 = vst.msk [vmem:[#allocation2 + $0xd8] sm:$0xff] %vm79, %v1252
    %v1257 = vld [vmem:[%s0 + $0x130] sm:$0xff]
    %v1258 = vld [vmem:[%s0 + $0x138] sm:$0xff]
    %1261 = vrot.lane.b32.xlu0 %v1257, 18
    %v1262 = vpop.permute.xlu0 %1261
    %1263 = vrot.lane.b32.xlu0 %v1258, 18
    %v1264 = vpop.permute.xlu0 %1263
    %1267 = vst.msk [vmem:[#allocation2 + $0xd2] sm:$0xff] %vm91, %v1262
    %1268 = vst.msk [vmem:[#allocation2 + $0xda] sm:$0x3f] %vm93, %v1264
    %1269 = vrot.lane.b32.xlu0 %v1257, 21
    %v1270 = vpop.permute.xlu0 %1269
    %1271 = vrot.lane.b32.xlu0 %v1258, 21
    %v1272 = vpop.permute.xlu0 %1271
    %1275 = vst.msk [vmem:[#allocation2 + $0xd1] sm:$0xfe] %vm101, %v1270
    %1276 = vst.msk [vmem:[#allocation2 + $0xd9] sm:$0x7f] %vm103, %v1272
    %1277 = vrot.lane.b32.xlu0 %v1257, 24
    %v1278 = vpop.permute.xlu0 %1277
    %1279 = vrot.lane.b32.xlu0 %v1258, 24
    %v1280 = vpop.permute.xlu0 %1279
    %1283 = vst.msk [vmem:[#allocation2 + $0xd0] sm:$0xfc] %vm111, %v1278
    %1284 = vst.msk [vmem:[#allocation2 + $0xd8] sm:$0xff] %vm113, %v1280
    %v1285 = vld [vmem:[%s0 + $0x120] sm:$0xff]
    %v1286 = vld [vmem:[%s0 + $0x128] sm:$0xff]
    %1287 = vst.msk [vmem:[#allocation2 + $0xe0] sm:$0xff] %vm21, %v1285
    %1288 = vst.msk [vmem:[#allocation2 + $0xe8] sm:$0x3f] %vm23, %v1286
    %1291 = vrot.lane.b32.xlu0 %v1285, 3
    %v1292 = vpop.permute.xlu0 %1291
    %1293 = vrot.lane.b32.xlu0 %v1286, 3
    %v1294 = vpop.permute.xlu0 %1293
    %1297 = vst.msk [vmem:[#allocation2 + $0xdf] sm:$0xfe] %vm33, %v1292
    %1298 = vst.msk [vmem:[#allocation2 + $0xe7] sm:$0x7f] %vm35, %v1294
    %1299 = vrot.lane.b32.xlu0 %v1285, 6
    %v1300 = vpop.permute.xlu0 %1299
    %1301 = vrot.lane.b32.xlu0 %v1286, 6
    %v1302 = vpop.permute.xlu0 %1301
    %1305 = vst.msk [vmem:[#allocation2 + $0xde] sm:$0xfc] %vm43, %v1300
    %1306 = vst.msk [vmem:[#allocation2 + $0xe6] sm:$0xff] %vm45, %v1302
    %v1307 = vld [vmem:[%s0 + $0x130] sm:$0xff]
    %v1308 = vld [vmem:[%s0 + $0x138] sm:$0xff]
    %1311 = vrot.lane.b32.xlu0 %v1307, 9
    %v1312 = vpop.permute.xlu0 %1311
    %1313 = vrot.lane.b32.xlu0 %v1308, 9
    %v1314 = vpop.permute.xlu0 %1313
    %1317 = vst.msk [vmem:[#allocation2 + $0xe0] sm:$0xff] %vm57, %v1312
    %1318 = vst.msk [vmem:[#allocation2 + $0xe8] sm:$0x3f] %vm59, %v1314
    %1319 = vrot.lane.b32.xlu0 %v1307, 12
    %v1320 = vpop.permute.xlu0 %1319
    %1321 = vrot.lane.b32.xlu0 %v1308, 12
    %v1322 = vpop.permute.xlu0 %1321
    %1325 = vst.msk [vmem:[#allocation2 + $0xdf] sm:$0xfe] %vm67, %v1320
    %1326 = vst.msk [vmem:[#allocation2 + $0xe7] sm:$0x7f] %vm69, %v1322
    %1327 = vrot.lane.b32.xlu0 %v1307, 15
    %v1328 = vpop.permute.xlu0 %1327
    %1329 = vrot.lane.b32.xlu0 %v1308, 15
    %v1330 = vpop.permute.xlu0 %1329
    %1333 = vst.msk [vmem:[#allocation2 + $0xde] sm:$0xfc] %vm77, %v1328
    %1334 = vst.msk [vmem:[#allocation2 + $0xe6] sm:$0xff] %vm79, %v1330
    %v1335 = vld [vmem:[%s0 + $0x140] sm:$0xff]
    %v1336 = vld [vmem:[%s0 + $0x148] sm:$0xff]
    %1339 = vrot.lane.b32.xlu0 %v1335, 18
    %v1340 = vpop.permute.xlu0 %1339
    %1341 = vrot.lane.b32.xlu0 %v1336, 18
    %v1342 = vpop.permute.xlu0 %1341
    %1345 = vst.msk [vmem:[#allocation2 + $0xe0] sm:$0xff] %vm91, %v1340
    %1346 = vst.msk [vmem:[#allocation2 + $0xe8] sm:$0x3f] %vm93, %v1342
    %1347 = vrot.lane.b32.xlu0 %v1335, 21
    %v1348 = vpop.permute.xlu0 %1347
    %1349 = vrot.lane.b32.xlu0 %v1336, 21
    %v1350 = vpop.permute.xlu0 %1349
    %1353 = vst.msk [vmem:[#allocation2 + $0xdf] sm:$0xfe] %vm101, %v1348
    %1354 = vst.msk [vmem:[#allocation2 + $0xe7] sm:$0x7f] %vm103, %v1350
    %1355 = vrot.lane.b32.xlu0 %v1335, 24
    %v1356 = vpop.permute.xlu0 %1355
    %1357 = vrot.lane.b32.xlu0 %v1336, 24
    %v1358 = vpop.permute.xlu0 %1357
    %1361 = vst.msk [vmem:[#allocation2 + $0xde] sm:$0xfc] %vm111, %v1356
    %1362 = vst.msk [vmem:[#allocation2 + $0xe6] sm:$0xff] %vm113, %v1358
    %v1363 = vld [vmem:[%s0 + $0x130] sm:$0xff]
    %v1364 = vld [vmem:[%s0 + $0x138] sm:$0xff]
    %1365 = vst.msk [vmem:[#allocation2 + $0xee] sm:$0xff] %vm21, %v1363
    %1366 = vst.msk [vmem:[#allocation2 + $0xf6] sm:$0x3f] %vm23, %v1364
    %1369 = vrot.lane.b32.xlu0 %v1363, 3
    %v1370 = vpop.permute.xlu0 %1369
    %1371 = vrot.lane.b32.xlu0 %v1364, 3
    %v1372 = vpop.permute.xlu0 %1371
    %1375 = vst.msk [vmem:[#allocation2 + $0xed] sm:$0xfe] %vm33, %v1370
    %1376 = vst.msk [vmem:[#allocation2 + $0xf5] sm:$0x7f] %vm35, %v1372
    %1377 = vrot.lane.b32.xlu0 %v1363, 6
    %v1378 = vpop.permute.xlu0 %1377
    %1379 = vrot.lane.b32.xlu0 %v1364, 6
    %v1380 = vpop.permute.xlu0 %1379
    %1383 = vst.msk [vmem:[#allocation2 + $0xec] sm:$0xfc] %vm43, %v1378
    %1384 = vst.msk [vmem:[#allocation2 + $0xf4] sm:$0xff] %vm45, %v1380
    %v1385 = vld [vmem:[%s0 + $0x140] sm:$0xff]
    %v1386 = vld [vmem:[%s0 + $0x148] sm:$0xff]
    %1389 = vrot.lane.b32.xlu0 %v1385, 9
    %v1390 = vpop.permute.xlu0 %1389
    %1391 = vrot.lane.b32.xlu0 %v1386, 9
    %v1392 = vpop.permute.xlu0 %1391
    %1395 = vst.msk [vmem:[#allocation2 + $0xee] sm:$0xff] %vm57, %v1390
    %1396 = vst.msk [vmem:[#allocation2 + $0xf6] sm:$0x3f] %vm59, %v1392
    %1397 = vrot.lane.b32.xlu0 %v1385, 12
    %v1398 = vpop.permute.xlu0 %1397
    %1399 = vrot.lane.b32.xlu0 %v1386, 12
    %v1400 = vpop.permute.xlu0 %1399
    %1403 = vst.msk [vmem:[#allocation2 + $0xed] sm:$0xfe] %vm67, %v1398
    %1404 = vst.msk [vmem:[#allocation2 + $0xf5] sm:$0x7f] %vm69, %v1400
    %1405 = vrot.lane.b32.xlu0 %v1385, 15
    %v1406 = vpop.permute.xlu0 %1405
    %1407 = vrot.lane.b32.xlu0 %v1386, 15
    %v1408 = vpop.permute.xlu0 %1407
    %1411 = vst.msk [vmem:[#allocation2 + $0xec] sm:$0xfc] %vm77, %v1406
    %1412 = vst.msk [vmem:[#allocation2 + $0xf4] sm:$0xff] %vm79, %v1408
    %v1413 = vld [vmem:[%s0 + $0x150] sm:$0xff]
    %v1414 = vld [vmem:[%s0 + $0x158] sm:$0xff]
    %1417 = vrot.lane.b32.xlu0 %v1413, 18
    %v1418 = vpop.permute.xlu0 %1417
    %1419 = vrot.lane.b32.xlu0 %v1414, 18
    %v1420 = vpop.permute.xlu0 %1419
    %1423 = vst.msk [vmem:[#allocation2 + $0xee] sm:$0xff] %vm91, %v1418
    %1424 = vst.msk [vmem:[#allocation2 + $0xf6] sm:$0x3f] %vm93, %v1420
    %1425 = vrot.lane.b32.xlu0 %v1413, 21
    %v1426 = vpop.permute.xlu0 %1425
    %1427 = vrot.lane.b32.xlu0 %v1414, 21
    %v1428 = vpop.permute.xlu0 %1427
    %1431 = vst.msk [vmem:[#allocation2 + $0xed] sm:$0xfe] %vm101, %v1426
    %1432 = vst.msk [vmem:[#allocation2 + $0xf5] sm:$0x7f] %vm103, %v1428
    %1433 = vrot.lane.b32.xlu0 %v1413, 24
    %v1434 = vpop.permute.xlu0 %1433
    %1435 = vrot.lane.b32.xlu0 %v1414, 24
    %v1436 = vpop.permute.xlu0 %1435
    %1439 = vst.msk [vmem:[#allocation2 + $0xec] sm:$0xfc] %vm111, %v1434
    %1440 = vst.msk [vmem:[#allocation2 + $0xf4] sm:$0xff] %vm113, %v1436
    %v1441 = vld [vmem:[%s0 + $0x140] sm:$0xff]
    %v1442 = vld [vmem:[%s0 + $0x148] sm:$0xff]
    %1443 = vst.msk [vmem:[#allocation2 + $0xfc] sm:$0xff] %vm21, %v1441
    %1444 = vst.msk [vmem:[#allocation2 + $0x104] sm:$0x3f] %vm23, %v1442
    %1447 = vrot.lane.b32.xlu0 %v1441, 3
    %v1448 = vpop.permute.xlu0 %1447
    %1449 = vrot.lane.b32.xlu0 %v1442, 3
    %v1450 = vpop.permute.xlu0 %1449
    %1453 = vst.msk [vmem:[#allocation2 + $0xfb] sm:$0xfe] %vm33, %v1448
    %1454 = vst.msk [vmem:[#allocation2 + $0x103] sm:$0x7f] %vm35, %v1450
    %1455 = vrot.lane.b32.xlu0 %v1441, 6
    %v1456 = vpop.permute.xlu0 %1455
    %1457 = vrot.lane.b32.xlu0 %v1442, 6
    %v1458 = vpop.permute.xlu0 %1457
    %1461 = vst.msk [vmem:[#allocation2 + $0xfa] sm:$0xfc] %vm43, %v1456
    %1462 = vst.msk [vmem:[#allocation2 + $0x102] sm:$0xff] %vm45, %v1458
    %v1463 = vld [vmem:[%s0 + $0x150] sm:$0xff]
    %v1464 = vld [vmem:[%s0 + $0x158] sm:$0xff]
    %1467 = vrot.lane.b32.xlu0 %v1463, 9
    %v1468 = vpop.permute.xlu0 %1467
    %1469 = vrot.lane.b32.xlu0 %v1464, 9
    %v1470 = vpop.permute.xlu0 %1469
    %1473 = vst.msk [vmem:[#allocation2 + $0xfc] sm:$0xff] %vm57, %v1468
    %1474 = vst.msk [vmem:[#allocation2 + $0x104] sm:$0x3f] %vm59, %v1470
    %1475 = vrot.lane.b32.xlu0 %v1463, 12
    %v1476 = vpop.permute.xlu0 %1475
    %1477 = vrot.lane.b32.xlu0 %v1464, 12
    %v1478 = vpop.permute.xlu0 %1477
    %1481 = vst.msk [vmem:[#allocation2 + $0xfb] sm:$0xfe] %vm67, %v1476
    %1482 = vst.msk [vmem:[#allocation2 + $0x103] sm:$0x7f] %vm69, %v1478
    %1483 = vrot.lane.b32.xlu0 %v1463, 15
    %v1484 = vpop.permute.xlu0 %1483
    %1485 = vrot.lane.b32.xlu0 %v1464, 15
    %v1486 = vpop.permute.xlu0 %1485
    %1489 = vst.msk [vmem:[#allocation2 + $0xfa] sm:$0xfc] %vm77, %v1484
    %1490 = vst.msk [vmem:[#allocation2 + $0x102] sm:$0xff] %vm79, %v1486
    %v1491 = vld [vmem:[%s0 + $0x160] sm:$0xff]
    %v1492 = vld [vmem:[%s0 + $0x168] sm:$0xff]
    %1495 = vrot.lane.b32.xlu0 %v1491, 18
    %v1496 = vpop.permute.xlu0 %1495
    %1497 = vrot.lane.b32.xlu0 %v1492, 18
    %v1498 = vpop.permute.xlu0 %1497
    %1501 = vst.msk [vmem:[#allocation2 + $0xfc] sm:$0xff] %vm91, %v1496
    %1502 = vst.msk [vmem:[#allocation2 + $0x104] sm:$0x3f] %vm93, %v1498
    %1503 = vrot.lane.b32.xlu0 %v1491, 21
    %v1504 = vpop.permute.xlu0 %1503
    %1505 = vrot.lane.b32.xlu0 %v1492, 21
    %v1506 = vpop.permute.xlu0 %1505
    %1509 = vst.msk [vmem:[#allocation2 + $0xfb] sm:$0xfe] %vm101, %v1504
    %1510 = vst.msk [vmem:[#allocation2 + $0x103] sm:$0x7f] %vm103, %v1506
    %1511 = vrot.lane.b32.xlu0 %v1491, 24
    %v1512 = vpop.permute.xlu0 %1511
    %1513 = vrot.lane.b32.xlu0 %v1492, 24
    %v1514 = vpop.permute.xlu0 %1513
    %1517 = vst.msk [vmem:[#allocation2 + $0xfa] sm:$0xfc] %vm111, %v1512
    %1518 = vst.msk [vmem:[#allocation2 + $0x102] sm:$0xff] %vm113, %v1514
    %v1519 = vld [vmem:[%s0 + $0x150] sm:$0xff]
    %v1520 = vld [vmem:[%s0 + $0x158] sm:$0xff]
    %1521 = vst.msk [vmem:[#allocation2 + $0x10a] sm:$0xff] %vm21, %v1519
    %1522 = vst.msk [vmem:[#allocation2 + $0x112] sm:$0x3f] %vm23, %v1520
    %1525 = vrot.lane.b32.xlu0 %v1519, 3
    %v1526 = vpop.permute.xlu0 %1525
    %1527 = vrot.lane.b32.xlu0 %v1520, 3
    %v1528 = vpop.permute.xlu0 %1527
    %1531 = vst.msk [vmem:[#allocation2 + $0x109] sm:$0xfe] %vm33, %v1526
    %1532 = vst.msk [vmem:[#allocation2 + $0x111] sm:$0x7f] %vm35, %v1528
    %1533 = vrot.lane.b32.xlu0 %v1519, 6
    %v1534 = vpop.permute.xlu0 %1533
    %1535 = vrot.lane.b32.xlu0 %v1520, 6
    %v1536 = vpop.permute.xlu0 %1535
    %1539 = vst.msk [vmem:[#allocation2 + $0x108] sm:$0xfc] %vm43, %v1534
    %1540 = vst.msk [vmem:[#allocation2 + $0x110] sm:$0xff] %vm45, %v1536
    %v1541 = vld [vmem:[%s0 + $0x160] sm:$0xff]
    %v1542 = vld [vmem:[%s0 + $0x168] sm:$0xff]
    %1545 = vrot.lane.b32.xlu0 %v1541, 9
    %v1546 = vpop.permute.xlu0 %1545
    %1547 = vrot.lane.b32.xlu0 %v1542, 9
    %v1548 = vpop.permute.xlu0 %1547
    %1551 = vst.msk [vmem:[#allocation2 + $0x10a] sm:$0xff] %vm57, %v1546
    %1552 = vst.msk [vmem:[#allocation2 + $0x112] sm:$0x3f] %vm59, %v1548
    %1553 = vrot.lane.b32.xlu0 %v1541, 12
    %v1554 = vpop.permute.xlu0 %1553
    %1555 = vrot.lane.b32.xlu0 %v1542, 12
    %v1556 = vpop.permute.xlu0 %1555
    %1559 = vst.msk [vmem:[#allocation2 + $0x109] sm:$0xfe] %vm67, %v1554
    %1560 = vst.msk [vmem:[#allocation2 + $0x111] sm:$0x7f] %vm69, %v1556
    %1561 = vrot.lane.b32.xlu0 %v1541, 15
    %v1562 = vpop.permute.xlu0 %1561
    %1563 = vrot.lane.b32.xlu0 %v1542, 15
    %v1564 = vpop.permute.xlu0 %1563
    %1567 = vst.msk [vmem:[#allocation2 + $0x108] sm:$0xfc] %vm77, %v1562
    %1568 = vst.msk [vmem:[#allocation2 + $0x110] sm:$0xff] %vm79, %v1564
    %v1569 = vld [vmem:[%s0 + $0x170] sm:$0xff]
    %v1570 = vld [vmem:[%s0 + $0x178] sm:$0xff]
    %1573 = vrot.lane.b32.xlu0 %v1569, 18
    %v1574 = vpop.permute.xlu0 %1573
    %1575 = vrot.lane.b32.xlu0 %v1570, 18
    %v1576 = vpop.permute.xlu0 %1575
    %1579 = vst.msk [vmem:[#allocation2 + $0x10a] sm:$0xff] %vm91, %v1574
    %1580 = vst.msk [vmem:[#allocation2 + $0x112] sm:$0x3f] %vm93, %v1576
    %1581 = vrot.lane.b32.xlu0 %v1569, 21
    %v1582 = vpop.permute.xlu0 %1581
    %1583 = vrot.lane.b32.xlu0 %v1570, 21
    %v1584 = vpop.permute.xlu0 %1583
    %1587 = vst.msk [vmem:[#allocation2 + $0x109] sm:$0xfe] %vm101, %v1582
    %1588 = vst.msk [vmem:[#allocation2 + $0x111] sm:$0x7f] %vm103, %v1584
    %1589 = vrot.lane.b32.xlu0 %v1569, 24
    %v1590 = vpop.permute.xlu0 %1589
    %1591 = vrot.lane.b32.xlu0 %v1570, 24
    %v1592 = vpop.permute.xlu0 %1591
    %1595 = vst.msk [vmem:[#allocation2 + $0x108] sm:$0xfc] %vm111, %v1590
    %1596 = vst.msk [vmem:[#allocation2 + $0x110] sm:$0xff] %vm113, %v1592
    %v1597 = vld [vmem:[%s0 + $0x160] sm:$0xff]
    %v1598 = vld [vmem:[%s0 + $0x168] sm:$0xff]
    %1599 = vst.msk [vmem:[#allocation2 + $0x118] sm:$0xff] %vm21, %v1597
    %1600 = vst.msk [vmem:[#allocation2 + $0x120] sm:$0x3f] %vm23, %v1598
    %1603 = vrot.lane.b32.xlu0 %v1597, 3
    %v1604 = vpop.permute.xlu0 %1603
    %1605 = vrot.lane.b32.xlu0 %v1598, 3
    %v1606 = vpop.permute.xlu0 %1605
    %1609 = vst.msk [vmem:[#allocation2 + $0x117] sm:$0xfe] %vm33, %v1604
    %1610 = vst.msk [vmem:[#allocation2 + $0x11f] sm:$0x7f] %vm35, %v1606
    %1611 = vrot.lane.b32.xlu0 %v1597, 6
    %v1612 = vpop.permute.xlu0 %1611
    %1613 = vrot.lane.b32.xlu0 %v1598, 6
    %v1614 = vpop.permute.xlu0 %1613
    %1617 = vst.msk [vmem:[#allocation2 + $0x116] sm:$0xfc] %vm43, %v1612
    %1618 = vst.msk [vmem:[#allocation2 + $0x11e] sm:$0xff] %vm45, %v1614
    %v1619 = vld [vmem:[%s0 + $0x170] sm:$0xff]
    %v1620 = vld [vmem:[%s0 + $0x178] sm:$0xff]
    %1623 = vrot.lane.b32.xlu0 %v1619, 9
    %v1624 = vpop.permute.xlu0 %1623
    %1625 = vrot.lane.b32.xlu0 %v1620, 9
    %v1626 = vpop.permute.xlu0 %1625
    %1629 = vst.msk [vmem:[#allocation2 + $0x118] sm:$0xff] %vm57, %v1624
    %1630 = vst.msk [vmem:[#allocation2 + $0x120] sm:$0x3f] %vm59, %v1626
    %1631 = vrot.lane.b32.xlu0 %v1619, 12
    %v1632 = vpop.permute.xlu0 %1631
    %1633 = vrot.lane.b32.xlu0 %v1620, 12
    %v1634 = vpop.permute.xlu0 %1633
    %1637 = vst.msk [vmem:[#allocation2 + $0x117] sm:$0xfe] %vm67, %v1632
    %1638 = vst.msk [vmem:[#allocation2 + $0x11f] sm:$0x7f] %vm69, %v1634
    %1639 = vrot.lane.b32.xlu0 %v1619, 15
    %v1640 = vpop.permute.xlu0 %1639
    %1641 = vrot.lane.b32.xlu0 %v1620, 15
    %v1642 = vpop.permute.xlu0 %1641
    %1645 = vst.msk [vmem:[#allocation2 + $0x116] sm:$0xfc] %vm77, %v1640
    %1646 = vst.msk [vmem:[#allocation2 + $0x11e] sm:$0xff] %vm79, %v1642
    %v1647 = vld [vmem:[%s0 + $0x180] sm:$0xff]
    %v1648 = vld [vmem:[%s0 + $0x188] sm:$0xff]
    %1651 = vrot.lane.b32.xlu0 %v1647, 18
    %v1652 = vpop.permute.xlu0 %1651
    %1653 = vrot.lane.b32.xlu0 %v1648, 18
    %v1654 = vpop.permute.xlu0 %1653
    %1657 = vst.msk [vmem:[#allocation2 + $0x118] sm:$0xff] %vm91, %v1652
    %1658 = vst.msk [vmem:[#allocation2 + $0x120] sm:$0x3f] %vm93, %v1654
    %1659 = vrot.lane.b32.xlu0 %v1647, 21
    %v1660 = vpop.permute.xlu0 %1659
    %1661 = vrot.lane.b32.xlu0 %v1648, 21
    %v1662 = vpop.permute.xlu0 %1661
    %1665 = vst.msk [vmem:[#allocation2 + $0x117] sm:$0xfe] %vm101, %v1660
    %1666 = vst.msk [vmem:[#allocation2 + $0x11f] sm:$0x7f] %vm103, %v1662
    %1667 = vrot.lane.b32.xlu0 %v1647, 24
    %v1668 = vpop.permute.xlu0 %1667
    %1669 = vrot.lane.b32.xlu0 %v1648, 24
    %v1670 = vpop.permute.xlu0 %1669
    %1673 = vst.msk [vmem:[#allocation2 + $0x116] sm:$0xfc] %vm111, %v1668
    %1674 = vst.msk [vmem:[#allocation2 + $0x11e] sm:$0xff] %vm113, %v1670
    %v1675 = vld [vmem:[%s0 + $0x170] sm:$0xff]
    %v1676 = vld [vmem:[%s0 + $0x178] sm:$0xff]
    %1677 = vst.msk [vmem:[#allocation2 + $0x126] sm:$0xff] %vm21, %v1675
    %1678 = vst.msk [vmem:[#allocation2 + $0x12e] sm:$0x3f] %vm23, %v1676
    %1681 = vrot.lane.b32.xlu0 %v1675, 3
    %v1682 = vpop.permute.xlu0 %1681
    %1683 = vrot.lane.b32.xlu0 %v1676, 3
    %v1684 = vpop.permute.xlu0 %1683
    %1687 = vst.msk [vmem:[#allocation2 + $0x125] sm:$0xfe] %vm33, %v1682
    %1688 = vst.msk [vmem:[#allocation2 + $0x12d] sm:$0x7f] %vm35, %v1684
    %1689 = vrot.lane.b32.xlu0 %v1675, 6
    %v1690 = vpop.permute.xlu0 %1689
    %1691 = vrot.lane.b32.xlu0 %v1676, 6
    %v1692 = vpop.permute.xlu0 %1691
    %1695 = vst.msk [vmem:[#allocation2 + $0x124] sm:$0xfc] %vm43, %v1690
    %1696 = vst.msk [vmem:[#allocation2 + $0x12c] sm:$0xff] %vm45, %v1692
    %v1697 = vld [vmem:[%s0 + $0x180] sm:$0xff]
    %v1698 = vld [vmem:[%s0 + $0x188] sm:$0xff]
    %1701 = vrot.lane.b32.xlu0 %v1697, 9
    %v1702 = vpop.permute.xlu0 %1701
    %1703 = vrot.lane.b32.xlu0 %v1698, 9
    %v1704 = vpop.permute.xlu0 %1703
    %1707 = vst.msk [vmem:[#allocation2 + $0x126] sm:$0xff] %vm57, %v1702
    %1708 = vst.msk [vmem:[#allocation2 + $0x12e] sm:$0x3f] %vm59, %v1704
    %1709 = vrot.lane.b32.xlu0 %v1697, 12
    %v1710 = vpop.permute.xlu0 %1709
    %1711 = vrot.lane.b32.xlu0 %v1698, 12
    %v1712 = vpop.permute.xlu0 %1711
    %1715 = vst.msk [vmem:[#allocation2 + $0x125] sm:$0xfe] %vm67, %v1710
    %1716 = vst.msk [vmem:[#allocation2 + $0x12d] sm:$0x7f] %vm69, %v1712
    %1717 = vrot.lane.b32.xlu0 %v1697, 15
    %v1718 = vpop.permute.xlu0 %1717
    %1719 = vrot.lane.b32.xlu0 %v1698, 15
    %v1720 = vpop.permute.xlu0 %1719
    %1723 = vst.msk [vmem:[#allocation2 + $0x124] sm:$0xfc] %vm77, %v1718
    %1724 = vst.msk [vmem:[#allocation2 + $0x12c] sm:$0xff] %vm79, %v1720
    %v1725 = vld [vmem:[%s0 + $0x190] sm:$0xff]
    %v1726 = vld [vmem:[%s0 + $0x198] sm:$0xff]
    %1729 = vrot.lane.b32.xlu0 %v1725, 18
    %v1730 = vpop.permute.xlu0 %1729
    %1731 = vrot.lane.b32.xlu0 %v1726, 18
    %v1732 = vpop.permute.xlu0 %1731
    %1735 = vst.msk [vmem:[#allocation2 + $0x126] sm:$0xff] %vm91, %v1730
    %1736 = vst.msk [vmem:[#allocation2 + $0x12e] sm:$0x3f] %vm93, %v1732
    %1737 = vrot.lane.b32.xlu0 %v1725, 21
    %v1738 = vpop.permute.xlu0 %1737
    %1739 = vrot.lane.b32.xlu0 %v1726, 21
    %v1740 = vpop.permute.xlu0 %1739
    %1743 = vst.msk [vmem:[#allocation2 + $0x125] sm:$0xfe] %vm101, %v1738
    %1744 = vst.msk [vmem:[#allocation2 + $0x12d] sm:$0x7f] %vm103, %v1740
    %1745 = vrot.lane.b32.xlu0 %v1725, 24
    %v1746 = vpop.permute.xlu0 %1745
    %1747 = vrot.lane.b32.xlu0 %v1726, 24
    %v1748 = vpop.permute.xlu0 %1747
    %1751 = vst.msk [vmem:[#allocation2 + $0x124] sm:$0xfc] %vm111, %v1746
    %1752 = vst.msk [vmem:[#allocation2 + $0x12c] sm:$0xff] %vm113, %v1748
    %v1753 = vld [vmem:[%s0 + $0x180] sm:$0xff]
    %v1754 = vld [vmem:[%s0 + $0x188] sm:$0xff]
    %1755 = vst.msk [vmem:[#allocation2 + $0x134] sm:$0xff] %vm21, %v1753
    %1756 = vst.msk [vmem:[#allocation2 + $0x13c] sm:$0x3f] %vm23, %v1754
    %1759 = vrot.lane.b32.xlu0 %v1753, 3
    %v1760 = vpop.permute.xlu0 %1759
    %1761 = vrot.lane.b32.xlu0 %v1754, 3
    %v1762 = vpop.permute.xlu0 %1761
    %1765 = vst.msk [vmem:[#allocation2 + $0x133] sm:$0xfe] %vm33, %v1760
    %1766 = vst.msk [vmem:[#allocation2 + $0x13b] sm:$0x7f] %vm35, %v1762
    %1767 = vrot.lane.b32.xlu0 %v1753, 6
    %v1768 = vpop.permute.xlu0 %1767
    %1769 = vrot.lane.b32.xlu0 %v1754, 6
    %v1770 = vpop.permute.xlu0 %1769
    %1773 = vst.msk [vmem:[#allocation2 + $0x132] sm:$0xfc] %vm43, %v1768
    %1774 = vst.msk [vmem:[#allocation2 + $0x13a] sm:$0xff] %vm45, %v1770
    %v1775 = vld [vmem:[%s0 + $0x190] sm:$0xff]
    %v1776 = vld [vmem:[%s0 + $0x198] sm:$0xff]
    %1779 = vrot.lane.b32.xlu0 %v1775, 9
    %v1780 = vpop.permute.xlu0 %1779
    %1781 = vrot.lane.b32.xlu0 %v1776, 9
    %v1782 = vpop.permute.xlu0 %1781
    %1785 = vst.msk [vmem:[#allocation2 + $0x134] sm:$0xff] %vm57, %v1780
    %1786 = vst.msk [vmem:[#allocation2 + $0x13c] sm:$0x3f] %vm59, %v1782
    %1787 = vrot.lane.b32.xlu0 %v1775, 12
    %v1788 = vpop.permute.xlu0 %1787
    %1789 = vrot.lane.b32.xlu0 %v1776, 12
    %v1790 = vpop.permute.xlu0 %1789
    %1793 = vst.msk [vmem:[#allocation2 + $0x133] sm:$0xfe] %vm67, %v1788
    %1794 = vst.msk [vmem:[#allocation2 + $0x13b] sm:$0x7f] %vm69, %v1790
    %1795 = vrot.lane.b32.xlu0 %v1775, 15
    %v1796 = vpop.permute.xlu0 %1795
    %1797 = vrot.lane.b32.xlu0 %v1776, 15
    %v1798 = vpop.permute.xlu0 %1797
    %1801 = vst.msk [vmem:[#allocation2 + $0x132] sm:$0xfc] %vm77, %v1796
    %1802 = vst.msk [vmem:[#allocation2 + $0x13a] sm:$0xff] %vm79, %v1798
    %v1803 = vld [vmem:[%s0 + $0x1a0] sm:$0xff]
    %v1804 = vld [vmem:[%s0 + $0x1a8] sm:$0xff]
    %1807 = vrot.lane.b32.xlu0 %v1803, 18
    %v1808 = vpop.permute.xlu0 %1807
    %1809 = vrot.lane.b32.xlu0 %v1804, 18
    %v1810 = vpop.permute.xlu0 %1809
    %1813 = vst.msk [vmem:[#allocation2 + $0x134] sm:$0xff] %vm91, %v1808
    %1814 = vst.msk [vmem:[#allocation2 + $0x13c] sm:$0x3f] %vm93, %v1810
    %1815 = vrot.lane.b32.xlu0 %v1803, 21
    %v1816 = vpop.permute.xlu0 %1815
    %1817 = vrot.lane.b32.xlu0 %v1804, 21
    %v1818 = vpop.permute.xlu0 %1817
    %1821 = vst.msk [vmem:[#allocation2 + $0x133] sm:$0xfe] %vm101, %v1816
    %1822 = vst.msk [vmem:[#allocation2 + $0x13b] sm:$0x7f] %vm103, %v1818
    %1823 = vrot.lane.b32.xlu0 %v1803, 24
    %v1824 = vpop.permute.xlu0 %1823
    %1825 = vrot.lane.b32.xlu0 %v1804, 24
    %v1826 = vpop.permute.xlu0 %1825
    %1829 = vst.msk [vmem:[#allocation2 + $0x132] sm:$0xfc] %vm111, %v1824
    %1830 = vst.msk [vmem:[#allocation2 + $0x13a] sm:$0xff] %vm113, %v1826
    %v1831 = vld [vmem:[%s0 + $0x190] sm:$0xff]
    %v1832 = vld [vmem:[%s0 + $0x198] sm:$0xff]
    %1833 = vst.msk [vmem:[#allocation2 + $0x142] sm:$0xff] %vm21, %v1831
    %1834 = vst.msk [vmem:[#allocation2 + $0x14a] sm:$0x3f] %vm23, %v1832
    %1837 = vrot.lane.b32.xlu0 %v1831, 3
    %v1838 = vpop.permute.xlu0 %1837
    %1839 = vrot.lane.b32.xlu0 %v1832, 3
    %v1840 = vpop.permute.xlu0 %1839
    %1843 = vst.msk [vmem:[#allocation2 + $0x141] sm:$0xfe] %vm33, %v1838
    %1844 = vst.msk [vmem:[#allocation2 + $0x149] sm:$0x7f] %vm35, %v1840
    %1845 = vrot.lane.b32.xlu0 %v1831, 6
    %v1846 = vpop.permute.xlu0 %1845
    %1847 = vrot.lane.b32.xlu0 %v1832, 6
    %v1848 = vpop.permute.xlu0 %1847
    %1851 = vst.msk [vmem:[#allocation2 + $0x140] sm:$0xfc] %vm43, %v1846
    %1852 = vst.msk [vmem:[#allocation2 + $0x148] sm:$0xff] %vm45, %v1848
    %v1853 = vld [vmem:[%s0 + $0x1a0] sm:$0xff]
    %v1854 = vld [vmem:[%s0 + $0x1a8] sm:$0xff]
    %1857 = vrot.lane.b32.xlu0 %v1853, 9
    %v1858 = vpop.permute.xlu0 %1857
    %1859 = vrot.lane.b32.xlu0 %v1854, 9
    %v1860 = vpop.permute.xlu0 %1859
    %1863 = vst.msk [vmem:[#allocation2 + $0x142] sm:$0xff] %vm57, %v1858
    %1864 = vst.msk [vmem:[#allocation2 + $0x14a] sm:$0x3f] %vm59, %v1860
    %1865 = vrot.lane.b32.xlu0 %v1853, 12
    %v1866 = vpop.permute.xlu0 %1865
    %1867 = vrot.lane.b32.xlu0 %v1854, 12
    %v1868 = vpop.permute.xlu0 %1867
    %1871 = vst.msk [vmem:[#allocation2 + $0x141] sm:$0xfe] %vm67, %v1866
    %1872 = vst.msk [vmem:[#allocation2 + $0x149] sm:$0x7f] %vm69, %v1868
    %1873 = vrot.lane.b32.xlu0 %v1853, 15
    %v1874 = vpop.permute.xlu0 %1873
    %1875 = vrot.lane.b32.xlu0 %v1854, 15
    %v1876 = vpop.permute.xlu0 %1875
    %1879 = vst.msk [vmem:[#allocation2 + $0x140] sm:$0xfc] %vm77, %v1874
    %1880 = vst.msk [vmem:[#allocation2 + $0x148] sm:$0xff] %vm79, %v1876
    %v1881 = vld [vmem:[%s0 + $0x1b0] sm:$0xff]
    %v1882 = vld [vmem:[%s0 + $0x1b8] sm:$0xff]
    %1885 = vrot.lane.b32.xlu0 %v1881, 18
    %v1886 = vpop.permute.xlu0 %1885
    %1887 = vrot.lane.b32.xlu0 %v1882, 18
    %v1888 = vpop.permute.xlu0 %1887
    %1891 = vst.msk [vmem:[#allocation2 + $0x142] sm:$0xff] %vm91, %v1886
    %1892 = vst.msk [vmem:[#allocation2 + $0x14a] sm:$0x3f] %vm93, %v1888
    %1893 = vrot.lane.b32.xlu0 %v1881, 21
    %v1894 = vpop.permute.xlu0 %1893
    %1895 = vrot.lane.b32.xlu0 %v1882, 21
    %v1896 = vpop.permute.xlu0 %1895
    %1899 = vst.msk [vmem:[#allocation2 + $0x141] sm:$0xfe] %vm101, %v1894
    %1900 = vst.msk [vmem:[#allocation2 + $0x149] sm:$0x7f] %vm103, %v1896
    %1901 = vrot.lane.b32.xlu0 %v1881, 24
    %v1902 = vpop.permute.xlu0 %1901
    %1903 = vrot.lane.b32.xlu0 %v1882, 24
    %v1904 = vpop.permute.xlu0 %1903
    %1907 = vst.msk [vmem:[#allocation2 + $0x140] sm:$0xfc] %vm111, %v1902
    %1908 = vst.msk [vmem:[#allocation2 + $0x148] sm:$0xff] %vm113, %v1904
    %v1909 = vld [vmem:[%s0 + $0x1a0] sm:$0xff]
    %v1910 = vld [vmem:[%s0 + $0x1a8] sm:$0xff]
    %1911 = vst.msk [vmem:[#allocation2 + $0x150] sm:$0xff] %vm21, %v1909
    %1912 = vst.msk [vmem:[#allocation2 + $0x158] sm:$0x3f] %vm23, %v1910
    %1915 = vrot.lane.b32.xlu0 %v1909, 3
    %v1916 = vpop.permute.xlu0 %1915
    %1917 = vrot.lane.b32.xlu0 %v1910, 3
    %v1918 = vpop.permute.xlu0 %1917
    %1921 = vst.msk [vmem:[#allocation2 + $0x14f] sm:$0xfe] %vm33, %v1916
    %1922 = vst.msk [vmem:[#allocation2 + $0x157] sm:$0x7f] %vm35, %v1918
    %1923 = vrot.lane.b32.xlu0 %v1909, 6
    %v1924 = vpop.permute.xlu0 %1923
    %1925 = vrot.lane.b32.xlu0 %v1910, 6
    %v1926 = vpop.permute.xlu0 %1925
    %1929 = vst.msk [vmem:[#allocation2 + $0x14e] sm:$0xfc] %vm43, %v1924
    %1930 = vst.msk [vmem:[#allocation2 + $0x156] sm:$0xff] %vm45, %v1926
    %v1931 = vld [vmem:[%s0 + $0x1b0] sm:$0xff]
    %v1932 = vld [vmem:[%s0 + $0x1b8] sm:$0xff]
    %1935 = vrot.lane.b32.xlu0 %v1931, 9
    %v1936 = vpop.permute.xlu0 %1935
    %1937 = vrot.lane.b32.xlu0 %v1932, 9
    %v1938 = vpop.permute.xlu0 %1937
    %1941 = vst.msk [vmem:[#allocation2 + $0x150] sm:$0xff] %vm57, %v1936
    %1942 = vst.msk [vmem:[#allocation2 + $0x158] sm:$0x3f] %vm59, %v1938
    %1943 = vrot.lane.b32.xlu0 %v1931, 12
    %v1944 = vpop.permute.xlu0 %1943
    %1945 = vrot.lane.b32.xlu0 %v1932, 12
    %v1946 = vpop.permute.xlu0 %1945
    %1949 = vst.msk [vmem:[#allocation2 + $0x14f] sm:$0xfe] %vm67, %v1944
    %1950 = vst.msk [vmem:[#allocation2 + $0x157] sm:$0x7f] %vm69, %v1946
    %1951 = vrot.lane.b32.xlu0 %v1931, 15
    %v1952 = vpop.permute.xlu0 %1951
    %1953 = vrot.lane.b32.xlu0 %v1932, 15
    %v1954 = vpop.permute.xlu0 %1953
    %1957 = vst.msk [vmem:[#allocation2 + $0x14e] sm:$0xfc] %vm77, %v1952
    %1958 = vst.msk [vmem:[#allocation2 + $0x156] sm:$0xff] %vm79, %v1954
    %v1959 = vld [vmem:[%s0 + $0x1c0] sm:$0xff]
    %v1960 = vld [vmem:[%s0 + $0x1c8] sm:$0xff]
    %1963 = vrot.lane.b32.xlu0 %v1959, 18
    %v1964 = vpop.permute.xlu0 %1963
    %1965 = vrot.lane.b32.xlu0 %v1960, 18
    %v1966 = vpop.permute.xlu0 %1965
    %1969 = vst.msk [vmem:[#allocation2 + $0x150] sm:$0xff] %vm91, %v1964
    %1970 = vst.msk [vmem:[#allocation2 + $0x158] sm:$0x3f] %vm93, %v1966
    %1971 = vrot.lane.b32.xlu0 %v1959, 21
    %v1972 = vpop.permute.xlu0 %1971
    %1973 = vrot.lane.b32.xlu0 %v1960, 21
    %v1974 = vpop.permute.xlu0 %1973
    %1977 = vst.msk [vmem:[#allocation2 + $0x14f] sm:$0xfe] %vm101, %v1972
    %1978 = vst.msk [vmem:[#allocation2 + $0x157] sm:$0x7f] %vm103, %v1974
    %1979 = vrot.lane.b32.xlu0 %v1959, 24
    %v1980 = vpop.permute.xlu0 %1979
    %1981 = vrot.lane.b32.xlu0 %v1960, 24
    %v1982 = vpop.permute.xlu0 %1981
    %1985 = vst.msk [vmem:[#allocation2 + $0x14e] sm:$0xfc] %vm111, %v1980
    %1986 = vst.msk [vmem:[#allocation2 + $0x156] sm:$0xff] %vm113, %v1982
    %v1987 = vld [vmem:[%s0 + $0x1b0] sm:$0xff]
    %v1988 = vld [vmem:[%s0 + $0x1b8] sm:$0xff]
    %1989 = vst.msk [vmem:[#allocation2 + $0x15e] sm:$0xff] %vm21, %v1987
    %1990 = vst.msk [vmem:[#allocation2 + $0x166] sm:$0x3f] %vm23, %v1988
    %1993 = vrot.lane.b32.xlu0 %v1987, 3
    %v1994 = vpop.permute.xlu0 %1993
    %1995 = vrot.lane.b32.xlu0 %v1988, 3
    %v1996 = vpop.permute.xlu0 %1995
    %1999 = vst.msk [vmem:[#allocation2 + $0x15d] sm:$0xfe] %vm33, %v1994
    %2000 = vst.msk [vmem:[#allocation2 + $0x165] sm:$0x7f] %vm35, %v1996
    %2001 = vrot.lane.b32.xlu0 %v1987, 6
    %v2002 = vpop.permute.xlu0 %2001
    %2003 = vrot.lane.b32.xlu0 %v1988, 6
    %v2004 = vpop.permute.xlu0 %2003
    %2007 = vst.msk [vmem:[#allocation2 + $0x15c] sm:$0xfc] %vm43, %v2002
    %2008 = vst.msk [vmem:[#allocation2 + $0x164] sm:$0xff] %vm45, %v2004
    %v2009 = vld [vmem:[%s0 + $0x1c0] sm:$0xff]
    %v2010 = vld [vmem:[%s0 + $0x1c8] sm:$0xff]
    %2013 = vrot.lane.b32.xlu0 %v2009, 9
    %v2014 = vpop.permute.xlu0 %2013
    %2015 = vrot.lane.b32.xlu0 %v2010, 9
    %v2016 = vpop.permute.xlu0 %2015
    %2019 = vst.msk [vmem:[#allocation2 + $0x15e] sm:$0xff] %vm57, %v2014
    %2020 = vst.msk [vmem:[#allocation2 + $0x166] sm:$0x3f] %vm59, %v2016
    %2021 = vrot.lane.b32.xlu0 %v2009, 12
    %v2022 = vpop.permute.xlu0 %2021
    %2023 = vrot.lane.b32.xlu0 %v2010, 12
    %v2024 = vpop.permute.xlu0 %2023
    %2027 = vst.msk [vmem:[#allocation2 + $0x15d] sm:$0xfe] %vm67, %v2022
    %2028 = vst.msk [vmem:[#allocation2 + $0x165] sm:$0x7f] %vm69, %v2024
    %2029 = vrot.lane.b32.xlu0 %v2009, 15
    %v2030 = vpop.permute.xlu0 %2029
    %2031 = vrot.lane.b32.xlu0 %v2010, 15
    %v2032 = vpop.permute.xlu0 %2031
    %2035 = vst.msk [vmem:[#allocation2 + $0x15c] sm:$0xfc] %vm77, %v2030
    %2036 = vst.msk [vmem:[#allocation2 + $0x164] sm:$0xff] %vm79, %v2032
    %v2037 = vld [vmem:[%s0 + $0x1d0] sm:$0xff]
    %v2038 = vld [vmem:[%s0 + $0x1d8] sm:$0xff]
    %2041 = vrot.lane.b32.xlu0 %v2037, 18
    %v2042 = vpop.permute.xlu0 %2041
    %2043 = vrot.lane.b32.xlu0 %v2038, 18
    %v2044 = vpop.permute.xlu0 %2043
    %2047 = vst.msk [vmem:[#allocation2 + $0x15e] sm:$0xff] %vm91, %v2042
    %2048 = vst.msk [vmem:[#allocation2 + $0x166] sm:$0x3f] %vm93, %v2044
    %2049 = vrot.lane.b32.xlu0 %v2037, 21
    %v2050 = vpop.permute.xlu0 %2049
    %2051 = vrot.lane.b32.xlu0 %v2038, 21
    %v2052 = vpop.permute.xlu0 %2051
    %2055 = vst.msk [vmem:[#allocation2 + $0x15d] sm:$0xfe] %vm101, %v2050
    %2056 = vst.msk [vmem:[#allocation2 + $0x165] sm:$0x7f] %vm103, %v2052
    %2057 = vrot.lane.b32.xlu0 %v2037, 24
    %v2058 = vpop.permute.xlu0 %2057
    %2059 = vrot.lane.b32.xlu0 %v2038, 24
    %v2060 = vpop.permute.xlu0 %2059
    %2063 = vst.msk [vmem:[#allocation2 + $0x15c] sm:$0xfc] %vm111, %v2058
    %2064 = vst.msk [vmem:[#allocation2 + $0x164] sm:$0xff] %vm113, %v2060
    %v2065 = vld [vmem:[%s0 + $0x1c0] sm:$0xff]
    %v2066 = vld [vmem:[%s0 + $0x1c8] sm:$0xff]
    %2067 = vst.msk [vmem:[#allocation2 + $0x16c] sm:$0xff] %vm21, %v2065
    %2068 = vst.msk [vmem:[#allocation2 + $0x174] sm:$0x3f] %vm23, %v2066
    %2071 = vrot.lane.b32.xlu0 %v2065, 3
    %v2072 = vpop.permute.xlu0 %2071
    %2073 = vrot.lane.b32.xlu0 %v2066, 3
    %v2074 = vpop.permute.xlu0 %2073
    %2077 = vst.msk [vmem:[#allocation2 + $0x16b] sm:$0xfe] %vm33, %v2072
    %2078 = vst.msk [vmem:[#allocation2 + $0x173] sm:$0x7f] %vm35, %v2074
    %2079 = vrot.lane.b32.xlu0 %v2065, 6
    %v2080 = vpop.permute.xlu0 %2079
    %2081 = vrot.lane.b32.xlu0 %v2066, 6
    %v2082 = vpop.permute.xlu0 %2081
    %2085 = vst.msk [vmem:[#allocation2 + $0x16a] sm:$0xfc] %vm43, %v2080
    %2086 = vst.msk [vmem:[#allocation2 + $0x172] sm:$0xff] %vm45, %v2082
    %v2087 = vld [vmem:[%s0 + $0x1d0] sm:$0xff]
    %v2088 = vld [vmem:[%s0 + $0x1d8] sm:$0xff]
    %2091 = vrot.lane.b32.xlu0 %v2087, 9
    %v2092 = vpop.permute.xlu0 %2091
    %2093 = vrot.lane.b32.xlu0 %v2088, 9
    %v2094 = vpop.permute.xlu0 %2093
    %2097 = vst.msk [vmem:[#allocation2 + $0x16c] sm:$0xff] %vm57, %v2092
    %2098 = vst.msk [vmem:[#allocation2 + $0x174] sm:$0x3f] %vm59, %v2094
    %2099 = vrot.lane.b32.xlu0 %v2087, 12
    %v2100 = vpop.permute.xlu0 %2099
    %2101 = vrot.lane.b32.xlu0 %v2088, 12
    %v2102 = vpop.permute.xlu0 %2101
    %2105 = vst.msk [vmem:[#allocation2 + $0x16b] sm:$0xfe] %vm67, %v2100
    %2106 = vst.msk [vmem:[#allocation2 + $0x173] sm:$0x7f] %vm69, %v2102
    %2107 = vrot.lane.b32.xlu0 %v2087, 15
    %v2108 = vpop.permute.xlu0 %2107
    %2109 = vrot.lane.b32.xlu0 %v2088, 15
    %v2110 = vpop.permute.xlu0 %2109
    %2113 = vst.msk [vmem:[#allocation2 + $0x16a] sm:$0xfc] %vm77, %v2108
    %2114 = vst.msk [vmem:[#allocation2 + $0x172] sm:$0xff] %vm79, %v2110
    %v2115 = vld [vmem:[%s0 + $0x1e0] sm:$0xff]
    %v2116 = vld [vmem:[%s0 + $0x1e8] sm:$0xff]
    %2119 = vrot.lane.b32.xlu0 %v2115, 18
    %v2120 = vpop.permute.xlu0 %2119
    %2121 = vrot.lane.b32.xlu0 %v2116, 18
    %v2122 = vpop.permute.xlu0 %2121
    %2125 = vst.msk [vmem:[#allocation2 + $0x16c] sm:$0xff] %vm91, %v2120
    %2126 = vst.msk [vmem:[#allocation2 + $0x174] sm:$0x3f] %vm93, %v2122
    %2127 = vrot.lane.b32.xlu0 %v2115, 21
    %v2128 = vpop.permute.xlu0 %2127
    %2129 = vrot.lane.b32.xlu0 %v2116, 21
    %v2130 = vpop.permute.xlu0 %2129
    %2133 = vst.msk [vmem:[#allocation2 + $0x16b] sm:$0xfe] %vm101, %v2128
    %2134 = vst.msk [vmem:[#allocation2 + $0x173] sm:$0x7f] %vm103, %v2130
    %2135 = vrot.lane.b32.xlu0 %v2115, 24
    %v2136 = vpop.permute.xlu0 %2135
    %2137 = vrot.lane.b32.xlu0 %v2116, 24
    %v2138 = vpop.permute.xlu0 %2137
    %2141 = vst.msk [vmem:[#allocation2 + $0x16a] sm:$0xfc] %vm111, %v2136
    %2142 = vst.msk [vmem:[#allocation2 + $0x172] sm:$0xff] %vm113, %v2138
    %v2143 = vld [vmem:[%s0 + $0x1d0] sm:$0xff]
    %v2144 = vld [vmem:[%s0 + $0x1d8] sm:$0xff]
    %2145 = vst.msk [vmem:[#allocation2 + $0x17a] sm:$0xff] %vm21, %v2143
    %2146 = vst.msk [vmem:[#allocation2 + $0x182] sm:$0x3f] %vm23, %v2144
    %2149 = vrot.lane.b32.xlu0 %v2143, 3
    %v2150 = vpop.permute.xlu0 %2149
    %2151 = vrot.lane.b32.xlu0 %v2144, 3
    %v2152 = vpop.permute.xlu0 %2151
    %2155 = vst.msk [vmem:[#allocation2 + $0x179] sm:$0xfe] %vm33, %v2150
    %2156 = vst.msk [vmem:[#allocation2 + $0x181] sm:$0x7f] %vm35, %v2152
    %2157 = vrot.lane.b32.xlu0 %v2143, 6
    %v2158 = vpop.permute.xlu0 %2157
    %2159 = vrot.lane.b32.xlu0 %v2144, 6
    %v2160 = vpop.permute.xlu0 %2159
    %2163 = vst.msk [vmem:[#allocation2 + $0x178] sm:$0xfc] %vm43, %v2158
    %2164 = vst.msk [vmem:[#allocation2 + $0x180] sm:$0xff] %vm45, %v2160
    %v2165 = vld [vmem:[%s0 + $0x1e0] sm:$0xff]
    %v2166 = vld [vmem:[%s0 + $0x1e8] sm:$0xff]
    %2169 = vrot.lane.b32.xlu0 %v2165, 9
    %v2170 = vpop.permute.xlu0 %2169
    %2171 = vrot.lane.b32.xlu0 %v2166, 9
    %v2172 = vpop.permute.xlu0 %2171
    %2175 = vst.msk [vmem:[#allocation2 + $0x17a] sm:$0xff] %vm57, %v2170
    %2176 = vst.msk [vmem:[#allocation2 + $0x182] sm:$0x3f] %vm59, %v2172
    %2177 = vrot.lane.b32.xlu0 %v2165, 12
    %v2178 = vpop.permute.xlu0 %2177
    %2179 = vrot.lane.b32.xlu0 %v2166, 12
    %v2180 = vpop.permute.xlu0 %2179
    %2183 = vst.msk [vmem:[#allocation2 + $0x179] sm:$0xfe] %vm67, %v2178
    %2184 = vst.msk [vmem:[#allocation2 + $0x181] sm:$0x7f] %vm69, %v2180
    %2185 = vrot.lane.b32.xlu0 %v2165, 15
    %v2186 = vpop.permute.xlu0 %2185
    %2187 = vrot.lane.b32.xlu0 %v2166, 15
    %v2188 = vpop.permute.xlu0 %2187
    %2191 = vst.msk [vmem:[#allocation2 + $0x178] sm:$0xfc] %vm77, %v2186
    %2192 = vst.msk [vmem:[#allocation2 + $0x180] sm:$0xff] %vm79, %v2188
    %v2193 = vld [vmem:[%s0 + $0x1f0] sm:$0xff]
    %v2194 = vld [vmem:[%s0 + $0x1f8] sm:$0xff]
    %2197 = vrot.lane.b32.xlu0 %v2193, 18
    %v2198 = vpop.permute.xlu0 %2197
    %2199 = vrot.lane.b32.xlu0 %v2194, 18
    %v2200 = vpop.permute.xlu0 %2199
    %2203 = vst.msk [vmem:[#allocation2 + $0x17a] sm:$0xff] %vm91, %v2198
    %2204 = vst.msk [vmem:[#allocation2 + $0x182] sm:$0x3f] %vm93, %v2200
    %2205 = vrot.lane.b32.xlu0 %v2193, 21
    %v2206 = vpop.permute.xlu0 %2205
    %2207 = vrot.lane.b32.xlu0 %v2194, 21
    %v2208 = vpop.permute.xlu0 %2207
    %2211 = vst.msk [vmem:[#allocation2 + $0x179] sm:$0xfe] %vm101, %v2206
    %2212 = vst.msk [vmem:[#allocation2 + $0x181] sm:$0x7f] %vm103, %v2208
    %2213 = vrot.lane.b32.xlu0 %v2193, 24
    %v2214 = vpop.permute.xlu0 %2213
    %2215 = vrot.lane.b32.xlu0 %v2194, 24
    %v2216 = vpop.permute.xlu0 %2215
    %2219 = vst.msk [vmem:[#allocation2 + $0x178] sm:$0xfc] %vm111, %v2214
    %2220 = vst.msk [vmem:[#allocation2 + $0x180] sm:$0xff] %vm113, %v2216
    %v2221 = vld [vmem:[#allocation2] sm:$0xff]
    %v2222 = vld [vmem:[#allocation2 + $0x8] sm:$0xff]
    %v2223 = vld [vmem:[#allocation2 + $0x10] sm:$0xff]
    %v2224 = vld [vmem:[#allocation2 + $0x18] sm:$0xff]
    %v2225 = vld [vmem:[#allocation2 + $0x20] sm:$0xff]
    %v2226 = vld [vmem:[#allocation2 + $0x28] sm:$0xff]
    %v2227 = vld [vmem:[#allocation2 + $0x30] sm:$0xff]
    %v2228 = vld [vmem:[#allocation2 + $0x38] sm:$0xff]
    %v2229 = vld [vmem:[#allocation2 + $0x40] sm:$0xff]
    %v2230 = vld [vmem:[#allocation2 + $0x48] sm:$0xff]
    %v2231 = vld [vmem:[#allocation2 + $0x50] sm:$0xff]
    %v2232 = vld [vmem:[#allocation2 + $0x58] sm:$0xff]
    %v2233 = vld [vmem:[#allocation2 + $0x60] sm:$0xff]
    %v2234 = vld [vmem:[#allocation2 + $0x68] sm:$0xff]
    %v2235 = vld [vmem:[#allocation2 + $0x70] sm:$0xff]
    %v2236 = vld [vmem:[#allocation2 + $0x78] sm:$0xff]
    %v2237 = vld [vmem:[#allocation2 + $0x80] sm:$0xff]
    %v2238 = vld [vmem:[#allocation2 + $0x88] sm:$0xff]
    %v2239 = vld [vmem:[#allocation2 + $0x90] sm:$0xff]
    %v2240 = vld [vmem:[#allocation2 + $0x98] sm:$0xff]
    %v2241 = vld [vmem:[#allocation2 + $0xa0] sm:$0xff]
    %v2242 = vld [vmem:[#allocation2 + $0xa8] sm:$0xff]
    %v2243 = vld [vmem:[#allocation2 + $0xb0] sm:$0xff]
    %v2244 = vld [vmem:[#allocation2 + $0xb8] sm:$0xff]
    %v2245 = vld [vmem:[#allocation2 + $0xc0] sm:$0xff]
    %v2246 = vld [vmem:[#allocation2 + $0xc8] sm:$0xff]
    %v2247 = vld [vmem:[#allocation2 + $0xd0] sm:$0xff]
    %v2248 = vld [vmem:[#allocation2 + $0xd8] sm:$0xff]
    %v2249 = vld [vmem:[#allocation2 + $0xe0] sm:$0xff]
    %v2250 = vld [vmem:[#allocation2 + $0xe8] sm:$0xff]
    %v2251 = vld [vmem:[#allocation2 + $0xf0] sm:$0xff]
    %v2252 = vld [vmem:[#allocation2 + $0xf8] sm:$0xff]
    %v2253 = vld [vmem:[#allocation2 + $0x100] sm:$0xff]
    %v2254 = vld [vmem:[#allocation2 + $0x108] sm:$0xff]
    %v2255 = vld [vmem:[#allocation2 + $0x110] sm:$0xff]
    %v2256 = vld [vmem:[#allocation2 + $0x118] sm:$0xff]
    %v2257 = vld [vmem:[#allocation2 + $0x120] sm:$0xff]
    %v2258 = vld [vmem:[#allocation2 + $0x128] sm:$0xff]
    %v2259 = vld [vmem:[#allocation2 + $0x130] sm:$0xff]
    %v2260 = vld [vmem:[#allocation2 + $0x138] sm:$0xff]
    %v2261 = vld [vmem:[#allocation2 + $0x140] sm:$0xff]
    %v2262 = vld [vmem:[#allocation2 + $0x148] sm:$0xff]
    %v2263 = vld [vmem:[#allocation2 + $0x150] sm:$0xff]
    %v2264 = vld [vmem:[#allocation2 + $0x158] sm:$0xff]
    %v2265 = vld [vmem:[#allocation2 + $0x160] sm:$0xff]
    %v2266 = vld [vmem:[#allocation2 + $0x168] sm:$0xff]
    %v2267 = vld [vmem:[#allocation2 + $0x170] sm:$0xff]
    %v2268 = vld [vmem:[#allocation2 + $0x178] sm:$0xff]
    %v2269 = vld [vmem:[#allocation2 + $0x180] sm:$0xff]
    %v2270 = vpack.c.bf16 %v2222, %v2221
    %v2271 = vpack.c.bf16 %v2224, %v2223
    %v2272 = vpack.c.bf16 %v2226, %v2225
    %v2273 = vpack.c.bf16 %v2228, %v2227
    %v2274 = vpack.c.bf16 %v2230, %v2229
    %v2275 = vpack.c.bf16 %v2232, %v2231
    %v2276 = vpack.c.bf16 %v2234, %v2233
    %v2277 = vpack.c.bf16 %v2236, %v2235
    %v2278 = vpack.c.bf16 %v2238, %v2237
    %v2279 = vpack.c.bf16 %v2240, %v2239
    %v2280 = vpack.c.bf16 %v2242, %v2241
    %v2281 = vpack.c.bf16 %v2244, %v2243
    %v2282 = vpack.c.bf16 %v2246, %v2245
    %v2283 = vpack.c.bf16 %v2248, %v2247
    %v2284 = vpack.c.bf16 %v2250, %v2249
    %v2285 = vpack.c.bf16 %v2252, %v2251
    %v2286 = vpack.c.bf16 %v2254, %v2253
    %v2287 = vpack.c.bf16 %v2256, %v2255
    %v2288 = vpack.c.bf16 %v2258, %v2257
    %v2289 = vpack.c.bf16 %v2260, %v2259
    %v2290 = vpack.c.bf16 %v2262, %v2261
    %v2291 = vpack.c.bf16 %v2264, %v2263
    %v2292 = vpack.c.bf16 %v2266, %v2265
    %v2293 = vpack.c.bf16 %v2268, %v2267
    %v2294 = vpack.c.bf16 %v2269, %v2269
    %v2295 = vld [vmem:[%s1] sm:$0xf]
    %v2296 = vld [vmem:[%s1 + $0x4] sm:$0xf]
    %v2297 = vld [vmem:[%s1 + $0x8] sm:$0xf]
    %v2298 = vld [vmem:[%s1 + $0xc] sm:$0x3]
    %v2303 = vunpack.c.l.b16 %v2295
    %v2304 = vunpack.c.l.b16 %v2296
    %v2305 = vunpack.c.l.b16 %v2297
    %v2306 = vunpack.c.l.b16 %v2298
    %v2307 = vpack.c.b16 %v2304, %v2303
    %v2308 = vpack.c.b16 %v2306, %v2305
    %vm2310 = vcmask 220160
    %v2312 = vsel %vm2310, %v2270, 0
    %v2315 = vsel %vm2310, %v2271, 0
    %v2318 = vsel %vm2310, %v2272, 0
    %v2321 = vsel %vm2310, %v2273, 0
    %v2324 = vsel %vm2310, %v2274, 0
    %v2327 = vsel %vm2310, %v2275, 0
    %v2330 = vsel %vm2310, %v2276, 0
    %v2333 = vsel %vm2310, %v2277, 0
    %v2336 = vsel %vm2310, %v2278, 0
    %v2339 = vsel %vm2310, %v2279, 0
    %v2342 = vsel %vm2310, %v2280, 0
    %v2345 = vsel %vm2310, %v2281, 0
    %v2348 = vsel %vm2310, %v2282, 0
    %v2351 = vsel %vm2310, %v2283, 0
    %v2354 = vsel %vm2310, %v2284, 0
    %v2357 = vsel %vm2310, %v2285, 0
    %v2360 = vsel %vm2310, %v2286, 0
    %v2363 = vsel %vm2310, %v2287, 0
    %v2366 = vsel %vm2310, %v2288, 0
    %v2369 = vsel %vm2310, %v2289, 0
    %v2372 = vsel %vm2310, %v2290, 0
    %v2375 = vsel %vm2310, %v2291, 0
    %v2378 = vsel %vm2310, %v2292, 0
    %v2381 = vsel %vm2310, %v2293, 0
    %v2384 = vsel %vm2310, %v2294, 0
    %vm2386 = vcmask 1044480
    %vm2387 = vcmask 1045504
    %v2388 = vsel %vm2386, 4294967295, 65535
    %v2389 = vsel %vm2387, %v2388, 0
    %v2391 = vand.u32 %v2308, %v2389
    %2393 = vmatprep.subr.bf16.mxu0 0
    %2394 = vmatpush1.bf16.msra.mxu0 %v2307
    %2395 = vmatprep.subr.bf16.mxu0 0
    %2396 = vmatpush1.bf16.msra.mxu0 %v2391
    %2397 = vmatprep.subr.bf16.mxu0 0
    %2398 = vmatpush1.bf16.msra.mxu0 0
    %2399 = vmatprep.subr.bf16.mxu0 0
    %2400 = vmatpush1.bf16.msra.mxu0 0
    %2401 = vmatprep.subr.bf16.mxu0 0
    %2402 = vmatpush1.bf16.msra.mxu0 0
    %2403 = vmatprep.subr.bf16.mxu0 0
    %2404 = vmatpush1.bf16.msra.mxu0 0
    %2405 = vmatprep.subr.bf16.mxu0 0
    %2406 = vmatpush1.bf16.msra.mxu0 0
    %2407 = vmatprep.subr.bf16.mxu0 0
    %2408 = vmatpush1.bf16.msra.mxu0 0
    %2409 = vmatprep.subr.bf16.mxu0 0
    %2410 = vmatpush1.bf16.msra.mxu0 0
    %2411 = vmatprep.subr.bf16.mxu0 0
    %2412 = vmatpush1.bf16.msra.mxu0 0
    %2413 = vmatprep.subr.bf16.mxu0 0
    %2414 = vmatpush1.bf16.msra.mxu0 0
    %2415 = vmatprep.subr.bf16.mxu0 0
    %2416 = vmatpush1.bf16.msra.mxu0 0
    %2417 = vmatprep.subr.bf16.mxu0 0
    %2418 = vmatpush1.bf16.msra.mxu0 0
    %2419 = vmatprep.subr.bf16.mxu0 0
    %2420 = vmatpush1.bf16.msra.mxu0 0
    %2421 = vmatprep.subr.bf16.mxu0 0
    %2422 = vmatpush1.bf16.msra.mxu0 0
    %2423 = vmatprep.subr.bf16.mxu0 0
    %2424 = vmatpush1.bf16.msra.mxu0 0
    %2425 = vmatprep.mubr.bf16.mxu0 0
    %2426 = vmatmul.mubr.bf16.gmra.mrb[0].mxu0 %v2312
    %v2427 = vpop.f32.mrb[0].mxu0
    %v2428 = vadd.f32 0.0, %v2427
    %v2429 = vpop.f32.mrb[0].mxu0
    %v2430 = vpop.f32.mrb[0].mxu0
    %v2431 = vadd.f32 0.0, %v2430
    %v2432 = vpop.f32.mrb[0].mxu0
    %2433 = vmatprep.mubr.bf16.mxu0 0
    %2434 = vmatmul.mubr.bf16.gmra.mrb[0].mxu0 %v2315
    %v2435 = vpop.f32.mrb[0].mxu0
    %v2436 = vadd.f32 0.0, %v2435
    %v2437 = vpop.f32.mrb[0].mxu0
    %v2438 = vpop.f32.mrb[0].mxu0
    %v2439 = vadd.f32 0.0, %v2438
    %v2440 = vpop.f32.mrb[0].mxu0
    %2441 = vmatprep.mubr.bf16.mxu0 0
    %2442 = vmatmul.mubr.bf16.gmra.mrb[0].mxu0 %v2318
    %v2443 = vpop.f32.mrb[0].mxu0
    %v2444 = vadd.f32 0.0, %v2443
    %v2445 = vpop.f32.mrb[0].mxu0
    %v2446 = vpop.f32.mrb[0].mxu0
    %v2447 = vadd.f32 0.0, %v2446
    %v2448 = vpop.f32.mrb[0].mxu0
    %2449 = vmatprep.mubr.bf16.mxu0 0
    %2450 = vmatmul.mubr.bf16.gmra.mrb[0].mxu0 %v2321
    %v2451 = vpop.f32.mrb[0].mxu0
    %v2452 = vadd.f32 0.0, %v2451
    %v2453 = vpop.f32.mrb[0].mxu0
    %v2454 = vpop.f32.mrb[0].mxu0
    %v2455 = vadd.f32 0.0, %v2454
    %v2456 = vpop.f32.mrb[0].mxu0
    %2457 = vmatprep.mubr.bf16.mxu0 0
    %2458 = vmatmul.mubr.bf16.gmra.mrb[0].mxu0 %v2324
    %v2459 = vpop.f32.mrb[0].mxu0
    %v2460 = vadd.f32 0.0, %v2459
    %v2461 = vpop.f32.mrb[0].mxu0
    %v2462 = vpop.f32.mrb[0].mxu0
    %v2463 = vadd.f32 0.0, %v2462
    %v2464 = vpop.f32.mrb[0].mxu0
    %2465 = vmatprep.mubr.bf16.mxu0 0
    %2466 = vmatmul.mubr.bf16.gmra.mrb[0].mxu0 %v2327
    %v2467 = vpop.f32.mrb[0].mxu0
    %v2468 = vadd.f32 0.0, %v2467
    %v2469 = vpop.f32.mrb[0].mxu0
    %v2470 = vpop.f32.mrb[0].mxu0
    %v2471 = vadd.f32 0.0, %v2470
    %v2472 = vpop.f32.mrb[0].mxu0
    %2473 = vmatprep.mubr.bf16.mxu0 0
    %2474 = vmatmul.mubr.bf16.gmra.mrb[0].mxu0 %v2330
    %v2475 = vpop.f32.mrb[0].mxu0
    %v2476 = vadd.f32 0.0, %v2475
    %v2477 = vpop.f32.mrb[0].mxu0
    %v2478 = vpop.f32.mrb[0].mxu0
    %v2479 = vadd.f32 0.0, %v2478
    %v2480 = vpop.f32.mrb[0].mxu0
    %2481 = vmatprep.mubr.bf16.mxu0 0
    %2482 = vmatmul.mubr.bf16.gmra.mrb[0].mxu0 %v2333
    %v2483 = vpop.f32.mrb[0].mxu0
    %v2484 = vadd.f32 0.0, %v2483
    %v2485 = vpop.f32.mrb[0].mxu0
    %v2486 = vpop.f32.mrb[0].mxu0
    %v2487 = vadd.f32 0.0, %v2486
    %v2488 = vpop.f32.mrb[0].mxu0
    %2489 = vmatprep.mubr.bf16.mxu0 0
    %2490 = vmatmul.mubr.bf16.gmra.mrb[0].mxu0 %v2336
    %v2491 = vpop.f32.mrb[0].mxu0
    %v2492 = vadd.f32 0.0, %v2491
    %v2493 = vpop.f32.mrb[0].mxu0
    %v2494 = vpop.f32.mrb[0].mxu0
    %v2495 = vadd.f32 0.0, %v2494
    %v2496 = vpop.f32.mrb[0].mxu0
    %2497 = vmatprep.mubr.bf16.mxu0 0
    %2498 = vmatmul.mubr.bf16.gmra.mrb[0].mxu0 %v2339
    %v2499 = vpop.f32.mrb[0].mxu0
    %v2500 = vadd.f32 0.0, %v2499
    %v2501 = vpop.f32.mrb[0].mxu0
    %v2502 = vpop.f32.mrb[0].mxu0
    %v2503 = vadd.f32 0.0, %v2502
    %v2504 = vpop.f32.mrb[0].mxu0
    %2505 = vmatprep.mubr.bf16.mxu0 0
    %2506 = vmatmul.mubr.bf16.gmra.mrb[0].mxu0 %v2342
    %v2507 = vpop.f32.mrb[0].mxu0
    %v2508 = vadd.f32 0.0, %v2507
    %v2509 = vpop.f32.mrb[0].mxu0
    %v2510 = vpop.f32.mrb[0].mxu0
    %v2511 = vadd.f32 0.0, %v2510
    %v2512 = vpop.f32.mrb[0].mxu0
    %2513 = vmatprep.mubr.bf16.mxu0 0
    %2514 = vmatmul.mubr.bf16.gmra.mrb[0].mxu0 %v2345
    %v2515 = vpop.f32.mrb[0].mxu0
    %v2516 = vadd.f32 0.0, %v2515
    %v2517 = vpop.f32.mrb[0].mxu0
    %v2518 = vpop.f32.mrb[0].mxu0
    %v2519 = vadd.f32 0.0, %v2518
    %v2520 = vpop.f32.mrb[0].mxu0
    %2521 = vmatprep.mubr.bf16.mxu0 0
    %2522 = vmatmul.mubr.bf16.gmra.mrb[0].mxu0 %v2348
    %v2523 = vpop.f32.mrb[0].mxu0
    %v2524 = vadd.f32 0.0, %v2523
    %v2525 = vpop.f32.mrb[0].mxu0
    %v2526 = vpop.f32.mrb[0].mxu0
    %v2527 = vadd.f32 0.0, %v2526
    %v2528 = vpop.f32.mrb[0].mxu0
    %2529 = vmatprep.mubr.bf16.mxu0 0
    %2530 = vmatmul.mubr.bf16.gmra.mrb[0].mxu0 %v2351
    %v2531 = vpop.f32.mrb[0].mxu0
    %v2532 = vadd.f32 0.0, %v2531
    %v2533 = vpop.f32.mrb[0].mxu0
    %v2534 = vpop.f32.mrb[0].mxu0
    %v2535 = vadd.f32 0.0, %v2534
    %v2536 = vpop.f32.mrb[0].mxu0
    %2537 = vmatprep.mubr.bf16.mxu0 0
    %2538 = vmatmul.mubr.bf16.gmra.mrb[0].mxu0 %v2354
    %v2539 = vpop.f32.mrb[0].mxu0
    %v2540 = vadd.f32 0.0, %v2539
    %v2541 = vpop.f32.mrb[0].mxu0
    %v2542 = vpop.f32.mrb[0].mxu0
    %v2543 = vadd.f32 0.0, %v2542
    %v2544 = vpop.f32.mrb[0].mxu0
    %2545 = vmatprep.mubr.bf16.mxu0 0
    %2546 = vmatmul.mubr.bf16.gmra.mrb[0].mxu0 %v2357
    %v2547 = vpop.f32.mrb[0].mxu0
    %v2548 = vadd.f32 0.0, %v2547
    %v2549 = vpop.f32.mrb[0].mxu0
    %v2550 = vpop.f32.mrb[0].mxu0
    %v2551 = vadd.f32 0.0, %v2550
    %v2552 = vpop.f32.mrb[0].mxu0
    %2553 = vmatprep.mubr.bf16.mxu0 0
    %2554 = vmatmul.mubr.bf16.gmra.mrb[0].mxu0 %v2360
    %v2555 = vpop.f32.mrb[0].mxu0
    %v2556 = vadd.f32 0.0, %v2555
    %v2557 = vpop.f32.mrb[0].mxu0
    %v2558 = vpop.f32.mrb[0].mxu0
    %v2559 = vadd.f32 0.0, %v2558
    %v2560 = vpop.f32.mrb[0].mxu0
    %2561 = vmatprep.mubr.bf16.mxu0 0
    %2562 = vmatmul.mubr.bf16.gmra.mrb[0].mxu0 %v2363
    %v2563 = vpop.f32.mrb[0].mxu0
    %v2564 = vadd.f32 0.0, %v2563
    %v2565 = vpop.f32.mrb[0].mxu0
    %v2566 = vpop.f32.mrb[0].mxu0
    %v2567 = vadd.f32 0.0, %v2566
    %v2568 = vpop.f32.mrb[0].mxu0
    %2569 = vmatprep.mubr.bf16.mxu0 0
    %2570 = vmatmul.mubr.bf16.gmra.mrb[0].mxu0 %v2366
    %v2571 = vpop.f32.mrb[0].mxu0
    %v2572 = vadd.f32 0.0, %v2571
    %v2573 = vpop.f32.mrb[0].mxu0
    %v2574 = vpop.f32.mrb[0].mxu0
    %v2575 = vadd.f32 0.0, %v2574
    %v2576 = vpop.f32.mrb[0].mxu0
    %2577 = vmatprep.mubr.bf16.mxu0 0
    %2578 = vmatmul.mubr.bf16.gmra.mrb[0].mxu0 %v2369
    %v2579 = vpop.f32.mrb[0].mxu0
    %v2580 = vadd.f32 0.0, %v2579
    %v2581 = vpop.f32.mrb[0].mxu0
    %v2582 = vpop.f32.mrb[0].mxu0
    %v2583 = vadd.f32 0.0, %v2582
    %v2584 = vpop.f32.mrb[0].mxu0
    %2585 = vmatprep.mubr.bf16.mxu0 0
    %2586 = vmatmul.mubr.bf16.gmra.mrb[0].mxu0 %v2372
    %v2587 = vpop.f32.mrb[0].mxu0
    %v2588 = vadd.f32 0.0, %v2587
    %v2589 = vpop.f32.mrb[0].mxu0
    %v2590 = vpop.f32.mrb[0].mxu0
    %v2591 = vadd.f32 0.0, %v2590
    %v2592 = vpop.f32.mrb[0].mxu0
    %2593 = vmatprep.mubr.bf16.mxu0 0
    %2594 = vmatmul.mubr.bf16.gmra.mrb[0].mxu0 %v2375
    %v2595 = vpop.f32.mrb[0].mxu0
    %v2596 = vadd.f32 0.0, %v2595
    %v2597 = vpop.f32.mrb[0].mxu0
    %v2598 = vpop.f32.mrb[0].mxu0
    %v2599 = vadd.f32 0.0, %v2598
    %v2600 = vpop.f32.mrb[0].mxu0
    %2601 = vmatprep.mubr.bf16.mxu0 0
    %2602 = vmatmul.mubr.bf16.gmra.mrb[0].mxu0 %v2378
    %v2603 = vpop.f32.mrb[0].mxu0
    %v2604 = vadd.f32 0.0, %v2603
    %v2605 = vpop.f32.mrb[0].mxu0
    %v2606 = vpop.f32.mrb[0].mxu0
    %v2607 = vadd.f32 0.0, %v2606
    %v2608 = vpop.f32.mrb[0].mxu0
    %2609 = vmatprep.mubr.bf16.mxu0 0
    %2610 = vmatmul.mubr.bf16.gmra.mrb[0].mxu0 %v2381
    %v2611 = vpop.f32.mrb[0].mxu0
    %v2612 = vadd.f32 0.0, %v2611
    %v2613 = vpop.f32.mrb[0].mxu0
    %v2614 = vpop.f32.mrb[0].mxu0
    %v2615 = vadd.f32 0.0, %v2614
    %v2616 = vpop.f32.mrb[0].mxu0
    %2617 = vmatprep.mubr.bf16.mxu0 0
    %2618 = vmatmul.mubr.bf16.gmra.mrb[0].mxu0 %v2384
    %v2619 = vpop.f32.mrb[0].mxu0
    %v2620 = vadd.f32 0.0, %v2619
    %v2621 = vpop.f32.mrb[0].mxu0
    %v2622 = vpop.f32.mrb[0].mxu0
    %v2623 = vpop.f32.mrb[0].mxu0
    %2624 = vdwg.mxu0
    %v2625 = vld [vmem:[%s3] sm:$0x1]
    %v2626 = vld [vmem:[%s3 + $0x1] sm:$0x1]
    %vm2627 = vcmask 523264
    %v2628 = vsel %vm2627, %v2428, 0.0
    %v2629 = vsel %vm2627, %v2431, 0.0
    %v2630 = vadd.f32 %v2628, %v2629
    %v2631 = vsel %vm2627, %v2436, 0.0
    %v2632 = vadd.f32 %v2630, %v2631
    %v2633 = vsel %vm2627, %v2439, 0.0
    %v2634 = vadd.f32 %v2632, %v2633
    %v2635 = vsel %vm2627, %v2444, 0.0
    %v2636 = vadd.f32 %v2634, %v2635
    %v2637 = vsel %vm2627, %v2447, 0.0
    %v2638 = vadd.f32 %v2636, %v2637
    %v2639 = vsel %vm2627, %v2452, 0.0
    %v2640 = vadd.f32 %v2638, %v2639
    %v2641 = vsel %vm2627, %v2455, 0.0
    %v2642 = vadd.f32 %v2640, %v2641
    %v2643 = vsel %vm2627, %v2460, 0.0
    %v2644 = vadd.f32 %v2642, %v2643
    %v2645 = vsel %vm2627, %v2463, 0.0
    %v2646 = vadd.f32 %v2644, %v2645
    %v2647 = vsel %vm2627, %v2468, 0.0
    %v2648 = vadd.f32 %v2646, %v2647
    %v2649 = vsel %vm2627, %v2471, 0.0
    %v2650 = vadd.f32 %v2648, %v2649
    %v2651 = vsel %vm2627, %v2476, 0.0
    %v2652 = vadd.f32 %v2650, %v2651
    %v2653 = vsel %vm2627, %v2479, 0.0
    %v2654 = vadd.f32 %v2652, %v2653
    %v2655 = vsel %vm2627, %v2484, 0.0
    %v2656 = vadd.f32 %v2654, %v2655
    %v2657 = vsel %vm2627, %v2487, 0.0
    %v2658 = vadd.f32 %v2656, %v2657
    %v2659 = vsel %vm2627, %v2492, 0.0
    %v2660 = vadd.f32 %v2658, %v2659
    %v2661 = vsel %vm2627, %v2495, 0.0
    %v2662 = vadd.f32 %v2660, %v2661
    %v2663 = vsel %vm2627, %v2500, 0.0
    %v2664 = vadd.f32 %v2662, %v2663
    %v2665 = vsel %vm2627, %v2503, 0.0
    %v2666 = vadd.f32 %v2664, %v2665
    %v2667 = vsel %vm2627, %v2508, 0.0
    %v2668 = vadd.f32 %v2666, %v2667
    %v2669 = vsel %vm2627, %v2511, 0.0
    %v2670 = vadd.f32 %v2668, %v2669
    %v2671 = vsel %vm2627, %v2516, 0.0
    %v2672 = vadd.f32 %v2670, %v2671
    %v2673 = vsel %vm2627, %v2519, 0.0
    %v2674 = vadd.f32 %v2672, %v2673
    %v2675 = vsel %vm2627, %v2524, 0.0
    %v2676 = vadd.f32 %v2674, %v2675
    %v2677 = vsel %vm2627, %v2527, 0.0
    %v2678 = vadd.f32 %v2676, %v2677
    %v2679 = vsel %vm2627, %v2532, 0.0
    %v2680 = vadd.f32 %v2678, %v2679
    %v2681 = vsel %vm2627, %v2535, 0.0
    %v2682 = vadd.f32 %v2680, %v2681
    %v2683 = vsel %vm2627, %v2540, 0.0
    %v2684 = vadd.f32 %v2682, %v2683
    %v2685 = vsel %vm2627, %v2543, 0.0
    %v2686 = vadd.f32 %v2684, %v2685
    %v2687 = vsel %vm2627, %v2548, 0.0
    %v2688 = vadd.f32 %v2686, %v2687
    %v2689 = vsel %vm2627, %v2551, 0.0
    %v2690 = vadd.f32 %v2688, %v2689
    %v2691 = vsel %vm2627, %v2556, 0.0
    %v2692 = vadd.f32 %v2690, %v2691
    %v2693 = vsel %vm2627, %v2559, 0.0
    %v2694 = vadd.f32 %v2692, %v2693
    %v2695 = vsel %vm2627, %v2564, 0.0
    %v2696 = vadd.f32 %v2694, %v2695
    %v2697 = vsel %vm2627, %v2567, 0.0
    %v2698 = vadd.f32 %v2696, %v2697
    %v2699 = vsel %vm2627, %v2572, 0.0
    %v2700 = vadd.f32 %v2698, %v2699
    %v2701 = vsel %vm2627, %v2575, 0.0
    %v2702 = vadd.f32 %v2700, %v2701
    %v2703 = vsel %vm2627, %v2580, 0.0
    %v2704 = vadd.f32 %v2702, %v2703
    %v2705 = vsel %vm2627, %v2583, 0.0
    %v2706 = vadd.f32 %v2704, %v2705
    %v2707 = vsel %vm2627, %v2588, 0.0
    %v2708 = vadd.f32 %v2706, %v2707
    %v2709 = vsel %vm2627, %v2591, 0.0
    %v2710 = vadd.f32 %v2708, %v2709
    %v2711 = vsel %vm2627, %v2596, 0.0
    %v2712 = vadd.f32 %v2710, %v2711
    %v2713 = vsel %vm2627, %v2599, 0.0
    %v2714 = vadd.f32 %v2712, %v2713
    %v2715 = vsel %vm2627, %v2604, 0.0
    %v2716 = vadd.f32 %v2714, %v2715
    %v2717 = vsel %vm2627, %v2607, 0.0
    %v2718 = vadd.f32 %v2716, %v2717
    %v2719 = vsel %vm2627, %v2612, 0.0
    %v2720 = vadd.f32 %v2718, %v2719
    %v2721 = vsel %vm2627, %v2615, 0.0
    %v2722 = vadd.f32 %v2720, %v2721
    %v2723 = vsel %vm2627, %v2620, 0.0
    %v2724 = vadd.f32 %v2722, %v2723
    %v2725 = vrot.slane %v2724, 4
    %v2726 = vadd.f32 %v2724, %v2725
    %v2727 = vrot.slane %v2726, 2
    %v2728 = vadd.f32 %v2726, %v2727
    %v2729 = vrot.slane %v2728, 1
    %v2730 = vadd.f32 %v2728, %v2729
    %v2731 = vmul.f32 %v2428, %v2428
    %v2732 = vmul.f32 %v2431, %v2431
    %v2733 = vmul.f32 %v2436, %v2436
    %v2734 = vmul.f32 %v2439, %v2439
    %v2735 = vmul.f32 %v2444, %v2444
    %v2736 = vmul.f32 %v2447, %v2447
    %v2737 = vmul.f32 %v2452, %v2452
    %v2738 = vmul.f32 %v2455, %v2455
    %v2739 = vmul.f32 %v2460, %v2460
    %v2740 = vmul.f32 %v2463, %v2463
    %v2741 = vmul.f32 %v2468, %v2468
    %v2742 = vmul.f32 %v2471, %v2471
    %v2743 = vmul.f32 %v2476, %v2476
    %v2744 = vmul.f32 %v2479, %v2479
    %v2745 = vmul.f32 %v2484, %v2484
    %v2746 = vmul.f32 %v2487, %v2487
    %v2747 = vmul.f32 %v2492, %v2492
    %v2748 = vmul.f32 %v2495, %v2495
    %v2749 = vmul.f32 %v2500, %v2500
    %v2750 = vmul.f32 %v2503, %v2503
    %v2751 = vmul.f32 %v2508, %v2508
    %v2752 = vmul.f32 %v2511, %v2511
    %v2753 = vmul.f32 %v2516, %v2516
    %v2754 = vmul.f32 %v2519, %v2519
    %v2755 = vmul.f32 %v2524, %v2524
    %v2756 = vmul.f32 %v2527, %v2527
    %v2757 = vmul.f32 %v2532, %v2532
    %v2758 = vmul.f32 %v2535, %v2535
    %v2759 = vmul.f32 %v2540, %v2540
    %v2760 = vmul.f32 %v2543, %v2543
    %v2761 = vmul.f32 %v2548, %v2548
    %v2762 = vmul.f32 %v2551, %v2551
    %v2763 = vmul.f32 %v2556, %v2556
    %v2764 = vmul.f32 %v2559, %v2559
    %v2765 = vmul.f32 %v2564, %v2564
    %v2766 = vmul.f32 %v2567, %v2567
    %v2767 = vmul.f32 %v2572, %v2572
    %v2768 = vmul.f32 %v2575, %v2575
    %v2769 = vmul.f32 %v2580, %v2580
    %v2770 = vmul.f32 %v2583, %v2583
    %v2771 = vmul.f32 %v2588, %v2588
    %v2772 = vmul.f32 %v2591, %v2591
    %v2773 = vmul.f32 %v2596, %v2596
    %v2774 = vmul.f32 %v2599, %v2599
    %v2775 = vmul.f32 %v2604, %v2604
    %v2776 = vmul.f32 %v2607, %v2607
    %v2777 = vmul.f32 %v2612, %v2612
    %v2778 = vmul.f32 %v2615, %v2615
    %v2779 = vmul.f32 %v2620, %v2620
    %v2780 = vsel %vm2627, %v2731, 0.0
    %v2781 = vsel %vm2627, %v2732, 0.0
    %v2782 = vadd.f32 %v2780, %v2781
    %v2783 = vsel %vm2627, %v2733, 0.0
    %v2784 = vadd.f32 %v2782, %v2783
    %v2785 = vsel %vm2627, %v2734, 0.0
    %v2786 = vadd.f32 %v2784, %v2785
    %v2787 = vsel %vm2627, %v2735, 0.0
    %v2788 = vadd.f32 %v2786, %v2787
    %v2789 = vsel %vm2627, %v2736, 0.0
    %v2790 = vadd.f32 %v2788, %v2789
    %v2791 = vsel %vm2627, %v2737, 0.0
    %v2792 = vadd.f32 %v2790, %v2791
    %v2793 = vsel %vm2627, %v2738, 0.0
    %v2794 = vadd.f32 %v2792, %v2793
    %v2795 = vsel %vm2627, %v2739, 0.0
    %v2796 = vadd.f32 %v2794, %v2795
    %v2797 = vsel %vm2627, %v2740, 0.0
    %v2798 = vadd.f32 %v2796, %v2797
    %v2799 = vsel %vm2627, %v2741, 0.0
    %v2800 = vadd.f32 %v2798, %v2799
    %v2801 = vsel %vm2627, %v2742, 0.0
    %v2802 = vadd.f32 %v2800, %v2801
    %v2803 = vsel %vm2627, %v2743, 0.0
    %v2804 = vadd.f32 %v2802, %v2803
    %v2805 = vsel %vm2627, %v2744, 0.0
    %v2806 = vadd.f32 %v2804, %v2805
    %v2807 = vsel %vm2627, %v2745, 0.0
    %v2808 = vadd.f32 %v2806, %v2807
    %v2809 = vsel %vm2627, %v2746, 0.0
    %v2810 = vadd.f32 %v2808, %v2809
    %v2811 = vsel %vm2627, %v2747, 0.0
    %v2812 = vadd.f32 %v2810, %v2811
    %v2813 = vsel %vm2627, %v2748, 0.0
    %v2814 = vadd.f32 %v2812, %v2813
    %v2815 = vsel %vm2627, %v2749, 0.0
    %v2816 = vadd.f32 %v2814, %v2815
    %v2817 = vsel %vm2627, %v2750, 0.0
    %v2818 = vadd.f32 %v2816, %v2817
    %v2819 = vsel %vm2627, %v2751, 0.0
    %v2820 = vadd.f32 %v2818, %v2819
    %v2821 = vsel %vm2627, %v2752, 0.0
    %v2822 = vadd.f32 %v2820, %v2821
    %v2823 = vsel %vm2627, %v2753, 0.0
    %v2824 = vadd.f32 %v2822, %v2823
    %v2825 = vsel %vm2627, %v2754, 0.0
    %v2826 = vadd.f32 %v2824, %v2825
    %v2827 = vsel %vm2627, %v2755, 0.0
    %v2828 = vadd.f32 %v2826, %v2827
    %v2829 = vsel %vm2627, %v2756, 0.0
    %v2830 = vadd.f32 %v2828, %v2829
    %v2831 = vsel %vm2627, %v2757, 0.0
    %v2832 = vadd.f32 %v2830, %v2831
    %v2833 = vsel %vm2627, %v2758, 0.0
    %v2834 = vadd.f32 %v2832, %v2833
    %v2835 = vsel %vm2627, %v2759, 0.0
    %v2836 = vadd.f32 %v2834, %v2835
    %v2837 = vsel %vm2627, %v2760, 0.0
    %v2838 = vadd.f32 %v2836, %v2837
    %v2839 = vsel %vm2627, %v2761, 0.0
    %v2840 = vadd.f32 %v2838, %v2839
    %v2841 = vsel %vm2627, %v2762, 0.0
    %v2842 = vadd.f32 %v2840, %v2841
    %v2843 = vsel %vm2627, %v2763, 0.0
    %v2844 = vadd.f32 %v2842, %v2843
    %v2845 = vsel %vm2627, %v2764, 0.0
    %v2846 = vadd.f32 %v2844, %v2845
    %v2847 = vsel %vm2627, %v2765, 0.0
    %v2848 = vadd.f32 %v2846, %v2847
    %v2849 = vsel %vm2627, %v2766, 0.0
    %v2850 = vadd.f32 %v2848, %v2849
    %v2851 = vsel %vm2627, %v2767, 0.0
    %v2852 = vadd.f32 %v2850, %v2851
    %v2853 = vsel %vm2627, %v2768, 0.0
    %v2854 = vadd.f32 %v2852, %v2853
    %v2855 = vsel %vm2627, %v2769, 0.0
    %v2856 = vadd.f32 %v2854, %v2855
    %v2857 = vsel %vm2627, %v2770, 0.0
    %v2858 = vadd.f32 %v2856, %v2857
    %v2859 = vsel %vm2627, %v2771, 0.0
    %v2860 = vadd.f32 %v2858, %v2859
    %v2861 = vsel %vm2627, %v2772, 0.0
    %v2862 = vadd.f32 %v2860, %v2861
    %v2863 = vsel %vm2627, %v2773, 0.0
    %v2864 = vadd.f32 %v2862, %v2863
    %v2865 = vsel %vm2627, %v2774, 0.0
    %v2866 = vadd.f32 %v2864, %v2865
    %v2867 = vsel %vm2627, %v2775, 0.0
    %v2868 = vadd.f32 %v2866, %v2867
    %v2869 = vsel %vm2627, %v2776, 0.0
    %v2870 = vadd.f32 %v2868, %v2869
    %v2871 = vsel %vm2627, %v2777, 0.0
    %v2872 = vadd.f32 %v2870, %v2871
    %v2873 = vsel %vm2627, %v2778, 0.0
    %v2874 = vadd.f32 %v2872, %v2873
    %v2875 = vsel %vm2627, %v2779, 0.0
    %v2876 = vadd.f32 %v2874, %v2875
    %v2877 = vrot.slane %v2876, 4
    %v2878 = vadd.f32 %v2876, %v2877
    %v2879 = vrot.slane %v2878, 2
    %v2880 = vadd.f32 %v2878, %v2879
    %v2881 = vrot.slane %v2880, 1
    %v2882 = vadd.f32 %v2880, %v2881
    %v2883 = vmul.f32 %v2730, 0.0025510204
    %v2884 = vmul.f32 %v2882, 0.0025510204
    %v2885 = vmul.f32 %v2883, %v2883
    %v2886 = vsub.f32 %v2884, %v2885
    %v2887 = vadd.f32 %v2886, 1e-05
    %v2888 = vrsqrt.pop %v2887
    %v2889 = vmul.f32 %v2625, %v2888
    %v2890 = vmul.f32 %v2883, %v2889
    %v2891 = vsub.f32 %v2626, %v2890
    %v2892 = vlaneseq
    %v2893 = vshrl.u32 %v2892, 7
    %v2894 = vsub.s32 0, %v2893
    %v2895 = vrot.slane %v2889, %v2894
    %v2896 = vmul.f32 %v2428, %v2895
    %v2897 = vmul.f32 %v2431, %v2895
    %v2898 = vmul.f32 %v2436, %v2895
    %v2899 = vmul.f32 %v2439, %v2895
    %v2900 = vmul.f32 %v2444, %v2895
    %v2901 = vmul.f32 %v2447, %v2895
    %v2902 = vmul.f32 %v2452, %v2895
    %v2903 = vmul.f32 %v2455, %v2895
    %v2904 = vmul.f32 %v2460, %v2895
    %v2905 = vmul.f32 %v2463, %v2895
    %v2906 = vmul.f32 %v2468, %v2895
    %v2907 = vmul.f32 %v2471, %v2895
    %v2908 = vmul.f32 %v2476, %v2895
    %v2909 = vmul.f32 %v2479, %v2895
    %v2910 = vmul.f32 %v2484, %v2895
    %v2911 = vmul.f32 %v2487, %v2895
    %v2912 = vmul.f32 %v2492, %v2895
    %v2913 = vmul.f32 %v2495, %v2895
    %v2914 = vmul.f32 %v2500, %v2895
    %v2915 = vmul.f32 %v2503, %v2895
    %v2916 = vmul.f32 %v2508, %v2895
    %v2917 = vmul.f32 %v2511, %v2895
    %v2918 = vmul.f32 %v2516, %v2895
    %v2919 = vmul.f32 %v2519, %v2895
    %v2920 = vmul.f32 %v2524, %v2895
    %v2921 = vmul.f32 %v2527, %v2895
    %v2922 = vmul.f32 %v2532, %v2895
    %v2923 = vmul.f32 %v2535, %v2895
    %v2924 = vmul.f32 %v2540, %v2895
    %v2925 = vmul.f32 %v2543, %v2895
    %v2926 = vmul.f32 %v2548, %v2895
    %v2927 = vmul.f32 %v2551, %v2895
    %v2928 = vmul.f32 %v2556, %v2895
    %v2929 = vmul.f32 %v2559, %v2895
    %v2930 = vmul.f32 %v2564, %v2895
    %v2931 = vmul.f32 %v2567, %v2895
    %v2932 = vmul.f32 %v2572, %v2895
    %v2933 = vmul.f32 %v2575, %v2895
    %v2934 = vmul.f32 %v2580, %v2895
    %v2935 = vmul.f32 %v2583, %v2895
    %v2936 = vmul.f32 %v2588, %v2895
    %v2937 = vmul.f32 %v2591, %v2895
    %v2938 = vmul.f32 %v2596, %v2895
    %v2939 = vmul.f32 %v2599, %v2895
    %v2940 = vmul.f32 %v2604, %v2895
    %v2941 = vmul.f32 %v2607, %v2895
    %v2942 = vmul.f32 %v2612, %v2895
    %v2943 = vmul.f32 %v2615, %v2895
    %v2944 = vmul.f32 %v2620, %v2895
    %v2945 = vlaneseq
    %v2946 = vshrl.u32 %v2945, 7
    %v2947 = vsub.s32 0, %v2946
    %v2948 = vrot.slane %v2891, %v2947
    %v2949 = vadd.f32 %v2896, %v2948
    %v2950 = vadd.f32 %v2897, %v2948
    %v2951 = vadd.f32 %v2898, %v2948
    %v2952 = vadd.f32 %v2899, %v2948
    %v2953 = vadd.f32 %v2900, %v2948
    %v2954 = vadd.f32 %v2901, %v2948
    %v2955 = vadd.f32 %v2902, %v2948
    %v2956 = vadd.f32 %v2903, %v2948
    %v2957 = vadd.f32 %v2904, %v2948
    %v2958 = vadd.f32 %v2905, %v2948
    %v2959 = vadd.f32 %v2906, %v2948
    %v2960 = vadd.f32 %v2907, %v2948
    %v2961 = vadd.f32 %v2908, %v2948
    %v2962 = vadd.f32 %v2909, %v2948
    %v2963 = vadd.f32 %v2910, %v2948
    %v2964 = vadd.f32 %v2911, %v2948
    %v2965 = vadd.f32 %v2912, %v2948
    %v2966 = vadd.f32 %v2913, %v2948
    %v2967 = vadd.f32 %v2914, %v2948
    %v2968 = vadd.f32 %v2915, %v2948
    %v2969 = vadd.f32 %v2916, %v2948
    %v2970 = vadd.f32 %v2917, %v2948
    %v2971 = vadd.f32 %v2918, %v2948
    %v2972 = vadd.f32 %v2919, %v2948
    %v2973 = vadd.f32 %v2920, %v2948
    %v2974 = vadd.f32 %v2921, %v2948
    %v2975 = vadd.f32 %v2922, %v2948
    %v2976 = vadd.f32 %v2923, %v2948
    %v2977 = vadd.f32 %v2924, %v2948
    %v2978 = vadd.f32 %v2925, %v2948
    %v2979 = vadd.f32 %v2926, %v2948
    %v2980 = vadd.f32 %v2927, %v2948
    %v2981 = vadd.f32 %v2928, %v2948
    %v2982 = vadd.f32 %v2929, %v2948
    %v2983 = vadd.f32 %v2930, %v2948
    %v2984 = vadd.f32 %v2931, %v2948
    %v2985 = vadd.f32 %v2932, %v2948
    %v2986 = vadd.f32 %v2933, %v2948
    %v2987 = vadd.f32 %v2934, %v2948
    %v2988 = vadd.f32 %v2935, %v2948
    %v2989 = vadd.f32 %v2936, %v2948
    %v2990 = vadd.f32 %v2937, %v2948
    %v2991 = vadd.f32 %v2938, %v2948
    %v2992 = vadd.f32 %v2939, %v2948
    %v2993 = vadd.f32 %v2940, %v2948
    %v2994 = vadd.f32 %v2941, %v2948
    %v2995 = vadd.f32 %v2942, %v2948
    %v2996 = vadd.f32 %v2943, %v2948
    %v2997 = vadd.f32 %v2944, %v2948
    %v2998 = vmax.f32 %v2949, 0.0
    %v2999 = vmax.f32 %v2950, 0.0
    %v3000 = vmax.f32 %v2951, 0.0
    %v3001 = vmax.f32 %v2952, 0.0
    %v3002 = vmax.f32 %v2953, 0.0
    %v3003 = vmax.f32 %v2954, 0.0
    %v3004 = vmax.f32 %v2955, 0.0
    %v3005 = vmax.f32 %v2956, 0.0
    %v3006 = vmax.f32 %v2957, 0.0
    %v3007 = vmax.f32 %v2958, 0.0
    %v3008 = vmax.f32 %v2959, 0.0
    %v3009 = vmax.f32 %v2960, 0.0
    %v3010 = vmax.f32 %v2961, 0.0
    %v3011 = vmax.f32 %v2962, 0.0
    %v3012 = vmax.f32 %v2963, 0.0
    %v3013 = vmax.f32 %v2964, 0.0
    %v3014 = vmax.f32 %v2965, 0.0
    %v3015 = vmax.f32 %v2966, 0.0
    %v3016 = vmax.f32 %v2967, 0.0
    %v3017 = vmax.f32 %v2968, 0.0
    %v3018 = vmax.f32 %v2969, 0.0
    %v3019 = vmax.f32 %v2970, 0.0
    %v3020 = vmax.f32 %v2971, 0.0
    %v3021 = vmax.f32 %v2972, 0.0
    %v3022 = vmax.f32 %v2973, 0.0
    %v3023 = vmax.f32 %v2974, 0.0
    %v3024 = vmax.f32 %v2975, 0.0
    %v3025 = vmax.f32 %v2976, 0.0
    %v3026 = vmax.f32 %v2977, 0.0
    %v3027 = vmax.f32 %v2978, 0.0
    %v3028 = vmax.f32 %v2979, 0.0
    %v3029 = vmax.f32 %v2980, 0.0
    %v3030 = vmax.f32 %v2981, 0.0
    %v3031 = vmax.f32 %v2982, 0.0
    %v3032 = vmax.f32 %v2983, 0.0
    %v3033 = vmax.f32 %v2984, 0.0
    %v3034 = vmax.f32 %v2985, 0.0
    %v3035 = vmax.f32 %v2986, 0.0
    %v3036 = vmax.f32 %v2987, 0.0
    %v3037 = vmax.f32 %v2988, 0.0
    %v3038 = vmax.f32 %v2989, 0.0
    %v3039 = vmax.f32 %v2990, 0.0
    %v3040 = vmax.f32 %v2991, 0.0
    %v3041 = vmax.f32 %v2992, 0.0
    %v3042 = vmax.f32 %v2993, 0.0
    %v3043 = vmax.f32 %v2994, 0.0
    %v3044 = vmax.f32 %v2995, 0.0
    %v3045 = vmax.f32 %v2996, 0.0
    %v3046 = vmax.f32 %v2997, 0.0
    %3047 = vst.msk [vmem:[#allocation3] sm:$0xff] %vm2627, %v2998
    %3048 = vst.msk [vmem:[#allocation3 + $0x8] sm:$0xff] %vm2627, %v2999
    %3049 = vst.msk [vmem:[#allocation3 + $0x10] sm:$0xff] %vm2627, %v3000
    %3050 = vst.msk [vmem:[#allocation3 + $0x18] sm:$0xff] %vm2627, %v3001
    %3051 = vst.msk [vmem:[#allocation3 + $0x20] sm:$0xff] %vm2627, %v3002
    %3052 = vst.msk [vmem:[#allocation3 + $0x28] sm:$0xff] %vm2627, %v3003
    %3053 = vst.msk [vmem:[#allocation3 + $0x30] sm:$0xff] %vm2627, %v3004
    %3054 = vst.msk [vmem:[#allocation3 + $0x38] sm:$0xff] %vm2627, %v3005
    %3055 = vst.msk [vmem:[#allocation3 + $0x40] sm:$0xff] %vm2627, %v3006
    %3056 = vst.msk [vmem:[#allocation3 + $0x48] sm:$0xff] %vm2627, %v3007
    %3057 = vst.msk [vmem:[#allocation3 + $0x50] sm:$0xff] %vm2627, %v3008
    %3058 = vst.msk [vmem:[#allocation3 + $0x58] sm:$0xff] %vm2627, %v3009
    %3059 = vst.msk [vmem:[#allocation3 + $0x60] sm:$0xff] %vm2627, %v3010
    %3060 = vst.msk [vmem:[#allocation3 + $0x68] sm:$0xff] %vm2627, %v3011
    %3061 = vst.msk [vmem:[#allocation3 + $0x70] sm:$0xff] %vm2627, %v3012
    %3062 = vst.msk [vmem:[#allocation3 + $0x78] sm:$0xff] %vm2627, %v3013
    %3063 = vst.msk [vmem:[#allocation3 + $0x80] sm:$0xff] %vm2627, %v3014
    %3064 = vst.msk [vmem:[#allocation3 + $0x88] sm:$0xff] %vm2627, %v3015
    %3065 = vst.msk [vmem:[#allocation3 + $0x90] sm:$0xff] %vm2627, %v3016
    %3066 = vst.msk [vmem:[#allocation3 + $0x98] sm:$0xff] %vm2627, %v3017
    %3067 = vst.msk [vmem:[#allocation3 + $0xa0] sm:$0xff] %vm2627, %v3018
    %3068 = vst.msk [vmem:[#allocation3 + $0xa8] sm:$0xff] %vm2627, %v3019
    %3069 = vst.msk [vmem:[#allocation3 + $0xb0] sm:$0xff] %vm2627, %v3020
    %3070 = vst.msk [vmem:[#allocation3 + $0xb8] sm:$0xff] %vm2627, %v3021
    %3071 = vst.msk [vmem:[#allocation3 + $0xc0] sm:$0xff] %vm2627, %v3022
    %3072 = vst.msk [vmem:[#allocation3 + $0xc8] sm:$0xff] %vm2627, %v3023
    %3073 = vst.msk [vmem:[#allocation3 + $0xd0] sm:$0xff] %vm2627, %v3024
    %3074 = vst.msk [vmem:[#allocation3 + $0xd8] sm:$0xff] %vm2627, %v3025
    %3075 = vst.msk [vmem:[#allocation3 + $0xe0] sm:$0xff] %vm2627, %v3026
    %3076 = vst.msk [vmem:[#allocation3 + $0xe8] sm:$0xff] %vm2627, %v3027
    %3077 = vst.msk [vmem:[#allocation3 + $0xf0] sm:$0xff] %vm2627, %v3028
    %3078 = vst.msk [vmem:[#allocation3 + $0xf8] sm:$0xff] %vm2627, %v3029
    %3079 = vst.msk [vmem:[#allocation3 + $0x100] sm:$0xff] %vm2627, %v3030
    %3080 = vst.msk [vmem:[#allocation3 + $0x108] sm:$0xff] %vm2627, %v3031
    %3081 = vst.msk [vmem:[#allocation3 + $0x110] sm:$0xff] %vm2627, %v3032
    %3082 = vst.msk [vmem:[#allocation3 + $0x118] sm:$0xff] %vm2627, %v3033
    %3083 = vst.msk [vmem:[#allocation3 + $0x120] sm:$0xff] %vm2627, %v3034
    %3084 = vst.msk [vmem:[#allocation3 + $0x128] sm:$0xff] %vm2627, %v3035
    %3085 = vst.msk [vmem:[#allocation3 + $0x130] sm:$0xff] %vm2627, %v3036
    %3086 = vst.msk [vmem:[#allocation3 + $0x138] sm:$0xff] %vm2627, %v3037
    %3087 = vst.msk [vmem:[#allocation3 + $0x140] sm:$0xff] %vm2627, %v3038
    %3088 = vst.msk [vmem:[#allocation3 + $0x148] sm:$0xff] %vm2627, %v3039
    %3089 = vst.msk [vmem:[#allocation3 + $0x150] sm:$0xff] %vm2627, %v3040
    %3090 = vst.msk [vmem:[#allocation3 + $0x158] sm:$0xff] %vm2627, %v3041
    %3091 = vst.msk [vmem:[#allocation3 + $0x160] sm:$0xff] %vm2627, %v3042
    %3092 = vst.msk [vmem:[#allocation3 + $0x168] sm:$0xff] %vm2627, %v3043
    %3093 = vst.msk [vmem:[#allocation3 + $0x170] sm:$0xff] %vm2627, %v3044
    %3094 = vst.msk [vmem:[#allocation3 + $0x178] sm:$0xff] %vm2627, %v3045
    %3095 = vst.msk [vmem:[#allocation3 + $0x180] sm:$0xff] %vm2627, %v3046
    %v3096 = vld [vmem:[#allocation3] ss:$2 sm:$0x7f]
    %s3097 = scalar_lea.vmem [#allocation3], 1
    %v3098 = vld [vmem:[%s3097] ss:$2 sm:$0x7f]
    %v3099 = vmax.f32 %v3096, %v3098
    %s3100 = scalar_lea.vmem [#allocation3], 14
    %v3101 = vld [vmem:[%s3100] ss:$2 sm:$0x7f]
    %v3102 = vmax.f32 %v3099, %v3101
    %s3103 = scalar_lea.vmem [#allocation3], 15
    %v3104 = vld [vmem:[%s3103] ss:$2 sm:$0x7f]
    %v3105 = vmax.f32 %v3102, %v3104
    %vm3106 = vcmask 522240
    %3107 = vst.msk [vmem:[#allocation4] sm:$0x7f] %vm3106, %v3105
    %s3108 = scalar_lea.vmem [#allocation3], 28
    %v3109 = vld [vmem:[%s3108] ss:$2 sm:$0x7f]
    %s3110 = scalar_lea.vmem [#allocation3], 29
    %v3111 = vld [vmem:[%s3110] ss:$2 sm:$0x7f]
    %v3112 = vmax.f32 %v3109, %v3111
    %s3113 = scalar_lea.vmem [#allocation3], 42
    %v3114 = vld [vmem:[%s3113] ss:$2 sm:$0x7f]
    %v3115 = vmax.f32 %v3112, %v3114
    %s3116 = scalar_lea.vmem [#allocation3], 43
    %v3117 = vld [vmem:[%s3116] ss:$2 sm:$0x7f]
    %v3118 = vmax.f32 %v3115, %v3117
    %3119 = vst.msk [vmem:[#allocation4 + $0x7] sm:$0x7f] %vm3106, %v3118
    %s3120 = scalar_lea.vmem [#allocation3], 56
    %v3121 = vld [vmem:[%s3120] ss:$2 sm:$0x7f]
    %s3122 = scalar_lea.vmem [#allocation3], 57
    %v3123 = vld [vmem:[%s3122] ss:$2 sm:$0x7f]
    %v3124 = vmax.f32 %v3121, %v3123
    %s3125 = scalar_lea.vmem [#allocation3], 70
    %v3126 = vld [vmem:[%s3125] ss:$2 sm:$0x7f]
    %v3127 = vmax.f32 %v3124, %v3126
    %s3128 = scalar_lea.vmem [#allocation3], 71
    %v3129 = vld [vmem:[%s3128] ss:$2 sm:$0x7f]
    %v3130 = vmax.f32 %v3127, %v3129
    %3131 = vst.msk [vmem:[#allocation4 + $0xe] sm:$0x7f] %vm3106, %v3130
    %s3132 = scalar_lea.vmem [#allocation3], 84
    %v3133 = vld [vmem:[%s3132] ss:$2 sm:$0x7f]
    %s3134 = scalar_lea.vmem [#allocation3], 85
    %v3135 = vld [vmem:[%s3134] ss:$2 sm:$0x7f]
    %v3136 = vmax.f32 %v3133, %v3135
    %s3137 = scalar_lea.vmem [#allocation3], 98
    %v3138 = vld [vmem:[%s3137] ss:$2 sm:$0x7f]
    %v3139 = vmax.f32 %v3136, %v3138
    %s3140 = scalar_lea.vmem [#allocation3], 99
    %v3141 = vld [vmem:[%s3140] ss:$2 sm:$0x7f]
    %v3142 = vmax.f32 %v3139, %v3141
    %3143 = vst.msk [vmem:[#allocation4 + $0x15] sm:$0x7f] %vm3106, %v3142
    %s3144 = scalar_lea.vmem [#allocation3], 112
    %v3145 = vld [vmem:[%s3144] ss:$2 sm:$0x7f]
    %s3146 = scalar_lea.vmem [#allocation3], 113
    %v3147 = vld [vmem:[%s3146] ss:$2 sm:$0x7f]
    %v3148 = vmax.f32 %v3145, %v3147
    %s3149 = scalar_lea.vmem [#allocation3], 126
    %v3150 = vld [vmem:[%s3149] ss:$2 sm:$0x7f]
    %v3151 = vmax.f32 %v3148, %v3150
    %s3152 = scalar_lea.vmem [#allocation3], 127
    %v3153 = vld [vmem:[%s3152] ss:$2 sm:$0x7f]
    %v3154 = vmax.f32 %v3151, %v3153
    %3155 = vst.msk [vmem:[#allocation4 + $0x1c] sm:$0x7f] %vm3106, %v3154
    %s3156 = scalar_lea.vmem [#allocation3], 140
    %v3157 = vld [vmem:[%s3156] ss:$2 sm:$0x7f]
    %s3158 = scalar_lea.vmem [#allocation3], 141
    %v3159 = vld [vmem:[%s3158] ss:$2 sm:$0x7f]
    %v3160 = vmax.f32 %v3157, %v3159
    %s3161 = scalar_lea.vmem [#allocation3], 154
    %v3162 = vld [vmem:[%s3161] ss:$2 sm:$0x7f]
    %v3163 = vmax.f32 %v3160, %v3162
    %s3164 = scalar_lea.vmem [#allocation3], 155
    %v3165 = vld [vmem:[%s3164] ss:$2 sm:$0x7f]
    %v3166 = vmax.f32 %v3163, %v3165
    %3167 = vst.msk [vmem:[#allocation4 + $0x23] sm:$0x7f] %vm3106, %v3166
    %s3168 = scalar_lea.vmem [#allocation3], 168
    %v3169 = vld [vmem:[%s3168] ss:$2 sm:$0x7f]
    %s3170 = scalar_lea.vmem [#allocation3], 169
    %v3171 = vld [vmem:[%s3170] ss:$2 sm:$0x7f]
    %v3172 = vmax.f32 %v3169, %v3171
    %s3173 = scalar_lea.vmem [#allocation3], 182
    %v3174 = vld [vmem:[%s3173] ss:$2 sm:$0x7f]
    %v3175 = vmax.f32 %v3172, %v3174
    %s3176 = scalar_lea.vmem [#allocation3], 183
    %v3177 = vld [vmem:[%s3176] ss:$2 sm:$0x7f]
    %v3178 = vmax.f32 %v3175, %v3177
    %3179 = vst.msk [vmem:[#allocation4 + $0x2a] sm:$0x7f] %vm3106, %v3178
    %s3180 = scalar_lea.vmem [#allocation3], 196
    %v3181 = vld [vmem:[%s3180] ss:$2 sm:$0x7f]
    %s3182 = scalar_lea.vmem [#allocation3], 197
    %v3183 = vld [vmem:[%s3182] ss:$2 sm:$0x7f]
    %v3184 = vmax.f32 %v3181, %v3183
    %s3185 = scalar_lea.vmem [#allocation3], 210
    %v3186 = vld [vmem:[%s3185] ss:$2 sm:$0x7f]
    %v3187 = vmax.f32 %v3184, %v3186
    %s3188 = scalar_lea.vmem [#allocation3], 211
    %v3189 = vld [vmem:[%s3188] ss:$2 sm:$0x7f]
    %v3190 = vmax.f32 %v3187, %v3189
    %3191 = vst.msk [vmem:[#allocation4 + $0x31] sm:$0x7f] %vm3106, %v3190
    %s3192 = scalar_lea.vmem [#allocation3], 224
    %v3193 = vld [vmem:[%s3192] ss:$2 sm:$0x7f]
    %s3194 = scalar_lea.vmem [#allocation3], 225
    %v3195 = vld [vmem:[%s3194] ss:$2 sm:$0x7f]
    %v3196 = vmax.f32 %v3193, %v3195
    %s3197 = scalar_lea.vmem [#allocation3], 238
    %v3198 = vld [vmem:[%s3197] ss:$2 sm:$0x7f]
    %v3199 = vmax.f32 %v3196, %v3198
    %s3200 = scalar_lea.vmem [#allocation3], 239
    %v3201 = vld [vmem:[%s3200] ss:$2 sm:$0x7f]
    %v3202 = vmax.f32 %v3199, %v3201
    %3203 = vst.msk [vmem:[#allocation4 + $0x38] sm:$0x7f] %vm3106, %v3202
    %s3204 = scalar_lea.vmem [#allocation3], 252
    %v3205 = vld [vmem:[%s3204] ss:$2 sm:$0x7f]
    %s3206 = scalar_lea.vmem [#allocation3], 253
    %v3207 = vld [vmem:[%s3206] ss:$2 sm:$0x7f]
    %v3208 = vmax.f32 %v3205, %v3207
    %s3209 = scalar_lea.vmem [#allocation3], 266
    %v3210 = vld [vmem:[%s3209] ss:$2 sm:$0x7f]
    %v3211 = vmax.f32 %v3208, %v3210
    %s3212 = scalar_lea.vmem [#allocation3], 267
    %v3213 = vld [vmem:[%s3212] ss:$2 sm:$0x7f]
    %v3214 = vmax.f32 %v3211, %v3213
    %3215 = vst.msk [vmem:[#allocation4 + $0x3f] sm:$0x7f] %vm3106, %v3214
    %s3216 = scalar_lea.vmem [#allocation3], 280
    %v3217 = vld [vmem:[%s3216] ss:$2 sm:$0x7f]
    %s3218 = scalar_lea.vmem [#allocation3], 281
    %v3219 = vld [vmem:[%s3218] ss:$2 sm:$0x7f]
    %v3220 = vmax.f32 %v3217, %v3219
    %s3221 = scalar_lea.vmem [#allocation3], 294
    %v3222 = vld [vmem:[%s3221] ss:$2 sm:$0x7f]
    %v3223 = vmax.f32 %v3220, %v3222
    %s3224 = scalar_lea.vmem [#allocation3], 295
    %v3225 = vld [vmem:[%s3224] ss:$2 sm:$0x7f]
    %v3226 = vmax.f32 %v3223, %v3225
    %3227 = vst.msk [vmem:[#allocation4 + $0x46] sm:$0x7f] %vm3106, %v3226
    %s3228 = scalar_lea.vmem [#allocation3], 308
    %v3229 = vld [vmem:[%s3228] ss:$2 sm:$0x7f]
    %s3230 = scalar_lea.vmem [#allocation3], 309
    %v3231 = vld [vmem:[%s3230] ss:$2 sm:$0x7f]
    %v3232 = vmax.f32 %v3229, %v3231
    %s3233 = scalar_lea.vmem [#allocation3], 322
    %v3234 = vld [vmem:[%s3233] ss:$2 sm:$0x7f]
    %v3235 = vmax.f32 %v3232, %v3234
    %s3236 = scalar_lea.vmem [#allocation3], 323
    %v3237 = vld [vmem:[%s3236] ss:$2 sm:$0x7f]
    %v3238 = vmax.f32 %v3235, %v3237
    %3239 = vst.msk [vmem:[#allocation4 + $0x4d] sm:$0x7f] %vm3106, %v3238
    %s3240 = scalar_lea.vmem [#allocation3], 336
    %v3241 = vld [vmem:[%s3240] ss:$2 sm:$0x7f]
    %s3242 = scalar_lea.vmem [#allocation3], 337
    %v3243 = vld [vmem:[%s3242] ss:$2 sm:$0x7f]
    %v3244 = vmax.f32 %v3241, %v3243
    %s3245 = scalar_lea.vmem [#allocation3], 350
    %v3246 = vld [vmem:[%s3245] ss:$2 sm:$0x7f]
    %v3247 = vmax.f32 %v3244, %v3246
    %s3248 = scalar_lea.vmem [#allocation3], 351
    %v3249 = vld [vmem:[%s3248] ss:$2 sm:$0x7f]
    %v3250 = vmax.f32 %v3247, %v3249
    %3251 = vst.msk [vmem:[#allocation4 + $0x54] sm:$0x7f] %vm3106, %v3250
    %s3252 = scalar_lea.vmem [#allocation3], 364
    %v3253 = vld [vmem:[%s3252] ss:$2 sm:$0x7f]
    %s3254 = scalar_lea.vmem [#allocation3], 365
    %v3255 = vld [vmem:[%s3254] ss:$2 sm:$0x7f]
    %v3256 = vmax.f32 %v3253, %v3255
    %s3257 = scalar_lea.vmem [#allocation3], 378
    %v3258 = vld [vmem:[%s3257] ss:$2 sm:$0x7f]
    %v3259 = vmax.f32 %v3256, %v3258
    %s3260 = scalar_lea.vmem [#allocation3], 379
    %v3261 = vld [vmem:[%s3260] ss:$2 sm:$0x7f]
    %v3262 = vmax.f32 %v3259, %v3261
    %3263 = vst.msk [vmem:[#allocation4 + $0x5b] sm:$0x7f] %vm3106, %v3262
    %v3264 = vld [vmem:[#allocation4] sm:$0x7f]
    %vm3265 = vcmask 520192
    %3266 = vst.msk [vmem:[#allocation5] sm:$0x1f] %vm3265, %v3264
    %v3268 = vrot.slane %v3264, 1
    %3269 = vrot.lane.b32.xlu0 %v3268, 64
    %v3270 = vpop.permute.xlu0 %3269
    %vm3272 = vcmask 1044992
    %3273 = vst.msk [vmem:[#allocation5] sm:$0x1f] %vm3272, %v3270
    %v3274 = vrot.slane %v3264, 2
    %3276 = vst.msk [vmem:[#allocation5 + $0x8] sm:$0x1f] %vm3265, %v3274
    %v3277 = vld [vmem:[#allocation4 + $0x7] sm:$0x7f]
    %3279 = vrot.lane.b32.xlu0 %v3277, 64
    %v3280 = vpop.permute.xlu0 %3279
    %3282 = vst.msk [vmem:[#allocation5 + $0x8] sm:$0x1f] %vm3272, %v3280
    %v3283 = vrot.slane %v3277, 1
    %3285 = vst.msk [vmem:[#allocation5 + $0x10] sm:$0x1f] %vm3265, %v3283
    %v3286 = vrot.slane %v3277, 2
    %3287 = vrot.lane.b32.xlu0 %v3286, 64
    %v3288 = vpop.permute.xlu0 %3287
    %3290 = vst.msk [vmem:[#allocation5 + $0x10] sm:$0x1f] %vm3272, %v3288
    %v3291 = vld [vmem:[#allocation4 + $0xe] sm:$0x7f]
    %3292 = vst.msk [vmem:[#allocation5 + $0x18] sm:$0x1f] %vm3265, %v3291
    %v3294 = vrot.slane %v3291, 1
    %3295 = vrot.lane.b32.xlu0 %v3294, 64
    %v3296 = vpop.permute.xlu0 %3295
    %3298 = vst.msk [vmem:[#allocation5 + $0x18] sm:$0x1f] %vm3272, %v3296
    %v3299 = vrot.slane %v3291, 2
    %3301 = vst.msk [vmem:[#allocation5 + $0x20] sm:$0x1f] %vm3265, %v3299
    %v3302 = vld [vmem:[#allocation4 + $0x7] sm:$0x7f]
    %v3304 = vrot.slane %v3302, 3
    %vm3306 = vcmask 523269
    %3307 = vst.msk [vmem:[#allocation5] sm:$0xe0] %vm3306, %v3304
    %vm3308 = vcmask 517120
    %3309 = vst.msk [vmem:[#allocation5 + $0x28] sm:$0x3] %vm3308, %v3304
    %v3310 = vrot.slane %v3302, 4
    %3311 = vrot.lane.b32.xlu0 %v3310, 64
    %v3312 = vpop.permute.xlu0 %3311
    %vm3314 = vcmask 1048069
    %3315 = vst.msk [vmem:[#allocation5] sm:$0xe0] %vm3314, %v3312
    %vm3316 = vcmask 1041920
    %3317 = vst.msk [vmem:[#allocation5 + $0x28] sm:$0x3] %vm3316, %v3312
    %v3318 = vrot.slane %v3302, 5
    %3320 = vst.msk [vmem:[#allocation5 + $0x8] sm:$0xe0] %vm3306, %v3318
    %3321 = vst.msk [vmem:[#allocation5 + $0x30] sm:$0x3] %vm3308, %v3318
    %v3322 = vld [vmem:[#allocation4 + $0xe] sm:$0x7f]
    %v3324 = vrot.slane %v3322, 3
    %3325 = vrot.lane.b32.xlu0 %v3324, 64
    %v3326 = vpop.permute.xlu0 %3325
    %3328 = vst.msk [vmem:[#allocation5 + $0x8] sm:$0xe0] %vm3314, %v3326
    %3329 = vst.msk [vmem:[#allocation5 + $0x30] sm:$0x3] %vm3316, %v3326
    %v3330 = vrot.slane %v3322, 4
    %3332 = vst.msk [vmem:[#allocation5 + $0x10] sm:$0xe0] %vm3306, %v3330
    %3333 = vst.msk [vmem:[#allocation5 + $0x38] sm:$0x3] %vm3308, %v3330
    %v3334 = vrot.slane %v3322, 5
    %3335 = vrot.lane.b32.xlu0 %v3334, 64
    %v3336 = vpop.permute.xlu0 %3335
    %3338 = vst.msk [vmem:[#allocation5 + $0x10] sm:$0xe0] %vm3314, %v3336
    %3339 = vst.msk [vmem:[#allocation5 + $0x38] sm:$0x3] %vm3316, %v3336
    %v3340 = vld [vmem:[#allocation4 + $0x15] sm:$0x7f]
    %v3342 = vrot.slane %v3340, 3
    %3344 = vst.msk [vmem:[#allocation5 + $0x18] sm:$0xe0] %vm3306, %v3342
    %3345 = vst.msk [vmem:[#allocation5 + $0x40] sm:$0x3] %vm3308, %v3342
    %v3346 = vrot.slane %v3340, 4
    %3347 = vrot.lane.b32.xlu0 %v3346, 64
    %v3348 = vpop.permute.xlu0 %3347
    %3350 = vst.msk [vmem:[#allocation5 + $0x18] sm:$0xe0] %vm3314, %v3348
    %3351 = vst.msk [vmem:[#allocation5 + $0x40] sm:$0x3] %vm3316, %v3348
    %v3352 = vrot.slane %v3340, 5
    %3354 = vst.msk [vmem:[#allocation5 + $0x20] sm:$0xe0] %vm3306, %v3352
    %3355 = vst.msk [vmem:[#allocation5 + $0x48] sm:$0x3] %vm3308, %v3352
    %v3356 = vld [vmem:[#allocation4 + $0xe] sm:$0x7f]
    %v3358 = vrot.slane %v3356, 6
    %vm3360 = vcmask 522242
    %3361 = vst.msk [vmem:[#allocation5 + $0x28] sm:$0x7c] %vm3360, %v3358
    %v3362 = vrot.slane %v3356, 7
    %3363 = vrot.lane.b32.xlu0 %v3362, 64
    %v3364 = vpop.permute.xlu0 %3363
    %vm3366 = vcmask 1047042
    %3367 = vst.msk [vmem:[#allocation5 + $0x28] sm:$0x7c] %vm3366, %v3364
    %3368 = vst.msk [vmem:[#allocation5 + $0x30] sm:$0x7c] %vm3360, %v3356
    %v3369 = vld [vmem:[#allocation4 + $0x15] sm:$0x7f]
    %v3371 = vrot.slane %v3369, 6
    %3372 = vrot.lane.b32.xlu0 %v3371, 64
    %v3373 = vpop.permute.xlu0 %3372
    %3375 = vst.msk [vmem:[#allocation5 + $0x30] sm:$0x7c] %vm3366, %v3373
    %v3376 = vrot.slane %v3369, 7
    %3378 = vst.msk [vmem:[#allocation5 + $0x38] sm:$0x7c] %vm3360, %v3376
    %3379 = vrot.lane.b32.xlu0 %v3369, 64
    %v3380 = vpop.permute.xlu0 %3379
    %3382 = vst.msk [vmem:[#allocation5 + $0x38] sm:$0x7c] %vm3366, %v3380
    %v3383 = vld [vmem:[#allocation4 + $0x1c] sm:$0x7f]
    %v3385 = vrot.slane %v3383, 6
    %3387 = vst.msk [vmem:[#allocation5 + $0x40] sm:$0x7c] %vm3360, %v3385
    %v3388 = vrot.slane %v3383, 7
    %3389 = vrot.lane.b32.xlu0 %v3388, 64
    %v3390 = vpop.permute.xlu0 %3389
    %3392 = vst.msk [vmem:[#allocation5 + $0x40] sm:$0x7c] %vm3366, %v3390
    %3393 = vst.msk [vmem:[#allocation5 + $0x48] sm:$0x7c] %vm3360, %v3383
    %v3394 = vld [vmem:[#allocation4 + $0x15] sm:$0x7f]
    %v3396 = vrot.slane %v3394, 1
    %vm3398 = vcmask 523271
    %3399 = vst.msk [vmem:[#allocation5 + $0x28] sm:$0x80] %vm3398, %v3396
    %vm3400 = vcmask 519168
    %3401 = vst.msk [vmem:[#allocation5 + $0x50] sm:$0xf] %vm3400, %v3396
    %v3402 = vrot.slane %v3394, 2
    %3403 = vrot.lane.b32.xlu0 %v3402, 64
    %v3404 = vpop.permute.xlu0 %3403
    %vm3406 = vcmask 1048071
    %3407 = vst.msk [vmem:[#allocation5 + $0x28] sm:$0x80] %vm3406, %v3404
    %vm3408 = vcmask 1043968
    %3409 = vst.msk [vmem:[#allocation5 + $0x50] sm:$0xf] %vm3408, %v3404
    %v3410 = vrot.slane %v3394, 3
    %3412 = vst.msk [vmem:[#allocation5 + $0x30] sm:$0x80] %vm3398, %v3410
    %3413 = vst.msk [vmem:[#allocation5 + $0x58] sm:$0xf] %vm3400, %v3410
    %v3414 = vld [vmem:[#allocation4 + $0x1c] sm:$0x7f]
    %v3416 = vrot.slane %v3414, 1
    %3417 = vrot.lane.b32.xlu0 %v3416, 64
    %v3418 = vpop.permute.xlu0 %3417
    %3420 = vst.msk [vmem:[#allocation5 + $0x30] sm:$0x80] %vm3406, %v3418
    %3421 = vst.msk [vmem:[#allocation5 + $0x58] sm:$0xf] %vm3408, %v3418
    %v3422 = vrot.slane %v3414, 2
    %3424 = vst.msk [vmem:[#allocation5 + $0x38] sm:$0x80] %vm3398, %v3422
    %3425 = vst.msk [vmem:[#allocation5 + $0x60] sm:$0xf] %vm3400, %v3422
    %v3426 = vrot.slane %v3414, 3
    %3427 = vrot.lane.b32.xlu0 %v3426, 64
    %v3428 = vpop.permute.xlu0 %3427
    %3430 = vst.msk [vmem:[#allocation5 + $0x38] sm:$0x80] %vm3406, %v3428
    %3431 = vst.msk [vmem:[#allocation5 + $0x60] sm:$0xf] %vm3408, %v3428
    %v3432 = vld [vmem:[#allocation4 + $0x23] sm:$0x7f]
    %v3434 = vrot.slane %v3432, 1
    %3436 = vst.msk [vmem:[#allocation5 + $0x40] sm:$0x80] %vm3398, %v3434
    %3437 = vst.msk [vmem:[#allocation5 + $0x68] sm:$0xf] %vm3400, %v3434
    %v3438 = vrot.slane %v3432, 2
    %3439 = vrot.lane.b32.xlu0 %v3438, 64
    %v3440 = vpop.permute.xlu0 %3439
    %3442 = vst.msk [vmem:[#allocation5 + $0x40] sm:$0x80] %vm3406, %v3440
    %3443 = vst.msk [vmem:[#allocation5 + $0x68] sm:$0xf] %vm3408, %v3440
    %v3444 = vrot.slane %v3432, 3
    %3446 = vst.msk [vmem:[#allocation5 + $0x48] sm:$0x80] %vm3398, %v3444
    %3447 = vst.msk [vmem:[#allocation5 + $0x70] sm:$0xf] %vm3400, %v3444
    %v3448 = vld [vmem:[#allocation4 + $0x1c] sm:$0x7f]
    %v3450 = vrot.slane %v3448, 4
    %vm3452 = vcmask 523268
    %3453 = vst.msk [vmem:[#allocation5 + $0x50] sm:$0xf0] %vm3452, %v3450
    %vm3454 = vcmask 516096
    %3455 = vst.msk [vmem:[#allocation5 + $0x78] sm:$0x1] %vm3454, %v3450
    %v3456 = vrot.slane %v3448, 5
    %3457 = vrot.lane.b32.xlu0 %v3456, 64
    %v3458 = vpop.permute.xlu0 %3457
    %vm3460 = vcmask 1048068
    %3461 = vst.msk [vmem:[#allocation5 + $0x50] sm:$0xf0] %vm3460, %v3458
    %vm3462 = vcmask 1040896
    %3463 = vst.msk [vmem:[#allocation5 + $0x78] sm:$0x1] %vm3462, %v3458
    %v3464 = vrot.slane %v3448, 6
    %3466 = vst.msk [vmem:[#allocation5 + $0x58] sm:$0xf0] %vm3452, %v3464
    %3467 = vst.msk [vmem:[#allocation5 + $0x80] sm:$0x1] %vm3454, %v3464
    %v3468 = vld [vmem:[#allocation4 + $0x23] sm:$0x7f]
    %v3470 = vrot.slane %v3468, 4
    %3471 = vrot.lane.b32.xlu0 %v3470, 64
    %v3472 = vpop.permute.xlu0 %3471
    %3474 = vst.msk [vmem:[#allocation5 + $0x58] sm:$0xf0] %vm3460, %v3472
    %3475 = vst.msk [vmem:[#allocation5 + $0x80] sm:$0x1] %vm3462, %v3472
    %v3476 = vrot.slane %v3468, 5
    %3478 = vst.msk [vmem:[#allocation5 + $0x60] sm:$0xf0] %vm3452, %v3476
    %3479 = vst.msk [vmem:[#allocation5 + $0x88] sm:$0x1] %vm3454, %v3476
    %v3480 = vrot.slane %v3468, 6
    %3481 = vrot.lane.b32.xlu0 %v3480, 64
    %v3482 = vpop.permute.xlu0 %3481
    %3484 = vst.msk [vmem:[#allocation5 + $0x60] sm:$0xf0] %vm3460, %v3482
    %3485 = vst.msk [vmem:[#allocation5 + $0x88] sm:$0x1] %vm3462, %v3482
    %v3486 = vld [vmem:[#allocation4 + $0x2a] sm:$0x7f]
    %v3488 = vrot.slane %v3486, 4
    %3490 = vst.msk [vmem:[#allocation5 + $0x68] sm:$0xf0] %vm3452, %v3488
    %3491 = vst.msk [vmem:[#allocation5 + $0x90] sm:$0x1] %vm3454, %v3488
    %v3492 = vrot.slane %v3486, 5
    %3493 = vrot.lane.b32.xlu0 %v3492, 64
    %v3494 = vpop.permute.xlu0 %3493
    %3496 = vst.msk [vmem:[#allocation5 + $0x68] sm:$0xf0] %vm3460, %v3494
    %3497 = vst.msk [vmem:[#allocation5 + $0x90] sm:$0x1] %vm3462, %v3494
    %v3498 = vrot.slane %v3486, 6
    %3500 = vst.msk [vmem:[#allocation5 + $0x70] sm:$0xf0] %vm3452, %v3498
    %3501 = vst.msk [vmem:[#allocation5 + $0x98] sm:$0x1] %vm3454, %v3498
    %v3502 = vld [vmem:[#allocation4 + $0x31] sm:$0x7f]
    %v3504 = vrot.slane %v3502, 7
    %vm3506 = vcmask 521217
    %3507 = vst.msk [vmem:[#allocation5 + $0x78] sm:$0x3e] %vm3506, %v3504
    %3508 = vrot.lane.b32.xlu0 %v3502, 64
    %v3509 = vpop.permute.xlu0 %3508
    %vm3511 = vcmask 1046017
    %3512 = vst.msk [vmem:[#allocation5 + $0x78] sm:$0x3e] %vm3511, %v3509
    %v3513 = vrot.slane %v3502, 1
    %3515 = vst.msk [vmem:[#allocation5 + $0x80] sm:$0x3e] %vm3506, %v3513
    %v3516 = vld [vmem:[#allocation4 + $0x38] sm:$0x7f]
    %v3518 = vrot.slane %v3516, 7
    %3519 = vrot.lane.b32.xlu0 %v3518, 64
    %v3520 = vpop.permute.xlu0 %3519
    %3522 = vst.msk [vmem:[#allocation5 + $0x80] sm:$0x3e] %vm3511, %v3520
    %3523 = vst.msk [vmem:[#allocation5 + $0x88] sm:$0x3e] %vm3506, %v3516
    %v3524 = vrot.slane %v3516, 1
    %3525 = vrot.lane.b32.xlu0 %v3524, 64
    %v3526 = vpop.permute.xlu0 %3525
    %3528 = vst.msk [vmem:[#allocation5 + $0x88] sm:$0x3e] %vm3511, %v3526
    %v3529 = vld [vmem:[#allocation4 + $0x3f] sm:$0x7f]
    %v3531 = vrot.slane %v3529, 7
    %3533 = vst.msk [vmem:[#allocation5 + $0x90] sm:$0x3e] %vm3506, %v3531
    %3534 = vrot.lane.b32.xlu0 %v3529, 64
    %v3535 = vpop.permute.xlu0 %3534
    %3537 = vst.msk [vmem:[#allocation5 + $0x90] sm:$0x3e] %vm3511, %v3535
    %v3538 = vrot.slane %v3529, 1
    %3540 = vst.msk [vmem:[#allocation5 + $0x98] sm:$0x3e] %vm3506, %v3538
    %v3541 = vld [vmem:[#allocation4 + $0x38] sm:$0x7f]
    %v3543 = vrot.slane %v3541, 2
    %vm3545 = vcmask 523270
    %3546 = vst.msk [vmem:[#allocation5 + $0x78] sm:$0xc0] %vm3545, %v3543
    %vm3547 = vcmask 518144
    %3548 = vst.msk [vmem:[#allocation5 + $0xa0] sm:$0x7] %vm3547, %v3543
    %v3549 = vrot.slane %v3541, 3
    %3550 = vrot.lane.b32.xlu0 %v3549, 64
    %v3551 = vpop.permute.xlu0 %3550
    %vm3553 = vcmask 1048070
    %3554 = vst.msk [vmem:[#allocation5 + $0x78] sm:$0xc0] %vm3553, %v3551
    %vm3555 = vcmask 1042944
    %3556 = vst.msk [vmem:[#allocation5 + $0xa0] sm:$0x7] %vm3555, %v3551
    %v3557 = vrot.slane %v3541, 4
    %3559 = vst.msk [vmem:[#allocation5 + $0x80] sm:$0xc0] %vm3545, %v3557
    %3560 = vst.msk [vmem:[#allocation5 + $0xa8] sm:$0x7] %vm3547, %v3557
    %v3561 = vld [vmem:[#allocation4 + $0x3f] sm:$0x7f]
    %v3563 = vrot.slane %v3561, 2
    %3564 = vrot.lane.b32.xlu0 %v3563, 64
    %v3565 = vpop.permute.xlu0 %3564
    %3567 = vst.msk [vmem:[#allocation5 + $0x80] sm:$0xc0] %vm3553, %v3565
    %3568 = vst.msk [vmem:[#allocation5 + $0xa8] sm:$0x7] %vm3555, %v3565
    %v3569 = vrot.slane %v3561, 3
    %3571 = vst.msk [vmem:[#allocation5 + $0x88] sm:$0xc0] %vm3545, %v3569
    %3572 = vst.msk [vmem:[#allocation5 + $0xb0] sm:$0x7] %vm3547, %v3569
    %v3573 = vrot.slane %v3561, 4
    %3574 = vrot.lane.b32.xlu0 %v3573, 64
    %v3575 = vpop.permute.xlu0 %3574
    %3577 = vst.msk [vmem:[#allocation5 + $0x88] sm:$0xc0] %vm3553, %v3575
    %3578 = vst.msk [vmem:[#allocation5 + $0xb0] sm:$0x7] %vm3555, %v3575
    %v3579 = vld [vmem:[#allocation4 + $0x46] sm:$0x7f]
    %v3581 = vrot.slane %v3579, 2
    %3583 = vst.msk [vmem:[#allocation5 + $0x90] sm:$0xc0] %vm3545, %v3581
    %3584 = vst.msk [vmem:[#allocation5 + $0xb8] sm:$0x7] %vm3547, %v3581
    %v3585 = vrot.slane %v3579, 3
    %3586 = vrot.lane.b32.xlu0 %v3585, 64
    %v3587 = vpop.permute.xlu0 %3586
    %3589 = vst.msk [vmem:[#allocation5 + $0x90] sm:$0xc0] %vm3553, %v3587
    %3590 = vst.msk [vmem:[#allocation5 + $0xb8] sm:$0x7] %vm3555, %v3587
    %v3591 = vrot.slane %v3579, 4
    %3593 = vst.msk [vmem:[#allocation5 + $0x98] sm:$0xc0] %vm3545, %v3591
    %3594 = vst.msk [vmem:[#allocation5 + $0xc0] sm:$0x7] %vm3547, %v3591
    %v3595 = vld [vmem:[#allocation4 + $0x3f] sm:$0x7f]
    %v3597 = vrot.slane %v3595, 5
    %vm3599 = vcmask 523267
    %3600 = vst.msk [vmem:[#allocation5 + $0xa0] sm:$0xf8] %vm3599, %v3597
    %v3601 = vrot.slane %v3595, 6
    %3602 = vrot.lane.b32.xlu0 %v3601, 64
    %v3603 = vpop.permute.xlu0 %3602
    %vm3605 = vcmask 1048067
    %3606 = vst.msk [vmem:[#allocation5 + $0xa0] sm:$0xf8] %vm3605, %v3603
    %v3607 = vrot.slane %v3595, 7
    %3609 = vst.msk [vmem:[#allocation5 + $0xa8] sm:$0xf8] %vm3599, %v3607
    %v3610 = vld [vmem:[#allocation4 + $0x46] sm:$0x7f]
    %v3612 = vrot.slane %v3610, 5
    %3613 = vrot.lane.b32.xlu0 %v3612, 64
    %v3614 = vpop.permute.xlu0 %3613
    %3616 = vst.msk [vmem:[#allocation5 + $0xa8] sm:$0xf8] %vm3605, %v3614
    %v3617 = vrot.slane %v3610, 6
    %3619 = vst.msk [vmem:[#allocation5 + $0xb0] sm:$0xf8] %vm3599, %v3617
    %v3620 = vrot.slane %v3610, 7
    %3621 = vrot.lane.b32.xlu0 %v3620, 64
    %v3622 = vpop.permute.xlu0 %3621
    %3624 = vst.msk [vmem:[#allocation5 + $0xb0] sm:$0xf8] %vm3605, %v3622
    %v3625 = vld [vmem:[#allocation4 + $0x4d] sm:$0x7f]
    %v3627 = vrot.slane %v3625, 5
    %3629 = vst.msk [vmem:[#allocation5 + $0xb8] sm:$0xf8] %vm3599, %v3627
    %v3630 = vrot.slane %v3625, 6
    %3631 = vrot.lane.b32.xlu0 %v3630, 64
    %v3632 = vpop.permute.xlu0 %3631
    %3634 = vst.msk [vmem:[#allocation5 + $0xb8] sm:$0xf8] %vm3605, %v3632
    %v3635 = vrot.slane %v3625, 7
    %3637 = vst.msk [vmem:[#allocation5 + $0xc0] sm:$0xf8] %vm3599, %v3635
    %v3638 = vld [vmem:[#allocation4 + $0x46] sm:$0x7f]
    %3639 = vst.msk [vmem:[#allocation5 + $0xc8] sm:$0x1f] %vm3265, %v3638
    %v3641 = vrot.slane %v3638, 1
    %3642 = vrot.lane.b32.xlu0 %v3641, 64
    %v3643 = vpop.permute.xlu0 %3642
    %3645 = vst.msk [vmem:[#allocation5 + $0xc8] sm:$0x1f] %vm3272, %v3643
    %v3646 = vrot.slane %v3638, 2
    %3648 = vst.msk [vmem:[#allocation5 + $0xd0] sm:$0x1f] %vm3265, %v3646
    %v3649 = vld [vmem:[#allocation4 + $0x4d] sm:$0x7f]
    %3651 = vrot.lane.b32.xlu0 %v3649, 64
    %v3652 = vpop.permute.xlu0 %3651
    %3654 = vst.msk [vmem:[#allocation5 + $0xd0] sm:$0x1f] %vm3272, %v3652
    %v3655 = vrot.slane %v3649, 1
    %3657 = vst.msk [vmem:[#allocation5 + $0xd8] sm:$0x1f] %vm3265, %v3655
    %v3658 = vrot.slane %v3649, 2
    %3659 = vrot.lane.b32.xlu0 %v3658, 64
    %v3660 = vpop.permute.xlu0 %3659
    %3662 = vst.msk [vmem:[#allocation5 + $0xd8] sm:$0x1f] %vm3272, %v3660
    %v3663 = vld [vmem:[#allocation4 + $0x54] sm:$0x7f]
    %3664 = vst.msk [vmem:[#allocation5 + $0xe0] sm:$0x1f] %vm3265, %v3663
    %v3666 = vrot.slane %v3663, 1
    %3667 = vrot.lane.b32.xlu0 %v3666, 64
    %v3668 = vpop.permute.xlu0 %3667
    %3670 = vst.msk [vmem:[#allocation5 + $0xe0] sm:$0x1f] %vm3272, %v3668
    %v3671 = vrot.slane %v3663, 2
    %3673 = vst.msk [vmem:[#allocation5 + $0xe8] sm:$0x1f] %vm3265, %v3671
    %v3674 = vld [vmem:[#allocation4 + $0x4d] sm:$0x7f]
    %v3676 = vrot.slane %v3674, 3
    %3678 = vst.msk [vmem:[#allocation5 + $0xc8] sm:$0xe0] %vm3306, %v3676
    %3679 = vst.msk [vmem:[#allocation5 + $0xf0] sm:$0x3] %vm3308, %v3676
    %v3680 = vrot.slane %v3674, 4
    %3681 = vrot.lane.b32.xlu0 %v3680, 64
    %v3682 = vpop.permute.xlu0 %3681
    %3684 = vst.msk [vmem:[#allocation5 + $0xc8] sm:$0xe0] %vm3314, %v3682
    %3685 = vst.msk [vmem:[#allocation5 + $0xf0] sm:$0x3] %vm3316, %v3682
    %v3686 = vrot.slane %v3674, 5
    %3688 = vst.msk [vmem:[#allocation5 + $0xd0] sm:$0xe0] %vm3306, %v3686
    %3689 = vst.msk [vmem:[#allocation5 + $0xf8] sm:$0x3] %vm3308, %v3686
    %v3690 = vld [vmem:[#allocation4 + $0x54] sm:$0x7f]
    %v3692 = vrot.slane %v3690, 3
    %3693 = vrot.lane.b32.xlu0 %v3692, 64
    %v3694 = vpop.permute.xlu0 %3693
    %3696 = vst.msk [vmem:[#allocation5 + $0xd0] sm:$0xe0] %vm3314, %v3694
    %3697 = vst.msk [vmem:[#allocation5 + $0xf8] sm:$0x3] %vm3316, %v3694
    %v3698 = vrot.slane %v3690, 4
    %3700 = vst.msk [vmem:[#allocation5 + $0xd8] sm:$0xe0] %vm3306, %v3698
    %3701 = vst.msk [vmem:[#allocation5 + $0x100] sm:$0x3] %vm3308, %v3698
    %v3702 = vrot.slane %v3690, 5
    %3703 = vrot.lane.b32.xlu0 %v3702, 64
    %v3704 = vpop.permute.xlu0 %3703
    %3706 = vst.msk [vmem:[#allocation5 + $0xd8] sm:$0xe0] %vm3314, %v3704
    %3707 = vst.msk [vmem:[#allocation5 + $0x100] sm:$0x3] %vm3316, %v3704
    %v3708 = vld [vmem:[#allocation4 + $0x5b] sm:$0x7f]
    %v3710 = vrot.slane %v3708, 3
    %3712 = vst.msk [vmem:[#allocation5 + $0xe0] sm:$0xe0] %vm3306, %v3710
    %3713 = vst.msk [vmem:[#allocation5 + $0x108] sm:$0x3] %vm3308, %v3710
    %v3714 = vrot.slane %v3708, 4
    %3715 = vrot.lane.b32.xlu0 %v3714, 64
    %v3716 = vpop.permute.xlu0 %3715
    %3718 = vst.msk [vmem:[#allocation5 + $0xe0] sm:$0xe0] %vm3314, %v3716
    %3719 = vst.msk [vmem:[#allocation5 + $0x108] sm:$0x3] %vm3316, %v3716
    %v3720 = vrot.slane %v3708, 5
    %3722 = vst.msk [vmem:[#allocation5 + $0xe8] sm:$0xe0] %vm3306, %v3720
    %3723 = vst.msk [vmem:[#allocation5 + $0x110] sm:$0x3] %vm3308, %v3720
    %v3724 = vld [vmem:[#allocation5] sm:$0xff]
    %v3725 = vld [vmem:[#allocation5 + $0x8] sm:$0xff]
    %v3726 = vld [vmem:[#allocation5 + $0x10] sm:$0xff]
    %v3727 = vld [vmem:[#allocation5 + $0x18] sm:$0xff]
    %v3728 = vld [vmem:[#allocation5 + $0x20] sm:$0xff]
    %v3729 = vld [vmem:[#allocation5 + $0x28] sm:$0xff]
    %v3730 = vld [vmem:[#allocation5 + $0x30] sm:$0xff]
    %v3731 = vld [vmem:[#allocation5 + $0x38] sm:$0xff]
    %v3732 = vld [vmem:[#allocation5 + $0x40] sm:$0xff]
    %v3733 = vld [vmem:[#allocation5 + $0x48] sm:$0xff]
    %v3734 = vld [vmem:[#allocation5 + $0x50] sm:$0xff]
    %v3735 = vld [vmem:[#allocation5 + $0x58] sm:$0xff]
    %v3736 = vld [vmem:[#allocation5 + $0x60] sm:$0xff]
    %v3737 = vld [vmem:[#allocation5 + $0x68] sm:$0xff]
    %v3738 = vld [vmem:[#allocation5 + $0x70] sm:$0xff]
    %v3739 = vld [vmem:[#allocation5 + $0x78] sm:$0xff]
    %v3740 = vld [vmem:[#allocation5 + $0x80] sm:$0xff]
    %v3741 = vld [vmem:[#allocation5 + $0x88] sm:$0xff]
    %v3742 = vld [vmem:[#allocation5 + $0x90] sm:$0xff]
    %v3743 = vld [vmem:[#allocation5 + $0x98] sm:$0xff]
    %v3744 = vld [vmem:[#allocation5 + $0xa0] sm:$0xff]
    %v3745 = vld [vmem:[#allocation5 + $0xa8] sm:$0xff]
    %v3746 = vld [vmem:[#allocation5 + $0xb0] sm:$0xff]
    %v3747 = vld [vmem:[#allocation5 + $0xb8] sm:$0xff]
    %v3748 = vld [vmem:[#allocation5 + $0xc0] sm:$0xff]
    %v3749 = vld [vmem:[#allocation5 + $0xc8] sm:$0xff]
    %v3750 = vld [vmem:[#allocation5 + $0xd0] sm:$0xff]
    %v3751 = vld [vmem:[#allocation5 + $0xd8] sm:$0xff]
    %v3752 = vld [vmem:[#allocation5 + $0xe0] sm:$0xff]
    %v3753 = vld [vmem:[#allocation5 + $0xe8] sm:$0xff]
    %v3754 = vld [vmem:[#allocation5 + $0xf0] sm:$0x3]
    %v3755 = vld [vmem:[#allocation5 + $0xf8] sm:$0x3]
    %v3756 = vld [vmem:[#allocation5 + $0x100] sm:$0x3]
    %v3757 = vld [vmem:[#allocation5 + $0x108] sm:$0x3]
    %v3758 = vld [vmem:[#allocation5 + $0x110] sm:$0x3]
    %v3759 = vpack.c.bf16 %v3729, %v3724
    %v3760 = vpack.c.bf16 %v3730, %v3725
    %v3761 = vpack.c.bf16 %v3731, %v3726
    %v3762 = vpack.c.bf16 %v3732, %v3727
    %v3763 = vpack.c.bf16 %v3733, %v3728
    %v3764 = vpack.c.bf16 %v3739, %v3734
    %v3765 = vpack.c.bf16 %v3740, %v3735
    %v3766 = vpack.c.bf16 %v3741, %v3736
    %v3767 = vpack.c.bf16 %v3742, %v3737
    %v3768 = vpack.c.bf16 %v3743, %v3738
    %v3769 = vpack.c.bf16 %v3749, %v3744
    %v3770 = vpack.c.bf16 %v3750, %v3745
    %v3771 = vpack.c.bf16 %v3751, %v3746
    %v3772 = vpack.c.bf16 %v3752, %v3747
    %v3773 = vpack.c.bf16 %v3753, %v3748
    %v3774 = vpack.c.bf16 %v3754, %v3754
    %v3775 = vpack.c.bf16 %v3755, %v3755
    %v3776 = vpack.c.bf16 %v3756, %v3756
    %v3777 = vpack.c.bf16 %v3757, %v3757
    %v3778 = vpack.c.bf16 %v3758, %v3758
    %v3779 = vld [vmem:[%s2] sm:$0xf]
    %v3780 = vld [vmem:[%s2 + $0x4] sm:$0xf]
    %v3781 = vld [vmem:[%s2 + $0x8] sm:$0xf]
    %v3782 = vld [vmem:[%s2 + $0xc] sm:$0xf]
    %v3783 = vld [vmem:[%s2 + $0x10] sm:$0xf]
    %v3784 = vld [vmem:[%s2 + $0x14] sm:$0xf]
    %v3785 = vld [vmem:[%s2 + $0x18] sm:$0xf]
    %v3786 = vld [vmem:[%s2 + $0x1c] sm:$0xf]
    %v3787 = vld [vmem:[%s2 + $0x20] sm:$0xf]
    %v3788 = vld [vmem:[%s2 + $0x24] sm:$0xf]
    %v3789 = vld [vmem:[%s2 + $0x28] sm:$0xf]
    %v3790 = vld [vmem:[%s2 + $0x2c] sm:$0xf]
    %v3791 = vld [vmem:[%s2 + $0x30] sm:$0xf]
    %v3792 = vld [vmem:[%s2 + $0x34] sm:$0xf]
    %v3793 = vld [vmem:[%s2 + $0x38] sm:$0xf]
    %v3794 = vld [vmem:[%s2 + $0x3c] sm:$0xf]
    %v3795 = vld [vmem:[%s2 + $0x40] sm:$0xf]
    %v3796 = vld [vmem:[%s2 + $0x44] sm:$0xf]
    %v3797 = vld [vmem:[%s2 + $0x48] sm:$0xf]
    %v3798 = vld [vmem:[%s2 + $0x4c] sm:$0xf]
    %v3799 = vld [vmem:[%s2 + $0x50] sm:$0xf]
    %v3800 = vld [vmem:[%s2 + $0x54] sm:$0xf]
    %v3801 = vld [vmem:[%s2 + $0x58] sm:$0xf]
    %v3802 = vld [vmem:[%s2 + $0x5c] sm:$0xf]
    %v3803 = vld [vmem:[%s2 + $0x60] sm:$0xf]
    %v3804 = vld [vmem:[%s2 + $0x64] sm:$0xf]
    %v3805 = vld [vmem:[%s2 + $0x68] sm:$0xf]
    %v3806 = vld [vmem:[%s2 + $0x6c] sm:$0xf]
    %v3807 = vld [vmem:[%s2 + $0x70] sm:$0xf]
    %v3808 = vld [vmem:[%s2 + $0x74] sm:$0xf]
    %v3809 = vld [vmem:[%s2 + $0x78] sm:$0xf]
    %v3810 = vld [vmem:[%s2 + $0x7c] sm:$0xf]
    %v3811 = vld [vmem:[%s2 + $0x80] sm:$0xf]
    %v3812 = vld [vmem:[%s2 + $0x84] sm:$0xf]
    %v3813 = vld [vmem:[%s2 + $0x88] sm:$0xf]
    %v3814 = vld [vmem:[%s2 + $0x8c] sm:$0xf]
    %v3815 = vld [vmem:[%s2 + $0x90] sm:$0xf]
    %v3816 = vld [vmem:[%s2 + $0x94] sm:$0xf]
    %v3817 = vld [vmem:[%s2 + $0x98] sm:$0xf]
    %v3818 = vld [vmem:[%s2 + $0x9c] sm:$0xf]
    %v3819 = vld [vmem:[%s2 + $0xa0] sm:$0xf]
    %v3820 = vld [vmem:[%s2 + $0xa4] sm:$0xf]
    %v3821 = vld [vmem:[%s2 + $0xa8] sm:$0xf]
    %v3822 = vld [vmem:[%s2 + $0xac] sm:$0xf]
    %v3823 = vld [vmem:[%s2 + $0xb0] sm:$0xf]
    %v3824 = vld [vmem:[%s2 + $0xb4] sm:$0xf]
    %v3825 = vld [vmem:[%s2 + $0xb8] sm:$0xf]
    %v3826 = vld [vmem:[%s2 + $0xbc] sm:$0xf]
    %v3827 = vld [vmem:[%s2 + $0xc0] sm:$0xf]
    %v3828 = vld [vmem:[%s2 + $0xc4] sm:$0xf]
    %v3829 = vld [vmem:[%s2 + $0xc8] sm:$0xf]
    %v3830 = vld [vmem:[%s2 + $0xcc] sm:$0xf]
    %v3831 = vld [vmem:[%s2 + $0xd0] sm:$0xf]
    %v3832 = vld [vmem:[%s2 + $0xd4] sm:$0xf]
    %v3833 = vld [vmem:[%s2 + $0xd8] sm:$0xf]
    %v3834 = vld [vmem:[%s2 + $0xdc] sm:$0xf]
    %v3835 = vld [vmem:[%s2 + $0xe0] sm:$0xf]
    %v3836 = vld [vmem:[%s2 + $0xe4] sm:$0xf]
    %v3837 = vld [vmem:[%s2 + $0xe8] sm:$0xf]
    %v3838 = vld [vmem:[%s2 + $0xec] sm:$0xf]
    %v3839 = vld [vmem:[%s2 + $0xf0] sm:$0xf]
    %v3840 = vld [vmem:[%s2 + $0xf4] sm:$0xf]
    %v3841 = vld [vmem:[%s2 + $0xf8] sm:$0xf]
    %v3842 = vld [vmem:[%s2 + $0xfc] sm:$0xf]
    %v3843 = vld [vmem:[%s2 + $0x100] sm:$0xf]
    %v3844 = vld [vmem:[%s2 + $0x104] sm:$0xf]
    %v3845 = vld [vmem:[%s2 + $0x108] sm:$0xf]
    %v3846 = vld [vmem:[%s2 + $0x10c] sm:$0xf]
    %v3847 = vld [vmem:[%s2 + $0x110] sm:$0xf]
    %v3848 = vld [vmem:[%s2 + $0x114] sm:$0xf]
    %v3849 = vld [vmem:[%s2 + $0x118] sm:$0xf]
    %v3850 = vld [vmem:[%s2 + $0x11c] sm:$0xf]
    %v3923 = vunpack.c.l.b16 %v3779
    %v3924 = vunpack.c.l.b16 %v3780
    %v3925 = vunpack.c.l.b16 %v3781
    %v3926 = vunpack.c.l.b16 %v3782
    %v3927 = vunpack.c.l.b16 %v3783
    %v3928 = vunpack.c.l.b16 %v3784
    %v3929 = vunpack.c.l.b16 %v3785
    %v3930 = vunpack.c.l.b16 %v3786
    %v3931 = vunpack.c.l.b16 %v3787
    %v3932 = vunpack.c.l.b16 %v3788
    %v3933 = vunpack.c.l.b16 %v3789
    %v3934 = vunpack.c.l.b16 %v3790
    %v3935 = vunpack.c.l.b16 %v3791
    %v3936 = vunpack.c.l.b16 %v3792
    %v3937 = vunpack.c.l.b16 %v3793
    %v3938 = vunpack.c.l.b16 %v3794
    %v3939 = vunpack.c.l.b16 %v3795
    %v3940 = vunpack.c.l.b16 %v3796
    %v3941 = vunpack.c.l.b16 %v3797
    %v3942 = vunpack.c.l.b16 %v3798
    %v3943 = vunpack.c.l.b16 %v3799
    %v3944 = vunpack.c.l.b16 %v3800
    %v3945 = vunpack.c.l.b16 %v3801
    %v3946 = vunpack.c.l.b16 %v3802
    %v3947 = vunpack.c.l.b16 %v3803
    %v3948 = vunpack.c.l.b16 %v3804
    %v3949 = vunpack.c.l.b16 %v3805
    %v3950 = vunpack.c.l.b16 %v3806
    %v3951 = vunpack.c.l.b16 %v3807
    %v3952 = vunpack.c.l.b16 %v3808
    %v3953 = vunpack.c.l.b16 %v3809
    %v3954 = vunpack.c.l.b16 %v3810
    %v3955 = vunpack.c.l.b16 %v3811
    %v3956 = vunpack.c.l.b16 %v3812
    %v3957 = vunpack.c.l.b16 %v3813
    %v3958 = vunpack.c.l.b16 %v3814
    %v3959 = vunpack.c.l.b16 %v3815
    %v3960 = vunpack.c.l.b16 %v3816
    %v3961 = vunpack.c.l.b16 %v3817
    %v3962 = vunpack.c.l.b16 %v3818
    %v3963 = vunpack.c.l.b16 %v3819
    %v3964 = vunpack.c.l.b16 %v3820
    %v3965 = vunpack.c.l.b16 %v3821
    %v3966 = vunpack.c.l.b16 %v3822
    %v3967 = vunpack.c.l.b16 %v3823
    %v3968 = vunpack.c.l.b16 %v3824
    %v3969 = vunpack.c.l.b16 %v3825
    %v3970 = vunpack.c.l.b16 %v3826
    %v3971 = vunpack.c.l.b16 %v3827
    %v3972 = vunpack.c.l.b16 %v3828
    %v3973 = vunpack.c.l.b16 %v3829
    %v3974 = vunpack.c.l.b16 %v3830
    %v3975 = vunpack.c.l.b16 %v3831
    %v3976 = vunpack.c.l.b16 %v3832
    %v3977 = vunpack.c.l.b16 %v3833
    %v3978 = vunpack.c.l.b16 %v3834
    %v3979 = vunpack.c.l.b16 %v3835
    %v3980 = vunpack.c.l.b16 %v3836
    %v3981 = vunpack.c.l.b16 %v3837
    %v3982 = vunpack.c.l.b16 %v3838
    %v3983 = vunpack.c.l.b16 %v3839
    %v3984 = vunpack.c.l.b16 %v3840
    %v3985 = vunpack.c.l.b16 %v3841
    %v3986 = vunpack.c.l.b16 %v3842
    %v3987 = vunpack.c.l.b16 %v3843
    %v3988 = vunpack.c.l.b16 %v3844
    %v3989 = vunpack.c.l.b16 %v3845
    %v3990 = vunpack.c.l.b16 %v3846
    %v3991 = vunpack.c.l.b16 %v3847
    %v3992 = vunpack.c.l.b16 %v3848
    %v3993 = vunpack.c.l.b16 %v3849
    %v3994 = vunpack.c.l.b16 %v3850
    %v3995 = vpack.c.b16 %v3924, %v3923
    %v3996 = vpack.c.b16 %v3926, %v3925
    %v3997 = vpack.c.b16 %v3928, %v3927
    %v3998 = vpack.c.b16 %v3930, %v3929
    %v3999 = vpack.c.b16 %v3932, %v3931
    %v4000 = vpack.c.b16 %v3934, %v3933
    %v4001 = vpack.c.b16 %v3936, %v3935
    %v4002 = vpack.c.b16 %v3938, %v3937
    %v4003 = vpack.c.b16 %v3940, %v3939
    %v4004 = vpack.c.b16 %v3942, %v3941
    %v4005 = vpack.c.b16 %v3944, %v3943
    %v4006 = vpack.c.b16 %v3946, %v3945
    %v4007 = vpack.c.b16 %v3948, %v3947
    %v4008 = vpack.c.b16 %v3950, %v3949
    %v4009 = vpack.c.b16 %v3952, %v3951
    %v4010 = vpack.c.b16 %v3954, %v3953
    %v4011 = vpack.c.b16 %v3956, %v3955
    %v4012 = vpack.c.b16 %v3958, %v3957
    %v4013 = vpack.c.b16 %v3960, %v3959
    %v4014 = vpack.c.b16 %v3962, %v3961
    %v4015 = vpack.c.b16 %v3964, %v3963
    %v4016 = vpack.c.b16 %v3966, %v3965
    %v4017 = vpack.c.b16 %v3968, %v3967
    %v4018 = vpack.c.b16 %v3970, %v3969
    %v4019 = vpack.c.b16 %v3972, %v3971
    %v4020 = vpack.c.b16 %v3974, %v3973
    %v4021 = vpack.c.b16 %v3976, %v3975
    %v4022 = vpack.c.b16 %v3978, %v3977
    %v4023 = vpack.c.b16 %v3980, %v3979
    %v4024 = vpack.c.b16 %v3982, %v3981
    %v4025 = vpack.c.b16 %v3984, %v3983
    %v4026 = vpack.c.b16 %v3986, %v3985
    %v4027 = vpack.c.b16 %v3988, %v3987
    %v4028 = vpack.c.b16 %v3990, %v3989
    %v4029 = vpack.c.b16 %v3992, %v3991
    %v4030 = vpack.c.b16 %v3994, %v3993
    %v4068 = vsel %vm2627, %v3763, 0
    %v4071 = vsel %vm2627, %v3768, 0
    %v4074 = vsel %vm2627, %v3773, 0
    %v4077 = vsel %vm2627, %v3778, 0
    %4079 = vmatprep.subr.bf16.mxu0 0
    %4080 = vmatpush1.bf16.msra.mxu0 %v3995
    %4081 = vmatprep.subr.bf16.mxu0 0
    %4082 = vmatpush1.bf16.msra.mxu0 %v3996
    %4083 = vmatprep.subr.bf16.mxu0 0
    %4084 = vmatpush1.bf16.msra.mxu0 %v3997
    %4085 = vmatprep.subr.bf16.mxu0 0
    %4086 = vmatpush1.bf16.msra.mxu0 %v3998
    %4087 = vmatprep.subr.bf16.mxu0 0
    %4088 = vmatpush1.bf16.msra.mxu0 %v3999
    %4089 = vmatprep.subr.bf16.mxu0 0
    %4090 = vmatpush1.bf16.msra.mxu0 %v4000
    %4091 = vmatprep.subr.bf16.mxu0 0
    %4092 = vmatpush1.bf16.msra.mxu0 %v4001
    %4093 = vmatprep.subr.bf16.mxu0 0
    %4094 = vmatpush1.bf16.msra.mxu0 %v4002
    %4095 = vmatprep.subr.bf16.mxu0 0
    %4096 = vmatpush1.bf16.msra.mxu0 %v4003
    %4097 = vmatprep.subr.bf16.mxu0 0
    %4098 = vmatpush1.bf16.msra.mxu0 %v4004
    %4099 = vmatprep.subr.bf16.mxu0 0
    %4100 = vmatpush1.bf16.msra.mxu0 %v4005
    %4101 = vmatprep.subr.bf16.mxu0 0
    %4102 = vmatpush1.bf16.msra.mxu0 %v4006
    %4103 = vmatprep.subr.bf16.mxu0 0
    %4104 = vmatpush1.bf16.msra.mxu0 %v4007
    %4105 = vmatprep.subr.bf16.mxu0 0
    %4106 = vmatpush1.bf16.msra.mxu0 %v4008
    %4107 = vmatprep.subr.bf16.mxu0 0
    %4108 = vmatpush1.bf16.msra.mxu0 %v4009
    %4109 = vmatprep.subr.bf16.mxu0 0
    %4110 = vmatpush1.bf16.msra.mxu0 %v4010
    %4111 = vmatprep.mubr.bf16.mxu0 %v3760
    %4112 = vmatmul.mubr.bf16.gmra.mrb[0].mxu0 %v3759
    %v4113 = vpop.f32.mrb[0].mxu0
    %v4114 = vadd.f32 0.0, %v4113
    %v4115 = vpop.f32.mrb[0].mxu0
    %v4116 = vpop.f32.mrb[0].mxu0
    %v4117 = vadd.f32 0.0, %v4116
    %v4118 = vpop.f32.mrb[0].mxu0
    %4119 = vmatprep.mubr.bf16.mxu0 %v3765
    %4120 = vmatmul.mubr.bf16.gmra.mrb[0].mxu0 %v3764
    %v4121 = vpop.f32.mrb[0].mxu0
    %v4122 = vadd.f32 0.0, %v4121
    %v4123 = vpop.f32.mrb[0].mxu0
    %v4124 = vpop.f32.mrb[0].mxu0
    %v4125 = vadd.f32 0.0, %v4124
    %v4126 = vpop.f32.mrb[0].mxu0
    %4127 = vmatprep.mubr.bf16.mxu0 %v3770
    %4128 = vmatmul.mubr.bf16.gmra.mrb[0].mxu0 %v3769
    %v4129 = vpop.f32.mrb[0].mxu0
    %v4130 = vadd.f32 0.0, %v4129
    %v4131 = vpop.f32.mrb[0].mxu0
    %v4132 = vpop.f32.mrb[0].mxu0
    %v4133 = vadd.f32 0.0, %v4132
    %v4134 = vpop.f32.mrb[0].mxu0
    %4135 = vmatprep.mubr.bf16.mxu0 %v3775
    %4136 = vmatmul.mubr.bf16.gmra.mrb[0].mxu0 %v3774
    %v4137 = vpop.f32.mrb[0].mxu0
    %v4138 = vadd.f32 0.0, %v4137
    %v4139 = vpop.f32.mrb[0].mxu0
    %v4140 = vpop.f32.mrb[0].mxu0
    %v4141 = vpop.f32.mrb[0].mxu0
    %4142 = vdwg.mxu0
    %4143 = vmatprep.subr.bf16.mxu0 0
    %4144 = vmatpush1.bf16.msra.mxu0 %v4011
    %4145 = vmatprep.subr.bf16.mxu0 0
    %4146 = vmatpush1.bf16.msra.mxu0 %v4012
    %4147 = vmatprep.subr.bf16.mxu0 0
    %4148 = vmatpush1.bf16.msra.mxu0 %v4013
    %4149 = vmatprep.subr.bf16.mxu0 0
    %4150 = vmatpush1.bf16.msra.mxu0 %v4014
    %4151 = vmatprep.subr.bf16.mxu0 0
    %4152 = vmatpush1.bf16.msra.mxu0 %v4015
    %4153 = vmatprep.subr.bf16.mxu0 0
    %4154 = vmatpush1.bf16.msra.mxu0 %v4016
    %4155 = vmatprep.subr.bf16.mxu0 0
    %4156 = vmatpush1.bf16.msra.mxu0 %v4017
    %4157 = vmatprep.subr.bf16.mxu0 0
    %4158 = vmatpush1.bf16.msra.mxu0 %v4018
    %4159 = vmatprep.subr.bf16.mxu0 0
    %4160 = vmatpush1.bf16.msra.mxu0 %v4019
    %4161 = vmatprep.subr.bf16.mxu0 0
    %4162 = vmatpush1.bf16.msra.mxu0 %v4020
    %4163 = vmatprep.subr.bf16.mxu0 0
    %4164 = vmatpush1.bf16.msra.mxu0 %v4021
    %4165 = vmatprep.subr.bf16.mxu0 0
    %4166 = vmatpush1.bf16.msra.mxu0 %v4022
    %4167 = vmatprep.subr.bf16.mxu0 0
    %4168 = vmatpush1.bf16.msra.mxu0 %v4023
    %4169 = vmatprep.subr.bf16.mxu0 0
    %4170 = vmatpush1.bf16.msra.mxu0 %v4024
    %4171 = vmatprep.subr.bf16.mxu0 0
    %4172 = vmatpush1.bf16.msra.mxu0 %v4025
    %4173 = vmatprep.subr.bf16.mxu0 0
    %4174 = vmatpush1.bf16.msra.mxu0 %v4026
    %4175 = vmatprep.mubr.bf16.mxu0 %v3762
    %4176 = vmatmul.mubr.bf16.gmra.mrb[0].mxu0 %v3761
    %v4177 = vpop.f32.mrb[0].mxu0
    %v4178 = vadd.f32 %v4114, %v4177
    %v4179 = vpop.f32.mrb[0].mxu0
    %v4180 = vpop.f32.mrb[0].mxu0
    %v4181 = vadd.f32 %v4117, %v4180
    %v4182 = vpop.f32.mrb[0].mxu0
    %4183 = vmatprep.mubr.bf16.mxu0 %v3767
    %4184 = vmatmul.mubr.bf16.gmra.mrb[0].mxu0 %v3766
    %v4185 = vpop.f32.mrb[0].mxu0
    %v4186 = vadd.f32 %v4122, %v4185
    %v4187 = vpop.f32.mrb[0].mxu0
    %v4188 = vpop.f32.mrb[0].mxu0
    %v4189 = vadd.f32 %v4125, %v4188
    %v4190 = vpop.f32.mrb[0].mxu0
    %4191 = vmatprep.mubr.bf16.mxu0 %v3772
    %4192 = vmatmul.mubr.bf16.gmra.mrb[0].mxu0 %v3771
    %v4193 = vpop.f32.mrb[0].mxu0
    %v4194 = vadd.f32 %v4130, %v4193
    %v4195 = vpop.f32.mrb[0].mxu0
    %v4196 = vpop.f32.mrb[0].mxu0
    %v4197 = vadd.f32 %v4133, %v4196
    %v4198 = vpop.f32.mrb[0].mxu0
    %4199 = vmatprep.mubr.bf16.mxu0 %v3777
    %4200 = vmatmul.mubr.bf16.gmra.mrb[0].mxu0 %v3776
    %v4201 = vpop.f32.mrb[0].mxu0
    %v4202 = vadd.f32 %v4138, %v4201
    %v4203 = vpop.f32.mrb[0].mxu0
    %v4204 = vpop.f32.mrb[0].mxu0
    %v4205 = vpop.f32.mrb[0].mxu0
    %4206 = vdwg.mxu0
    %4207 = vmatprep.subr.bf16.mxu0 0
    %4208 = vmatpush1.bf16.msra.mxu0 %v4027
    %4209 = vmatprep.subr.bf16.mxu0 0
    %4210 = vmatpush1.bf16.msra.mxu0 %v4028
    %4211 = vmatprep.subr.bf16.mxu0 0
    %4212 = vmatpush1.bf16.msra.mxu0 %v4029
    %4213 = vmatprep.subr.bf16.mxu0 0
    %4214 = vmatpush1.bf16.msra.mxu0 %v4030
    %4215 = vmatprep.subr.bf16.mxu0 0
    %4216 = vmatpush1.bf16.msra.mxu0 0
    %4217 = vmatprep.subr.bf16.mxu0 0
    %4218 = vmatpush1.bf16.msra.mxu0 0
    %4219 = vmatprep.subr.bf16.mxu0 0
    %4220 = vmatpush1.bf16.msra.mxu0 0
    %4221 = vmatprep.subr.bf16.mxu0 0
    %4222 = vmatpush1.bf16.msra.mxu0 0
    %4223 = vmatprep.subr.bf16.mxu0 0
    %4224 = vmatpush1.bf16.msra.mxu0 0
    %4225 = vmatprep.subr.bf16.mxu0 0
    %4226 = vmatpush1.bf16.msra.mxu0 0
    %4227 = vmatprep.subr.bf16.mxu0 0
    %4228 = vmatpush1.bf16.msra.mxu0 0
    %4229 = vmatprep.subr.bf16.mxu0 0
    %4230 = vmatpush1.bf16.msra.mxu0 0
    %4231 = vmatprep.subr.bf16.mxu0 0
    %4232 = vmatpush1.bf16.msra.mxu0 0
    %4233 = vmatprep.subr.bf16.mxu0 0
    %4234 = vmatpush1.bf16.msra.mxu0 0
    %4235 = vmatprep.subr.bf16.mxu0 0
    %4236 = vmatpush1.bf16.msra.mxu0 0
    %4237 = vmatprep.subr.bf16.mxu0 0
    %4238 = vmatpush1.bf16.msra.mxu0 0
    %4239 = vmatprep.mubr.bf16.mxu0 0
    %4240 = vmatmul.mubr.bf16.gmra.mrb[0].mxu0 %v4068
    %v4241 = vpop.f32.mrb[0].mxu0
    %v4242 = vadd.f32 %v4178, %v4241
    %v4243 = vpop.f32.mrb[0].mxu0
    %v4244 = vpop.f32.mrb[0].mxu0
    %v4245 = vadd.f32 %v4181, %v4244
    %v4246 = vpop.f32.mrb[0].mxu0
    %4247 = vmatprep.mubr.bf16.mxu0 0
    %4248 = vmatmul.mubr.bf16.gmra.mrb[0].mxu0 %v4071
    %v4249 = vpop.f32.mrb[0].mxu0
    %v4250 = vadd.f32 %v4186, %v4249
    %v4251 = vpop.f32.mrb[0].mxu0
    %v4252 = vpop.f32.mrb[0].mxu0
    %v4253 = vadd.f32 %v4189, %v4252
    %v4254 = vpop.f32.mrb[0].mxu0
    %4255 = vmatprep.mubr.bf16.mxu0 0
    %4256 = vmatmul.mubr.bf16.gmra.mrb[0].mxu0 %v4074
    %v4257 = vpop.f32.mrb[0].mxu0
    %v4258 = vadd.f32 %v4194, %v4257
    %v4259 = vpop.f32.mrb[0].mxu0
    %v4260 = vpop.f32.mrb[0].mxu0
    %v4261 = vadd.f32 %v4197, %v4260
    %v4262 = vpop.f32.mrb[0].mxu0
    %4263 = vmatprep.mubr.bf16.mxu0 0
    %4264 = vmatmul.mubr.bf16.gmra.mrb[0].mxu0 %v4077
    %v4265 = vpop.f32.mrb[0].mxu0
    %v4266 = vadd.f32 %v4202, %v4265
    %v4267 = vpop.f32.mrb[0].mxu0
    %v4268 = vpop.f32.mrb[0].mxu0
    %v4269 = vpop.f32.mrb[0].mxu0
    %4270 = vdwg.mxu0
    %v4271 = vld [vmem:[%s3 + $0x2] sm:$0x1]
    %v4272 = vld [vmem:[%s3 + $0x3] sm:$0x1]
    %v4273 = vsel %vm2627, %v4242, 0.0
    %v4274 = vsel %vm2627, %v4245, 0.0
    %v4275 = vadd.f32 %v4273, %v4274
    %v4276 = vsel %vm2627, %v4250, 0.0
    %v4277 = vadd.f32 %v4275, %v4276
    %v4278 = vsel %vm2627, %v4253, 0.0
    %v4279 = vadd.f32 %v4277, %v4278
    %v4280 = vsel %vm2627, %v4258, 0.0
    %v4281 = vadd.f32 %v4279, %v4280
    %v4282 = vsel %vm2627, %v4261, 0.0
    %v4283 = vadd.f32 %v4281, %v4282
    %v4284 = vsel %vm3308, %v4266, 0.0
    %v4285 = vadd.f32 %v4283, %v4284
    %v4286 = vrot.slane %v4285, 4
    %v4287 = vadd.f32 %v4285, %v4286
    %v4288 = vrot.slane %v4287, 2
    %v4289 = vadd.f32 %v4287, %v4288
    %v4290 = vrot.slane %v4289, 1
    %v4291 = vadd.f32 %v4289, %v4290
    %v4292 = vmul.f32 %v4242, %v4242
    %v4293 = vmul.f32 %v4245, %v4245
    %v4294 = vmul.f32 %v4250, %v4250
    %v4295 = vmul.f32 %v4253, %v4253
    %v4296 = vmul.f32 %v4258, %v4258
    %v4297 = vmul.f32 %v4261, %v4261
    %v4298 = vmul.f32 %v4266, %v4266
    %v4299 = vsel %vm2627, %v4292, 0.0
    %v4300 = vsel %vm2627, %v4293, 0.0
    %v4301 = vadd.f32 %v4299, %v4300
    %v4302 = vsel %vm2627, %v4294, 0.0
    %v4303 = vadd.f32 %v4301, %v4302
    %v4304 = vsel %vm2627, %v4295, 0.0
    %v4305 = vadd.f32 %v4303, %v4304
    %v4306 = vsel %vm2627, %v4296, 0.0
    %v4307 = vadd.f32 %v4305, %v4306
    %v4308 = vsel %vm2627, %v4297, 0.0
    %v4309 = vadd.f32 %v4307, %v4308
    %v4310 = vsel %vm3308, %v4298, 0.0
    %v4311 = vadd.f32 %v4309, %v4310
    %v4312 = vrot.slane %v4311, 4
    %v4313 = vadd.f32 %v4311, %v4312
    %v4314 = vrot.slane %v4313, 2
    %v4315 = vadd.f32 %v4313, %v4314
    %v4316 = vrot.slane %v4315, 1
    %v4317 = vadd.f32 %v4315, %v4316
    %v4318 = vmul.f32 %v4291, 0.02
    %v4319 = vmul.f32 %v4317, 0.02
    %v4320 = vmul.f32 %v4318, %v4318
    %v4321 = vsub.f32 %v4319, %v4320
    %v4322 = vadd.f32 %v4321, 1e-05
    %v4323 = vrsqrt.pop %v4322
    %v4324 = vmul.f32 %v4271, %v4323
    %v4325 = vmul.f32 %v4318, %v4324
    %v4326 = vsub.f32 %v4272, %v4325
    %v4327 = vlaneseq
    %v4328 = vshrl.u32 %v4327, 7
    %v4329 = vsub.s32 0, %v4328
    %v4330 = vrot.slane %v4324, %v4329
    %v4331 = vmul.f32 %v4242, %v4330
    %v4332 = vmul.f32 %v4245, %v4330
    %v4333 = vmul.f32 %v4250, %v4330
    %v4334 = vmul.f32 %v4253, %v4330
    %v4335 = vmul.f32 %v4258, %v4330
    %v4336 = vmul.f32 %v4261, %v4330
    %v4337 = vmul.f32 %v4266, %v4330
    %v4338 = vlaneseq
    %v4339 = vshrl.u32 %v4338, 7
    %v4340 = vsub.s32 0, %v4339
    %v4341 = vrot.slane %v4326, %v4340
    %v4342 = vadd.f32 %v4331, %v4341
    %v4343 = vadd.f32 %v4332, %v4341
    %v4344 = vadd.f32 %v4333, %v4341
    %v4345 = vadd.f32 %v4334, %v4341
    %v4346 = vadd.f32 %v4335, %v4341
    %v4347 = vadd.f32 %v4336, %v4341
    %v4348 = vadd.f32 %v4337, %v4341
    %v4349 = vmax.f32 %v4342, 0.0
    %v4350 = vmax.f32 %v4343, 0.0
    %v4351 = vmax.f32 %v4344, 0.0
    %v4352 = vmax.f32 %v4345, 0.0
    %v4353 = vmax.f32 %v4346, 0.0
    %v4354 = vmax.f32 %v4347, 0.0
    %v4355 = vmax.f32 %v4348, 0.0
    %4356 = vst.msk [vmem:[#allocation6] sm:$0xff] %vm2627, %v4349
    %4357 = vst.msk [vmem:[#allocation6 + $0x8] sm:$0xff] %vm2627, %v4350
    %4358 = vst.msk [vmem:[#allocation6 + $0x10] sm:$0xff] %vm2627, %v4351
    %4359 = vst.msk [vmem:[#allocation6 + $0x18] sm:$0xff] %vm2627, %v4352
    %4360 = vst.msk [vmem:[#allocation6 + $0x20] sm:$0xff] %vm2627, %v4353
    %4361 = vst.msk [vmem:[#allocation6 + $0x28] sm:$0xff] %vm2627, %v4354
    %4362 = vst.msk [vmem:[#allocation6 + $0x30] sm:$0x3] %vm3308, %v4355
    %v4363 = vld [vmem:[#allocation6] ss:$2 sm:$0x3]
    %s4364 = scalar_lea.vmem [#allocation6], 1
    %v4365 = vld [vmem:[%s4364] ss:$2 sm:$0x3]
    %v4366 = vmax.f32 %v4363, %v4365
    %s4367 = scalar_lea.vmem [#allocation6], 5
    %v4368 = vld [vmem:[%s4367] ss:$2 sm:$0x3]
    %v4369 = vmax.f32 %v4366, %v4368
    %s4370 = scalar_lea.vmem [#allocation6], 6
    %v4371 = vld [vmem:[%s4370] ss:$2 sm:$0x3]
    %v4372 = vmax.f32 %v4369, %v4371
    %4373 = vst.msk [vmem:[#allocation7] sm:$0x3] %vm3308, %v4372
    %s4374 = scalar_lea.vmem [#allocation6], 10
    %v4375 = vld [vmem:[%s4374] ss:$2 sm:$0x3]
    %s4376 = scalar_lea.vmem [#allocation6], 11
    %v4377 = vld [vmem:[%s4376] ss:$2 sm:$0x3]
    %v4378 = vmax.f32 %v4375, %v4377
    %s4379 = scalar_lea.vmem [#allocation6], 15
    %v4380 = vld [vmem:[%s4379] ss:$2 sm:$0x3]
    %v4381 = vmax.f32 %v4378, %v4380
    %s4382 = scalar_lea.vmem [#allocation6], 16
    %v4383 = vld [vmem:[%s4382] ss:$2 sm:$0x3]
    %v4384 = vmax.f32 %v4381, %v4383
    %4385 = vst.msk [vmem:[#allocation7 + $0x2] sm:$0x3] %vm3308, %v4384
    %s4386 = scalar_lea.vmem [#allocation6], 25
    %v4387 = vld [vmem:[%s4386] ss:$2 sm:$0x3]
    %s4388 = scalar_lea.vmem [#allocation6], 26
    %v4389 = vld [vmem:[%s4388] ss:$2 sm:$0x3]
    %v4390 = vmax.f32 %v4387, %v4389
    %s4391 = scalar_lea.vmem [#allocation6], 30
    %v4392 = vld [vmem:[%s4391] ss:$2 sm:$0x3]
    %v4393 = vmax.f32 %v4390, %v4392
    %s4394 = scalar_lea.vmem [#allocation6], 31
    %v4395 = vld [vmem:[%s4394] ss:$2 sm:$0x3]
    %v4396 = vmax.f32 %v4393, %v4395
    %4397 = vst.msk [vmem:[#allocation7 + $0x4] sm:$0x3] %vm3308, %v4396
    %s4398 = scalar_lea.vmem [#allocation6], 35
    %v4399 = vld [vmem:[%s4398] ss:$2 sm:$0x3]
    %s4400 = scalar_lea.vmem [#allocation6], 36
    %v4401 = vld [vmem:[%s4400] ss:$2 sm:$0x3]
    %v4402 = vmax.f32 %v4399, %v4401
    %s4403 = scalar_lea.vmem [#allocation6], 40
    %v4404 = vld [vmem:[%s4403] ss:$2 sm:$0x3]
    %v4405 = vmax.f32 %v4402, %v4404
    %s4406 = scalar_lea.vmem [#allocation6], 41
    %v4407 = vld [vmem:[%s4406] ss:$2 sm:$0x3]
    %v4408 = vmax.f32 %v4405, %v4407
    %4409 = vst.msk [vmem:[#allocation7 + $0x6] sm:$0x3] %vm3308, %v4408
    %4410 = vst.msk [vmem:[#allocation8] sm:$0xff] %vm2627, 0.0
    %4411 = vst.msk [vmem:[#allocation8 + $0x8] sm:$0xff] %vm2627, 0.0
    %4412 = vst.msk [vmem:[#allocation8 + $0x10] sm:$0xff] %vm2627, 0.0
    %4413 = vst.msk [vmem:[#allocation8 + $0x18] sm:$0xff] %vm2627, 0.0
    %v4414 = vld [vmem:[#allocation7] sm:$0x3]
    %4415 = vst.msk [vmem:[#allocation8 + $0x5] sm:$0x3] %vm3308, %v4414
    %v4416 = vld [vmem:[#allocation7 + $0x2] sm:$0x3]
    %4417 = vst.msk [vmem:[#allocation8 + $0x9] sm:$0x3] %vm3308, %v4416
    %v4418 = vld [vmem:[#allocation7 + $0x4] sm:$0x3]
    %4419 = vst.msk [vmem:[#allocation8 + $0x15] sm:$0x3] %vm3308, %v4418
    %v4420 = vld [vmem:[#allocation7 + $0x6] sm:$0x3]
    %4421 = vst.msk [vmem:[#allocation8 + $0x19] sm:$0x3] %vm3308, %v4420
    %v4422 = vld [vmem:[#allocation8] sm:$0xf]
    %4423 = vst.msk [vmem:[#allocation9] sm:$0x3] %vm3308, %v4422
    %v4425 = vrot.slane %v4422, 1
    %4426 = vrot.lane.b32.xlu0 %v4425, 64
    %v4427 = vpop.permute.xlu0 %4426
    %4429 = vst.msk [vmem:[#allocation9] sm:$0x3] %vm3316, %v4427
    %v4430 = vrot.slane %v4422, 2
    %4432 = vst.msk [vmem:[#allocation9 + $0x8] sm:$0x3] %vm3308, %v4430
    %v4433 = vld [vmem:[#allocation8 + $0x4] sm:$0xf]
    %4435 = vrot.lane.b32.xlu0 %v4433, 64
    %v4436 = vpop.permute.xlu0 %4435
    %4438 = vst.msk [vmem:[#allocation9 + $0x8] sm:$0x3] %vm3316, %v4436
    %v4439 = vrot.slane %v4433, 1
    %4441 = vst.msk [vmem:[#allocation9 + $0x10] sm:$0x3] %vm3308, %v4439
    %v4442 = vrot.slane %v4433, 2
    %4443 = vrot.lane.b32.xlu0 %v4442, 64
    %v4444 = vpop.permute.xlu0 %4443
    %4446 = vst.msk [vmem:[#allocation9 + $0x10] sm:$0x3] %vm3316, %v4444
    %v4447 = vld [vmem:[#allocation8 + $0x8] sm:$0xf]
    %4448 = vst.msk [vmem:[#allocation9 + $0x18] sm:$0x3] %vm3308, %v4447
    %v4450 = vrot.slane %v4447, 1
    %4451 = vrot.lane.b32.xlu0 %v4450, 64
    %v4452 = vpop.permute.xlu0 %4451
    %4454 = vst.msk [vmem:[#allocation9 + $0x18] sm:$0x3] %vm3316, %v4452
    %v4455 = vrot.slane %v4447, 2
    %4457 = vst.msk [vmem:[#allocation9 + $0x20] sm:$0x3] %vm3308, %v4455
    %v4458 = vld [vmem:[#allocation8 + $0x4] sm:$0xf]
    %v4460 = vrot.slane %v4458, 6
    %vm4462 = vcmask 519170
    %4463 = vst.msk [vmem:[#allocation9] sm:$0xc] %vm4462, %v4460
    %v4464 = vrot.slane %v4458, 7
    %4465 = vrot.lane.b32.xlu0 %v4464, 64
    %v4466 = vpop.permute.xlu0 %4465
    %vm4468 = vcmask 1043970
    %4469 = vst.msk [vmem:[#allocation9] sm:$0xc] %vm4468, %v4466
    %4470 = vst.msk [vmem:[#allocation9 + $0x8] sm:$0xc] %vm4462, %v4458
    %v4471 = vld [vmem:[#allocation8 + $0x8] sm:$0xf]
    %v4473 = vrot.slane %v4471, 6
    %4474 = vrot.lane.b32.xlu0 %v4473, 64
    %v4475 = vpop.permute.xlu0 %4474
    %4477 = vst.msk [vmem:[#allocation9 + $0x8] sm:$0xc] %vm4468, %v4475
    %v4478 = vrot.slane %v4471, 7
    %4480 = vst.msk [vmem:[#allocation9 + $0x10] sm:$0xc] %vm4462, %v4478
    %4481 = vrot.lane.b32.xlu0 %v4471, 64
    %v4482 = vpop.permute.xlu0 %4481
    %4484 = vst.msk [vmem:[#allocation9 + $0x10] sm:$0xc] %vm4468, %v4482
    %v4485 = vld [vmem:[#allocation8 + $0xc] sm:$0xf]
    %v4487 = vrot.slane %v4485, 6
    %4489 = vst.msk [vmem:[#allocation9 + $0x18] sm:$0xc] %vm4462, %v4487
    %v4490 = vrot.slane %v4485, 7
    %4491 = vrot.lane.b32.xlu0 %v4490, 64
    %v4492 = vpop.permute.xlu0 %4491
    %4494 = vst.msk [vmem:[#allocation9 + $0x18] sm:$0xc] %vm4468, %v4492
    %4495 = vst.msk [vmem:[#allocation9 + $0x20] sm:$0xc] %vm4462, %v4485
    %v4496 = vld [vmem:[#allocation8 + $0x10] sm:$0xf]
    %v4498 = vrot.slane %v4496, 4
    %vm4500 = vcmask 521220
    %4501 = vst.msk [vmem:[#allocation9] sm:$0x30] %vm4500, %v4498
    %v4502 = vrot.slane %v4496, 5
    %4503 = vrot.lane.b32.xlu0 %v4502, 64
    %v4504 = vpop.permute.xlu0 %4503
    %vm4506 = vcmask 1046020
    %4507 = vst.msk [vmem:[#allocation9] sm:$0x30] %vm4506, %v4504
    %v4508 = vrot.slane %v4496, 6
    %4510 = vst.msk [vmem:[#allocation9 + $0x8] sm:$0x30] %vm4500, %v4508
    %v4511 = vld [vmem:[#allocation8 + $0x14] sm:$0xf]
    %v4513 = vrot.slane %v4511, 4
    %4514 = vrot.lane.b32.xlu0 %v4513, 64
    %v4515 = vpop.permute.xlu0 %4514
    %4517 = vst.msk [vmem:[#allocation9 + $0x8] sm:$0x30] %vm4506, %v4515
    %v4518 = vrot.slane %v4511, 5
    %4520 = vst.msk [vmem:[#allocation9 + $0x10] sm:$0x30] %vm4500, %v4518
    %v4521 = vrot.slane %v4511, 6
    %4522 = vrot.lane.b32.xlu0 %v4521, 64
    %v4523 = vpop.permute.xlu0 %4522
    %4525 = vst.msk [vmem:[#allocation9 + $0x10] sm:$0x30] %vm4506, %v4523
    %v4526 = vld [vmem:[#allocation8 + $0x18] sm:$0xf]
    %v4528 = vrot.slane %v4526, 4
    %4530 = vst.msk [vmem:[#allocation9 + $0x18] sm:$0x30] %vm4500, %v4528
    %v4531 = vrot.slane %v4526, 5
    %4532 = vrot.lane.b32.xlu0 %v4531, 64
    %v4533 = vpop.permute.xlu0 %4532
    %4535 = vst.msk [vmem:[#allocation9 + $0x18] sm:$0x30] %vm4506, %v4533
    %v4536 = vrot.slane %v4526, 6
    %4538 = vst.msk [vmem:[#allocation9 + $0x20] sm:$0x30] %vm4500, %v4536
    %v4539 = vld [vmem:[#allocation8 + $0x14] sm:$0xf]
    %v4541 = vrot.slane %v4539, 2
    %4543 = vst.msk [vmem:[#allocation9] sm:$0xc0] %vm3545, %v4541
    %v4544 = vrot.slane %v4539, 3
    %4545 = vrot.lane.b32.xlu0 %v4544, 64
    %v4546 = vpop.permute.xlu0 %4545
    %4548 = vst.msk [vmem:[#allocation9] sm:$0xc0] %vm3553, %v4546
    %v4549 = vrot.slane %v4539, 4
    %4551 = vst.msk [vmem:[#allocation9 + $0x8] sm:$0xc0] %vm3545, %v4549
    %v4552 = vld [vmem:[#allocation8 + $0x18] sm:$0xf]
    %v4554 = vrot.slane %v4552, 2
    %4555 = vrot.lane.b32.xlu0 %v4554, 64
    %v4556 = vpop.permute.xlu0 %4555
    %4558 = vst.msk [vmem:[#allocation9 + $0x8] sm:$0xc0] %vm3553, %v4556
    %v4559 = vrot.slane %v4552, 3
    %4561 = vst.msk [vmem:[#allocation9 + $0x10] sm:$0xc0] %vm3545, %v4559
    %v4562 = vrot.slane %v4552, 4
    %4563 = vrot.lane.b32.xlu0 %v4562, 64
    %v4564 = vpop.permute.xlu0 %4563
    %4566 = vst.msk [vmem:[#allocation9 + $0x10] sm:$0xc0] %vm3553, %v4564
    %v4567 = vld [vmem:[#allocation8 + $0x1c] sm:$0xf]
    %v4569 = vrot.slane %v4567, 2
    %4571 = vst.msk [vmem:[#allocation9 + $0x18] sm:$0xc0] %vm3545, %v4569
    %v4572 = vrot.slane %v4567, 3
    %4573 = vrot.lane.b32.xlu0 %v4572, 64
    %v4574 = vpop.permute.xlu0 %4573
    %4576 = vst.msk [vmem:[#allocation9 + $0x18] sm:$0xc0] %vm3553, %v4574
    %v4577 = vrot.slane %v4567, 4
    %4579 = vst.msk [vmem:[#allocation9 + $0x20] sm:$0xc0] %vm3545, %v4577
    %v4580 = vld [vmem:[#allocation9] sm:$0xff]
    %v4581 = vld [vmem:[#allocation9 + $0x8] sm:$0xff]
    %v4582 = vld [vmem:[#allocation9 + $0x10] sm:$0xff]
    %v4583 = vld [vmem:[#allocation9 + $0x18] sm:$0xff]
    %v4584 = vld [vmem:[#allocation9 + $0x20] sm:$0xff]
    %v4585 = vpack.c.bf16 %v4580, %v4580
    %v4586 = vpack.c.bf16 %v4581, %v4581
    %v4587 = vpack.c.bf16 %v4582, %v4582
    %v4588 = vpack.c.bf16 %v4583, %v4583
    %v4589 = vpack.c.bf16 %v4584, %v4584
    %s4590 = scalar_lea.vmem %s2, 288
    %v4591 = vld [vmem:[%s4590] sm:$0xf]
    %v4592 = vld [vmem:[%s4590 + $0x4] sm:$0xf]
    %v4593 = vld [vmem:[%s4590 + $0x8] sm:$0xf]
    %v4594 = vld [vmem:[%s4590 + $0xc] sm:$0xf]
    %v4595 = vld [vmem:[%s4590 + $0x10] sm:$0xf]
    %v4596 = vld [vmem:[%s4590 + $0x14] sm:$0xf]
    %v4597 = vld [vmem:[%s4590 + $0x18] sm:$0xf]
    %v4598 = vld [vmem:[%s4590 + $0x1c] sm:$0xf]
    %v4599 = vld [vmem:[%s4590 + $0x20] sm:$0xf]
    %v4600 = vld [vmem:[%s4590 + $0x24] sm:$0xf]
    %v4601 = vld [vmem:[%s4590 + $0x28] sm:$0xf]
    %v4602 = vld [vmem:[%s4590 + $0x2c] sm:$0xf]
    %v4603 = vld [vmem:[%s4590 + $0x30] sm:$0xf]
    %v4604 = vld [vmem:[%s4590 + $0x34] sm:$0xf]
    %v4605 = vld [vmem:[%s4590 + $0x38] sm:$0xf]
    %v4606 = vld [vmem:[%s4590 + $0x3c] sm:$0xf]
    %v4607 = vld [vmem:[%s4590 + $0x40] sm:$0xf]
    %v4608 = vld [vmem:[%s4590 + $0x44] sm:$0xf]
    %v4609 = vld [vmem:[%s4590 + $0x48] sm:$0xf]
    %v4610 = vld [vmem:[%s4590 + $0x4c] sm:$0xf]
    %v4611 = vld [vmem:[%s4590 + $0x50] sm:$0xf]
    %v4612 = vld [vmem:[%s4590 + $0x54] sm:$0xf]
    %v4613 = vld [vmem:[%s4590 + $0x58] sm:$0xf]
    %v4614 = vld [vmem:[%s4590 + $0x5c] sm:$0xf]
    %v4615 = vld [vmem:[%s4590 + $0x60] sm:$0xf]
    %v4616 = vld [vmem:[%s4590 + $0x64] sm:$0xf]
    %v4617 = vld [vmem:[%s4590 + $0x68] sm:$0xf]
    %v4618 = vld [vmem:[%s4590 + $0x6c] sm:$0xf]
    %v4619 = vld [vmem:[%s4590 + $0x70] sm:$0xf]
    %v4620 = vld [vmem:[%s4590 + $0x74] sm:$0xf]
    %v4621 = vld [vmem:[%s4590 + $0x78] sm:$0xf]
    %v4622 = vld [vmem:[%s4590 + $0x7c] sm:$0xf]
    %v4623 = vld [vmem:[%s4590 + $0x80] sm:$0xf]
    %v4624 = vld [vmem:[%s4590 + $0x84] sm:$0xf]
    %v4625 = vld [vmem:[%s4590 + $0x88] sm:$0xf]
    %v4626 = vld [vmem:[%s4590 + $0x8c] sm:$0xf]
    %v4627 = vld [vmem:[%s4590 + $0x90] sm:$0xf]
    %v4628 = vld [vmem:[%s4590 + $0x94] sm:$0xf]
    %v4629 = vld [vmem:[%s4590 + $0x98] sm:$0xf]
    %v4630 = vld [vmem:[%s4590 + $0x9c] sm:$0xf]
    %v4631 = vld [vmem:[%s4590 + $0xa0] sm:$0xf]
    %v4632 = vld [vmem:[%s4590 + $0xa4] sm:$0xf]
    %v4633 = vld [vmem:[%s4590 + $0xa8] sm:$0xf]
    %v4634 = vld [vmem:[%s4590 + $0xac] sm:$0xf]
    %v4635 = vld [vmem:[%s4590 + $0xb0] sm:$0xf]
    %v4636 = vld [vmem:[%s4590 + $0xb4] sm:$0xf]
    %v4637 = vld [vmem:[%s4590 + $0xb8] sm:$0xf]
    %v4638 = vld [vmem:[%s4590 + $0xbc] sm:$0xf]
    %v4639 = vld [vmem:[%s4590 + $0xc0] sm:$0xf]
    %v4640 = vld [vmem:[%s4590 + $0xc4] sm:$0xf]
    %v4641 = vld [vmem:[%s4590 + $0xc8] sm:$0xf]
    %v4642 = vld [vmem:[%s4590 + $0xcc] sm:$0xf]
    %v4643 = vld [vmem:[%s4590 + $0xd0] sm:$0xf]
    %v4644 = vld [vmem:[%s4590 + $0xd4] sm:$0xf]
    %v4645 = vld [vmem:[%s4590 + $0xd8] sm:$0xf]
    %v4646 = vld [vmem:[%s4590 + $0xdc] sm:$0xf]
    %v4647 = vld [vmem:[%s4590 + $0xe0] sm:$0xf]
    %v4648 = vld [vmem:[%s4590 + $0xe4] sm:$0xf]
    %v4649 = vld [vmem:[%s4590 + $0xe8] sm:$0xf]
    %v4650 = vld [vmem:[%s4590 + $0xec] sm:$0xf]
    %v4651 = vld [vmem:[%s4590 + $0xf0] sm:$0xf]
    %v4652 = vld [vmem:[%s4590 + $0xf4] sm:$0xf]
    %v4653 = vld [vmem:[%s4590 + $0xf8] sm:$0xf]
    %v4654 = vld [vmem:[%s4590 + $0xfc] sm:$0xf]
    %v4655 = vld [vmem:[%s4590 + $0x100] sm:$0xf]
    %v4656 = vld [vmem:[%s4590 + $0x104] sm:$0xf]
    %v4657 = vld [vmem:[%s4590 + $0x108] sm:$0xf]
    %v4658 = vld [vmem:[%s4590 + $0x10c] sm:$0xf]
    %v4659 = vld [vmem:[%s4590 + $0x110] sm:$0xf]
    %v4660 = vld [vmem:[%s4590 + $0x114] sm:$0xf]
    %v4661 = vld [vmem:[%s4590 + $0x118] sm:$0xf]
    %v4662 = vld [vmem:[%s4590 + $0x11c] sm:$0xf]
    %v4735 = vunpack.c.l.b16 %v4591
    %v4736 = vunpack.c.l.b16 %v4592
    %v4737 = vunpack.c.l.b16 %v4593
    %v4738 = vunpack.c.l.b16 %v4594
    %v4739 = vunpack.c.l.b16 %v4595
    %v4740 = vunpack.c.l.b16 %v4596
    %v4741 = vunpack.c.l.b16 %v4597
    %v4742 = vunpack.c.l.b16 %v4598
    %v4743 = vunpack.c.l.b16 %v4599
    %v4744 = vunpack.c.l.b16 %v4600
    %v4745 = vunpack.c.l.b16 %v4601
    %v4746 = vunpack.c.l.b16 %v4602
    %v4747 = vunpack.c.l.b16 %v4603
    %v4748 = vunpack.c.l.b16 %v4604
    %v4749 = vunpack.c.l.b16 %v4605
    %v4750 = vunpack.c.l.b16 %v4606
    %v4751 = vunpack.c.l.b16 %v4607
    %v4752 = vunpack.c.l.b16 %v4608
    %v4753 = vunpack.c.l.b16 %v4609
    %v4754 = vunpack.c.l.b16 %v4610
    %v4755 = vunpack.c.l.b16 %v4611
    %v4756 = vunpack.c.l.b16 %v4612
    %v4757 = vunpack.c.l.b16 %v4613
    %v4758 = vunpack.c.l.b16 %v4614
    %v4759 = vunpack.c.l.b16 %v4615
    %v4760 = vunpack.c.l.b16 %v4616
    %v4761 = vunpack.c.l.b16 %v4617
    %v4762 = vunpack.c.l.b16 %v4618
    %v4763 = vunpack.c.l.b16 %v4619
    %v4764 = vunpack.c.l.b16 %v4620
    %v4765 = vunpack.c.l.b16 %v4621
    %v4766 = vunpack.c.l.b16 %v4622
    %v4767 = vunpack.c.l.b16 %v4623
    %v4768 = vunpack.c.l.b16 %v4624
    %v4769 = vunpack.c.l.b16 %v4625
    %v4770 = vunpack.c.l.b16 %v4626
    %v4771 = vunpack.c.l.b16 %v4627
    %v4772 = vunpack.c.l.b16 %v4628
    %v4773 = vunpack.c.l.b16 %v4629
    %v4774 = vunpack.c.l.b16 %v4630
    %v4775 = vunpack.c.l.b16 %v4631
    %v4776 = vunpack.c.l.b16 %v4632
    %v4777 = vunpack.c.l.b16 %v4633
    %v4778 = vunpack.c.l.b16 %v4634
    %v4779 = vunpack.c.l.b16 %v4635
    %v4780 = vunpack.c.l.b16 %v4636
    %v4781 = vunpack.c.l.b16 %v4637
    %v4782 = vunpack.c.l.b16 %v4638
    %v4783 = vunpack.c.l.b16 %v4639
    %v4784 = vunpack.c.l.b16 %v4640
    %v4785 = vunpack.c.l.b16 %v4641
    %v4786 = vunpack.c.l.b16 %v4642
    %v4787 = vunpack.c.l.b16 %v4643
    %v4788 = vunpack.c.l.b16 %v4644
    %v4789 = vunpack.c.l.b16 %v4645
    %v4790 = vunpack.c.l.b16 %v4646
    %v4791 = vunpack.c.l.b16 %v4647
    %v4792 = vunpack.c.l.b16 %v4648
    %v4793 = vunpack.c.l.b16 %v4649
    %v4794 = vunpack.c.l.b16 %v4650
    %v4795 = vunpack.c.l.b16 %v4651
    %v4796 = vunpack.c.l.b16 %v4652
    %v4797 = vunpack.c.l.b16 %v4653
    %v4798 = vunpack.c.l.b16 %v4654
    %v4799 = vunpack.c.l.b16 %v4655
    %v4800 = vunpack.c.l.b16 %v4656
    %v4801 = vunpack.c.l.b16 %v4657
    %v4802 = vunpack.c.l.b16 %v4658
    %v4803 = vunpack.c.l.b16 %v4659
    %v4804 = vunpack.c.l.b16 %v4660
    %v4805 = vunpack.c.l.b16 %v4661
    %v4806 = vunpack.c.l.b16 %v4662
    %v4807 = vpack.c.b16 %v4736, %v4735
    %v4808 = vpack.c.b16 %v4738, %v4737
    %v4809 = vpack.c.b16 %v4740, %v4739
    %v4810 = vpack.c.b16 %v4742, %v4741
    %v4811 = vpack.c.b16 %v4744, %v4743
    %v4812 = vpack.c.b16 %v4746, %v4745
    %v4813 = vpack.c.b16 %v4748, %v4747
    %v4814 = vpack.c.b16 %v4750, %v4749
    %v4815 = vpack.c.b16 %v4752, %v4751
    %v4816 = vpack.c.b16 %v4754, %v4753
    %v4817 = vpack.c.b16 %v4756, %v4755
    %v4818 = vpack.c.b16 %v4758, %v4757
    %v4819 = vpack.c.b16 %v4760, %v4759
    %v4820 = vpack.c.b16 %v4762, %v4761
    %v4821 = vpack.c.b16 %v4764, %v4763
    %v4822 = vpack.c.b16 %v4766, %v4765
    %v4823 = vpack.c.b16 %v4768, %v4767
    %v4824 = vpack.c.b16 %v4770, %v4769
    %v4825 = vpack.c.b16 %v4772, %v4771
    %v4826 = vpack.c.b16 %v4774, %v4773
    %v4827 = vpack.c.b16 %v4776, %v4775
    %v4828 = vpack.c.b16 %v4778, %v4777
    %v4829 = vpack.c.b16 %v4780, %v4779
    %v4830 = vpack.c.b16 %v4782, %v4781
    %v4831 = vpack.c.b16 %v4784, %v4783
    %v4832 = vpack.c.b16 %v4786, %v4785
    %v4833 = vpack.c.b16 %v4788, %v4787
    %v4834 = vpack.c.b16 %v4790, %v4789
    %v4835 = vpack.c.b16 %v4792, %v4791
    %v4836 = vpack.c.b16 %v4794, %v4793
    %v4837 = vpack.c.b16 %v4796, %v4795
    %v4838 = vpack.c.b16 %v4798, %v4797
    %v4839 = vpack.c.b16 %v4800, %v4799
    %v4840 = vpack.c.b16 %v4802, %v4801
    %v4841 = vpack.c.b16 %v4804, %v4803
    %v4842 = vpack.c.b16 %v4806, %v4805
    %v4880 = vsel %vm2627, %v4589, 0
    %4882 = vmatprep.subr.bf16.mxu0 0
    %4883 = vmatpush1.bf16.msra.mxu0 %v4807
    %4884 = vmatprep.subr.bf16.mxu0 0
    %4885 = vmatpush1.bf16.msra.mxu0 %v4808
    %4886 = vmatprep.subr.bf16.mxu0 0
    %4887 = vmatpush1.bf16.msra.mxu0 %v4809
    %4888 = vmatprep.subr.bf16.mxu0 0
    %4889 = vmatpush1.bf16.msra.mxu0 %v4810
    %4890 = vmatprep.subr.bf16.mxu0 0
    %4891 = vmatpush1.bf16.msra.mxu0 %v4811
    %4892 = vmatprep.subr.bf16.mxu0 0
    %4893 = vmatpush1.bf16.msra.mxu0 %v4812
    %4894 = vmatprep.subr.bf16.mxu0 0
    %4895 = vmatpush1.bf16.msra.mxu0 %v4813
    %4896 = vmatprep.subr.bf16.mxu0 0
    %4897 = vmatpush1.bf16.msra.mxu0 %v4814
    %4898 = vmatprep.subr.bf16.mxu0 0
    %4899 = vmatpush1.bf16.msra.mxu0 %v4815
    %4900 = vmatprep.subr.bf16.mxu0 0
    %4901 = vmatpush1.bf16.msra.mxu0 %v4816
    %4902 = vmatprep.subr.bf16.mxu0 0
    %4903 = vmatpush1.bf16.msra.mxu0 %v4817
    %4904 = vmatprep.subr.bf16.mxu0 0
    %4905 = vmatpush1.bf16.msra.mxu0 %v4818
    %4906 = vmatprep.subr.bf16.mxu0 0
    %4907 = vmatpush1.bf16.msra.mxu0 %v4819
    %4908 = vmatprep.subr.bf16.mxu0 0
    %4909 = vmatpush1.bf16.msra.mxu0 %v4820
    %4910 = vmatprep.subr.bf16.mxu0 0
    %4911 = vmatpush1.bf16.msra.mxu0 %v4821
    %4912 = vmatprep.subr.bf16.mxu0 0
    %4913 = vmatpush1.bf16.msra.mxu0 %v4822
    %4914 = vmatprep.mubr.bf16.mxu0 %v4586
    %4915 = vmatmul.mubr.bf16.gmra.mrb[0].mxu0 %v4585
    %v4916 = vpop.f32.mrb[0].mxu0
    %v4917 = vadd.f32 0.0, %v4916
    %v4918 = vpop.f32.mrb[0].mxu0
    %v4919 = vpop.f32.mrb[0].mxu0
    %v4920 = vpop.f32.mrb[0].mxu0
    %4921 = vdwg.mxu0
    %4922 = vmatprep.subr.bf16.mxu0 0
    %4923 = vmatpush1.bf16.msra.mxu0 %v4823
    %4924 = vmatprep.subr.bf16.mxu0 0
    %4925 = vmatpush1.bf16.msra.mxu0 %v4824
    %4926 = vmatprep.subr.bf16.mxu0 0
    %4927 = vmatpush1.bf16.msra.mxu0 %v4825
    %4928 = vmatprep.subr.bf16.mxu0 0
    %4929 = vmatpush1.bf16.msra.mxu0 %v4826
    %4930 = vmatprep.subr.bf16.mxu0 0
    %4931 = vmatpush1.bf16.msra.mxu0 %v4827
    %4932 = vmatprep.subr.bf16.mxu0 0
    %4933 = vmatpush1.bf16.msra.mxu0 %v4828
    %4934 = vmatprep.subr.bf16.mxu0 0
    %4935 = vmatpush1.bf16.msra.mxu0 %v4829
    %4936 = vmatprep.subr.bf16.mxu0 0
    %4937 = vmatpush1.bf16.msra.mxu0 %v4830
    %4938 = vmatprep.subr.bf16.mxu0 0
    %4939 = vmatpush1.bf16.msra.mxu0 %v4831
    %4940 = vmatprep.subr.bf16.mxu0 0
    %4941 = vmatpush1.bf16.msra.mxu0 %v4832
    %4942 = vmatprep.subr.bf16.mxu0 0
    %4943 = vmatpush1.bf16.msra.mxu0 %v4833
    %4944 = vmatprep.subr.bf16.mxu0 0
    %4945 = vmatpush1.bf16.msra.mxu0 %v4834
    %4946 = vmatprep.subr.bf16.mxu0 0
    %4947 = vmatpush1.bf16.msra.mxu0 %v4835
    %4948 = vmatprep.subr.bf16.mxu0 0
    %4949 = vmatpush1.bf16.msra.mxu0 %v4836
    %4950 = vmatprep.subr.bf16.mxu0 0
    %4951 = vmatpush1.bf16.msra.mxu0 %v4837
    %4952 = vmatprep.subr.bf16.mxu0 0
    %4953 = vmatpush1.bf16.msra.mxu0 %v4838
    %4954 = vmatprep.mubr.bf16.mxu0 %v4588
    %4955 = vmatmul.mubr.bf16.gmra.mrb[0].mxu0 %v4587
    %v4956 = vpop.f32.mrb[0].mxu0
    %v4957 = vadd.f32 %v4917, %v4956
    %v4958 = vpop.f32.mrb[0].mxu0
    %v4959 = vpop.f32.mrb[0].mxu0
    %v4960 = vpop.f32.mrb[0].mxu0
    %4961 = vdwg.mxu0
    %4962 = vmatprep.subr.bf16.mxu0 0
    %4963 = vmatpush1.bf16.msra.mxu0 %v4839
    %4964 = vmatprep.subr.bf16.mxu0 0
    %4965 = vmatpush1.bf16.msra.mxu0 %v4840
    %4966 = vmatprep.subr.bf16.mxu0 0
    %4967 = vmatpush1.bf16.msra.mxu0 %v4841
    %4968 = vmatprep.subr.bf16.mxu0 0
    %4969 = vmatpush1.bf16.msra.mxu0 %v4842
    %4970 = vmatprep.subr.bf16.mxu0 0
    %4971 = vmatpush1.bf16.msra.mxu0 0
    %4972 = vmatprep.subr.bf16.mxu0 0
    %4973 = vmatpush1.bf16.msra.mxu0 0
    %4974 = vmatprep.subr.bf16.mxu0 0
    %4975 = vmatpush1.bf16.msra.mxu0 0
    %4976 = vmatprep.subr.bf16.mxu0 0
    %4977 = vmatpush1.bf16.msra.mxu0 0
    %4978 = vmatprep.subr.bf16.mxu0 0
    %4979 = vmatpush1.bf16.msra.mxu0 0
    %4980 = vmatprep.subr.bf16.mxu0 0
    %4981 = vmatpush1.bf16.msra.mxu0 0
    %4982 = vmatprep.subr.bf16.mxu0 0
    %4983 = vmatpush1.bf16.msra.mxu0 0
    %4984 = vmatprep.subr.bf16.mxu0 0
    %4985 = vmatpush1.bf16.msra.mxu0 0
    %4986 = vmatprep.subr.bf16.mxu0 0
    %4987 = vmatpush1.bf16.msra.mxu0 0
    %4988 = vmatprep.subr.bf16.mxu0 0
    %4989 = vmatpush1.bf16.msra.mxu0 0
    %4990 = vmatprep.subr.bf16.mxu0 0
    %4991 = vmatpush1.bf16.msra.mxu0 0
    %4992 = vmatprep.subr.bf16.mxu0 0
    %4993 = vmatpush1.bf16.msra.mxu0 0
    %4994 = vmatprep.mubr.bf16.mxu0 0
    %4995 = vmatmul.mubr.bf16.gmra.mrb[0].mxu0 %v4880
    %v4996 = vpop.f32.mrb[0].mxu0
    %v4997 = vadd.f32 %v4957, %v4996
    %v4998 = vpop.f32.mrb[0].mxu0
    %v4999 = vpop.f32.mrb[0].mxu0
    %v5000 = vpop.f32.mrb[0].mxu0
    %5001 = vdwg.mxu0
    %v5002 = vld [vmem:[%s3 + $0x4] sm:$0x1]
    %v5003 = vld [vmem:[%s3 + $0x5] sm:$0x1]
    %v5004 = vsel %vm2627, %v4997, 0.0
    %v5005 = vrot.slane %v5004, 4
    %v5006 = vadd.f32 %v5004, %v5005
    %v5007 = vrot.slane %v5006, 2
    %v5008 = vadd.f32 %v5006, %v5007
    %v5009 = vrot.slane %v5008, 1
    %v5010 = vadd.f32 %v5008, %v5009
    %v5011 = vmul.f32 %v4997, %v4997
    %v5012 = vsel %vm2627, %v5011, 0.0
    %v5013 = vrot.slane %v5012, 4
    %v5014 = vadd.f32 %v5012, %v5013
    %v5015 = vrot.slane %v5014, 2
    %v5016 = vadd.f32 %v5014, %v5015
    %v5017 = vrot.slane %v5016, 1
    %v5018 = vadd.f32 %v5016, %v5017
    %v5019 = vmul.f32 %v5010, 0.125
    %v5020 = vmul.f32 %v5018, 0.125
    %v5021 = vmul.f32 %v5019, %v5019
    %v5022 = vsub.f32 %v5020, %v5021
    %v5023 = vadd.f32 %v5022, 1e-05
    %v5024 = vrsqrt.pop %v5023
    %v5025 = vmul.f32 %v5002, %v5024
    %v5026 = vmul.f32 %v5019, %v5025
    %v5027 = vsub.f32 %v5003, %v5026
    %v5028 = vlaneseq
    %v5029 = vshrl.u32 %v5028, 7
    %v5030 = vsub.s32 0, %v5029
    %v5031 = vrot.slane %v5025, %v5030
    %v5032 = vmul.f32 %v4997, %v5031
    %v5033 = vlaneseq
    %v5034 = vshrl.u32 %v5033, 7
    %v5035 = vsub.s32 0, %v5034
    %v5036 = vrot.slane %v5027, %v5035
    %v5037 = vadd.f32 %v5032, %v5036
    %v5038 = vmax.f32 %v5037, 0.0
    %5039 = vst.msk [vmem:[#allocation10] sm:$0xff] %vm2627, %v5038
    %v5040 = vld [vmem:[#allocation10] sm:$0x3]
    %5041 = vst.msk [vmem:[#allocation8 + $0x5] sm:$0x3] %vm3308, %v5040
    %v5042 = vld [vmem:[#allocation10 + $0x2] sm:$0x3]
    %5043 = vst.msk [vmem:[#allocation8 + $0x9] sm:$0x3] %vm3308, %v5042
    %v5044 = vld [vmem:[#allocation10 + $0x4] sm:$0x3]
    %5045 = vst.msk [vmem:[#allocation8 + $0x15] sm:$0x3] %vm3308, %v5044
    %v5046 = vld [vmem:[#allocation10 + $0x6] sm:$0x3]
    %5047 = vst.msk [vmem:[#allocation8 + $0x19] sm:$0x3] %vm3308, %v5046
    %v5048 = vld [vmem:[#allocation8] sm:$0xf]
    %5049 = vst.msk [vmem:[#allocation9] sm:$0x3] %vm3308, %v5048
    %v5051 = vrot.slane %v5048, 1
    %5052 = vrot.lane.b32.xlu0 %v5051, 64
    %v5053 = vpop.permute.xlu0 %5052
    %5055 = vst.msk [vmem:[#allocation9] sm:$0x3] %vm3316, %v5053
    %v5056 = vrot.slane %v5048, 2
    %5058 = vst.msk [vmem:[#allocation9 + $0x8] sm:$0x3] %vm3308, %v5056
    %v5059 = vld [vmem:[#allocation8 + $0x4] sm:$0xf]
    %5061 = vrot.lane.b32.xlu0 %v5059, 64
    %v5062 = vpop.permute.xlu0 %5061
    %5064 = vst.msk [vmem:[#allocation9 + $0x8] sm:$0x3] %vm3316, %v5062
    %v5065 = vrot.slane %v5059, 1
    %5067 = vst.msk [vmem:[#allocation9 + $0x10] sm:$0x3] %vm3308, %v5065
    %v5068 = vrot.slane %v5059, 2
    %5069 = vrot.lane.b32.xlu0 %v5068, 64
    %v5070 = vpop.permute.xlu0 %5069
    %5072 = vst.msk [vmem:[#allocation9 + $0x10] sm:$0x3] %vm3316, %v5070
    %v5073 = vld [vmem:[#allocation8 + $0x8] sm:$0xf]
    %5074 = vst.msk [vmem:[#allocation9 + $0x18] sm:$0x3] %vm3308, %v5073
    %v5076 = vrot.slane %v5073, 1
    %5077 = vrot.lane.b32.xlu0 %v5076, 64
    %v5078 = vpop.permute.xlu0 %5077
    %5080 = vst.msk [vmem:[#allocation9 + $0x18] sm:$0x3] %vm3316, %v5078
    %v5081 = vrot.slane %v5073, 2
    %5083 = vst.msk [vmem:[#allocation9 + $0x20] sm:$0x3] %vm3308, %v5081
    %v5084 = vld [vmem:[#allocation8 + $0x4] sm:$0xf]
    %v5086 = vrot.slane %v5084, 6
    %5088 = vst.msk [vmem:[#allocation9] sm:$0xc] %vm4462, %v5086
    %v5089 = vrot.slane %v5084, 7
    %5090 = vrot.lane.b32.xlu0 %v5089, 64
    %v5091 = vpop.permute.xlu0 %5090
    %5093 = vst.msk [vmem:[#allocation9] sm:$0xc] %vm4468, %v5091
    %5094 = vst.msk [vmem:[#allocation9 + $0x8] sm:$0xc] %vm4462, %v5084
    %v5095 = vld [vmem:[#allocation8 + $0x8] sm:$0xf]
    %v5097 = vrot.slane %v5095, 6
    %5098 = vrot.lane.b32.xlu0 %v5097, 64
    %v5099 = vpop.permute.xlu0 %5098
    %5101 = vst.msk [vmem:[#allocation9 + $0x8] sm:$0xc] %vm4468, %v5099
    %v5102 = vrot.slane %v5095, 7
    %5104 = vst.msk [vmem:[#allocation9 + $0x10] sm:$0xc] %vm4462, %v5102
    %5105 = vrot.lane.b32.xlu0 %v5095, 64
    %v5106 = vpop.permute.xlu0 %5105
    %5108 = vst.msk [vmem:[#allocation9 + $0x10] sm:$0xc] %vm4468, %v5106
    %v5109 = vld [vmem:[#allocation8 + $0xc] sm:$0xf]
    %v5111 = vrot.slane %v5109, 6
    %5113 = vst.msk [vmem:[#allocation9 + $0x18] sm:$0xc] %vm4462, %v5111
    %v5114 = vrot.slane %v5109, 7
    %5115 = vrot.lane.b32.xlu0 %v5114, 64
    %v5116 = vpop.permute.xlu0 %5115
    %5118 = vst.msk [vmem:[#allocation9 + $0x18] sm:$0xc] %vm4468, %v5116
    %5119 = vst.msk [vmem:[#allocation9 + $0x20] sm:$0xc] %vm4462, %v5109
    %v5120 = vld [vmem:[#allocation8 + $0x10] sm:$0xf]
    %v5122 = vrot.slane %v5120, 4
    %5124 = vst.msk [vmem:[#allocation9] sm:$0x30] %vm4500, %v5122
    %v5125 = vrot.slane %v5120, 5
    %5126 = vrot.lane.b32.xlu0 %v5125, 64
    %v5127 = vpop.permute.xlu0 %5126
    %5129 = vst.msk [vmem:[#allocation9] sm:$0x30] %vm4506, %v5127
    %v5130 = vrot.slane %v5120, 6
    %5132 = vst.msk [vmem:[#allocation9 + $0x8] sm:$0x30] %vm4500, %v5130
    %v5133 = vld [vmem:[#allocation8 + $0x14] sm:$0xf]
    %v5135 = vrot.slane %v5133, 4
    %5136 = vrot.lane.b32.xlu0 %v5135, 64
    %v5137 = vpop.permute.xlu0 %5136
    %5139 = vst.msk [vmem:[#allocation9 + $0x8] sm:$0x30] %vm4506, %v5137
    %v5140 = vrot.slane %v5133, 5
    %5142 = vst.msk [vmem:[#allocation9 + $0x10] sm:$0x30] %vm4500, %v5140
    %v5143 = vrot.slane %v5133, 6
    %5144 = vrot.lane.b32.xlu0 %v5143, 64
    %v5145 = vpop.permute.xlu0 %5144
    %5147 = vst.msk [vmem:[#allocation9 + $0x10] sm:$0x30] %vm4506, %v5145
    %v5148 = vld [vmem:[#allocation8 + $0x18] sm:$0xf]
    %v5150 = vrot.slane %v5148, 4
    %5152 = vst.msk [vmem:[#allocation9 + $0x18] sm:$0x30] %vm4500, %v5150
    %v5153 = vrot.slane %v5148, 5
    %5154 = vrot.lane.b32.xlu0 %v5153, 64
    %v5155 = vpop.permute.xlu0 %5154
    %5157 = vst.msk [vmem:[#allocation9 + $0x18] sm:$0x30] %vm4506, %v5155
    %v5158 = vrot.slane %v5148, 6
    %5160 = vst.msk [vmem:[#allocation9 + $0x20] sm:$0x30] %vm4500, %v5158
    %v5161 = vld [vmem:[#allocation8 + $0x14] sm:$0xf]
    %v5163 = vrot.slane %v5161, 2
    %5165 = vst.msk [vmem:[#allocation9] sm:$0xc0] %vm3545, %v5163
    %v5166 = vrot.slane %v5161, 3
    %5167 = vrot.lane.b32.xlu0 %v5166, 64
    %v5168 = vpop.permute.xlu0 %5167
    %5170 = vst.msk [vmem:[#allocation9] sm:$0xc0] %vm3553, %v5168
    %v5171 = vrot.slane %v5161, 4
    %5173 = vst.msk [vmem:[#allocation9 + $0x8] sm:$0xc0] %vm3545, %v5171
    %v5174 = vld [vmem:[#allocation8 + $0x18] sm:$0xf]
    %v5176 = vrot.slane %v5174, 2
    %5177 = vrot.lane.b32.xlu0 %v5176, 64
    %v5178 = vpop.permute.xlu0 %5177
    %5180 = vst.msk [vmem:[#allocation9 + $0x8] sm:$0xc0] %vm3553, %v5178
    %v5181 = vrot.slane %v5174, 3
    %5183 = vst.msk [vmem:[#allocation9 + $0x10] sm:$0xc0] %vm3545, %v5181
    %v5184 = vrot.slane %v5174, 4
    %5185 = vrot.lane.b32.xlu0 %v5184, 64
    %v5186 = vpop.permute.xlu0 %5185
    %5188 = vst.msk [vmem:[#allocation9 + $0x10] sm:$0xc0] %vm3553, %v5186
    %v5189 = vld [vmem:[#allocation8 + $0x1c] sm:$0xf]
    %v5191 = vrot.slane %v5189, 2
    %5193 = vst.msk [vmem:[#allocation9 + $0x18] sm:$0xc0] %vm3545, %v5191
    %v5194 = vrot.slane %v5189, 3
    %5195 = vrot.lane.b32.xlu0 %v5194, 64
    %v5196 = vpop.permute.xlu0 %5195
    %5198 = vst.msk [vmem:[#allocation9 + $0x18] sm:$0xc0] %vm3553, %v5196
    %v5199 = vrot.slane %v5189, 4
    %5201 = vst.msk [vmem:[#allocation9 + $0x20] sm:$0xc0] %vm3545, %v5199
    %v5202 = vld [vmem:[#allocation9] sm:$0xff]
    %v5203 = vld [vmem:[#allocation9 + $0x8] sm:$0xff]
    %v5204 = vld [vmem:[#allocation9 + $0x10] sm:$0xff]
    %v5205 = vld [vmem:[#allocation9 + $0x18] sm:$0xff]
    %v5206 = vld [vmem:[#allocation9 + $0x20] sm:$0xff]
    %v5207 = vpack.c.bf16 %v5202, %v5202
    %v5208 = vpack.c.bf16 %v5203, %v5203
    %v5209 = vpack.c.bf16 %v5204, %v5204
    %v5210 = vpack.c.bf16 %v5205, %v5205
    %v5211 = vpack.c.bf16 %v5206, %v5206
    %s5212 = scalar_lea.vmem %s2, 576
    %v5213 = vld [vmem:[%s5212] sm:$0xf]
    %v5214 = vld [vmem:[%s5212 + $0x4] sm:$0xf]
    %v5215 = vld [vmem:[%s5212 + $0x8] sm:$0xf]
    %v5216 = vld [vmem:[%s5212 + $0xc] sm:$0xf]
    %v5217 = vld [vmem:[%s5212 + $0x10] sm:$0xf]
    %v5218 = vld [vmem:[%s5212 + $0x14] sm:$0xf]
    %v5219 = vld [vmem:[%s5212 + $0x18] sm:$0xf]
    %v5220 = vld [vmem:[%s5212 + $0x1c] sm:$0xf]
    %v5221 = vld [vmem:[%s5212 + $0x20] sm:$0xf]
    %v5222 = vld [vmem:[%s5212 + $0x24] sm:$0xf]
    %v5223 = vld [vmem:[%s5212 + $0x28] sm:$0xf]
    %v5224 = vld [vmem:[%s5212 + $0x2c] sm:$0xf]
    %v5225 = vld [vmem:[%s5212 + $0x30] sm:$0xf]
    %v5226 = vld [vmem:[%s5212 + $0x34] sm:$0xf]
    %v5227 = vld [vmem:[%s5212 + $0x38] sm:$0xf]
    %v5228 = vld [vmem:[%s5212 + $0x3c] sm:$0xf]
    %v5229 = vld [vmem:[%s5212 + $0x40] sm:$0xf]
    %v5230 = vld [vmem:[%s5212 + $0x44] sm:$0xf]
    %v5231 = vld [vmem:[%s5212 + $0x48] sm:$0xf]
    %v5232 = vld [vmem:[%s5212 + $0x4c] sm:$0xf]
    %v5233 = vld [vmem:[%s5212 + $0x50] sm:$0xf]
    %v5234 = vld [vmem:[%s5212 + $0x54] sm:$0xf]
    %v5235 = vld [vmem:[%s5212 + $0x58] sm:$0xf]
    %v5236 = vld [vmem:[%s5212 + $0x5c] sm:$0xf]
    %v5237 = vld [vmem:[%s5212 + $0x60] sm:$0xf]
    %v5238 = vld [vmem:[%s5212 + $0x64] sm:$0xf]
    %v5239 = vld [vmem:[%s5212 + $0x68] sm:$0xf]
    %v5240 = vld [vmem:[%s5212 + $0x6c] sm:$0xf]
    %v5241 = vld [vmem:[%s5212 + $0x70] sm:$0xf]
    %v5242 = vld [vmem:[%s5212 + $0x74] sm:$0xf]
    %v5243 = vld [vmem:[%s5212 + $0x78] sm:$0xf]
    %v5244 = vld [vmem:[%s5212 + $0x7c] sm:$0xf]
    %v5245 = vld [vmem:[%s5212 + $0x80] sm:$0xf]
    %v5246 = vld [vmem:[%s5212 + $0x84] sm:$0xf]
    %v5247 = vld [vmem:[%s5212 + $0x88] sm:$0xf]
    %v5248 = vld [vmem:[%s5212 + $0x8c] sm:$0xf]
    %v5249 = vld [vmem:[%s5212 + $0x90] sm:$0xf]
    %v5250 = vld [vmem:[%s5212 + $0x94] sm:$0xf]
    %v5251 = vld [vmem:[%s5212 + $0x98] sm:$0xf]
    %v5252 = vld [vmem:[%s5212 + $0x9c] sm:$0xf]
    %v5253 = vld [vmem:[%s5212 + $0xa0] sm:$0xf]
    %v5254 = vld [vmem:[%s5212 + $0xa4] sm:$0xf]
    %v5255 = vld [vmem:[%s5212 + $0xa8] sm:$0xf]
    %v5256 = vld [vmem:[%s5212 + $0xac] sm:$0xf]
    %v5257 = vld [vmem:[%s5212 + $0xb0] sm:$0xf]
    %v5258 = vld [vmem:[%s5212 + $0xb4] sm:$0xf]
    %v5259 = vld [vmem:[%s5212 + $0xb8] sm:$0xf]
    %v5260 = vld [vmem:[%s5212 + $0xbc] sm:$0xf]
    %v5261 = vld [vmem:[%s5212 + $0xc0] sm:$0xf]
    %v5262 = vld [vmem:[%s5212 + $0xc4] sm:$0xf]
    %v5263 = vld [vmem:[%s5212 + $0xc8] sm:$0xf]
    %v5264 = vld [vmem:[%s5212 + $0xcc] sm:$0xf]
    %v5265 = vld [vmem:[%s5212 + $0xd0] sm:$0xf]
    %v5266 = vld [vmem:[%s5212 + $0xd4] sm:$0xf]
    %v5267 = vld [vmem:[%s5212 + $0xd8] sm:$0xf]
    %v5268 = vld [vmem:[%s5212 + $0xdc] sm:$0xf]
    %v5269 = vld [vmem:[%s5212 + $0xe0] sm:$0xf]
    %v5270 = vld [vmem:[%s5212 + $0xe4] sm:$0xf]
    %v5271 = vld [vmem:[%s5212 + $0xe8] sm:$0xf]
    %v5272 = vld [vmem:[%s5212 + $0xec] sm:$0xf]
    %v5273 = vld [vmem:[%s5212 + $0xf0] sm:$0xf]
    %v5274 = vld [vmem:[%s5212 + $0xf4] sm:$0xf]
    %v5275 = vld [vmem:[%s5212 + $0xf8] sm:$0xf]
    %v5276 = vld [vmem:[%s5212 + $0xfc] sm:$0xf]
    %v5277 = vld [vmem:[%s5212 + $0x100] sm:$0xf]
    %v5278 = vld [vmem:[%s5212 + $0x104] sm:$0xf]
    %v5279 = vld [vmem:[%s5212 + $0x108] sm:$0xf]
    %v5280 = vld [vmem:[%s5212 + $0x10c] sm:$0xf]
    %v5281 = vld [vmem:[%s5212 + $0x110] sm:$0xf]
    %v5282 = vld [vmem:[%s5212 + $0x114] sm:$0xf]
    %v5283 = vld [vmem:[%s5212 + $0x118] sm:$0xf]
    %v5284 = vld [vmem:[%s5212 + $0x11c] sm:$0xf]
    %v5357 = vunpack.c.l.b16 %v5213
    %v5358 = vunpack.c.l.b16 %v5214
    %v5359 = vunpack.c.l.b16 %v5215
    %v5360 = vunpack.c.l.b16 %v5216
    %v5361 = vunpack.c.l.b16 %v5217
    %v5362 = vunpack.c.l.b16 %v5218
    %v5363 = vunpack.c.l.b16 %v5219
    %v5364 = vunpack.c.l.b16 %v5220
    %v5365 = vunpack.c.l.b16 %v5221
    %v5366 = vunpack.c.l.b16 %v5222
    %v5367 = vunpack.c.l.b16 %v5223
    %v5368 = vunpack.c.l.b16 %v5224
    %v5369 = vunpack.c.l.b16 %v5225
    %v5370 = vunpack.c.l.b16 %v5226
    %v5371 = vunpack.c.l.b16 %v5227
    %v5372 = vunpack.c.l.b16 %v5228
    %v5373 = vunpack.c.l.b16 %v5229
    %v5374 = vunpack.c.l.b16 %v5230
    %v5375 = vunpack.c.l.b16 %v5231
    %v5376 = vunpack.c.l.b16 %v5232
    %v5377 = vunpack.c.l.b16 %v5233
    %v5378 = vunpack.c.l.b16 %v5234
    %v5379 = vunpack.c.l.b16 %v5235
    %v5380 = vunpack.c.l.b16 %v5236
    %v5381 = vunpack.c.l.b16 %v5237
    %v5382 = vunpack.c.l.b16 %v5238
    %v5383 = vunpack.c.l.b16 %v5239
    %v5384 = vunpack.c.l.b16 %v5240
    %v5385 = vunpack.c.l.b16 %v5241
    %v5386 = vunpack.c.l.b16 %v5242
    %v5387 = vunpack.c.l.b16 %v5243
    %v5388 = vunpack.c.l.b16 %v5244
    %v5389 = vunpack.c.l.b16 %v5245
    %v5390 = vunpack.c.l.b16 %v5246
    %v5391 = vunpack.c.l.b16 %v5247
    %v5392 = vunpack.c.l.b16 %v5248
    %v5393 = vunpack.c.l.b16 %v5249
    %v5394 = vunpack.c.l.b16 %v5250
    %v5395 = vunpack.c.l.b16 %v5251
    %v5396 = vunpack.c.l.b16 %v5252
    %v5397 = vunpack.c.l.b16 %v5253
    %v5398 = vunpack.c.l.b16 %v5254
    %v5399 = vunpack.c.l.b16 %v5255
    %v5400 = vunpack.c.l.b16 %v5256
    %v5401 = vunpack.c.l.b16 %v5257
    %v5402 = vunpack.c.l.b16 %v5258
    %v5403 = vunpack.c.l.b16 %v5259
    %v5404 = vunpack.c.l.b16 %v5260
    %v5405 = vunpack.c.l.b16 %v5261
    %v5406 = vunpack.c.l.b16 %v5262
    %v5407 = vunpack.c.l.b16 %v5263
    %v5408 = vunpack.c.l.b16 %v5264
    %v5409 = vunpack.c.l.b16 %v5265
    %v5410 = vunpack.c.l.b16 %v5266
    %v5411 = vunpack.c.l.b16 %v5267
    %v5412 = vunpack.c.l.b16 %v5268
    %v5413 = vunpack.c.l.b16 %v5269
    %v5414 = vunpack.c.l.b16 %v5270
    %v5415 = vunpack.c.l.b16 %v5271
    %v5416 = vunpack.c.l.b16 %v5272
    %v5417 = vunpack.c.l.b16 %v5273
    %v5418 = vunpack.c.l.b16 %v5274
    %v5419 = vunpack.c.l.b16 %v5275
    %v5420 = vunpack.c.l.b16 %v5276
    %v5421 = vunpack.c.l.b16 %v5277
    %v5422 = vunpack.c.l.b16 %v5278
    %v5423 = vunpack.c.l.b16 %v5279
    %v5424 = vunpack.c.l.b16 %v5280
    %v5425 = vunpack.c.l.b16 %v5281
    %v5426 = vunpack.c.l.b16 %v5282
    %v5427 = vunpack.c.l.b16 %v5283
    %v5428 = vunpack.c.l.b16 %v5284
    %v5429 = vpack.c.b16 %v5358, %v5357
    %v5430 = vpack.c.b16 %v5360, %v5359
    %v5431 = vpack.c.b16 %v5362, %v5361
    %v5432 = vpack.c.b16 %v5364, %v5363
    %v5433 = vpack.c.b16 %v5366, %v5365
    %v5434 = vpack.c.b16 %v5368, %v5367
    %v5435 = vpack.c.b16 %v5370, %v5369
    %v5436 = vpack.c.b16 %v5372, %v5371
    %v5437 = vpack.c.b16 %v5374, %v5373
    %v5438 = vpack.c.b16 %v5376, %v5375
    %v5439 = vpack.c.b16 %v5378, %v5377
    %v5440 = vpack.c.b16 %v5380, %v5379
    %v5441 = vpack.c.b16 %v5382, %v5381
    %v5442 = vpack.c.b16 %v5384, %v5383
    %v5443 = vpack.c.b16 %v5386, %v5385
    %v5444 = vpack.c.b16 %v5388, %v5387
    %v5445 = vpack.c.b16 %v5390, %v5389
    %v5446 = vpack.c.b16 %v5392, %v5391
    %v5447 = vpack.c.b16 %v5394, %v5393
    %v5448 = vpack.c.b16 %v5396, %v5395
    %v5449 = vpack.c.b16 %v5398, %v5397
    %v5450 = vpack.c.b16 %v5400, %v5399
    %v5451 = vpack.c.b16 %v5402, %v5401
    %v5452 = vpack.c.b16 %v5404, %v5403
    %v5453 = vpack.c.b16 %v5406, %v5405
    %v5454 = vpack.c.b16 %v5408, %v5407
    %v5455 = vpack.c.b16 %v5410, %v5409
    %v5456 = vpack.c.b16 %v5412, %v5411
    %v5457 = vpack.c.b16 %v5414, %v5413
    %v5458 = vpack.c.b16 %v5416, %v5415
    %v5459 = vpack.c.b16 %v5418, %v5417
    %v5460 = vpack.c.b16 %v5420, %v5419
    %v5461 = vpack.c.b16 %v5422, %v5421
    %v5462 = vpack.c.b16 %v5424, %v5423
    %v5463 = vpack.c.b16 %v5426, %v5425
    %v5464 = vpack.c.b16 %v5428, %v5427
    %v5502 = vsel %vm2627, %v5211, 0
    %5504 = vmatprep.subr.bf16.mxu0 0
    %5505 = vmatpush1.bf16.msra.mxu0 %v5429
    %5506 = vmatprep.subr.bf16.mxu0 0
    %5507 = vmatpush1.bf16.msra.mxu0 %v5430
    %5508 = vmatprep.subr.bf16.mxu0 0
    %5509 = vmatpush1.bf16.msra.mxu0 %v5431
    %5510 = vmatprep.subr.bf16.mxu0 0
    %5511 = vmatpush1.bf16.msra.mxu0 %v5432
    %5512 = vmatprep.subr.bf16.mxu0 0
    %5513 = vmatpush1.bf16.msra.mxu0 %v5433
    %5514 = vmatprep.subr.bf16.mxu0 0
    %5515 = vmatpush1.bf16.msra.mxu0 %v5434
    %5516 = vmatprep.subr.bf16.mxu0 0
    %5517 = vmatpush1.bf16.msra.mxu0 %v5435
    %5518 = vmatprep.subr.bf16.mxu0 0
    %5519 = vmatpush1.bf16.msra.mxu0 %v5436
    %5520 = vmatprep.subr.bf16.mxu0 0
    %5521 = vmatpush1.bf16.msra.mxu0 %v5437
    %5522 = vmatprep.subr.bf16.mxu0 0
    %5523 = vmatpush1.bf16.msra.mxu0 %v5438
    %5524 = vmatprep.subr.bf16.mxu0 0
    %5525 = vmatpush1.bf16.msra.mxu0 %v5439
    %5526 = vmatprep.subr.bf16.mxu0 0
    %5527 = vmatpush1.bf16.msra.mxu0 %v5440
    %5528 = vmatprep.subr.bf16.mxu0 0
    %5529 = vmatpush1.bf16.msra.mxu0 %v5441
    %5530 = vmatprep.subr.bf16.mxu0 0
    %5531 = vmatpush1.bf16.msra.mxu0 %v5442
    %5532 = vmatprep.subr.bf16.mxu0 0
    %5533 = vmatpush1.bf16.msra.mxu0 %v5443
    %5534 = vmatprep.subr.bf16.mxu0 0
    %5535 = vmatpush1.bf16.msra.mxu0 %v5444
    %5536 = vmatprep.mubr.bf16.mxu0 %v5208
    %5537 = vmatmul.mubr.bf16.gmra.mrb[0].mxu0 %v5207
    %v5538 = vpop.f32.mrb[0].mxu0
    %v5539 = vadd.f32 0.0, %v5538
    %v5540 = vpop.f32.mrb[0].mxu0
    %v5541 = vpop.f32.mrb[0].mxu0
    %v5542 = vpop.f32.mrb[0].mxu0
    %5543 = vdwg.mxu0
    %5544 = vmatprep.subr.bf16.mxu0 0
    %5545 = vmatpush1.bf16.msra.mxu0 %v5445
    %5546 = vmatprep.subr.bf16.mxu0 0
    %5547 = vmatpush1.bf16.msra.mxu0 %v5446
    %5548 = vmatprep.subr.bf16.mxu0 0
    %5549 = vmatpush1.bf16.msra.mxu0 %v5447
    %5550 = vmatprep.subr.bf16.mxu0 0
    %5551 = vmatpush1.bf16.msra.mxu0 %v5448
    %5552 = vmatprep.subr.bf16.mxu0 0
    %5553 = vmatpush1.bf16.msra.mxu0 %v5449
    %5554 = vmatprep.subr.bf16.mxu0 0
    %5555 = vmatpush1.bf16.msra.mxu0 %v5450
    %5556 = vmatprep.subr.bf16.mxu0 0
    %5557 = vmatpush1.bf16.msra.mxu0 %v5451
    %5558 = vmatprep.subr.bf16.mxu0 0
    %5559 = vmatpush1.bf16.msra.mxu0 %v5452
    %5560 = vmatprep.subr.bf16.mxu0 0
    %5561 = vmatpush1.bf16.msra.mxu0 %v5453
    %5562 = vmatprep.subr.bf16.mxu0 0
    %5563 = vmatpush1.bf16.msra.mxu0 %v5454
    %5564 = vmatprep.subr.bf16.mxu0 0
    %5565 = vmatpush1.bf16.msra.mxu0 %v5455
    %5566 = vmatprep.subr.bf16.mxu0 0
    %5567 = vmatpush1.bf16.msra.mxu0 %v5456
    %5568 = vmatprep.subr.bf16.mxu0 0
    %5569 = vmatpush1.bf16.msra.mxu0 %v5457
    %5570 = vmatprep.subr.bf16.mxu0 0
    %5571 = vmatpush1.bf16.msra.mxu0 %v5458
    %5572 = vmatprep.subr.bf16.mxu0 0
    %5573 = vmatpush1.bf16.msra.mxu0 %v5459
    %5574 = vmatprep.subr.bf16.mxu0 0
    %5575 = vmatpush1.bf16.msra.mxu0 %v5460
    %5576 = vmatprep.mubr.bf16.mxu0 %v5210
    %5577 = vmatmul.mubr.bf16.gmra.mrb[0].mxu0 %v5209
    %v5578 = vpop.f32.mrb[0].mxu0
    %v5579 = vadd.f32 %v5539, %v5578
    %v5580 = vpop.f32.mrb[0].mxu0
    %v5581 = vpop.f32.mrb[0].mxu0
    %v5582 = vpop.f32.mrb[0].mxu0
    %5583 = vdwg.mxu0
    %5584 = vmatprep.subr.bf16.mxu0 0
    %5585 = vmatpush1.bf16.msra.mxu0 %v5461
    %5586 = vmatprep.subr.bf16.mxu0 0
    %5587 = vmatpush1.bf16.msra.mxu0 %v5462
    %5588 = vmatprep.subr.bf16.mxu0 0
    %5589 = vmatpush1.bf16.msra.mxu0 %v5463
    %5590 = vmatprep.subr.bf16.mxu0 0
    %5591 = vmatpush1.bf16.msra.mxu0 %v5464
    %5592 = vmatprep.subr.bf16.mxu0 0
    %5593 = vmatpush1.bf16.msra.mxu0 0
    %5594 = vmatprep.subr.bf16.mxu0 0
    %5595 = vmatpush1.bf16.msra.mxu0 0
    %5596 = vmatprep.subr.bf16.mxu0 0
    %5597 = vmatpush1.bf16.msra.mxu0 0
    %5598 = vmatprep.subr.bf16.mxu0 0
    %5599 = vmatpush1.bf16.msra.mxu0 0
    %5600 = vmatprep.subr.bf16.mxu0 0
    %5601 = vmatpush1.bf16.msra.mxu0 0
    %5602 = vmatprep.subr.bf16.mxu0 0
    %5603 = vmatpush1.bf16.msra.mxu0 0
    %5604 = vmatprep.subr.bf16.mxu0 0
    %5605 = vmatpush1.bf16.msra.mxu0 0
    %5606 = vmatprep.subr.bf16.mxu0 0
    %5607 = vmatpush1.bf16.msra.mxu0 0
    %5608 = vmatprep.subr.bf16.mxu0 0
    %5609 = vmatpush1.bf16.msra.mxu0 0
    %5610 = vmatprep.subr.bf16.mxu0 0
    %5611 = vmatpush1.bf16.msra.mxu0 0
    %5612 = vmatprep.subr.bf16.mxu0 0
    %5613 = vmatpush1.bf16.msra.mxu0 0
    %5614 = vmatprep.subr.bf16.mxu0 0
    %5615 = vmatpush1.bf16.msra.mxu0 0
    %5616 = vmatprep.mubr.bf16.mxu0 0
    %5617 = vmatmul.mubr.bf16.gmra.mrb[0].mxu0 %v5502
    %v5618 = vpop.f32.mrb[0].mxu0
    %v5619 = vadd.f32 %v5579, %v5618
    %v5620 = vpop.f32.mrb[0].mxu0
    %v5621 = vpop.f32.mrb[0].mxu0
    %v5622 = vpop.f32.mrb[0].mxu0
    %5623 = vdwg.mxu0
    %v5624 = vld [vmem:[%s3 + $0x6] sm:$0x1]
    %v5625 = vld [vmem:[%s3 + $0x7] sm:$0x1]
    %v5626 = vsel %vm2627, %v5619, 0.0
    %v5627 = vrot.slane %v5626, 4
    %v5628 = vadd.f32 %v5626, %v5627
    %v5629 = vrot.slane %v5628, 2
    %v5630 = vadd.f32 %v5628, %v5629
    %v5631 = vrot.slane %v5630, 1
    %v5632 = vadd.f32 %v5630, %v5631
    %v5633 = vmul.f32 %v5619, %v5619
    %v5634 = vsel %vm2627, %v5633, 0.0
    %v5635 = vrot.slane %v5634, 4
    %v5636 = vadd.f32 %v5634, %v5635
    %v5637 = vrot.slane %v5636, 2
    %v5638 = vadd.f32 %v5636, %v5637
    %v5639 = vrot.slane %v5638, 1
    %v5640 = vadd.f32 %v5638, %v5639
    %v5641 = vmul.f32 %v5632, 0.125
    %v5642 = vmul.f32 %v5640, 0.125
    %v5643 = vmul.f32 %v5641, %v5641
    %v5644 = vsub.f32 %v5642, %v5643
    %v5645 = vadd.f32 %v5644, 1e-05
    %v5646 = vrsqrt.pop %v5645
    %v5647 = vmul.f32 %v5624, %v5646
    %v5648 = vmul.f32 %v5641, %v5647
    %v5649 = vsub.f32 %v5625, %v5648
    %v5650 = vlaneseq
    %v5651 = vshrl.u32 %v5650, 7
    %v5652 = vsub.s32 0, %v5651
    %v5653 = vrot.slane %v5647, %v5652
    %v5654 = vmul.f32 %v5619, %v5653
    %v5655 = vlaneseq
    %v5656 = vshrl.u32 %v5655, 7
    %v5657 = vsub.s32 0, %v5656
    %v5658 = vrot.slane %v5649, %v5657
    %v5659 = vadd.f32 %v5654, %v5658
    %v5660 = vmax.f32 %v5659, 0.0
    %5661 = vst.msk [vmem:[#allocation11] sm:$0xff] %vm2627, %v5660
    // Predicated region
    $region18: #{convnet_nopool_forward.1} parent=1 // pred_check
      _
    $region19: #{convnet_nopool_forward.1} parent=1 // pred_check_branch
      %5663 = sbr.rel (0) target = $region21
    $region20: #{convnet_nopool_forward.1} parent=1 // pred_region
      %s5665 = ssub.s32 128, 128
      %5666 = vsyncadd [#allocation12], %s5665
      %s5668 = sshll.u32 [#allocation11], 4
      %s5669 = int_to_ptr.vmem [resolvable:$true] %s5668
      %5671 = dma.vmem_to_hbm [thread:$0]  %s5669, 128, %s4, [#allocation12]
    $region21: #{convnet_nopool_forward.1} parent=1 // pred_fallthru
      _
    // Predicated region
    $region22: #{convnet_nopool_forward.1} parent=1 // pred_check
      _
    $region23: #{convnet_nopool_forward.1} parent=1 // pred_check_branch
      %5673 = sbr.rel (0) target = $region25
    $region24: #{convnet_nopool_forward.1} parent=1 // pred_region
      %5674 = dma.done [#allocation12], 128
    $region25: #{convnet_nopool_forward.1} parent=1 // pred_fallthru
      _
    %5675 = vsyncpa [#allocation12], 1

</llo_original>
